<compile_context>
chip_gen: v6e
topology: v6e:2x2x1
jax: 0.10.0
libtpu: 0.0.40
codegen_flags: <defaults>
</compile_context>

<pallas_src>
import jax
import jax.numpy as jnp
from jax.experimental import pallas as pl
from jax.experimental.pallas import tpu as pltpu

HIDDEN = 64              # hidden_size (module default)
KSIZE = 3                # conv kernel_size
PAD = 1                  # conv padding
SEQ = 168                # implied by fc1 in_features = hidden_size * 84
POOLED = SEQ // 2        # 84 (MaxPool1d(2))
PPAD = 128               # pooled length padded to one lane tile
FC1_OUT = 100
FC2_OUT = 48
FC1_PAD = 128            # lane-dense padded fc1 width
FC2_PAD = 128            # lane-dense padded fc2 width

# TODO(synk): nn.Dropout(0.1) is treated as inference-mode identity (no RNG mask applied).


def fused_forward_kernel(xs_ref, cw_ref, cb_ref, w1_ref, b1_ref, w2_ref, b2_ref,
                         o_ref, acc_ref):
    """Conv1d(1->H,k=3,pad=1) + ReLU + MaxPool1d(2) + fc1 + ReLU + fc2 for one batch tile.

    xs_ref : (TB, 4*PPAD) VMEM   phase d in lanes [d*128,(d+1)*128): xs[b,d*128+p]=xpad[b,2p+d]
    cw_ref : (KSIZE, HIDDEN) SMEM   conv weight (scalar reads)
    cb_ref : (HIDDEN,)       SMEM   conv bias   (scalar reads)
    w1_ref : (HIDDEN, PPAD, FC1_PAD) VMEM  fc1 weight, per-channel (128,128) tiles,
                                           zero rows for p>=84, zero cols for n>=100
    b1_ref : (1, FC1_PAD)    VMEM
    w2_ref : (FC1_PAD, FC2_PAD) VMEM       fc2 weight, zero-padded
    b2_ref : (1, FC2_PAD)    VMEM
    o_ref  : (TB, FC2_PAD)   VMEM
    acc_ref: (TB, FC1_PAD)   VMEM scratch (fc1 accumulator)
    """
    x0 = xs_ref[:, 0 * PPAD:1 * PPAD]          # (TB, 128) lane-aligned views
    x1 = xs_ref[:, 1 * PPAD:2 * PPAD]
    x2 = xs_ref[:, 2 * PPAD:3 * PPAD]
    x3 = xs_ref[:, 3 * PPAD:4 * PPAD]

    # Per-channel 3-tap FIR (scalar weights -> no broadcast materialization),
    # pool+bias+relu, then K-blocked fc1 accumulation on the MXU.
    for h in range(HIDDEN):
        w0 = cw_ref[0, h]
        w1c = cw_ref[1, h]
        w2c = cw_ref[2, h]
        b = cb_ref[h]
        y_even = w0 * x0 + w1c * x1 + w2c * x2              # conv output at t = 2p
        y_odd = w0 * x1 + w1c * x2 + w2c * x3               # conv output at t = 2p + 1
        pooled = jnp.maximum(jnp.maximum(y_even, y_odd) + b, 0.0)   # (TB, 128)
        contrib = jnp.dot(pooled, w1_ref[h], preferred_element_type=jnp.float32)
        if h == 0:
            acc_ref[...] = contrib
        else:
            acc_ref[...] += contrib

    hidden = jnp.maximum(acc_ref[...] + b1_ref[...], 0.0)   # fc1 bias + ReLU
    o_ref[...] = jnp.dot(hidden, w2_ref[...],
                         preferred_element_type=jnp.float32) + b2_ref[...]


def init_params(key):
    ks = jax.random.split(key, 6)
    s = 0.05
    return dict(
        conv_w=s * jax.random.normal(ks[0], (HIDDEN, 1, KSIZE), jnp.float32),
        conv_b=s * jax.random.normal(ks[1], (HIDDEN,), jnp.float32),
        fc1_w=s * jax.random.normal(ks[2], (FC1_OUT, HIDDEN * POOLED), jnp.float32),
        fc1_b=s * jax.random.normal(ks[3], (FC1_OUT,), jnp.float32),
        fc2_w=s * jax.random.normal(ks[4], (FC2_OUT, FC1_OUT), jnp.float32),
        fc2_b=s * jax.random.normal(ks[5], (FC2_OUT,), jnp.float32),
    )


def _batch_tile(B):
    """Rows per grid step: fill MXU rows, but keep >=2 grid steps once B >= 16 (v7x 2 TCs)."""
    if B <= 16:
        return 8
    half = (B + 1) // 2
    return min(256, ((half + 7) // 8) * 8)


@jax.jit
def cnn_forecast_forward(x, params):
    """x: (B, SEQ, 1) float32 — same layout the PyTorch module expects."""
    B = x.shape[0]
    TB = _batch_tile(B)
    Bp = ((B + TB - 1) // TB) * TB                    # batch padded to a multiple of TB

    # --- glue: drop channel dim, zero-pad (batch + conv padding + tail) and phase-slice ---
    x2d = x[:, :, 0]                                               # (B, SEQ)
    pw = 2 * PPAD + 4                                              # 260 >= 2*(PPAD-1)+3+1
    xpad = jnp.pad(x2d, ((0, Bp - B), (PAD, pw - SEQ - PAD)))      # (Bp, 260); col 0 = conv pad
    # phase d occupies lanes [d*PPAD,(d+1)*PPAD): xs[b, d*128 + p] = xpad[b, 2p + d]
    xs = jnp.concatenate([xpad[:, d:d + 2 * PPAD:2] for d in range(KSIZE + 1)],
                         axis=1)                                   # (Bp, 512) lane-dense

    # --- glue: conv weight/bias as small SMEM scalar tables ---
    cw = params["conv_w"][:, 0, :].T                               # (KSIZE, HIDDEN)
    cb = params["conv_b"]                                          # (HIDDEN,)

    # --- glue: fc1 weight -> (HIDDEN, 128, 128) per-channel tiles, zero on dead rows/cols ---
    w1r = params["fc1_w"].reshape(FC1_OUT, HIDDEN, POOLED)         # (100, H, 84)
    w1p = jnp.pad(w1r, ((0, FC1_PAD - FC1_OUT), (0, 0), (0, PPAD - POOLED)))  # (128, H, 128)
    w1t = jnp.transpose(w1p, (1, 2, 0))                            # (H, 128, 128)
    b1 = jnp.pad(params["fc1_b"], (0, FC1_PAD - FC1_OUT))[None, :]             # (1, 128)
    w2t = jnp.pad(params["fc2_w"].T,
                  ((0, FC1_PAD - FC1_OUT), (0, FC2_PAD - FC2_OUT)))            # (128, 128)
    b2 = jnp.pad(params["fc2_b"], (0, FC2_PAD - FC2_OUT))[None, :]             # (1, 128)

    out_padded = pl.pallas_call(
        fused_forward_kernel,
        out_shape=jax.ShapeDtypeStruct((Bp, FC2_PAD), jnp.float32),
        grid=(Bp // TB,),
        in_specs=[
            pl.BlockSpec((TB, 4 * PPAD), lambda i: (i, 0)),                    # phase slices
            pl.BlockSpec(memory_space=pltpu.MemorySpace.SMEM),                 # conv weight
            pl.BlockSpec(memory_space=pltpu.MemorySpace.SMEM),                 # conv bias
            pl.BlockSpec((HIDDEN, PPAD, FC1_PAD), lambda i: (0, 0, 0),
                         pipeline_mode=pl.Buffered(1)),                        # fc1 w (resident)
            pl.BlockSpec((1, FC1_PAD), lambda i: (0, 0),
                         pipeline_mode=pl.Buffered(1)),                        # fc1 b
            pl.BlockSpec((FC1_PAD, FC2_PAD), lambda i: (0, 0),
                         pipeline_mode=pl.Buffered(1)),                        # fc2 w
            pl.BlockSpec((1, FC2_PAD), lambda i: (0, 0),
                         pipeline_mode=pl.Buffered(1)),                        # fc2 b
        ],
        out_specs=pl.BlockSpec((TB, FC2_PAD), lambda i: (i, 0)),
        scratch_shapes=[pltpu.VMEM((TB, FC1_PAD), jnp.float32)],               # fc1 accumulator
        compiler_params=pltpu.CompilerParams(
            dimension_semantics=("parallel",),
            vmem_limit_bytes=32 * 1024 * 1024),
    )(xs, cw, cb, w1t, b1, w2t, b2)

    return out_padded[:B, :FC2_OUT].reshape(B, FC2_OUT, 1)


def reference_forward(x, params):
    """Pure-JAX reference matching the PyTorch forward (eval mode)."""
    B = x.shape[0]
    xc = jnp.transpose(x, (0, 2, 1))                  # (B, 1, SEQ)
    y = jax.lax.conv_general_dilated(
        xc, params["conv_w"], window_strides=(1,), padding=[(PAD, PAD)],
        dimension_numbers=("NCH", "OIH", "NCH"))
    y = y + params["conv_b"][None, :, None]
    y = jnp.maximum(y, 0.0)
    y = jnp.max(y.reshape(B, HIDDEN, POOLED, 2), axis=-1)
    flat = y.reshape(B, -1)
    h = jnp.maximum(flat @ params["fc1_w"].T + params["fc1_b"], 0.0)
    o = h @ params["fc2_w"].T + params["fc2_b"]
    return o.reshape(B, FC2_OUT, 1)


if __name__ == "__main__":
    key = jax.random.PRNGKey(0)
    pkey, xkey = jax.random.split(key)
    params = init_params(pkey)

    B = 2
    x = jax.random.normal(xkey, (B, SEQ, 1), jnp.float32)

    out = cnn_forecast_forward(x, params)
    out = jax.block_until_ready(out)
    assert out.shape == (B, FC2_OUT, 1), out.shape

    ref = reference_forward(x, params)
    max_err = float(jnp.max(jnp.abs(out - ref)))
    assert jnp.allclose(out, ref, rtol=1e-3, atol=1e-3), f"max abs err = {max_err}"

    print("KERNEL_OK")
</pallas_src>

<mosaic_0001>
module attributes {stable_mosaic.version = 11 : i64} {
  func.func @fused_forward_kernel(%arg0: i32, %arg1: memref<8x512xf32, #tpu.memory_space<vmem>>, %arg2: memref<3x64xf32, #tpu.memory_space<smem>>, %arg3: memref<64xf32, #tpu.memory_space<smem>>, %arg4: memref<64x128x128xf32, #tpu.memory_space<vmem>>, %arg5: memref<1x128xf32, #tpu.memory_space<vmem>>, %arg6: memref<128x128xf32, #tpu.memory_space<vmem>>, %arg7: memref<1x128xf32, #tpu.memory_space<vmem>>, %arg8: memref<8x128xf32, #tpu.memory_space<vmem>>, %arg9: memref<8x128xf32, #tpu.memory_space<vmem>>) attributes {dimension_semantics = [#tpu.dimension_semantics<parallel>], iteration_bounds = array<i64: 1>, scalar_prefetch = 0 : i64, scratch_operands = 1 : i64, tpu.core_type = #tpu.core_type<tc>, window_params = [{transform_indices = @transform_0, window_bounds = array<i64: 8, 512>}, {transform_indices = @transform_1, window_bounds = array<i64: 3, 64>}, {transform_indices = @transform_2, window_bounds = array<i64: 64>}, {pipeline_mode = #tpu.pipeline_mode<synchronous>, transform_indices = @transform_3, window_bounds = array<i64: 64, 128, 128>}, {pipeline_mode = #tpu.pipeline_mode<synchronous>, transform_indices = @transform_4, window_bounds = array<i64: 1, 128>}, {pipeline_mode = #tpu.pipeline_mode<synchronous>, transform_indices = @transform_5, window_bounds = array<i64: 128, 128>}, {pipeline_mode = #tpu.pipeline_mode<synchronous>, transform_indices = @transform_6, window_bounds = array<i64: 1, 128>}, {transform_indices = @transform_7, window_bounds = array<i64: 8, 128>}]} {
    %c0 = arith.constant 0 : index
    %c0_0 = arith.constant 0 : index
    %0 = vector.load %arg1[%c0, %c0_0] : memref<8x512xf32, #tpu.memory_space<vmem>>, vector<8x128xf32>
    %c0_1 = arith.constant 0 : index
    %c128 = arith.constant 128 : index
    %1 = vector.load %arg1[%c0_1, %c128] : memref<8x512xf32, #tpu.memory_space<vmem>>, vector<8x128xf32>
    %c0_2 = arith.constant 0 : index
    %c256 = arith.constant 256 : index
    %2 = vector.load %arg1[%c0_2, %c256] : memref<8x512xf32, #tpu.memory_space<vmem>>, vector<8x128xf32>
    %c0_3 = arith.constant 0 : index
    %c384 = arith.constant 384 : index
    %3 = vector.load %arg1[%c0_3, %c384] : memref<8x512xf32, #tpu.memory_space<vmem>>, vector<8x128xf32>
    %c0_4 = arith.constant 0 : index
    %c0_5 = arith.constant 0 : index
    %4 = memref.load %arg2[%c0_4, %c0_5] : memref<3x64xf32, #tpu.memory_space<smem>>
    %c1 = arith.constant 1 : index
    %c0_6 = arith.constant 0 : index
    %5 = memref.load %arg2[%c1, %c0_6] : memref<3x64xf32, #tpu.memory_space<smem>>
    %c2 = arith.constant 2 : index
    %c0_7 = arith.constant 0 : index
    %6 = memref.load %arg2[%c2, %c0_7] : memref<3x64xf32, #tpu.memory_space<smem>>
    %c0_8 = arith.constant 0 : index
    %7 = memref.load %arg3[%c0_8] : memref<64xf32, #tpu.memory_space<smem>>
    %8 = vector.broadcast %4 : f32 to vector<8x128xf32>
    %9 = arith.mulf %8, %0 : vector<8x128xf32>
    %10 = vector.broadcast %5 : f32 to vector<8x128xf32>
    %11 = arith.mulf %10, %1 : vector<8x128xf32>
    %12 = arith.addf %9, %11 : vector<8x128xf32>
    %13 = vector.broadcast %6 : f32 to vector<8x128xf32>
    %14 = arith.mulf %13, %2 : vector<8x128xf32>
    %15 = arith.addf %12, %14 : vector<8x128xf32>
    %16 = vector.broadcast %4 : f32 to vector<8x128xf32>
    %17 = arith.mulf %16, %1 : vector<8x128xf32>
    %18 = vector.broadcast %5 : f32 to vector<8x128xf32>
    %19 = arith.mulf %18, %2 : vector<8x128xf32>
    %20 = arith.addf %17, %19 : vector<8x128xf32>
    %21 = vector.broadcast %6 : f32 to vector<8x128xf32>
    %22 = arith.mulf %21, %3 : vector<8x128xf32>
    %23 = arith.addf %20, %22 : vector<8x128xf32>
    %24 = arith.maximumf %15, %23 : vector<8x128xf32>
    %25 = vector.broadcast %7 : f32 to vector<8x128xf32>
    %26 = arith.addf %24, %25 : vector<8x128xf32>
    %cst = arith.constant 0.000000e+00 : f32
    %27 = vector.broadcast %cst : f32 to vector<8x128xf32>
    %28 = arith.maximumf %26, %27 : vector<8x128xf32>
    %c0_9 = arith.constant 0 : index
    %c0_10 = arith.constant 0 : index
    %c0_11 = arith.constant 0 : index
    %29 = vector.load %arg4[%c0_9, %c0_10, %c0_11] : memref<64x128x128xf32, #tpu.memory_space<vmem>>, vector<1x128x128xf32>
    %30 = vector.shape_cast %29 : vector<1x128x128xf32> to vector<128x128xf32>
    %cst_12 = arith.constant dense<0.000000e+00> : vector<8x128xf32>
    %31 = tpu.matmul %28, %30, %cst_12 {dimension_numbers = #tpu.dot_dimension_numbers<[1], [0], [0], [1], [0, 0, 1, 1], [], []>} : vector<8x128xf32>, vector<128x128xf32>, vector<8x128xf32> -> vector<8x128xf32>
    %c0_13 = arith.constant 0 : index
    %c0_14 = arith.constant 0 : index
    %32 = vector.load %arg9[%c0_13, %c0_14] : memref<8x128xf32, #tpu.memory_space<vmem>>, vector<8x128xf32>
    tpu.vector_store %arg9[%c0_13, %c0_14], %31 {strides = array<i32>} : memref<8x128xf32, #tpu.memory_space<vmem>>, vector<8x128xf32>,
    %c0_15 = arith.constant 0 : index
    %c1_16 = arith.constant 1 : index
    %33 = memref.load %arg2[%c0_15, %c1_16] : memref<3x64xf32, #tpu.memory_space<smem>>
    %c1_17 = arith.constant 1 : index
    %c1_18 = arith.constant 1 : index
    %34 = memref.load %arg2[%c1_17, %c1_18] : memref<3x64xf32, #tpu.memory_space<smem>>
    %c2_19 = arith.constant 2 : index
    %c1_20 = arith.constant 1 : index
    %35 = memref.load %arg2[%c2_19, %c1_20] : memref<3x64xf32, #tpu.memory_space<smem>>
    %c1_21 = arith.constant 1 : index
    %36 = memref.load %arg3[%c1_21] : memref<64xf32, #tpu.memory_space<smem>>
    %37 = vector.broadcast %33 : f32 to vector<8x128xf32>
    %38 = arith.mulf %37, %0 : vector<8x128xf32>
    %39 = vector.broadcast %34 : f32 to vector<8x128xf32>
    %40 = arith.mulf %39, %1 : vector<8x128xf32>
    %41 = arith.addf %38, %40 : vector<8x128xf32>
    %42 = vector.broadcast %35 : f32 to vector<8x128xf32>
    %43 = arith.mulf %42, %2 : vector<8x128xf32>
    %44 = arith.addf %41, %43 : vector<8x128xf32>
    %45 = vector.broadcast %33 : f32 to vector<8x128xf32>
    %46 = arith.mulf %45, %1 : vector<8x128xf32>
    %47 = vector.broadcast %34 : f32 to vector<8x128xf32>
    %48 = arith.mulf %47, %2 : vector<8x128xf32>
    %49 = arith.addf %46, %48 : vector<8x128xf32>
    %50 = vector.broadcast %35 : f32 to vector<8x128xf32>
    %51 = arith.mulf %50, %3 : vector<8x128xf32>
    %52 = arith.addf %49, %51 : vector<8x128xf32>
    %53 = arith.maximumf %44, %52 : vector<8x128xf32>
    %54 = vector.broadcast %36 : f32 to vector<8x128xf32>
    %55 = arith.addf %53, %54 : vector<8x128xf32>
    %cst_22 = arith.constant 0.000000e+00 : f32
    %56 = vector.broadcast %cst_22 : f32 to vector<8x128xf32>
    %57 = arith.maximumf %55, %56 : vector<8x128xf32>
    %c1_23 = arith.constant 1 : index
    %c0_24 = arith.constant 0 : index
    %c0_25 = arith.constant 0 : index
    %58 = vector.load %arg4[%c1_23, %c0_24, %c0_25] : memref<64x128x128xf32, #tpu.memory_space<vmem>>, vector<1x128x128xf32>
    %59 = vector.shape_cast %58 : vector<1x128x128xf32> to vector<128x128xf32>
    %cst_26 = arith.constant dense<0.000000e+00> : vector<8x128xf32>
    %60 = tpu.matmul %57, %59, %cst_26 {dimension_numbers = #tpu.dot_dimension_numbers<[1], [0], [0], [1], [0, 0, 1, 1], [], []>} : vector<8x128xf32>, vector<128x128xf32>, vector<8x128xf32> -> vector<8x128xf32>
    %c0_27 = arith.constant 0 : index
    %c0_28 = arith.constant 0 : index
    %61 = vector.load %arg9[%c0_27, %c0_28] : memref<8x128xf32, #tpu.memory_space<vmem>>, vector<8x128xf32>
    %62 = arith.addf %61, %60 : vector<8x128xf32>
    %c0_29 = arith.constant 0 : index
    %c0_30 = arith.constant 0 : index
    %63 = vector.load %arg9[%c0_29, %c0_30] : memref<8x128xf32, #tpu.memory_space<vmem>>, vector<8x128xf32>
    tpu.vector_store %arg9[%c0_29, %c0_30], %62 {strides = array<i32>} : memref<8x128xf32, #tpu.memory_space<vmem>>, vector<8x128xf32>,
    %c0_31 = arith.constant 0 : index
    %c2_32 = arith.constant 2 : index
    %64 = memref.load %arg2[%c0_31, %c2_32] : memref<3x64xf32, #tpu.memory_space<smem>>
    %c1_33 = arith.constant 1 : index
    %c2_34 = arith.constant 2 : index
    %65 = memref.load %arg2[%c1_33, %c2_34] : memref<3x64xf32, #tpu.memory_space<smem>>
    %c2_35 = arith.constant 2 : index
    %c2_36 = arith.constant 2 : index
    %66 = memref.load %arg2[%c2_35, %c2_36] : memref<3x64xf32, #tpu.memory_space<smem>>
    %c2_37 = arith.constant 2 : index
    %67 = memref.load %arg3[%c2_37] : memref<64xf32, #tpu.memory_space<smem>>
    %68 = vector.broadcast %64 : f32 to vector<8x128xf32>
    %69 = arith.mulf %68, %0 : vector<8x128xf32>
    %70 = vector.broadcast %65 : f32 to vector<8x128xf32>
    %71 = arith.mulf %70, %1 : vector<8x128xf32>
    %72 = arith.addf %69, %71 : vector<8x128xf32>
    %73 = vector.broadcast %66 : f32 to vector<8x128xf32>
    %74 = arith.mulf %73, %2 : vector<8x128xf32>
    %75 = arith.addf %72, %74 : vector<8x128xf32>
    %76 = vector.broadcast %64 : f32 to vector<8x128xf32>
    %77 = arith.mulf %76, %1 : vector<8x128xf32>
    %78 = vector.broadcast %65 : f32 to vector<8x128xf32>
    %79 = arith.mulf %78, %2 : vector<8x128xf32>
    %80 = arith.addf %77, %79 : vector<8x128xf32>
    %81 = vector.broadcast %66 : f32 to vector<8x128xf32>
    %82 = arith.mulf %81, %3 : vector<8x128xf32>
    %83 = arith.addf %80, %82 : vector<8x128xf32>
    %84 = arith.maximumf %75, %83 : vector<8x128xf32>
    %85 = vector.broadcast %67 : f32 to vector<8x128xf32>
    %86 = arith.addf %84, %85 : vector<8x128xf32>
    %cst_38 = arith.constant 0.000000e+00 : f32
    %87 = vector.broadcast %cst_38 : f32 to vector<8x128xf32>
    %88 = arith.maximumf %86, %87 : vector<8x128xf32>
    %c2_39 = arith.constant 2 : index
    %c0_40 = arith.constant 0 : index
    %c0_41 = arith.constant 0 : index
    %89 = vector.load %arg4[%c2_39, %c0_40, %c0_41] : memref<64x128x128xf32, #tpu.memory_space<vmem>>, vector<1x128x128xf32>
    %90 = vector.shape_cast %89 : vector<1x128x128xf32> to vector<128x128xf32>
    %cst_42 = arith.constant dense<0.000000e+00> : vector<8x128xf32>
    %91 = tpu.matmul %88, %90, %cst_42 {dimension_numbers = #tpu.dot_dimension_numbers<[1], [0], [0], [1], [0, 0, 1, 1], [], []>} : vector<8x128xf32>, vector<128x128xf32>, vector<8x128xf32> -> vector<8x128xf32>
    %c0_43 = arith.constant 0 : index
    %c0_44 = arith.constant 0 : index
    %92 = vector.load %arg9[%c0_43, %c0_44] : memref<8x128xf32, #tpu.memory_space<vmem>>, vector<8x128xf32>
    %93 = arith.addf %92, %91 : vector<8x128xf32>
    %c0_45 = arith.constant 0 : index
    %c0_46 = arith.constant 0 : index
    %94 = vector.load %arg9[%c0_45, %c0_46] : memref<8x128xf32, #tpu.memory_space<vmem>>, vector<8x128xf32>
    tpu.vector_store %arg9[%c0_45, %c0_46], %93 {strides = array<i32>} : memref<8x128xf32, #tpu.memory_space<vmem>>, vector<8x128xf32>,
    %c0_47 = arith.constant 0 : index
    %c3 = arith.constant 3 : index
    %95 = memref.load %arg2[%c0_47, %c3] : memref<3x64xf32, #tpu.memory_space<smem>>
    %c1_48 = arith.constant 1 : index
    %c3_49 = arith.constant 3 : index
    %96 = memref.load %arg2[%c1_48, %c3_49] : memref<3x64xf32, #tpu.memory_space<smem>>
    %c2_50 = arith.constant 2 : index
    %c3_51 = arith.constant 3 : index
    %97 = memref.load %arg2[%c2_50, %c3_51] : memref<3x64xf32, #tpu.memory_space<smem>>
    %c3_52 = arith.constant 3 : index
    %98 = memref.load %arg3[%c3_52] : memref<64xf32, #tpu.memory_space<smem>>
    %99 = vector.broadcast %95 : f32 to vector<8x128xf32>
    %100 = arith.mulf %99, %0 : vector<8x128xf32>
    %101 = vector.broadcast %96 : f32 to vector<8x128xf32>
    %102 = arith.mulf %101, %1 : vector<8x128xf32>
    %103 = arith.addf %100, %102 : vector<8x128xf32>
    %104 = vector.broadcast %97 : f32 to vector<8x128xf32>
    %105 = arith.mulf %104, %2 : vector<8x128xf32>
    %106 = arith.addf %103, %105 : vector<8x128xf32>
    %107 = vector.broadcast %95 : f32 to vector<8x128xf32>
    %108 = arith.mulf %107, %1 : vector<8x128xf32>
    %109 = vector.broadcast %96 : f32 to vector<8x128xf32>
    %110 = arith.mulf %109, %2 : vector<8x128xf32>
    %111 = arith.addf %108, %110 : vector<8x128xf32>
    %112 = vector.broadcast %97 : f32 to vector<8x128xf32>
    %113 = arith.mulf %112, %3 : vector<8x128xf32>
    %114 = arith.addf %111, %113 : vector<8x128xf32>
    %115 = arith.maximumf %106, %114 : vector<8x128xf32>
    %116 = vector.broadcast %98 : f32 to vector<8x128xf32>
    %117 = arith.addf %115, %116 : vector<8x128xf32>
    %cst_53 = arith.constant 0.000000e+00 : f32
    %118 = vector.broadcast %cst_53 : f32 to vector<8x128xf32>
    %119 = arith.maximumf %117, %118 : vector<8x128xf32>
    %c3_54 = arith.constant 3 : index
    %c0_55 = arith.constant 0 : index
    %c0_56 = arith.constant 0 : index
    %120 = vector.load %arg4[%c3_54, %c0_55, %c0_56] : memref<64x128x128xf32, #tpu.memory_space<vmem>>, vector<1x128x128xf32>
    %121 = vector.shape_cast %120 : vector<1x128x128xf32> to vector<128x128xf32>
    %cst_57 = arith.constant dense<0.000000e+00> : vector<8x128xf32>
    %122 = tpu.matmul %119, %121, %cst_57 {dimension_numbers = #tpu.dot_dimension_numbers<[1], [0], [0], [1], [0, 0, 1, 1], [], []>} : vector<8x128xf32>, vector<128x128xf32>, vector<8x128xf32> -> vector<8x128xf32>
    %c0_58 = arith.constant 0 : index
    %c0_59 = arith.constant 0 : index
    %123 = vector.load %arg9[%c0_58, %c0_59] : memref<8x128xf32, #tpu.memory_space<vmem>>, vector<8x128xf32>
    %124 = arith.addf %123, %122 : vector<8x128xf32>
    %c0_60 = arith.constant 0 : index
    %c0_61 = arith.constant 0 : index
    %125 = vector.load %arg9[%c0_60, %c0_61] : memref<8x128xf32, #tpu.memory_space<vmem>>, vector<8x128xf32>
    tpu.vector_store %arg9[%c0_60, %c0_61], %124 {strides = array<i32>} : memref<8x128xf32, #tpu.memory_space<vmem>>, vector<8x128xf32>,
    %c0_62 = arith.constant 0 : index
    %c4 = arith.constant 4 : index
    %126 = memref.load %arg2[%c0_62, %c4] : memref<3x64xf32, #tpu.memory_space<smem>>
    %c1_63 = arith.constant 1 : index
    %c4_64 = arith.constant 4 : index
    %127 = memref.load %arg2[%c1_63, %c4_64] : memref<3x64xf32, #tpu.memory_space<smem>>
    %c2_65 = arith.constant 2 : index
    %c4_66 = arith.constant 4 : index
    %128 = memref.load %arg2[%c2_65, %c4_66] : memref<3x64xf32, #tpu.memory_space<smem>>
    %c4_67 = arith.constant 4 : index
    %129 = memref.load %arg3[%c4_67] : memref<64xf32, #tpu.memory_space<smem>>
    %130 = vector.broadcast %126 : f32 to vector<8x128xf32>
    %131 = arith.mulf %130, %0 : vector<8x128xf32>
    %132 = vector.broadcast %127 : f32 to vector<8x128xf32>
    %133 = arith.mulf %132, %1 : vector<8x128xf32>
    %134 = arith.addf %131, %133 : vector<8x128xf32>
    %135 = vector.broadcast %128 : f32 to vector<8x128xf32>
    %136 = arith.mulf %135, %2 : vector<8x128xf32>
    %137 = arith.addf %134, %136 : vector<8x128xf32>
    %138 = vector.broadcast %126 : f32 to vector<8x128xf32>
    %139 = arith.mulf %138, %1 : vector<8x128xf32>
    %140 = vector.broadcast %127 : f32 to vector<8x128xf32>
    %141 = arith.mulf %140, %2 : vector<8x128xf32>
    %142 = arith.addf %139, %141 : vector<8x128xf32>
    %143 = vector.broadcast %128 : f32 to vector<8x128xf32>
    %144 = arith.mulf %143, %3 : vector<8x128xf32>
    %145 = arith.addf %142, %144 : vector<8x128xf32>
    %146 = arith.maximumf %137, %145 : vector<8x128xf32>
    %147 = vector.broadcast %129 : f32 to vector<8x128xf32>
    %148 = arith.addf %146, %147 : vector<8x128xf32>
    %cst_68 = arith.constant 0.000000e+00 : f32
    %149 = vector.broadcast %cst_68 : f32 to vector<8x128xf32>
    %150 = arith.maximumf %148, %149 : vector<8x128xf32>
    %c4_69 = arith.constant 4 : index
    %c0_70 = arith.constant 0 : index
    %c0_71 = arith.constant 0 : index
    %151 = vector.load %arg4[%c4_69, %c0_70, %c0_71] : memref<64x128x128xf32, #tpu.memory_space<vmem>>, vector<1x128x128xf32>
    %152 = vector.shape_cast %151 : vector<1x128x128xf32> to vector<128x128xf32>
    %cst_72 = arith.constant dense<0.000000e+00> : vector<8x128xf32>
    %153 = tpu.matmul %150, %152, %cst_72 {dimension_numbers = #tpu.dot_dimension_numbers<[1], [0], [0], [1], [0, 0, 1, 1], [], []>} : vector<8x128xf32>, vector<128x128xf32>, vector<8x128xf32> -> vector<8x128xf32>
    %c0_73 = arith.constant 0 : index
    %c0_74 = arith.constant 0 : index
    %154 = vector.load %arg9[%c0_73, %c0_74] : memref<8x128xf32, #tpu.memory_space<vmem>>, vector<8x128xf32>
    %155 = arith.addf %154, %153 : vector<8x128xf32>
    %c0_75 = arith.constant 0 : index
    %c0_76 = arith.constant 0 : index
    %156 = vector.load %arg9[%c0_75, %c0_76] : memref<8x128xf32, #tpu.memory_space<vmem>>, vector<8x128xf32>
    tpu.vector_store %arg9[%c0_75, %c0_76], %155 {strides = array<i32>} : memref<8x128xf32, #tpu.memory_space<vmem>>, vector<8x128xf32>,
    %c0_77 = arith.constant 0 : index
    %c5 = arith.constant 5 : index
    %157 = memref.load %arg2[%c0_77, %c5] : memref<3x64xf32, #tpu.memory_space<smem>>
    %c1_78 = arith.constant 1 : index
    %c5_79 = arith.constant 5 : index
    %158 = memref.load %arg2[%c1_78, %c5_79] : memref<3x64xf32, #tpu.memory_space<smem>>
    %c2_80 = arith.constant 2 : index
    %c5_81 = arith.constant 5 : index
    %159 = memref.load %arg2[%c2_80, %c5_81] : memref<3x64xf32, #tpu.memory_space<smem>>
    %c5_82 = arith.constant 5 : index
    %160 = memref.load %arg3[%c5_82] : memref<64xf32, #tpu.memory_space<smem>>
    %161 = vector.broadcast %157 : f32 to vector<8x128xf32>
    %162 = arith.mulf %161, %0 : vector<8x128xf32>
    %163 = vector.broadcast %158 : f32 to vector<8x128xf32>
    %164 = arith.mulf %163, %1 : vector<8x128xf32>
    %165 = arith.addf %162, %164 : vector<8x128xf32>
    %166 = vector.broadcast %159 : f32 to vector<8x128xf32>
    %167 = arith.mulf %166, %2 : vector<8x128xf32>
    %168 = arith.addf %165, %167 : vector<8x128xf32>
    %169 = vector.broadcast %157 : f32 to vector<8x128xf32>
    %170 = arith.mulf %169, %1 : vector<8x128xf32>
    %171 = vector.broadcast %158 : f32 to vector<8x128xf32>
    %172 = arith.mulf %171, %2 : vector<8x128xf32>
    %173 = arith.addf %170, %172 : vector<8x128xf32>
    %174 = vector.broadcast %159 : f32 to vector<8x128xf32>
    %175 = arith.mulf %174, %3 : vector<8x128xf32>
    %176 = arith.addf %173, %175 : vector<8x128xf32>
    %177 = arith.maximumf %168, %176 : vector<8x128xf32>
    %178 = vector.broadcast %160 : f32 to vector<8x128xf32>
    %179 = arith.addf %177, %178 : vector<8x128xf32>
    %cst_83 = arith.constant 0.000000e+00 : f32
    %180 = vector.broadcast %cst_83 : f32 to vector<8x128xf32>
    %181 = arith.maximumf %179, %180 : vector<8x128xf32>
    %c5_84 = arith.constant 5 : index
    %c0_85 = arith.constant 0 : index
    %c0_86 = arith.constant 0 : index
    %182 = vector.load %arg4[%c5_84, %c0_85, %c0_86] : memref<64x128x128xf32, #tpu.memory_space<vmem>>, vector<1x128x128xf32>
    %183 = vector.shape_cast %182 : vector<1x128x128xf32> to vector<128x128xf32>
    %cst_87 = arith.constant dense<0.000000e+00> : vector<8x128xf32>
    %184 = tpu.matmul %181, %183, %cst_87 {dimension_numbers = #tpu.dot_dimension_numbers<[1], [0], [0], [1], [0, 0, 1, 1], [], []>} : vector<8x128xf32>, vector<128x128xf32>, vector<8x128xf32> -> vector<8x128xf32>
    %c0_88 = arith.constant 0 : index
    %c0_89 = arith.constant 0 : index
    %185 = vector.load %arg9[%c0_88, %c0_89] : memref<8x128xf32, #tpu.memory_space<vmem>>, vector<8x128xf32>
    %186 = arith.addf %185, %184 : vector<8x128xf32>
    %c0_90 = arith.constant 0 : index
    %c0_91 = arith.constant 0 : index
    %187 = vector.load %arg9[%c0_90, %c0_91] : memref<8x128xf32, #tpu.memory_space<vmem>>, vector<8x128xf32>
    tpu.vector_store %arg9[%c0_90, %c0_91], %186 {strides = array<i32>} : memref<8x128xf32, #tpu.memory_space<vmem>>, vector<8x128xf32>,
    %c0_92 = arith.constant 0 : index
    %c6 = arith.constant 6 : index
    %188 = memref.load %arg2[%c0_92, %c6] : memref<3x64xf32, #tpu.memory_space<smem>>
    %c1_93 = arith.constant 1 : index
    %c6_94 = arith.constant 6 : index
    %189 = memref.load %arg2[%c1_93, %c6_94] : memref<3x64xf32, #tpu.memory_space<smem>>
    %c2_95 = arith.constant 2 : index
    %c6_96 = arith.constant 6 : index
    %190 = memref.load %arg2[%c2_95, %c6_96] : memref<3x64xf32, #tpu.memory_space<smem>>
    %c6_97 = arith.constant 6 : index
    %191 = memref.load %arg3[%c6_97] : memref<64xf32, #tpu.memory_space<smem>>
    %192 = vector.broadcast %188 : f32 to vector<8x128xf32>
    %193 = arith.mulf %192, %0 : vector<8x128xf32>
    %194 = vector.broadcast %189 : f32 to vector<8x128xf32>
    %195 = arith.mulf %194, %1 : vector<8x128xf32>
    %196 = arith.addf %193, %195 : vector<8x128xf32>
    %197 = vector.broadcast %190 : f32 to vector<8x128xf32>
    %198 = arith.mulf %197, %2 : vector<8x128xf32>
    %199 = arith.addf %196, %198 : vector<8x128xf32>
    %200 = vector.broadcast %188 : f32 to vector<8x128xf32>
    %201 = arith.mulf %200, %1 : vector<8x128xf32>
    %202 = vector.broadcast %189 : f32 to vector<8x128xf32>
    %203 = arith.mulf %202, %2 : vector<8x128xf32>
    %204 = arith.addf %201, %203 : vector<8x128xf32>
    %205 = vector.broadcast %190 : f32 to vector<8x128xf32>
    %206 = arith.mulf %205, %3 : vector<8x128xf32>
    %207 = arith.addf %204, %206 : vector<8x128xf32>
    %208 = arith.maximumf %199, %207 : vector<8x128xf32>
    %209 = vector.broadcast %191 : f32 to vector<8x128xf32>
    %210 = arith.addf %208, %209 : vector<8x128xf32>
    %cst_98 = arith.constant 0.000000e+00 : f32
    %211 = vector.broadcast %cst_98 : f32 to vector<8x128xf32>
    %212 = arith.maximumf %210, %211 : vector<8x128xf32>
    %c6_99 = arith.constant 6 : index
    %c0_100 = arith.constant 0 : index
    %c0_101 = arith.constant 0 : index
    %213 = vector.load %arg4[%c6_99, %c0_100, %c0_101] : memref<64x128x128xf32, #tpu.memory_space<vmem>>, vector<1x128x128xf32>
    %214 = vector.shape_cast %213 : vector<1x128x128xf32> to vector<128x128xf32>
    %cst_102 = arith.constant dense<0.000000e+00> : vector<8x128xf32>
    %215 = tpu.matmul %212, %214, %cst_102 {dimension_numbers = #tpu.dot_dimension_numbers<[1], [0], [0], [1], [0, 0, 1, 1], [], []>} : vector<8x128xf32>, vector<128x128xf32>, vector<8x128xf32> -> vector<8x128xf32>
    %c0_103 = arith.constant 0 : index
    %c0_104 = arith.constant 0 : index
    %216 = vector.load %arg9[%c0_103, %c0_104] : memref<8x128xf32, #tpu.memory_space<vmem>>, vector<8x128xf32>
    %217 = arith.addf %216, %215 : vector<8x128xf32>
    %c0_105 = arith.constant 0 : index
    %c0_106 = arith.constant 0 : index
    %218 = vector.load %arg9[%c0_105, %c0_106] : memref<8x128xf32, #tpu.memory_space<vmem>>, vector<8x128xf32>
    tpu.vector_store %arg9[%c0_105, %c0_106], %217 {strides = array<i32>} : memref<8x128xf32, #tpu.memory_space<vmem>>, vector<8x128xf32>,
    %c0_107 = arith.constant 0 : index
    %c7 = arith.constant 7 : index
    %219 = memref.load %arg2[%c0_107, %c7] : memref<3x64xf32, #tpu.memory_space<smem>>
    %c1_108 = arith.constant 1 : index
    %c7_109 = arith.constant 7 : index
    %220 = memref.load %arg2[%c1_108, %c7_109] : memref<3x64xf32, #tpu.memory_space<smem>>
    %c2_110 = arith.constant 2 : index
    %c7_111 = arith.constant 7 : index
    %221 = memref.load %arg2[%c2_110, %c7_111] : memref<3x64xf32, #tpu.memory_space<smem>>
    %c7_112 = arith.constant 7 : index
    %222 = memref.load %arg3[%c7_112] : memref<64xf32, #tpu.memory_space<smem>>
    %223 = vector.broadcast %219 : f32 to vector<8x128xf32>
    %224 = arith.mulf %223, %0 : vector<8x128xf32>
    %225 = vector.broadcast %220 : f32 to vector<8x128xf32>
    %226 = arith.mulf %225, %1 : vector<8x128xf32>
    %227 = arith.addf %224, %226 : vector<8x128xf32>
    %228 = vector.broadcast %221 : f32 to vector<8x128xf32>
    %229 = arith.mulf %228, %2 : vector<8x128xf32>
    %230 = arith.addf %227, %229 : vector<8x128xf32>
    %231 = vector.broadcast %219 : f32 to vector<8x128xf32>
    %232 = arith.mulf %231, %1 : vector<8x128xf32>
    %233 = vector.broadcast %220 : f32 to vector<8x128xf32>
    %234 = arith.mulf %233, %2 : vector<8x128xf32>
    %235 = arith.addf %232, %234 : vector<8x128xf32>
    %236 = vector.broadcast %221 : f32 to vector<8x128xf32>
    %237 = arith.mulf %236, %3 : vector<8x128xf32>
    %238 = arith.addf %235, %237 : vector<8x128xf32>
    %239 = arith.maximumf %230, %238 : vector<8x128xf32>
    %240 = vector.broadcast %222 : f32 to vector<8x128xf32>
    %241 = arith.addf %239, %240 : vector<8x128xf32>
    %cst_113 = arith.constant 0.000000e+00 : f32
    %242 = vector.broadcast %cst_113 : f32 to vector<8x128xf32>
    %243 = arith.maximumf %241, %242 : vector<8x128xf32>
    %c7_114 = arith.constant 7 : index
    %c0_115 = arith.constant 0 : index
    %c0_116 = arith.constant 0 : index
    %244 = vector.load %arg4[%c7_114, %c0_115, %c0_116] : memref<64x128x128xf32, #tpu.memory_space<vmem>>, vector<1x128x128xf32>
    %245 = vector.shape_cast %244 : vector<1x128x128xf32> to vector<128x128xf32>
    %cst_117 = arith.constant dense<0.000000e+00> : vector<8x128xf32>
    %246 = tpu.matmul %243, %245, %cst_117 {dimension_numbers = #tpu.dot_dimension_numbers<[1], [0], [0], [1], [0, 0, 1, 1], [], []>} : vector<8x128xf32>, vector<128x128xf32>, vector<8x128xf32> -> vector<8x128xf32>
    %c0_118 = arith.constant 0 : index
    %c0_119 = arith.constant 0 : index
    %247 = vector.load %arg9[%c0_118, %c0_119] : memref<8x128xf32, #tpu.memory_space<vmem>>, vector<8x128xf32>
    %248 = arith.addf %247, %246 : vector<8x128xf32>
    %c0_120 = arith.constant 0 : index
    %c0_121 = arith.constant 0 : index
    %249 = vector.load %arg9[%c0_120, %c0_121] : memref<8x128xf32, #tpu.memory_space<vmem>>, vector<8x128xf32>
    tpu.vector_store %arg9[%c0_120, %c0_121], %248 {strides = array<i32>} : memref<8x128xf32, #tpu.memory_space<vmem>>, vector<8x128xf32>,
    %c0_122 = arith.constant 0 : index
    %c8 = arith.constant 8 : index
    %250 = memref.load %arg2[%c0_122, %c8] : memref<3x64xf32, #tpu.memory_space<smem>>
    %c1_123 = arith.constant 1 : index
    %c8_124 = arith.constant 8 : index
    %251 = memref.load %arg2[%c1_123, %c8_124] : memref<3x64xf32, #tpu.memory_space<smem>>
    %c2_125 = arith.constant 2 : index
    %c8_126 = arith.constant 8 : index
    %252 = memref.load %arg2[%c2_125, %c8_126] : memref<3x64xf32, #tpu.memory_space<smem>>
    %c8_127 = arith.constant 8 : index
    %253 = memref.load %arg3[%c8_127] : memref<64xf32, #tpu.memory_space<smem>>
    %254 = vector.broadcast %250 : f32 to vector<8x128xf32>
    %255 = arith.mulf %254, %0 : vector<8x128xf32>
    %256 = vector.broadcast %251 : f32 to vector<8x128xf32>
    %257 = arith.mulf %256, %1 : vector<8x128xf32>
    %258 = arith.addf %255, %257 : vector<8x128xf32>
    %259 = vector.broadcast %252 : f32 to vector<8x128xf32>
    %260 = arith.mulf %259, %2 : vector<8x128xf32>
    %261 = arith.addf %258, %260 : vector<8x128xf32>
    %262 = vector.broadcast %250 : f32 to vector<8x128xf32>
    %263 = arith.mulf %262, %1 : vector<8x128xf32>
    %264 = vector.broadcast %251 : f32 to vector<8x128xf32>
    %265 = arith.mulf %264, %2 : vector<8x128xf32>
    %266 = arith.addf %263, %265 : vector<8x128xf32>
    %267 = vector.broadcast %252 : f32 to vector<8x128xf32>
    %268 = arith.mulf %267, %3 : vector<8x128xf32>
    %269 = arith.addf %266, %268 : vector<8x128xf32>
    %270 = arith.maximumf %261, %269 : vector<8x128xf32>
    %271 = vector.broadcast %253 : f32 to vector<8x128xf32>
    %272 = arith.addf %270, %271 : vector<8x128xf32>
    %cst_128 = arith.constant 0.000000e+00 : f32
    %273 = vector.broadcast %cst_128 : f32 to vector<8x128xf32>
    %274 = arith.maximumf %272, %273 : vector<8x128xf32>
    %c8_129 = arith.constant 8 : index
    %c0_130 = arith.constant 0 : index
    %c0_131 = arith.constant 0 : index
    %275 = vector.load %arg4[%c8_129, %c0_130, %c0_131] : memref<64x128x128xf32, #tpu.memory_space<vmem>>, vector<1x128x128xf32>
    %276 = vector.shape_cast %275 : vector<1x128x128xf32> to vector<128x128xf32>
    %cst_132 = arith.constant dense<0.000000e+00> : vector<8x128xf32>
    %277 = tpu.matmul %274, %276, %cst_132 {dimension_numbers = #tpu.dot_dimension_numbers<[1], [0], [0], [1], [0, 0, 1, 1], [], []>} : vector<8x128xf32>, vector<128x128xf32>, vector<8x128xf32> -> vector<8x128xf32>
    %c0_133 = arith.constant 0 : index
    %c0_134 = arith.constant 0 : index
    %278 = vector.load %arg9[%c0_133, %c0_134] : memref<8x128xf32, #tpu.memory_space<vmem>>, vector<8x128xf32>
    %279 = arith.addf %278, %277 : vector<8x128xf32>
    %c0_135 = arith.constant 0 : index
    %c0_136 = arith.constant 0 : index
    %280 = vector.load %arg9[%c0_135, %c0_136] : memref<8x128xf32, #tpu.memory_space<vmem>>, vector<8x128xf32>
    tpu.vector_store %arg9[%c0_135, %c0_136], %279 {strides = array<i32>} : memref<8x128xf32, #tpu.memory_space<vmem>>, vector<8x128xf32>,
    %c0_137 = arith.constant 0 : index
    %c9 = arith.constant 9 : index
    %281 = memref.load %arg2[%c0_137, %c9] : memref<3x64xf32, #tpu.memory_space<smem>>
    %c1_138 = arith.constant 1 : index
    %c9_139 = arith.constant 9 : index
    %282 = memref.load %arg2[%c1_138, %c9_139] : memref<3x64xf32, #tpu.memory_space<smem>>
    %c2_140 = arith.constant 2 : index
    %c9_141 = arith.constant 9 : index
    %283 = memref.load %arg2[%c2_140, %c9_141] : memref<3x64xf32, #tpu.memory_space<smem>>
    %c9_142 = arith.constant 9 : index
    %284 = memref.load %arg3[%c9_142] : memref<64xf32, #tpu.memory_space<smem>>
    %285 = vector.broadcast %281 : f32 to vector<8x128xf32>
    %286 = arith.mulf %285, %0 : vector<8x128xf32>
    %287 = vector.broadcast %282 : f32 to vector<8x128xf32>
    %288 = arith.mulf %287, %1 : vector<8x128xf32>
    %289 = arith.addf %286, %288 : vector<8x128xf32>
    %290 = vector.broadcast %283 : f32 to vector<8x128xf32>
    %291 = arith.mulf %290, %2 : vector<8x128xf32>
    %292 = arith.addf %289, %291 : vector<8x128xf32>
    %293 = vector.broadcast %281 : f32 to vector<8x128xf32>
    %294 = arith.mulf %293, %1 : vector<8x128xf32>
    %295 = vector.broadcast %282 : f32 to vector<8x128xf32>
    %296 = arith.mulf %295, %2 : vector<8x128xf32>
    %297 = arith.addf %294, %296 : vector<8x128xf32>
    %298 = vector.broadcast %283 : f32 to vector<8x128xf32>
    %299 = arith.mulf %298, %3 : vector<8x128xf32>
    %300 = arith.addf %297, %299 : vector<8x128xf32>
    %301 = arith.maximumf %292, %300 : vector<8x128xf32>
    %302 = vector.broadcast %284 : f32 to vector<8x128xf32>
    %303 = arith.addf %301, %302 : vector<8x128xf32>
    %cst_143 = arith.constant 0.000000e+00 : f32
    %304 = vector.broadcast %cst_143 : f32 to vector<8x128xf32>
    %305 = arith.maximumf %303, %304 : vector<8x128xf32>
    %c9_144 = arith.constant 9 : index
    %c0_145 = arith.constant 0 : index
    %c0_146 = arith.constant 0 : index
    %306 = vector.load %arg4[%c9_144, %c0_145, %c0_146] : memref<64x128x128xf32, #tpu.memory_space<vmem>>, vector<1x128x128xf32>
    %307 = vector.shape_cast %306 : vector<1x128x128xf32> to vector<128x128xf32>
    %cst_147 = arith.constant dense<0.000000e+00> : vector<8x128xf32>
    %308 = tpu.matmul %305, %307, %cst_147 {dimension_numbers = #tpu.dot_dimension_numbers<[1], [0], [0], [1], [0, 0, 1, 1], [], []>} : vector<8x128xf32>, vector<128x128xf32>, vector<8x128xf32> -> vector<8x128xf32>
    %c0_148 = arith.constant 0 : index
    %c0_149 = arith.constant 0 : index
    %309 = vector.load %arg9[%c0_148, %c0_149] : memref<8x128xf32, #tpu.memory_space<vmem>>, vector<8x128xf32>
    %310 = arith.addf %309, %308 : vector<8x128xf32>
    %c0_150 = arith.constant 0 : index
    %c0_151 = arith.constant 0 : index
    %311 = vector.load %arg9[%c0_150, %c0_151] : memref<8x128xf32, #tpu.memory_space<vmem>>, vector<8x128xf32>
    tpu.vector_store %arg9[%c0_150, %c0_151], %310 {strides = array<i32>} : memref<8x128xf32, #tpu.memory_space<vmem>>, vector<8x128xf32>,
    %c0_152 = arith.constant 0 : index
    %c10 = arith.constant 10 : index
    %312 = memref.load %arg2[%c0_152, %c10] : memref<3x64xf32, #tpu.memory_space<smem>>
    %c1_153 = arith.constant 1 : index
    %c10_154 = arith.constant 10 : index
    %313 = memref.load %arg2[%c1_153, %c10_154] : memref<3x64xf32, #tpu.memory_space<smem>>
    %c2_155 = arith.constant 2 : index
    %c10_156 = arith.constant 10 : index
    %314 = memref.load %arg2[%c2_155, %c10_156] : memref<3x64xf32, #tpu.memory_space<smem>>
    %c10_157 = arith.constant 10 : index
    %315 = memref.load %arg3[%c10_157] : memref<64xf32, #tpu.memory_space<smem>>
    %316 = vector.broadcast %312 : f32 to vector<8x128xf32>
    %317 = arith.mulf %316, %0 : vector<8x128xf32>
    %318 = vector.broadcast %313 : f32 to vector<8x128xf32>
    %319 = arith.mulf %318, %1 : vector<8x128xf32>
    %320 = arith.addf %317, %319 : vector<8x128xf32>
    %321 = vector.broadcast %314 : f32 to vector<8x128xf32>
    %322 = arith.mulf %321, %2 : vector<8x128xf32>
    %323 = arith.addf %320, %322 : vector<8x128xf32>
    %324 = vector.broadcast %312 : f32 to vector<8x128xf32>
    %325 = arith.mulf %324, %1 : vector<8x128xf32>
    %326 = vector.broadcast %313 : f32 to vector<8x128xf32>
    %327 = arith.mulf %326, %2 : vector<8x128xf32>
    %328 = arith.addf %325, %327 : vector<8x128xf32>
    %329 = vector.broadcast %314 : f32 to vector<8x128xf32>
    %330 = arith.mulf %329, %3 : vector<8x128xf32>
    %331 = arith.addf %328, %330 : vector<8x128xf32>
    %332 = arith.maximumf %323, %331 : vector<8x128xf32>
    %333 = vector.broadcast %315 : f32 to vector<8x128xf32>
    %334 = arith.addf %332, %333 : vector<8x128xf32>
    %cst_158 = arith.constant 0.000000e+00 : f32
    %335 = vector.broadcast %cst_158 : f32 to vector<8x128xf32>
    %336 = arith.maximumf %334, %335 : vector<8x128xf32>
    %c10_159 = arith.constant 10 : index
    %c0_160 = arith.constant 0 : index
    %c0_161 = arith.constant 0 : index
    %337 = vector.load %arg4[%c10_159, %c0_160, %c0_161] : memref<64x128x128xf32, #tpu.memory_space<vmem>>, vector<1x128x128xf32>
    %338 = vector.shape_cast %337 : vector<1x128x128xf32> to vector<128x128xf32>
    %cst_162 = arith.constant dense<0.000000e+00> : vector<8x128xf32>
    %339 = tpu.matmul %336, %338, %cst_162 {dimension_numbers = #tpu.dot_dimension_numbers<[1], [0], [0], [1], [0, 0, 1, 1], [], []>} : vector<8x128xf32>, vector<128x128xf32>, vector<8x128xf32> -> vector<8x128xf32>
    %c0_163 = arith.constant 0 : index
    %c0_164 = arith.constant 0 : index
    %340 = vector.load %arg9[%c0_163, %c0_164] : memref<8x128xf32, #tpu.memory_space<vmem>>, vector<8x128xf32>
    %341 = arith.addf %340, %339 : vector<8x128xf32>
    %c0_165 = arith.constant 0 : index
    %c0_166 = arith.constant 0 : index
    %342 = vector.load %arg9[%c0_165, %c0_166] : memref<8x128xf32, #tpu.memory_space<vmem>>, vector<8x128xf32>
    tpu.vector_store %arg9[%c0_165, %c0_166], %341 {strides = array<i32>} : memref<8x128xf32, #tpu.memory_space<vmem>>, vector<8x128xf32>,
    %c0_167 = arith.constant 0 : index
    %c11 = arith.constant 11 : index
    %343 = memref.load %arg2[%c0_167, %c11] : memref<3x64xf32, #tpu.memory_space<smem>>
    %c1_168 = arith.constant 1 : index
    %c11_169 = arith.constant 11 : index
    %344 = memref.load %arg2[%c1_168, %c11_169] : memref<3x64xf32, #tpu.memory_space<smem>>
    %c2_170 = arith.constant 2 : index
    %c11_171 = arith.constant 11 : index
    %345 = memref.load %arg2[%c2_170, %c11_171] : memref<3x64xf32, #tpu.memory_space<smem>>
    %c11_172 = arith.constant 11 : index
    %346 = memref.load %arg3[%c11_172] : memref<64xf32, #tpu.memory_space<smem>>
    %347 = vector.broadcast %343 : f32 to vector<8x128xf32>
    %348 = arith.mulf %347, %0 : vector<8x128xf32>
    %349 = vector.broadcast %344 : f32 to vector<8x128xf32>
    %350 = arith.mulf %349, %1 : vector<8x128xf32>
    %351 = arith.addf %348, %350 : vector<8x128xf32>
    %352 = vector.broadcast %345 : f32 to vector<8x128xf32>
    %353 = arith.mulf %352, %2 : vector<8x128xf32>
    %354 = arith.addf %351, %353 : vector<8x128xf32>
    %355 = vector.broadcast %343 : f32 to vector<8x128xf32>
    %356 = arith.mulf %355, %1 : vector<8x128xf32>
    %357 = vector.broadcast %344 : f32 to vector<8x128xf32>
    %358 = arith.mulf %357, %2 : vector<8x128xf32>
    %359 = arith.addf %356, %358 : vector<8x128xf32>
    %360 = vector.broadcast %345 : f32 to vector<8x128xf32>
    %361 = arith.mulf %360, %3 : vector<8x128xf32>
    %362 = arith.addf %359, %361 : vector<8x128xf32>
    %363 = arith.maximumf %354, %362 : vector<8x128xf32>
    %364 = vector.broadcast %346 : f32 to vector<8x128xf32>
    %365 = arith.addf %363, %364 : vector<8x128xf32>
    %cst_173 = arith.constant 0.000000e+00 : f32
    %366 = vector.broadcast %cst_173 : f32 to vector<8x128xf32>
    %367 = arith.maximumf %365, %366 : vector<8x128xf32>
    %c11_174 = arith.constant 11 : index
    %c0_175 = arith.constant 0 : index
    %c0_176 = arith.constant 0 : index
    %368 = vector.load %arg4[%c11_174, %c0_175, %c0_176] : memref<64x128x128xf32, #tpu.memory_space<vmem>>, vector<1x128x128xf32>
    %369 = vector.shape_cast %368 : vector<1x128x128xf32> to vector<128x128xf32>
    %cst_177 = arith.constant dense<0.000000e+00> : vector<8x128xf32>
    %370 = tpu.matmul %367, %369, %cst_177 {dimension_numbers = #tpu.dot_dimension_numbers<[1], [0], [0], [1], [0, 0, 1, 1], [], []>} : vector<8x128xf32>, vector<128x128xf32>, vector<8x128xf32> -> vector<8x128xf32>
    %c0_178 = arith.constant 0 : index
    %c0_179 = arith.constant 0 : index
    %371 = vector.load %arg9[%c0_178, %c0_179] : memref<8x128xf32, #tpu.memory_space<vmem>>, vector<8x128xf32>
    %372 = arith.addf %371, %370 : vector<8x128xf32>
    %c0_180 = arith.constant 0 : index
    %c0_181 = arith.constant 0 : index
    %373 = vector.load %arg9[%c0_180, %c0_181] : memref<8x128xf32, #tpu.memory_space<vmem>>, vector<8x128xf32>
    tpu.vector_store %arg9[%c0_180, %c0_181], %372 {strides = array<i32>} : memref<8x128xf32, #tpu.memory_space<vmem>>, vector<8x128xf32>,
    %c0_182 = arith.constant 0 : index
    %c12 = arith.constant 12 : index
    %374 = memref.load %arg2[%c0_182, %c12] : memref<3x64xf32, #tpu.memory_space<smem>>
    %c1_183 = arith.constant 1 : index
    %c12_184 = arith.constant 12 : index
    %375 = memref.load %arg2[%c1_183, %c12_184] : memref<3x64xf32, #tpu.memory_space<smem>>
    %c2_185 = arith.constant 2 : index
    %c12_186 = arith.constant 12 : index
    %376 = memref.load %arg2[%c2_185, %c12_186] : memref<3x64xf32, #tpu.memory_space<smem>>
    %c12_187 = arith.constant 12 : index
    %377 = memref.load %arg3[%c12_187] : memref<64xf32, #tpu.memory_space<smem>>
    %378 = vector.broadcast %374 : f32 to vector<8x128xf32>
    %379 = arith.mulf %378, %0 : vector<8x128xf32>
    %380 = vector.broadcast %375 : f32 to vector<8x128xf32>
    %381 = arith.mulf %380, %1 : vector<8x128xf32>
    %382 = arith.addf %379, %381 : vector<8x128xf32>
    %383 = vector.broadcast %376 : f32 to vector<8x128xf32>
    %384 = arith.mulf %383, %2 : vector<8x128xf32>
    %385 = arith.addf %382, %384 : vector<8x128xf32>
    %386 = vector.broadcast %374 : f32 to vector<8x128xf32>
    %387 = arith.mulf %386, %1 : vector<8x128xf32>
    %388 = vector.broadcast %375 : f32 to vector<8x128xf32>
    %389 = arith.mulf %388, %2 : vector<8x128xf32>
    %390 = arith.addf %387, %389 : vector<8x128xf32>
    %391 = vector.broadcast %376 : f32 to vector<8x128xf32>
    %392 = arith.mulf %391, %3 : vector<8x128xf32>
    %393 = arith.addf %390, %392 : vector<8x128xf32>
    %394 = arith.maximumf %385, %393 : vector<8x128xf32>
    %395 = vector.broadcast %377 : f32 to vector<8x128xf32>
    %396 = arith.addf %394, %395 : vector<8x128xf32>
    %cst_188 = arith.constant 0.000000e+00 : f32
    %397 = vector.broadcast %cst_188 : f32 to vector<8x128xf32>
    %398 = arith.maximumf %396, %397 : vector<8x128xf32>
    %c12_189 = arith.constant 12 : index
    %c0_190 = arith.constant 0 : index
    %c0_191 = arith.constant 0 : index
    %399 = vector.load %arg4[%c12_189, %c0_190, %c0_191] : memref<64x128x128xf32, #tpu.memory_space<vmem>>, vector<1x128x128xf32>
    %400 = vector.shape_cast %399 : vector<1x128x128xf32> to vector<128x128xf32>
    %cst_192 = arith.constant dense<0.000000e+00> : vector<8x128xf32>
    %401 = tpu.matmul %398, %400, %cst_192 {dimension_numbers = #tpu.dot_dimension_numbers<[1], [0], [0], [1], [0, 0, 1, 1], [], []>} : vector<8x128xf32>, vector<128x128xf32>, vector<8x128xf32> -> vector<8x128xf32>
    %c0_193 = arith.constant 0 : index
    %c0_194 = arith.constant 0 : index
    %402 = vector.load %arg9[%c0_193, %c0_194] : memref<8x128xf32, #tpu.memory_space<vmem>>, vector<8x128xf32>
    %403 = arith.addf %402, %401 : vector<8x128xf32>
    %c0_195 = arith.constant 0 : index
    %c0_196 = arith.constant 0 : index
    %404 = vector.load %arg9[%c0_195, %c0_196] : memref<8x128xf32, #tpu.memory_space<vmem>>, vector<8x128xf32>
    tpu.vector_store %arg9[%c0_195, %c0_196], %403 {strides = array<i32>} : memref<8x128xf32, #tpu.memory_space<vmem>>, vector<8x128xf32>,
    %c0_197 = arith.constant 0 : index
    %c13 = arith.constant 13 : index
    %405 = memref.load %arg2[%c0_197, %c13] : memref<3x64xf32, #tpu.memory_space<smem>>
    %c1_198 = arith.constant 1 : index
    %c13_199 = arith.constant 13 : index
    %406 = memref.load %arg2[%c1_198, %c13_199] : memref<3x64xf32, #tpu.memory_space<smem>>
    %c2_200 = arith.constant 2 : index
    %c13_201 = arith.constant 13 : index
    %407 = memref.load %arg2[%c2_200, %c13_201] : memref<3x64xf32, #tpu.memory_space<smem>>
    %c13_202 = arith.constant 13 : index
    %408 = memref.load %arg3[%c13_202] : memref<64xf32, #tpu.memory_space<smem>>
    %409 = vector.broadcast %405 : f32 to vector<8x128xf32>
    %410 = arith.mulf %409, %0 : vector<8x128xf32>
    %411 = vector.broadcast %406 : f32 to vector<8x128xf32>
    %412 = arith.mulf %411, %1 : vector<8x128xf32>
    %413 = arith.addf %410, %412 : vector<8x128xf32>
    %414 = vector.broadcast %407 : f32 to vector<8x128xf32>
    %415 = arith.mulf %414, %2 : vector<8x128xf32>
    %416 = arith.addf %413, %415 : vector<8x128xf32>
    %417 = vector.broadcast %405 : f32 to vector<8x128xf32>
    %418 = arith.mulf %417, %1 : vector<8x128xf32>
    %419 = vector.broadcast %406 : f32 to vector<8x128xf32>
    %420 = arith.mulf %419, %2 : vector<8x128xf32>
    %421 = arith.addf %418, %420 : vector<8x128xf32>
    %422 = vector.broadcast %407 : f32 to vector<8x128xf32>
    %423 = arith.mulf %422, %3 : vector<8x128xf32>
    %424 = arith.addf %421, %423 : vector<8x128xf32>
    %425 = arith.maximumf %416, %424 : vector<8x128xf32>
    %426 = vector.broadcast %408 : f32 to vector<8x128xf32>
    %427 = arith.addf %425, %426 : vector<8x128xf32>
    %cst_203 = arith.constant 0.000000e+00 : f32
    %428 = vector.broadcast %cst_203 : f32 to vector<8x128xf32>
    %429 = arith.maximumf %427, %428 : vector<8x128xf32>
    %c13_204 = arith.constant 13 : index
    %c0_205 = arith.constant 0 : index
    %c0_206 = arith.constant 0 : index
    %430 = vector.load %arg4[%c13_204, %c0_205, %c0_206] : memref<64x128x128xf32, #tpu.memory_space<vmem>>, vector<1x128x128xf32>
    %431 = vector.shape_cast %430 : vector<1x128x128xf32> to vector<128x128xf32>
    %cst_207 = arith.constant dense<0.000000e+00> : vector<8x128xf32>
    %432 = tpu.matmul %429, %431, %cst_207 {dimension_numbers = #tpu.dot_dimension_numbers<[1], [0], [0], [1], [0, 0, 1, 1], [], []>} : vector<8x128xf32>, vector<128x128xf32>, vector<8x128xf32> -> vector<8x128xf32>
    %c0_208 = arith.constant 0 : index
    %c0_209 = arith.constant 0 : index
    %433 = vector.load %arg9[%c0_208, %c0_209] : memref<8x128xf32, #tpu.memory_space<vmem>>, vector<8x128xf32>
    %434 = arith.addf %433, %432 : vector<8x128xf32>
    %c0_210 = arith.constant 0 : index
    %c0_211 = arith.constant 0 : index
    %435 = vector.load %arg9[%c0_210, %c0_211] : memref<8x128xf32, #tpu.memory_space<vmem>>, vector<8x128xf32>
    tpu.vector_store %arg9[%c0_210, %c0_211], %434 {strides = array<i32>} : memref<8x128xf32, #tpu.memory_space<vmem>>, vector<8x128xf32>,
    %c0_212 = arith.constant 0 : index
    %c14 = arith.constant 14 : index
    %436 = memref.load %arg2[%c0_212, %c14] : memref<3x64xf32, #tpu.memory_space<smem>>
    %c1_213 = arith.constant 1 : index
    %c14_214 = arith.constant 14 : index
    %437 = memref.load %arg2[%c1_213, %c14_214] : memref<3x64xf32, #tpu.memory_space<smem>>
    %c2_215 = arith.constant 2 : index
    %c14_216 = arith.constant 14 : index
    %438 = memref.load %arg2[%c2_215, %c14_216] : memref<3x64xf32, #tpu.memory_space<smem>>
    %c14_217 = arith.constant 14 : index
    %439 = memref.load %arg3[%c14_217] : memref<64xf32, #tpu.memory_space<smem>>
    %440 = vector.broadcast %436 : f32 to vector<8x128xf32>
    %441 = arith.mulf %440, %0 : vector<8x128xf32>
    %442 = vector.broadcast %437 : f32 to vector<8x128xf32>
    %443 = arith.mulf %442, %1 : vector<8x128xf32>
    %444 = arith.addf %441, %443 : vector<8x128xf32>
    %445 = vector.broadcast %438 : f32 to vector<8x128xf32>
    %446 = arith.mulf %445, %2 : vector<8x128xf32>
    %447 = arith.addf %444, %446 : vector<8x128xf32>
    %448 = vector.broadcast %436 : f32 to vector<8x128xf32>
    %449 = arith.mulf %448, %1 : vector<8x128xf32>
    %450 = vector.broadcast %437 : f32 to vector<8x128xf32>
    %451 = arith.mulf %450, %2 : vector<8x128xf32>
    %452 = arith.addf %449, %451 : vector<8x128xf32>
    %453 = vector.broadcast %438 : f32 to vector<8x128xf32>
    %454 = arith.mulf %453, %3 : vector<8x128xf32>
    %455 = arith.addf %452, %454 : vector<8x128xf32>
    %456 = arith.maximumf %447, %455 : vector<8x128xf32>
    %457 = vector.broadcast %439 : f32 to vector<8x128xf32>
    %458 = arith.addf %456, %457 : vector<8x128xf32>
    %cst_218 = arith.constant 0.000000e+00 : f32
    %459 = vector.broadcast %cst_218 : f32 to vector<8x128xf32>
    %460 = arith.maximumf %458, %459 : vector<8x128xf32>
    %c14_219 = arith.constant 14 : index
    %c0_220 = arith.constant 0 : index
    %c0_221 = arith.constant 0 : index
    %461 = vector.load %arg4[%c14_219, %c0_220, %c0_221] : memref<64x128x128xf32, #tpu.memory_space<vmem>>, vector<1x128x128xf32>
    %462 = vector.shape_cast %461 : vector<1x128x128xf32> to vector<128x128xf32>
    %cst_222 = arith.constant dense<0.000000e+00> : vector<8x128xf32>
    %463 = tpu.matmul %460, %462, %cst_222 {dimension_numbers = #tpu.dot_dimension_numbers<[1], [0], [0], [1], [0, 0, 1, 1], [], []>} : vector<8x128xf32>, vector<128x128xf32>, vector<8x128xf32> -> vector<8x128xf32>
    %c0_223 = arith.constant 0 : index
    %c0_224 = arith.constant 0 : index
    %464 = vector.load %arg9[%c0_223, %c0_224] : memref<8x128xf32, #tpu.memory_space<vmem>>, vector<8x128xf32>
    %465 = arith.addf %464, %463 : vector<8x128xf32>
    %c0_225 = arith.constant 0 : index
    %c0_226 = arith.constant 0 : index
    %466 = vector.load %arg9[%c0_225, %c0_226] : memref<8x128xf32, #tpu.memory_space<vmem>>, vector<8x128xf32>
    tpu.vector_store %arg9[%c0_225, %c0_226], %465 {strides = array<i32>} : memref<8x128xf32, #tpu.memory_space<vmem>>, vector<8x128xf32>,
    %c0_227 = arith.constant 0 : index
    %c15 = arith.constant 15 : index
    %467 = memref.load %arg2[%c0_227, %c15] : memref<3x64xf32, #tpu.memory_space<smem>>
    %c1_228 = arith.constant 1 : index
    %c15_229 = arith.constant 15 : index
    %468 = memref.load %arg2[%c1_228, %c15_229] : memref<3x64xf32, #tpu.memory_space<smem>>
    %c2_230 = arith.constant 2 : index
    %c15_231 = arith.constant 15 : index
    %469 = memref.load %arg2[%c2_230, %c15_231] : memref<3x64xf32, #tpu.memory_space<smem>>
    %c15_232 = arith.constant 15 : index
    %470 = memref.load %arg3[%c15_232] : memref<64xf32, #tpu.memory_space<smem>>
    %471 = vector.broadcast %467 : f32 to vector<8x128xf32>
    %472 = arith.mulf %471, %0 : vector<8x128xf32>
    %473 = vector.broadcast %468 : f32 to vector<8x128xf32>
    %474 = arith.mulf %473, %1 : vector<8x128xf32>
    %475 = arith.addf %472, %474 : vector<8x128xf32>
    %476 = vector.broadcast %469 : f32 to vector<8x128xf32>
    %477 = arith.mulf %476, %2 : vector<8x128xf32>
    %478 = arith.addf %475, %477 : vector<8x128xf32>
    %479 = vector.broadcast %467 : f32 to vector<8x128xf32>
    %480 = arith.mulf %479, %1 : vector<8x128xf32>
    %481 = vector.broadcast %468 : f32 to vector<8x128xf32>
    %482 = arith.mulf %481, %2 : vector<8x128xf32>
    %483 = arith.addf %480, %482 : vector<8x128xf32>
    %484 = vector.broadcast %469 : f32 to vector<8x128xf32>
    %485 = arith.mulf %484, %3 : vector<8x128xf32>
    %486 = arith.addf %483, %485 : vector<8x128xf32>
    %487 = arith.maximumf %478, %486 : vector<8x128xf32>
    %488 = vector.broadcast %470 : f32 to vector<8x128xf32>
    %489 = arith.addf %487, %488 : vector<8x128xf32>
    %cst_233 = arith.constant 0.000000e+00 : f32
    %490 = vector.broadcast %cst_233 : f32 to vector<8x128xf32>
    %491 = arith.maximumf %489, %490 : vector<8x128xf32>
    %c15_234 = arith.constant 15 : index
    %c0_235 = arith.constant 0 : index
    %c0_236 = arith.constant 0 : index
    %492 = vector.load %arg4[%c15_234, %c0_235, %c0_236] : memref<64x128x128xf32, #tpu.memory_space<vmem>>, vector<1x128x128xf32>
    %493 = vector.shape_cast %492 : vector<1x128x128xf32> to vector<128x128xf32>
    %cst_237 = arith.constant dense<0.000000e+00> : vector<8x128xf32>
    %494 = tpu.matmul %491, %493, %cst_237 {dimension_numbers = #tpu.dot_dimension_numbers<[1], [0], [0], [1], [0, 0, 1, 1], [], []>} : vector<8x128xf32>, vector<128x128xf32>, vector<8x128xf32> -> vector<8x128xf32>
    %c0_238 = arith.constant 0 : index
    %c0_239 = arith.constant 0 : index
    %495 = vector.load %arg9[%c0_238, %c0_239] : memref<8x128xf32, #tpu.memory_space<vmem>>, vector<8x128xf32>
    %496 = arith.addf %495, %494 : vector<8x128xf32>
    %c0_240 = arith.constant 0 : index
    %c0_241 = arith.constant 0 : index
    %497 = vector.load %arg9[%c0_240, %c0_241] : memref<8x128xf32, #tpu.memory_space<vmem>>, vector<8x128xf32>
    tpu.vector_store %arg9[%c0_240, %c0_241], %496 {strides = array<i32>} : memref<8x128xf32, #tpu.memory_space<vmem>>, vector<8x128xf32>,
    %c0_242 = arith.constant 0 : index
    %c16 = arith.constant 16 : index
    %498 = memref.load %arg2[%c0_242, %c16] : memref<3x64xf32, #tpu.memory_space<smem>>
    %c1_243 = arith.constant 1 : index
    %c16_244 = arith.constant 16 : index
    %499 = memref.load %arg2[%c1_243, %c16_244] : memref<3x64xf32, #tpu.memory_space<smem>>
    %c2_245 = arith.constant 2 : index
    %c16_246 = arith.constant 16 : index
    %500 = memref.load %arg2[%c2_245, %c16_246] : memref<3x64xf32, #tpu.memory_space<smem>>
    %c16_247 = arith.constant 16 : index
    %501 = memref.load %arg3[%c16_247] : memref<64xf32, #tpu.memory_space<smem>>
    %502 = vector.broadcast %498 : f32 to vector<8x128xf32>
    %503 = arith.mulf %502, %0 : vector<8x128xf32>
    %504 = vector.broadcast %499 : f32 to vector<8x128xf32>
    %505 = arith.mulf %504, %1 : vector<8x128xf32>
    %506 = arith.addf %503, %505 : vector<8x128xf32>
    %507 = vector.broadcast %500 : f32 to vector<8x128xf32>
    %508 = arith.mulf %507, %2 : vector<8x128xf32>
    %509 = arith.addf %506, %508 : vector<8x128xf32>
    %510 = vector.broadcast %498 : f32 to vector<8x128xf32>
    %511 = arith.mulf %510, %1 : vector<8x128xf32>
    %512 = vector.broadcast %499 : f32 to vector<8x128xf32>
    %513 = arith.mulf %512, %2 : vector<8x128xf32>
    %514 = arith.addf %511, %513 : vector<8x128xf32>
    %515 = vector.broadcast %500 : f32 to vector<8x128xf32>
    %516 = arith.mulf %515, %3 : vector<8x128xf32>
    %517 = arith.addf %514, %516 : vector<8x128xf32>
    %518 = arith.maximumf %509, %517 : vector<8x128xf32>
    %519 = vector.broadcast %501 : f32 to vector<8x128xf32>
    %520 = arith.addf %518, %519 : vector<8x128xf32>
    %cst_248 = arith.constant 0.000000e+00 : f32
    %521 = vector.broadcast %cst_248 : f32 to vector<8x128xf32>
    %522 = arith.maximumf %520, %521 : vector<8x128xf32>
    %c16_249 = arith.constant 16 : index
    %c0_250 = arith.constant 0 : index
    %c0_251 = arith.constant 0 : index
    %523 = vector.load %arg4[%c16_249, %c0_250, %c0_251] : memref<64x128x128xf32, #tpu.memory_space<vmem>>, vector<1x128x128xf32>
    %524 = vector.shape_cast %523 : vector<1x128x128xf32> to vector<128x128xf32>
    %cst_252 = arith.constant dense<0.000000e+00> : vector<8x128xf32>
    %525 = tpu.matmul %522, %524, %cst_252 {dimension_numbers = #tpu.dot_dimension_numbers<[1], [0], [0], [1], [0, 0, 1, 1], [], []>} : vector<8x128xf32>, vector<128x128xf32>, vector<8x128xf32> -> vector<8x128xf32>
    %c0_253 = arith.constant 0 : index
    %c0_254 = arith.constant 0 : index
    %526 = vector.load %arg9[%c0_253, %c0_254] : memref<8x128xf32, #tpu.memory_space<vmem>>, vector<8x128xf32>
    %527 = arith.addf %526, %525 : vector<8x128xf32>
    %c0_255 = arith.constant 0 : index
    %c0_256 = arith.constant 0 : index
    %528 = vector.load %arg9[%c0_255, %c0_256] : memref<8x128xf32, #tpu.memory_space<vmem>>, vector<8x128xf32>
    tpu.vector_store %arg9[%c0_255, %c0_256], %527 {strides = array<i32>} : memref<8x128xf32, #tpu.memory_space<vmem>>, vector<8x128xf32>,
    %c0_257 = arith.constant 0 : index
    %c17 = arith.constant 17 : index
    %529 = memref.load %arg2[%c0_257, %c17] : memref<3x64xf32, #tpu.memory_space<smem>>
    %c1_258 = arith.constant 1 : index
    %c17_259 = arith.constant 17 : index
    %530 = memref.load %arg2[%c1_258, %c17_259] : memref<3x64xf32, #tpu.memory_space<smem>>
    %c2_260 = arith.constant 2 : index
    %c17_261 = arith.constant 17 : index
    %531 = memref.load %arg2[%c2_260, %c17_261] : memref<3x64xf32, #tpu.memory_space<smem>>
    %c17_262 = arith.constant 17 : index
    %532 = memref.load %arg3[%c17_262] : memref<64xf32, #tpu.memory_space<smem>>
    %533 = vector.broadcast %529 : f32 to vector<8x128xf32>
    %534 = arith.mulf %533, %0 : vector<8x128xf32>
    %535 = vector.broadcast %530 : f32 to vector<8x128xf32>
    %536 = arith.mulf %535, %1 : vector<8x128xf32>
    %537 = arith.addf %534, %536 : vector<8x128xf32>
    %538 = vector.broadcast %531 : f32 to vector<8x128xf32>
    %539 = arith.mulf %538, %2 : vector<8x128xf32>
    %540 = arith.addf %537, %539 : vector<8x128xf32>
    %541 = vector.broadcast %529 : f32 to vector<8x128xf32>
    %542 = arith.mulf %541, %1 : vector<8x128xf32>
    %543 = vector.broadcast %530 : f32 to vector<8x128xf32>
    %544 = arith.mulf %543, %2 : vector<8x128xf32>
    %545 = arith.addf %542, %544 : vector<8x128xf32>
    %546 = vector.broadcast %531 : f32 to vector<8x128xf32>
    %547 = arith.mulf %546, %3 : vector<8x128xf32>
    %548 = arith.addf %545, %547 : vector<8x128xf32>
    %549 = arith.maximumf %540, %548 : vector<8x128xf32>
    %550 = vector.broadcast %532 : f32 to vector<8x128xf32>
    %551 = arith.addf %549, %550 : vector<8x128xf32>
    %cst_263 = arith.constant 0.000000e+00 : f32
    %552 = vector.broadcast %cst_263 : f32 to vector<8x128xf32>
    %553 = arith.maximumf %551, %552 : vector<8x128xf32>
    %c17_264 = arith.constant 17 : index
    %c0_265 = arith.constant 0 : index
    %c0_266 = arith.constant 0 : index
    %554 = vector.load %arg4[%c17_264, %c0_265, %c0_266] : memref<64x128x128xf32, #tpu.memory_space<vmem>>, vector<1x128x128xf32>
    %555 = vector.shape_cast %554 : vector<1x128x128xf32> to vector<128x128xf32>
    %cst_267 = arith.constant dense<0.000000e+00> : vector<8x128xf32>
    %556 = tpu.matmul %553, %555, %cst_267 {dimension_numbers = #tpu.dot_dimension_numbers<[1], [0], [0], [1], [0, 0, 1, 1], [], []>} : vector<8x128xf32>, vector<128x128xf32>, vector<8x128xf32> -> vector<8x128xf32>
    %c0_268 = arith.constant 0 : index
    %c0_269 = arith.constant 0 : index
    %557 = vector.load %arg9[%c0_268, %c0_269] : memref<8x128xf32, #tpu.memory_space<vmem>>, vector<8x128xf32>
    %558 = arith.addf %557, %556 : vector<8x128xf32>
    %c0_270 = arith.constant 0 : index
    %c0_271 = arith.constant 0 : index
    %559 = vector.load %arg9[%c0_270, %c0_271] : memref<8x128xf32, #tpu.memory_space<vmem>>, vector<8x128xf32>
    tpu.vector_store %arg9[%c0_270, %c0_271], %558 {strides = array<i32>} : memref<8x128xf32, #tpu.memory_space<vmem>>, vector<8x128xf32>,
    %c0_272 = arith.constant 0 : index
    %c18 = arith.constant 18 : index
    %560 = memref.load %arg2[%c0_272, %c18] : memref<3x64xf32, #tpu.memory_space<smem>>
    %c1_273 = arith.constant 1 : index
    %c18_274 = arith.constant 18 : index
    %561 = memref.load %arg2[%c1_273, %c18_274] : memref<3x64xf32, #tpu.memory_space<smem>>
    %c2_275 = arith.constant 2 : index
    %c18_276 = arith.constant 18 : index
    %562 = memref.load %arg2[%c2_275, %c18_276] : memref<3x64xf32, #tpu.memory_space<smem>>
    %c18_277 = arith.constant 18 : index
    %563 = memref.load %arg3[%c18_277] : memref<64xf32, #tpu.memory_space<smem>>
    %564 = vector.broadcast %560 : f32 to vector<8x128xf32>
    %565 = arith.mulf %564, %0 : vector<8x128xf32>
    %566 = vector.broadcast %561 : f32 to vector<8x128xf32>
    %567 = arith.mulf %566, %1 : vector<8x128xf32>
    %568 = arith.addf %565, %567 : vector<8x128xf32>
    %569 = vector.broadcast %562 : f32 to vector<8x128xf32>
    %570 = arith.mulf %569, %2 : vector<8x128xf32>
    %571 = arith.addf %568, %570 : vector<8x128xf32>
    %572 = vector.broadcast %560 : f32 to vector<8x128xf32>
    %573 = arith.mulf %572, %1 : vector<8x128xf32>
    %574 = vector.broadcast %561 : f32 to vector<8x128xf32>
    %575 = arith.mulf %574, %2 : vector<8x128xf32>
    %576 = arith.addf %573, %575 : vector<8x128xf32>
    %577 = vector.broadcast %562 : f32 to vector<8x128xf32>
    %578 = arith.mulf %577, %3 : vector<8x128xf32>
    %579 = arith.addf %576, %578 : vector<8x128xf32>
    %580 = arith.maximumf %571, %579 : vector<8x128xf32>
    %581 = vector.broadcast %563 : f32 to vector<8x128xf32>
    %582 = arith.addf %580, %581 : vector<8x128xf32>
    %cst_278 = arith.constant 0.000000e+00 : f32
    %583 = vector.broadcast %cst_278 : f32 to vector<8x128xf32>
    %584 = arith.maximumf %582, %583 : vector<8x128xf32>
    %c18_279 = arith.constant 18 : index
    %c0_280 = arith.constant 0 : index
    %c0_281 = arith.constant 0 : index
    %585 = vector.load %arg4[%c18_279, %c0_280, %c0_281] : memref<64x128x128xf32, #tpu.memory_space<vmem>>, vector<1x128x128xf32>
    %586 = vector.shape_cast %585 : vector<1x128x128xf32> to vector<128x128xf32>
    %cst_282 = arith.constant dense<0.000000e+00> : vector<8x128xf32>
    %587 = tpu.matmul %584, %586, %cst_282 {dimension_numbers = #tpu.dot_dimension_numbers<[1], [0], [0], [1], [0, 0, 1, 1], [], []>} : vector<8x128xf32>, vector<128x128xf32>, vector<8x128xf32> -> vector<8x128xf32>
    %c0_283 = arith.constant 0 : index
    %c0_284 = arith.constant 0 : index
    %588 = vector.load %arg9[%c0_283, %c0_284] : memref<8x128xf32, #tpu.memory_space<vmem>>, vector<8x128xf32>
    %589 = arith.addf %588, %587 : vector<8x128xf32>
    %c0_285 = arith.constant 0 : index
    %c0_286 = arith.constant 0 : index
    %590 = vector.load %arg9[%c0_285, %c0_286] : memref<8x128xf32, #tpu.memory_space<vmem>>, vector<8x128xf32>
    tpu.vector_store %arg9[%c0_285, %c0_286], %589 {strides = array<i32>} : memref<8x128xf32, #tpu.memory_space<vmem>>, vector<8x128xf32>,
    %c0_287 = arith.constant 0 : index
    %c19 = arith.constant 19 : index
    %591 = memref.load %arg2[%c0_287, %c19] : memref<3x64xf32, #tpu.memory_space<smem>>
    %c1_288 = arith.constant 1 : index
    %c19_289 = arith.constant 19 : index
    %592 = memref.load %arg2[%c1_288, %c19_289] : memref<3x64xf32, #tpu.memory_space<smem>>
    %c2_290 = arith.constant 2 : index
    %c19_291 = arith.constant 19 : index
    %593 = memref.load %arg2[%c2_290, %c19_291] : memref<3x64xf32, #tpu.memory_space<smem>>
    %c19_292 = arith.constant 19 : index
    %594 = memref.load %arg3[%c19_292] : memref<64xf32, #tpu.memory_space<smem>>
    %595 = vector.broadcast %591 : f32 to vector<8x128xf32>
    %596 = arith.mulf %595, %0 : vector<8x128xf32>
    %597 = vector.broadcast %592 : f32 to vector<8x128xf32>
    %598 = arith.mulf %597, %1 : vector<8x128xf32>
    %599 = arith.addf %596, %598 : vector<8x128xf32>
    %600 = vector.broadcast %593 : f32 to vector<8x128xf32>
    %601 = arith.mulf %600, %2 : vector<8x128xf32>
    %602 = arith.addf %599, %601 : vector<8x128xf32>
    %603 = vector.broadcast %591 : f32 to vector<8x128xf32>
    %604 = arith.mulf %603, %1 : vector<8x128xf32>
    %605 = vector.broadcast %592 : f32 to vector<8x128xf32>
    %606 = arith.mulf %605, %2 : vector<8x128xf32>
    %607 = arith.addf %604, %606 : vector<8x128xf32>
    %608 = vector.broadcast %593 : f32 to vector<8x128xf32>
    %609 = arith.mulf %608, %3 : vector<8x128xf32>
    %610 = arith.addf %607, %609 : vector<8x128xf32>
    %611 = arith.maximumf %602, %610 : vector<8x128xf32>
    %612 = vector.broadcast %594 : f32 to vector<8x128xf32>
    %613 = arith.addf %611, %612 : vector<8x128xf32>
    %cst_293 = arith.constant 0.000000e+00 : f32
    %614 = vector.broadcast %cst_293 : f32 to vector<8x128xf32>
    %615 = arith.maximumf %613, %614 : vector<8x128xf32>
    %c19_294 = arith.constant 19 : index
    %c0_295 = arith.constant 0 : index
    %c0_296 = arith.constant 0 : index
    %616 = vector.load %arg4[%c19_294, %c0_295, %c0_296] : memref<64x128x128xf32, #tpu.memory_space<vmem>>, vector<1x128x128xf32>
    %617 = vector.shape_cast %616 : vector<1x128x128xf32> to vector<128x128xf32>
    %cst_297 = arith.constant dense<0.000000e+00> : vector<8x128xf32>
    %618 = tpu.matmul %615, %617, %cst_297 {dimension_numbers = #tpu.dot_dimension_numbers<[1], [0], [0], [1], [0, 0, 1, 1], [], []>} : vector<8x128xf32>, vector<128x128xf32>, vector<8x128xf32> -> vector<8x128xf32>
    %c0_298 = arith.constant 0 : index
    %c0_299 = arith.constant 0 : index
    %619 = vector.load %arg9[%c0_298, %c0_299] : memref<8x128xf32, #tpu.memory_space<vmem>>, vector<8x128xf32>
    %620 = arith.addf %619, %618 : vector<8x128xf32>
    %c0_300 = arith.constant 0 : index
    %c0_301 = arith.constant 0 : index
    %621 = vector.load %arg9[%c0_300, %c0_301] : memref<8x128xf32, #tpu.memory_space<vmem>>, vector<8x128xf32>
    tpu.vector_store %arg9[%c0_300, %c0_301], %620 {strides = array<i32>} : memref<8x128xf32, #tpu.memory_space<vmem>>, vector<8x128xf32>,
    %c0_302 = arith.constant 0 : index
    %c20 = arith.constant 20 : index
    %622 = memref.load %arg2[%c0_302, %c20] : memref<3x64xf32, #tpu.memory_space<smem>>
    %c1_303 = arith.constant 1 : index
    %c20_304 = arith.constant 20 : index
    %623 = memref.load %arg2[%c1_303, %c20_304] : memref<3x64xf32, #tpu.memory_space<smem>>
    %c2_305 = arith.constant 2 : index
    %c20_306 = arith.constant 20 : index
    %624 = memref.load %arg2[%c2_305, %c20_306] : memref<3x64xf32, #tpu.memory_space<smem>>
    %c20_307 = arith.constant 20 : index
    %625 = memref.load %arg3[%c20_307] : memref<64xf32, #tpu.memory_space<smem>>
    %626 = vector.broadcast %622 : f32 to vector<8x128xf32>
    %627 = arith.mulf %626, %0 : vector<8x128xf32>
    %628 = vector.broadcast %623 : f32 to vector<8x128xf32>
    %629 = arith.mulf %628, %1 : vector<8x128xf32>
    %630 = arith.addf %627, %629 : vector<8x128xf32>
    %631 = vector.broadcast %624 : f32 to vector<8x128xf32>
    %632 = arith.mulf %631, %2 : vector<8x128xf32>
    %633 = arith.addf %630, %632 : vector<8x128xf32>
    %634 = vector.broadcast %622 : f32 to vector<8x128xf32>
    %635 = arith.mulf %634, %1 : vector<8x128xf32>
    %636 = vector.broadcast %623 : f32 to vector<8x128xf32>
    %637 = arith.mulf %636, %2 : vector<8x128xf32>
    %638 = arith.addf %635, %637 : vector<8x128xf32>
    %639 = vector.broadcast %624 : f32 to vector<8x128xf32>
    %640 = arith.mulf %639, %3 : vector<8x128xf32>
    %641 = arith.addf %638, %640 : vector<8x128xf32>
    %642 = arith.maximumf %633, %641 : vector<8x128xf32>
    %643 = vector.broadcast %625 : f32 to vector<8x128xf32>
    %644 = arith.addf %642, %643 : vector<8x128xf32>
    %cst_308 = arith.constant 0.000000e+00 : f32
    %645 = vector.broadcast %cst_308 : f32 to vector<8x128xf32>
    %646 = arith.maximumf %644, %645 : vector<8x128xf32>
    %c20_309 = arith.constant 20 : index
    %c0_310 = arith.constant 0 : index
    %c0_311 = arith.constant 0 : index
    %647 = vector.load %arg4[%c20_309, %c0_310, %c0_311] : memref<64x128x128xf32, #tpu.memory_space<vmem>>, vector<1x128x128xf32>
    %648 = vector.shape_cast %647 : vector<1x128x128xf32> to vector<128x128xf32>
    %cst_312 = arith.constant dense<0.000000e+00> : vector<8x128xf32>
    %649 = tpu.matmul %646, %648, %cst_312 {dimension_numbers = #tpu.dot_dimension_numbers<[1], [0], [0], [1], [0, 0, 1, 1], [], []>} : vector<8x128xf32>, vector<128x128xf32>, vector<8x128xf32> -> vector<8x128xf32>
    %c0_313 = arith.constant 0 : index
    %c0_314 = arith.constant 0 : index
    %650 = vector.load %arg9[%c0_313, %c0_314] : memref<8x128xf32, #tpu.memory_space<vmem>>, vector<8x128xf32>
    %651 = arith.addf %650, %649 : vector<8x128xf32>
    %c0_315 = arith.constant 0 : index
    %c0_316 = arith.constant 0 : index
    %652 = vector.load %arg9[%c0_315, %c0_316] : memref<8x128xf32, #tpu.memory_space<vmem>>, vector<8x128xf32>
    tpu.vector_store %arg9[%c0_315, %c0_316], %651 {strides = array<i32>} : memref<8x128xf32, #tpu.memory_space<vmem>>, vector<8x128xf32>,
    %c0_317 = arith.constant 0 : index
    %c21 = arith.constant 21 : index
    %653 = memref.load %arg2[%c0_317, %c21] : memref<3x64xf32, #tpu.memory_space<smem>>
    %c1_318 = arith.constant 1 : index
    %c21_319 = arith.constant 21 : index
    %654 = memref.load %arg2[%c1_318, %c21_319] : memref<3x64xf32, #tpu.memory_space<smem>>
    %c2_320 = arith.constant 2 : index
    %c21_321 = arith.constant 21 : index
    %655 = memref.load %arg2[%c2_320, %c21_321] : memref<3x64xf32, #tpu.memory_space<smem>>
    %c21_322 = arith.constant 21 : index
    %656 = memref.load %arg3[%c21_322] : memref<64xf32, #tpu.memory_space<smem>>
    %657 = vector.broadcast %653 : f32 to vector<8x128xf32>
    %658 = arith.mulf %657, %0 : vector<8x128xf32>
    %659 = vector.broadcast %654 : f32 to vector<8x128xf32>
    %660 = arith.mulf %659, %1 : vector<8x128xf32>
    %661 = arith.addf %658, %660 : vector<8x128xf32>
    %662 = vector.broadcast %655 : f32 to vector<8x128xf32>
    %663 = arith.mulf %662, %2 : vector<8x128xf32>
    %664 = arith.addf %661, %663 : vector<8x128xf32>
    %665 = vector.broadcast %653 : f32 to vector<8x128xf32>
    %666 = arith.mulf %665, %1 : vector<8x128xf32>
    %667 = vector.broadcast %654 : f32 to vector<8x128xf32>
    %668 = arith.mulf %667, %2 : vector<8x128xf32>
    %669 = arith.addf %666, %668 : vector<8x128xf32>
    %670 = vector.broadcast %655 : f32 to vector<8x128xf32>
    %671 = arith.mulf %670, %3 : vector<8x128xf32>
    %672 = arith.addf %669, %671 : vector<8x128xf32>
    %673 = arith.maximumf %664, %672 : vector<8x128xf32>
    %674 = vector.broadcast %656 : f32 to vector<8x128xf32>
    %675 = arith.addf %673, %674 : vector<8x128xf32>
    %cst_323 = arith.constant 0.000000e+00 : f32
    %676 = vector.broadcast %cst_323 : f32 to vector<8x128xf32>
    %677 = arith.maximumf %675, %676 : vector<8x128xf32>
    %c21_324 = arith.constant 21 : index
    %c0_325 = arith.constant 0 : index
    %c0_326 = arith.constant 0 : index
    %678 = vector.load %arg4[%c21_324, %c0_325, %c0_326] : memref<64x128x128xf32, #tpu.memory_space<vmem>>, vector<1x128x128xf32>
    %679 = vector.shape_cast %678 : vector<1x128x128xf32> to vector<128x128xf32>
    %cst_327 = arith.constant dense<0.000000e+00> : vector<8x128xf32>
    %680 = tpu.matmul %677, %679, %cst_327 {dimension_numbers = #tpu.dot_dimension_numbers<[1], [0], [0], [1], [0, 0, 1, 1], [], []>} : vector<8x128xf32>, vector<128x128xf32>, vector<8x128xf32> -> vector<8x128xf32>
    %c0_328 = arith.constant 0 : index
    %c0_329 = arith.constant 0 : index
    %681 = vector.load %arg9[%c0_328, %c0_329] : memref<8x128xf32, #tpu.memory_space<vmem>>, vector<8x128xf32>
    %682 = arith.addf %681, %680 : vector<8x128xf32>
    %c0_330 = arith.constant 0 : index
    %c0_331 = arith.constant 0 : index
    %683 = vector.load %arg9[%c0_330, %c0_331] : memref<8x128xf32, #tpu.memory_space<vmem>>, vector<8x128xf32>
    tpu.vector_store %arg9[%c0_330, %c0_331], %682 {strides = array<i32>} : memref<8x128xf32, #tpu.memory_space<vmem>>, vector<8x128xf32>,
    %c0_332 = arith.constant 0 : index
    %c22 = arith.constant 22 : index
    %684 = memref.load %arg2[%c0_332, %c22] : memref<3x64xf32, #tpu.memory_space<smem>>
    %c1_333 = arith.constant 1 : index
    %c22_334 = arith.constant 22 : index
    %685 = memref.load %arg2[%c1_333, %c22_334] : memref<3x64xf32, #tpu.memory_space<smem>>
    %c2_335 = arith.constant 2 : index
    %c22_336 = arith.constant 22 : index
    %686 = memref.load %arg2[%c2_335, %c22_336] : memref<3x64xf32, #tpu.memory_space<smem>>
    %c22_337 = arith.constant 22 : index
    %687 = memref.load %arg3[%c22_337] : memref<64xf32, #tpu.memory_space<smem>>
    %688 = vector.broadcast %684 : f32 to vector<8x128xf32>
    %689 = arith.mulf %688, %0 : vector<8x128xf32>
    %690 = vector.broadcast %685 : f32 to vector<8x128xf32>
    %691 = arith.mulf %690, %1 : vector<8x128xf32>
    %692 = arith.addf %689, %691 : vector<8x128xf32>
    %693 = vector.broadcast %686 : f32 to vector<8x128xf32>
    %694 = arith.mulf %693, %2 : vector<8x128xf32>
    %695 = arith.addf %692, %694 : vector<8x128xf32>
    %696 = vector.broadcast %684 : f32 to vector<8x128xf32>
    %697 = arith.mulf %696, %1 : vector<8x128xf32>
    %698 = vector.broadcast %685 : f32 to vector<8x128xf32>
    %699 = arith.mulf %698, %2 : vector<8x128xf32>
    %700 = arith.addf %697, %699 : vector<8x128xf32>
    %701 = vector.broadcast %686 : f32 to vector<8x128xf32>
    %702 = arith.mulf %701, %3 : vector<8x128xf32>
    %703 = arith.addf %700, %702 : vector<8x128xf32>
    %704 = arith.maximumf %695, %703 : vector<8x128xf32>
    %705 = vector.broadcast %687 : f32 to vector<8x128xf32>
    %706 = arith.addf %704, %705 : vector<8x128xf32>
    %cst_338 = arith.constant 0.000000e+00 : f32
    %707 = vector.broadcast %cst_338 : f32 to vector<8x128xf32>
    %708 = arith.maximumf %706, %707 : vector<8x128xf32>
    %c22_339 = arith.constant 22 : index
    %c0_340 = arith.constant 0 : index
    %c0_341 = arith.constant 0 : index
    %709 = vector.load %arg4[%c22_339, %c0_340, %c0_341] : memref<64x128x128xf32, #tpu.memory_space<vmem>>, vector<1x128x128xf32>
    %710 = vector.shape_cast %709 : vector<1x128x128xf32> to vector<128x128xf32>
    %cst_342 = arith.constant dense<0.000000e+00> : vector<8x128xf32>
    %711 = tpu.matmul %708, %710, %cst_342 {dimension_numbers = #tpu.dot_dimension_numbers<[1], [0], [0], [1], [0, 0, 1, 1], [], []>} : vector<8x128xf32>, vector<128x128xf32>, vector<8x128xf32> -> vector<8x128xf32>
    %c0_343 = arith.constant 0 : index
    %c0_344 = arith.constant 0 : index
    %712 = vector.load %arg9[%c0_343, %c0_344] : memref<8x128xf32, #tpu.memory_space<vmem>>, vector<8x128xf32>
    %713 = arith.addf %712, %711 : vector<8x128xf32>
    %c0_345 = arith.constant 0 : index
    %c0_346 = arith.constant 0 : index
    %714 = vector.load %arg9[%c0_345, %c0_346] : memref<8x128xf32, #tpu.memory_space<vmem>>, vector<8x128xf32>
    tpu.vector_store %arg9[%c0_345, %c0_346], %713 {strides = array<i32>} : memref<8x128xf32, #tpu.memory_space<vmem>>, vector<8x128xf32>,
    %c0_347 = arith.constant 0 : index
    %c23 = arith.constant 23 : index
    %715 = memref.load %arg2[%c0_347, %c23] : memref<3x64xf32, #tpu.memory_space<smem>>
    %c1_348 = arith.constant 1 : index
    %c23_349 = arith.constant 23 : index
    %716 = memref.load %arg2[%c1_348, %c23_349] : memref<3x64xf32, #tpu.memory_space<smem>>
    %c2_350 = arith.constant 2 : index
    %c23_351 = arith.constant 23 : index
    %717 = memref.load %arg2[%c2_350, %c23_351] : memref<3x64xf32, #tpu.memory_space<smem>>
    %c23_352 = arith.constant 23 : index
    %718 = memref.load %arg3[%c23_352] : memref<64xf32, #tpu.memory_space<smem>>
    %719 = vector.broadcast %715 : f32 to vector<8x128xf32>
    %720 = arith.mulf %719, %0 : vector<8x128xf32>
    %721 = vector.broadcast %716 : f32 to vector<8x128xf32>
    %722 = arith.mulf %721, %1 : vector<8x128xf32>
    %723 = arith.addf %720, %722 : vector<8x128xf32>
    %724 = vector.broadcast %717 : f32 to vector<8x128xf32>
    %725 = arith.mulf %724, %2 : vector<8x128xf32>
    %726 = arith.addf %723, %725 : vector<8x128xf32>
    %727 = vector.broadcast %715 : f32 to vector<8x128xf32>
    %728 = arith.mulf %727, %1 : vector<8x128xf32>
    %729 = vector.broadcast %716 : f32 to vector<8x128xf32>
    %730 = arith.mulf %729, %2 : vector<8x128xf32>
    %731 = arith.addf %728, %730 : vector<8x128xf32>
    %732 = vector.broadcast %717 : f32 to vector<8x128xf32>
    %733 = arith.mulf %732, %3 : vector<8x128xf32>
    %734 = arith.addf %731, %733 : vector<8x128xf32>
    %735 = arith.maximumf %726, %734 : vector<8x128xf32>
    %736 = vector.broadcast %718 : f32 to vector<8x128xf32>
    %737 = arith.addf %735, %736 : vector<8x128xf32>
    %cst_353 = arith.constant 0.000000e+00 : f32
    %738 = vector.broadcast %cst_353 : f32 to vector<8x128xf32>
    %739 = arith.maximumf %737, %738 : vector<8x128xf32>
    %c23_354 = arith.constant 23 : index
    %c0_355 = arith.constant 0 : index
    %c0_356 = arith.constant 0 : index
    %740 = vector.load %arg4[%c23_354, %c0_355, %c0_356] : memref<64x128x128xf32, #tpu.memory_space<vmem>>, vector<1x128x128xf32>
    %741 = vector.shape_cast %740 : vector<1x128x128xf32> to vector<128x128xf32>
    %cst_357 = arith.constant dense<0.000000e+00> : vector<8x128xf32>
    %742 = tpu.matmul %739, %741, %cst_357 {dimension_numbers = #tpu.dot_dimension_numbers<[1], [0], [0], [1], [0, 0, 1, 1], [], []>} : vector<8x128xf32>, vector<128x128xf32>, vector<8x128xf32> -> vector<8x128xf32>
    %c0_358 = arith.constant 0 : index
    %c0_359 = arith.constant 0 : index
    %743 = vector.load %arg9[%c0_358, %c0_359] : memref<8x128xf32, #tpu.memory_space<vmem>>, vector<8x128xf32>
    %744 = arith.addf %743, %742 : vector<8x128xf32>
    %c0_360 = arith.constant 0 : index
    %c0_361 = arith.constant 0 : index
    %745 = vector.load %arg9[%c0_360, %c0_361] : memref<8x128xf32, #tpu.memory_space<vmem>>, vector<8x128xf32>
    tpu.vector_store %arg9[%c0_360, %c0_361], %744 {strides = array<i32>} : memref<8x128xf32, #tpu.memory_space<vmem>>, vector<8x128xf32>,
    %c0_362 = arith.constant 0 : index
    %c24 = arith.constant 24 : index
    %746 = memref.load %arg2[%c0_362, %c24] : memref<3x64xf32, #tpu.memory_space<smem>>
    %c1_363 = arith.constant 1 : index
    %c24_364 = arith.constant 24 : index
    %747 = memref.load %arg2[%c1_363, %c24_364] : memref<3x64xf32, #tpu.memory_space<smem>>
    %c2_365 = arith.constant 2 : index
    %c24_366 = arith.constant 24 : index
    %748 = memref.load %arg2[%c2_365, %c24_366] : memref<3x64xf32, #tpu.memory_space<smem>>
    %c24_367 = arith.constant 24 : index
    %749 = memref.load %arg3[%c24_367] : memref<64xf32, #tpu.memory_space<smem>>
    %750 = vector.broadcast %746 : f32 to vector<8x128xf32>
    %751 = arith.mulf %750, %0 : vector<8x128xf32>
    %752 = vector.broadcast %747 : f32 to vector<8x128xf32>
    %753 = arith.mulf %752, %1 : vector<8x128xf32>
    %754 = arith.addf %751, %753 : vector<8x128xf32>
    %755 = vector.broadcast %748 : f32 to vector<8x128xf32>
    %756 = arith.mulf %755, %2 : vector<8x128xf32>
    %757 = arith.addf %754, %756 : vector<8x128xf32>
    %758 = vector.broadcast %746 : f32 to vector<8x128xf32>
    %759 = arith.mulf %758, %1 : vector<8x128xf32>
    %760 = vector.broadcast %747 : f32 to vector<8x128xf32>
    %761 = arith.mulf %760, %2 : vector<8x128xf32>
    %762 = arith.addf %759, %761 : vector<8x128xf32>
    %763 = vector.broadcast %748 : f32 to vector<8x128xf32>
    %764 = arith.mulf %763, %3 : vector<8x128xf32>
    %765 = arith.addf %762, %764 : vector<8x128xf32>
    %766 = arith.maximumf %757, %765 : vector<8x128xf32>
    %767 = vector.broadcast %749 : f32 to vector<8x128xf32>
    %768 = arith.addf %766, %767 : vector<8x128xf32>
    %cst_368 = arith.constant 0.000000e+00 : f32
    %769 = vector.broadcast %cst_368 : f32 to vector<8x128xf32>
    %770 = arith.maximumf %768, %769 : vector<8x128xf32>
    %c24_369 = arith.constant 24 : index
    %c0_370 = arith.constant 0 : index
    %c0_371 = arith.constant 0 : index
    %771 = vector.load %arg4[%c24_369, %c0_370, %c0_371] : memref<64x128x128xf32, #tpu.memory_space<vmem>>, vector<1x128x128xf32>
    %772 = vector.shape_cast %771 : vector<1x128x128xf32> to vector<128x128xf32>
    %cst_372 = arith.constant dense<0.000000e+00> : vector<8x128xf32>
    %773 = tpu.matmul %770, %772, %cst_372 {dimension_numbers = #tpu.dot_dimension_numbers<[1], [0], [0], [1], [0, 0, 1, 1], [], []>} : vector<8x128xf32>, vector<128x128xf32>, vector<8x128xf32> -> vector<8x128xf32>
    %c0_373 = arith.constant 0 : index
    %c0_374 = arith.constant 0 : index
    %774 = vector.load %arg9[%c0_373, %c0_374] : memref<8x128xf32, #tpu.memory_space<vmem>>, vector<8x128xf32>
    %775 = arith.addf %774, %773 : vector<8x128xf32>
    %c0_375 = arith.constant 0 : index
    %c0_376 = arith.constant 0 : index
    %776 = vector.load %arg9[%c0_375, %c0_376] : memref<8x128xf32, #tpu.memory_space<vmem>>, vector<8x128xf32>
    tpu.vector_store %arg9[%c0_375, %c0_376], %775 {strides = array<i32>} : memref<8x128xf32, #tpu.memory_space<vmem>>, vector<8x128xf32>,
    %c0_377 = arith.constant 0 : index
    %c25 = arith.constant 25 : index
    %777 = memref.load %arg2[%c0_377, %c25] : memref<3x64xf32, #tpu.memory_space<smem>>
    %c1_378 = arith.constant 1 : index
    %c25_379 = arith.constant 25 : index
    %778 = memref.load %arg2[%c1_378, %c25_379] : memref<3x64xf32, #tpu.memory_space<smem>>
    %c2_380 = arith.constant 2 : index
    %c25_381 = arith.constant 25 : index
    %779 = memref.load %arg2[%c2_380, %c25_381] : memref<3x64xf32, #tpu.memory_space<smem>>
    %c25_382 = arith.constant 25 : index
    %780 = memref.load %arg3[%c25_382] : memref<64xf32, #tpu.memory_space<smem>>
    %781 = vector.broadcast %777 : f32 to vector<8x128xf32>
    %782 = arith.mulf %781, %0 : vector<8x128xf32>
    %783 = vector.broadcast %778 : f32 to vector<8x128xf32>
    %784 = arith.mulf %783, %1 : vector<8x128xf32>
    %785 = arith.addf %782, %784 : vector<8x128xf32>
    %786 = vector.broadcast %779 : f32 to vector<8x128xf32>
    %787 = arith.mulf %786, %2 : vector<8x128xf32>
    %788 = arith.addf %785, %787 : vector<8x128xf32>
    %789 = vector.broadcast %777 : f32 to vector<8x128xf32>
    %790 = arith.mulf %789, %1 : vector<8x128xf32>
    %791 = vector.broadcast %778 : f32 to vector<8x128xf32>
    %792 = arith.mulf %791, %2 : vector<8x128xf32>
    %793 = arith.addf %790, %792 : vector<8x128xf32>
    %794 = vector.broadcast %779 : f32 to vector<8x128xf32>
    %795 = arith.mulf %794, %3 : vector<8x128xf32>
    %796 = arith.addf %793, %795 : vector<8x128xf32>
    %797 = arith.maximumf %788, %796 : vector<8x128xf32>
    %798 = vector.broadcast %780 : f32 to vector<8x128xf32>
    %799 = arith.addf %797, %798 : vector<8x128xf32>
    %cst_383 = arith.constant 0.000000e+00 : f32
    %800 = vector.broadcast %cst_383 : f32 to vector<8x128xf32>
    %801 = arith.maximumf %799, %800 : vector<8x128xf32>
    %c25_384 = arith.constant 25 : index
    %c0_385 = arith.constant 0 : index
    %c0_386 = arith.constant 0 : index
    %802 = vector.load %arg4[%c25_384, %c0_385, %c0_386] : memref<64x128x128xf32, #tpu.memory_space<vmem>>, vector<1x128x128xf32>
    %803 = vector.shape_cast %802 : vector<1x128x128xf32> to vector<128x128xf32>
    %cst_387 = arith.constant dense<0.000000e+00> : vector<8x128xf32>
    %804 = tpu.matmul %801, %803, %cst_387 {dimension_numbers = #tpu.dot_dimension_numbers<[1], [0], [0], [1], [0, 0, 1, 1], [], []>} : vector<8x128xf32>, vector<128x128xf32>, vector<8x128xf32> -> vector<8x128xf32>
    %c0_388 = arith.constant 0 : index
    %c0_389 = arith.constant 0 : index
    %805 = vector.load %arg9[%c0_388, %c0_389] : memref<8x128xf32, #tpu.memory_space<vmem>>, vector<8x128xf32>
    %806 = arith.addf %805, %804 : vector<8x128xf32>
    %c0_390 = arith.constant 0 : index
    %c0_391 = arith.constant 0 : index
    %807 = vector.load %arg9[%c0_390, %c0_391] : memref<8x128xf32, #tpu.memory_space<vmem>>, vector<8x128xf32>
    tpu.vector_store %arg9[%c0_390, %c0_391], %806 {strides = array<i32>} : memref<8x128xf32, #tpu.memory_space<vmem>>, vector<8x128xf32>,
    %c0_392 = arith.constant 0 : index
    %c26 = arith.constant 26 : index
    %808 = memref.load %arg2[%c0_392, %c26] : memref<3x64xf32, #tpu.memory_space<smem>>
    %c1_393 = arith.constant 1 : index
    %c26_394 = arith.constant 26 : index
    %809 = memref.load %arg2[%c1_393, %c26_394] : memref<3x64xf32, #tpu.memory_space<smem>>
    %c2_395 = arith.constant 2 : index
    %c26_396 = arith.constant 26 : index
    %810 = memref.load %arg2[%c2_395, %c26_396] : memref<3x64xf32, #tpu.memory_space<smem>>
    %c26_397 = arith.constant 26 : index
    %811 = memref.load %arg3[%c26_397] : memref<64xf32, #tpu.memory_space<smem>>
    %812 = vector.broadcast %808 : f32 to vector<8x128xf32>
    %813 = arith.mulf %812, %0 : vector<8x128xf32>
    %814 = vector.broadcast %809 : f32 to vector<8x128xf32>
    %815 = arith.mulf %814, %1 : vector<8x128xf32>
    %816 = arith.addf %813, %815 : vector<8x128xf32>
    %817 = vector.broadcast %810 : f32 to vector<8x128xf32>
    %818 = arith.mulf %817, %2 : vector<8x128xf32>
    %819 = arith.addf %816, %818 : vector<8x128xf32>
    %820 = vector.broadcast %808 : f32 to vector<8x128xf32>
    %821 = arith.mulf %820, %1 : vector<8x128xf32>
    %822 = vector.broadcast %809 : f32 to vector<8x128xf32>
    %823 = arith.mulf %822, %2 : vector<8x128xf32>
    %824 = arith.addf %821, %823 : vector<8x128xf32>
    %825 = vector.broadcast %810 : f32 to vector<8x128xf32>
    %826 = arith.mulf %825, %3 : vector<8x128xf32>
    %827 = arith.addf %824, %826 : vector<8x128xf32>
    %828 = arith.maximumf %819, %827 : vector<8x128xf32>
    %829 = vector.broadcast %811 : f32 to vector<8x128xf32>
    %830 = arith.addf %828, %829 : vector<8x128xf32>
    %cst_398 = arith.constant 0.000000e+00 : f32
    %831 = vector.broadcast %cst_398 : f32 to vector<8x128xf32>
    %832 = arith.maximumf %830, %831 : vector<8x128xf32>
    %c26_399 = arith.constant 26 : index
    %c0_400 = arith.constant 0 : index
    %c0_401 = arith.constant 0 : index
    %833 = vector.load %arg4[%c26_399, %c0_400, %c0_401] : memref<64x128x128xf32, #tpu.memory_space<vmem>>, vector<1x128x128xf32>
    %834 = vector.shape_cast %833 : vector<1x128x128xf32> to vector<128x128xf32>
    %cst_402 = arith.constant dense<0.000000e+00> : vector<8x128xf32>
    %835 = tpu.matmul %832, %834, %cst_402 {dimension_numbers = #tpu.dot_dimension_numbers<[1], [0], [0], [1], [0, 0, 1, 1], [], []>} : vector<8x128xf32>, vector<128x128xf32>, vector<8x128xf32> -> vector<8x128xf32>
    %c0_403 = arith.constant 0 : index
    %c0_404 = arith.constant 0 : index
    %836 = vector.load %arg9[%c0_403, %c0_404] : memref<8x128xf32, #tpu.memory_space<vmem>>, vector<8x128xf32>
    %837 = arith.addf %836, %835 : vector<8x128xf32>
    %c0_405 = arith.constant 0 : index
    %c0_406 = arith.constant 0 : index
    %838 = vector.load %arg9[%c0_405, %c0_406] : memref<8x128xf32, #tpu.memory_space<vmem>>, vector<8x128xf32>
    tpu.vector_store %arg9[%c0_405, %c0_406], %837 {strides = array<i32>} : memref<8x128xf32, #tpu.memory_space<vmem>>, vector<8x128xf32>,
    %c0_407 = arith.constant 0 : index
    %c27 = arith.constant 27 : index
    %839 = memref.load %arg2[%c0_407, %c27] : memref<3x64xf32, #tpu.memory_space<smem>>
    %c1_408 = arith.constant 1 : index
    %c27_409 = arith.constant 27 : index
    %840 = memref.load %arg2[%c1_408, %c27_409] : memref<3x64xf32, #tpu.memory_space<smem>>
    %c2_410 = arith.constant 2 : index
    %c27_411 = arith.constant 27 : index
    %841 = memref.load %arg2[%c2_410, %c27_411] : memref<3x64xf32, #tpu.memory_space<smem>>
    %c27_412 = arith.constant 27 : index
    %842 = memref.load %arg3[%c27_412] : memref<64xf32, #tpu.memory_space<smem>>
    %843 = vector.broadcast %839 : f32 to vector<8x128xf32>
    %844 = arith.mulf %843, %0 : vector<8x128xf32>
    %845 = vector.broadcast %840 : f32 to vector<8x128xf32>
    %846 = arith.mulf %845, %1 : vector<8x128xf32>
    %847 = arith.addf %844, %846 : vector<8x128xf32>
    %848 = vector.broadcast %841 : f32 to vector<8x128xf32>
    %849 = arith.mulf %848, %2 : vector<8x128xf32>
    %850 = arith.addf %847, %849 : vector<8x128xf32>
    %851 = vector.broadcast %839 : f32 to vector<8x128xf32>
    %852 = arith.mulf %851, %1 : vector<8x128xf32>
    %853 = vector.broadcast %840 : f32 to vector<8x128xf32>
    %854 = arith.mulf %853, %2 : vector<8x128xf32>
    %855 = arith.addf %852, %854 : vector<8x128xf32>
    %856 = vector.broadcast %841 : f32 to vector<8x128xf32>
    %857 = arith.mulf %856, %3 : vector<8x128xf32>
    %858 = arith.addf %855, %857 : vector<8x128xf32>
    %859 = arith.maximumf %850, %858 : vector<8x128xf32>
    %860 = vector.broadcast %842 : f32 to vector<8x128xf32>
    %861 = arith.addf %859, %860 : vector<8x128xf32>
    %cst_413 = arith.constant 0.000000e+00 : f32
    %862 = vector.broadcast %cst_413 : f32 to vector<8x128xf32>
    %863 = arith.maximumf %861, %862 : vector<8x128xf32>
    %c27_414 = arith.constant 27 : index
    %c0_415 = arith.constant 0 : index
    %c0_416 = arith.constant 0 : index
    %864 = vector.load %arg4[%c27_414, %c0_415, %c0_416] : memref<64x128x128xf32, #tpu.memory_space<vmem>>, vector<1x128x128xf32>
    %865 = vector.shape_cast %864 : vector<1x128x128xf32> to vector<128x128xf32>
    %cst_417 = arith.constant dense<0.000000e+00> : vector<8x128xf32>
    %866 = tpu.matmul %863, %865, %cst_417 {dimension_numbers = #tpu.dot_dimension_numbers<[1], [0], [0], [1], [0, 0, 1, 1], [], []>} : vector<8x128xf32>, vector<128x128xf32>, vector<8x128xf32> -> vector<8x128xf32>
    %c0_418 = arith.constant 0 : index
    %c0_419 = arith.constant 0 : index
    %867 = vector.load %arg9[%c0_418, %c0_419] : memref<8x128xf32, #tpu.memory_space<vmem>>, vector<8x128xf32>
    %868 = arith.addf %867, %866 : vector<8x128xf32>
    %c0_420 = arith.constant 0 : index
    %c0_421 = arith.constant 0 : index
    %869 = vector.load %arg9[%c0_420, %c0_421] : memref<8x128xf32, #tpu.memory_space<vmem>>, vector<8x128xf32>
    tpu.vector_store %arg9[%c0_420, %c0_421], %868 {strides = array<i32>} : memref<8x128xf32, #tpu.memory_space<vmem>>, vector<8x128xf32>,
    %c0_422 = arith.constant 0 : index
    %c28 = arith.constant 28 : index
    %870 = memref.load %arg2[%c0_422, %c28] : memref<3x64xf32, #tpu.memory_space<smem>>
    %c1_423 = arith.constant 1 : index
    %c28_424 = arith.constant 28 : index
    %871 = memref.load %arg2[%c1_423, %c28_424] : memref<3x64xf32, #tpu.memory_space<smem>>
    %c2_425 = arith.constant 2 : index
    %c28_426 = arith.constant 28 : index
    %872 = memref.load %arg2[%c2_425, %c28_426] : memref<3x64xf32, #tpu.memory_space<smem>>
    %c28_427 = arith.constant 28 : index
    %873 = memref.load %arg3[%c28_427] : memref<64xf32, #tpu.memory_space<smem>>
    %874 = vector.broadcast %870 : f32 to vector<8x128xf32>
    %875 = arith.mulf %874, %0 : vector<8x128xf32>
    %876 = vector.broadcast %871 : f32 to vector<8x128xf32>
    %877 = arith.mulf %876, %1 : vector<8x128xf32>
    %878 = arith.addf %875, %877 : vector<8x128xf32>
    %879 = vector.broadcast %872 : f32 to vector<8x128xf32>
    %880 = arith.mulf %879, %2 : vector<8x128xf32>
    %881 = arith.addf %878, %880 : vector<8x128xf32>
    %882 = vector.broadcast %870 : f32 to vector<8x128xf32>
    %883 = arith.mulf %882, %1 : vector<8x128xf32>
    %884 = vector.broadcast %871 : f32 to vector<8x128xf32>
    %885 = arith.mulf %884, %2 : vector<8x128xf32>
    %886 = arith.addf %883, %885 : vector<8x128xf32>
    %887 = vector.broadcast %872 : f32 to vector<8x128xf32>
    %888 = arith.mulf %887, %3 : vector<8x128xf32>
    %889 = arith.addf %886, %888 : vector<8x128xf32>
    %890 = arith.maximumf %881, %889 : vector<8x128xf32>
    %891 = vector.broadcast %873 : f32 to vector<8x128xf32>
    %892 = arith.addf %890, %891 : vector<8x128xf32>
    %cst_428 = arith.constant 0.000000e+00 : f32
    %893 = vector.broadcast %cst_428 : f32 to vector<8x128xf32>
    %894 = arith.maximumf %892, %893 : vector<8x128xf32>
    %c28_429 = arith.constant 28 : index
    %c0_430 = arith.constant 0 : index
    %c0_431 = arith.constant 0 : index
    %895 = vector.load %arg4[%c28_429, %c0_430, %c0_431] : memref<64x128x128xf32, #tpu.memory_space<vmem>>, vector<1x128x128xf32>
    %896 = vector.shape_cast %895 : vector<1x128x128xf32> to vector<128x128xf32>
    %cst_432 = arith.constant dense<0.000000e+00> : vector<8x128xf32>
    %897 = tpu.matmul %894, %896, %cst_432 {dimension_numbers = #tpu.dot_dimension_numbers<[1], [0], [0], [1], [0, 0, 1, 1], [], []>} : vector<8x128xf32>, vector<128x128xf32>, vector<8x128xf32> -> vector<8x128xf32>
    %c0_433 = arith.constant 0 : index
    %c0_434 = arith.constant 0 : index
    %898 = vector.load %arg9[%c0_433, %c0_434] : memref<8x128xf32, #tpu.memory_space<vmem>>, vector<8x128xf32>
    %899 = arith.addf %898, %897 : vector<8x128xf32>
    %c0_435 = arith.constant 0 : index
    %c0_436 = arith.constant 0 : index
    %900 = vector.load %arg9[%c0_435, %c0_436] : memref<8x128xf32, #tpu.memory_space<vmem>>, vector<8x128xf32>
    tpu.vector_store %arg9[%c0_435, %c0_436], %899 {strides = array<i32>} : memref<8x128xf32, #tpu.memory_space<vmem>>, vector<8x128xf32>,
    %c0_437 = arith.constant 0 : index
    %c29 = arith.constant 29 : index
    %901 = memref.load %arg2[%c0_437, %c29] : memref<3x64xf32, #tpu.memory_space<smem>>
    %c1_438 = arith.constant 1 : index
    %c29_439 = arith.constant 29 : index
    %902 = memref.load %arg2[%c1_438, %c29_439] : memref<3x64xf32, #tpu.memory_space<smem>>
    %c2_440 = arith.constant 2 : index
    %c29_441 = arith.constant 29 : index
    %903 = memref.load %arg2[%c2_440, %c29_441] : memref<3x64xf32, #tpu.memory_space<smem>>
    %c29_442 = arith.constant 29 : index
    %904 = memref.load %arg3[%c29_442] : memref<64xf32, #tpu.memory_space<smem>>
    %905 = vector.broadcast %901 : f32 to vector<8x128xf32>
    %906 = arith.mulf %905, %0 : vector<8x128xf32>
    %907 = vector.broadcast %902 : f32 to vector<8x128xf32>
    %908 = arith.mulf %907, %1 : vector<8x128xf32>
    %909 = arith.addf %906, %908 : vector<8x128xf32>
    %910 = vector.broadcast %903 : f32 to vector<8x128xf32>
    %911 = arith.mulf %910, %2 : vector<8x128xf32>
    %912 = arith.addf %909, %911 : vector<8x128xf32>
    %913 = vector.broadcast %901 : f32 to vector<8x128xf32>
    %914 = arith.mulf %913, %1 : vector<8x128xf32>
    %915 = vector.broadcast %902 : f32 to vector<8x128xf32>
    %916 = arith.mulf %915, %2 : vector<8x128xf32>
    %917 = arith.addf %914, %916 : vector<8x128xf32>
    %918 = vector.broadcast %903 : f32 to vector<8x128xf32>
    %919 = arith.mulf %918, %3 : vector<8x128xf32>
    %920 = arith.addf %917, %919 : vector<8x128xf32>
    %921 = arith.maximumf %912, %920 : vector<8x128xf32>
    %922 = vector.broadcast %904 : f32 to vector<8x128xf32>
    %923 = arith.addf %921, %922 : vector<8x128xf32>
    %cst_443 = arith.constant 0.000000e+00 : f32
    %924 = vector.broadcast %cst_443 : f32 to vector<8x128xf32>
    %925 = arith.maximumf %923, %924 : vector<8x128xf32>
    %c29_444 = arith.constant 29 : index
    %c0_445 = arith.constant 0 : index
    %c0_446 = arith.constant 0 : index
    %926 = vector.load %arg4[%c29_444, %c0_445, %c0_446] : memref<64x128x128xf32, #tpu.memory_space<vmem>>, vector<1x128x128xf32>
    %927 = vector.shape_cast %926 : vector<1x128x128xf32> to vector<128x128xf32>
    %cst_447 = arith.constant dense<0.000000e+00> : vector<8x128xf32>
    %928 = tpu.matmul %925, %927, %cst_447 {dimension_numbers = #tpu.dot_dimension_numbers<[1], [0], [0], [1], [0, 0, 1, 1], [], []>} : vector<8x128xf32>, vector<128x128xf32>, vector<8x128xf32> -> vector<8x128xf32>
    %c0_448 = arith.constant 0 : index
    %c0_449 = arith.constant 0 : index
    %929 = vector.load %arg9[%c0_448, %c0_449] : memref<8x128xf32, #tpu.memory_space<vmem>>, vector<8x128xf32>
    %930 = arith.addf %929, %928 : vector<8x128xf32>
    %c0_450 = arith.constant 0 : index
    %c0_451 = arith.constant 0 : index
    %931 = vector.load %arg9[%c0_450, %c0_451] : memref<8x128xf32, #tpu.memory_space<vmem>>, vector<8x128xf32>
    tpu.vector_store %arg9[%c0_450, %c0_451], %930 {strides = array<i32>} : memref<8x128xf32, #tpu.memory_space<vmem>>, vector<8x128xf32>,
    %c0_452 = arith.constant 0 : index
    %c30 = arith.constant 30 : index
    %932 = memref.load %arg2[%c0_452, %c30] : memref<3x64xf32, #tpu.memory_space<smem>>
    %c1_453 = arith.constant 1 : index
    %c30_454 = arith.constant 30 : index
    %933 = memref.load %arg2[%c1_453, %c30_454] : memref<3x64xf32, #tpu.memory_space<smem>>
    %c2_455 = arith.constant 2 : index
    %c30_456 = arith.constant 30 : index
    %934 = memref.load %arg2[%c2_455, %c30_456] : memref<3x64xf32, #tpu.memory_space<smem>>
    %c30_457 = arith.constant 30 : index
    %935 = memref.load %arg3[%c30_457] : memref<64xf32, #tpu.memory_space<smem>>
    %936 = vector.broadcast %932 : f32 to vector<8x128xf32>
    %937 = arith.mulf %936, %0 : vector<8x128xf32>
    %938 = vector.broadcast %933 : f32 to vector<8x128xf32>
    %939 = arith.mulf %938, %1 : vector<8x128xf32>
    %940 = arith.addf %937, %939 : vector<8x128xf32>
    %941 = vector.broadcast %934 : f32 to vector<8x128xf32>
    %942 = arith.mulf %941, %2 : vector<8x128xf32>
    %943 = arith.addf %940, %942 : vector<8x128xf32>
    %944 = vector.broadcast %932 : f32 to vector<8x128xf32>
    %945 = arith.mulf %944, %1 : vector<8x128xf32>
    %946 = vector.broadcast %933 : f32 to vector<8x128xf32>
    %947 = arith.mulf %946, %2 : vector<8x128xf32>
    %948 = arith.addf %945, %947 : vector<8x128xf32>
    %949 = vector.broadcast %934 : f32 to vector<8x128xf32>
    %950 = arith.mulf %949, %3 : vector<8x128xf32>
    %951 = arith.addf %948, %950 : vector<8x128xf32>
    %952 = arith.maximumf %943, %951 : vector<8x128xf32>
    %953 = vector.broadcast %935 : f32 to vector<8x128xf32>
    %954 = arith.addf %952, %953 : vector<8x128xf32>
    %cst_458 = arith.constant 0.000000e+00 : f32
    %955 = vector.broadcast %cst_458 : f32 to vector<8x128xf32>
    %956 = arith.maximumf %954, %955 : vector<8x128xf32>
    %c30_459 = arith.constant 30 : index
    %c0_460 = arith.constant 0 : index
    %c0_461 = arith.constant 0 : index
    %957 = vector.load %arg4[%c30_459, %c0_460, %c0_461] : memref<64x128x128xf32, #tpu.memory_space<vmem>>, vector<1x128x128xf32>
    %958 = vector.shape_cast %957 : vector<1x128x128xf32> to vector<128x128xf32>
    %cst_462 = arith.constant dense<0.000000e+00> : vector<8x128xf32>
    %959 = tpu.matmul %956, %958, %cst_462 {dimension_numbers = #tpu.dot_dimension_numbers<[1], [0], [0], [1], [0, 0, 1, 1], [], []>} : vector<8x128xf32>, vector<128x128xf32>, vector<8x128xf32> -> vector<8x128xf32>
    %c0_463 = arith.constant 0 : index
    %c0_464 = arith.constant 0 : index
    %960 = vector.load %arg9[%c0_463, %c0_464] : memref<8x128xf32, #tpu.memory_space<vmem>>, vector<8x128xf32>
    %961 = arith.addf %960, %959 : vector<8x128xf32>
    %c0_465 = arith.constant 0 : index
    %c0_466 = arith.constant 0 : index
    %962 = vector.load %arg9[%c0_465, %c0_466] : memref<8x128xf32, #tpu.memory_space<vmem>>, vector<8x128xf32>
    tpu.vector_store %arg9[%c0_465, %c0_466], %961 {strides = array<i32>} : memref<8x128xf32, #tpu.memory_space<vmem>>, vector<8x128xf32>,
    %c0_467 = arith.constant 0 : index
    %c31 = arith.constant 31 : index
    %963 = memref.load %arg2[%c0_467, %c31] : memref<3x64xf32, #tpu.memory_space<smem>>
    %c1_468 = arith.constant 1 : index
    %c31_469 = arith.constant 31 : index
    %964 = memref.load %arg2[%c1_468, %c31_469] : memref<3x64xf32, #tpu.memory_space<smem>>
    %c2_470 = arith.constant 2 : index
    %c31_471 = arith.constant 31 : index
    %965 = memref.load %arg2[%c2_470, %c31_471] : memref<3x64xf32, #tpu.memory_space<smem>>
    %c31_472 = arith.constant 31 : index
    %966 = memref.load %arg3[%c31_472] : memref<64xf32, #tpu.memory_space<smem>>
    %967 = vector.broadcast %963 : f32 to vector<8x128xf32>
    %968 = arith.mulf %967, %0 : vector<8x128xf32>
    %969 = vector.broadcast %964 : f32 to vector<8x128xf32>
    %970 = arith.mulf %969, %1 : vector<8x128xf32>
    %971 = arith.addf %968, %970 : vector<8x128xf32>
    %972 = vector.broadcast %965 : f32 to vector<8x128xf32>
    %973 = arith.mulf %972, %2 : vector<8x128xf32>
    %974 = arith.addf %971, %973 : vector<8x128xf32>
    %975 = vector.broadcast %963 : f32 to vector<8x128xf32>
    %976 = arith.mulf %975, %1 : vector<8x128xf32>
    %977 = vector.broadcast %964 : f32 to vector<8x128xf32>
    %978 = arith.mulf %977, %2 : vector<8x128xf32>
    %979 = arith.addf %976, %978 : vector<8x128xf32>
    %980 = vector.broadcast %965 : f32 to vector<8x128xf32>
    %981 = arith.mulf %980, %3 : vector<8x128xf32>
    %982 = arith.addf %979, %981 : vector<8x128xf32>
    %983 = arith.maximumf %974, %982 : vector<8x128xf32>
    %984 = vector.broadcast %966 : f32 to vector<8x128xf32>
    %985 = arith.addf %983, %984 : vector<8x128xf32>
    %cst_473 = arith.constant 0.000000e+00 : f32
    %986 = vector.broadcast %cst_473 : f32 to vector<8x128xf32>
    %987 = arith.maximumf %985, %986 : vector<8x128xf32>
    %c31_474 = arith.constant 31 : index
    %c0_475 = arith.constant 0 : index
    %c0_476 = arith.constant 0 : index
    %988 = vector.load %arg4[%c31_474, %c0_475, %c0_476] : memref<64x128x128xf32, #tpu.memory_space<vmem>>, vector<1x128x128xf32>
    %989 = vector.shape_cast %988 : vector<1x128x128xf32> to vector<128x128xf32>
    %cst_477 = arith.constant dense<0.000000e+00> : vector<8x128xf32>
    %990 = tpu.matmul %987, %989, %cst_477 {dimension_numbers = #tpu.dot_dimension_numbers<[1], [0], [0], [1], [0, 0, 1, 1], [], []>} : vector<8x128xf32>, vector<128x128xf32>, vector<8x128xf32> -> vector<8x128xf32>
    %c0_478 = arith.constant 0 : index
    %c0_479 = arith.constant 0 : index
    %991 = vector.load %arg9[%c0_478, %c0_479] : memref<8x128xf32, #tpu.memory_space<vmem>>, vector<8x128xf32>
    %992 = arith.addf %991, %990 : vector<8x128xf32>
    %c0_480 = arith.constant 0 : index
    %c0_481 = arith.constant 0 : index
    %993 = vector.load %arg9[%c0_480, %c0_481] : memref<8x128xf32, #tpu.memory_space<vmem>>, vector<8x128xf32>
    tpu.vector_store %arg9[%c0_480, %c0_481], %992 {strides = array<i32>} : memref<8x128xf32, #tpu.memory_space<vmem>>, vector<8x128xf32>,
    %c0_482 = arith.constant 0 : index
    %c32 = arith.constant 32 : index
    %994 = memref.load %arg2[%c0_482, %c32] : memref<3x64xf32, #tpu.memory_space<smem>>
    %c1_483 = arith.constant 1 : index
    %c32_484 = arith.constant 32 : index
    %995 = memref.load %arg2[%c1_483, %c32_484] : memref<3x64xf32, #tpu.memory_space<smem>>
    %c2_485 = arith.constant 2 : index
    %c32_486 = arith.constant 32 : index
    %996 = memref.load %arg2[%c2_485, %c32_486] : memref<3x64xf32, #tpu.memory_space<smem>>
    %c32_487 = arith.constant 32 : index
    %997 = memref.load %arg3[%c32_487] : memref<64xf32, #tpu.memory_space<smem>>
    %998 = vector.broadcast %994 : f32 to vector<8x128xf32>
    %999 = arith.mulf %998, %0 : vector<8x128xf32>
    %1000 = vector.broadcast %995 : f32 to vector<8x128xf32>
    %1001 = arith.mulf %1000, %1 : vector<8x128xf32>
    %1002 = arith.addf %999, %1001 : vector<8x128xf32>
    %1003 = vector.broadcast %996 : f32 to vector<8x128xf32>
    %1004 = arith.mulf %1003, %2 : vector<8x128xf32>
    %1005 = arith.addf %1002, %1004 : vector<8x128xf32>
    %1006 = vector.broadcast %994 : f32 to vector<8x128xf32>
    %1007 = arith.mulf %1006, %1 : vector<8x128xf32>
    %1008 = vector.broadcast %995 : f32 to vector<8x128xf32>
    %1009 = arith.mulf %1008, %2 : vector<8x128xf32>
    %1010 = arith.addf %1007, %1009 : vector<8x128xf32>
    %1011 = vector.broadcast %996 : f32 to vector<8x128xf32>
    %1012 = arith.mulf %1011, %3 : vector<8x128xf32>
    %1013 = arith.addf %1010, %1012 : vector<8x128xf32>
    %1014 = arith.maximumf %1005, %1013 : vector<8x128xf32>
    %1015 = vector.broadcast %997 : f32 to vector<8x128xf32>
    %1016 = arith.addf %1014, %1015 : vector<8x128xf32>
    %cst_488 = arith.constant 0.000000e+00 : f32
    %1017 = vector.broadcast %cst_488 : f32 to vector<8x128xf32>
    %1018 = arith.maximumf %1016, %1017 : vector<8x128xf32>
    %c32_489 = arith.constant 32 : index
    %c0_490 = arith.constant 0 : index
    %c0_491 = arith.constant 0 : index
    %1019 = vector.load %arg4[%c32_489, %c0_490, %c0_491] : memref<64x128x128xf32, #tpu.memory_space<vmem>>, vector<1x128x128xf32>
    %1020 = vector.shape_cast %1019 : vector<1x128x128xf32> to vector<128x128xf32>
    %cst_492 = arith.constant dense<0.000000e+00> : vector<8x128xf32>
    %1021 = tpu.matmul %1018, %1020, %cst_492 {dimension_numbers = #tpu.dot_dimension_numbers<[1], [0], [0], [1], [0, 0, 1, 1], [], []>} : vector<8x128xf32>, vector<128x128xf32>, vector<8x128xf32> -> vector<8x128xf32>
    %c0_493 = arith.constant 0 : index
    %c0_494 = arith.constant 0 : index
    %1022 = vector.load %arg9[%c0_493, %c0_494] : memref<8x128xf32, #tpu.memory_space<vmem>>, vector<8x128xf32>
    %1023 = arith.addf %1022, %1021 : vector<8x128xf32>
    %c0_495 = arith.constant 0 : index
    %c0_496 = arith.constant 0 : index
    %1024 = vector.load %arg9[%c0_495, %c0_496] : memref<8x128xf32, #tpu.memory_space<vmem>>, vector<8x128xf32>
    tpu.vector_store %arg9[%c0_495, %c0_496], %1023 {strides = array<i32>} : memref<8x128xf32, #tpu.memory_space<vmem>>, vector<8x128xf32>,
    %c0_497 = arith.constant 0 : index
    %c33 = arith.constant 33 : index
    %1025 = memref.load %arg2[%c0_497, %c33] : memref<3x64xf32, #tpu.memory_space<smem>>
    %c1_498 = arith.constant 1 : index
    %c33_499 = arith.constant 33 : index
    %1026 = memref.load %arg2[%c1_498, %c33_499] : memref<3x64xf32, #tpu.memory_space<smem>>
    %c2_500 = arith.constant 2 : index
    %c33_501 = arith.constant 33 : index
    %1027 = memref.load %arg2[%c2_500, %c33_501] : memref<3x64xf32, #tpu.memory_space<smem>>
    %c33_502 = arith.constant 33 : index
    %1028 = memref.load %arg3[%c33_502] : memref<64xf32, #tpu.memory_space<smem>>
    %1029 = vector.broadcast %1025 : f32 to vector<8x128xf32>
    %1030 = arith.mulf %1029, %0 : vector<8x128xf32>
    %1031 = vector.broadcast %1026 : f32 to vector<8x128xf32>
    %1032 = arith.mulf %1031, %1 : vector<8x128xf32>
    %1033 = arith.addf %1030, %1032 : vector<8x128xf32>
    %1034 = vector.broadcast %1027 : f32 to vector<8x128xf32>
    %1035 = arith.mulf %1034, %2 : vector<8x128xf32>
    %1036 = arith.addf %1033, %1035 : vector<8x128xf32>
    %1037 = vector.broadcast %1025 : f32 to vector<8x128xf32>
    %1038 = arith.mulf %1037, %1 : vector<8x128xf32>
    %1039 = vector.broadcast %1026 : f32 to vector<8x128xf32>
    %1040 = arith.mulf %1039, %2 : vector<8x128xf32>
    %1041 = arith.addf %1038, %1040 : vector<8x128xf32>
    %1042 = vector.broadcast %1027 : f32 to vector<8x128xf32>
    %1043 = arith.mulf %1042, %3 : vector<8x128xf32>
    %1044 = arith.addf %1041, %1043 : vector<8x128xf32>
    %1045 = arith.maximumf %1036, %1044 : vector<8x128xf32>
    %1046 = vector.broadcast %1028 : f32 to vector<8x128xf32>
    %1047 = arith.addf %1045, %1046 : vector<8x128xf32>
    %cst_503 = arith.constant 0.000000e+00 : f32
    %1048 = vector.broadcast %cst_503 : f32 to vector<8x128xf32>
    %1049 = arith.maximumf %1047, %1048 : vector<8x128xf32>
    %c33_504 = arith.constant 33 : index
    %c0_505 = arith.constant 0 : index
    %c0_506 = arith.constant 0 : index
    %1050 = vector.load %arg4[%c33_504, %c0_505, %c0_506] : memref<64x128x128xf32, #tpu.memory_space<vmem>>, vector<1x128x128xf32>
    %1051 = vector.shape_cast %1050 : vector<1x128x128xf32> to vector<128x128xf32>
    %cst_507 = arith.constant dense<0.000000e+00> : vector<8x128xf32>
    %1052 = tpu.matmul %1049, %1051, %cst_507 {dimension_numbers = #tpu.dot_dimension_numbers<[1], [0], [0], [1], [0, 0, 1, 1], [], []>} : vector<8x128xf32>, vector<128x128xf32>, vector<8x128xf32> -> vector<8x128xf32>
    %c0_508 = arith.constant 0 : index
    %c0_509 = arith.constant 0 : index
    %1053 = vector.load %arg9[%c0_508, %c0_509] : memref<8x128xf32, #tpu.memory_space<vmem>>, vector<8x128xf32>
    %1054 = arith.addf %1053, %1052 : vector<8x128xf32>
    %c0_510 = arith.constant 0 : index
    %c0_511 = arith.constant 0 : index
    %1055 = vector.load %arg9[%c0_510, %c0_511] : memref<8x128xf32, #tpu.memory_space<vmem>>, vector<8x128xf32>
    tpu.vector_store %arg9[%c0_510, %c0_511], %1054 {strides = array<i32>} : memref<8x128xf32, #tpu.memory_space<vmem>>, vector<8x128xf32>,
    %c0_512 = arith.constant 0 : index
    %c34 = arith.constant 34 : index
    %1056 = memref.load %arg2[%c0_512, %c34] : memref<3x64xf32, #tpu.memory_space<smem>>
    %c1_513 = arith.constant 1 : index
    %c34_514 = arith.constant 34 : index
    %1057 = memref.load %arg2[%c1_513, %c34_514] : memref<3x64xf32, #tpu.memory_space<smem>>
    %c2_515 = arith.constant 2 : index
    %c34_516 = arith.constant 34 : index
    %1058 = memref.load %arg2[%c2_515, %c34_516] : memref<3x64xf32, #tpu.memory_space<smem>>
    %c34_517 = arith.constant 34 : index
    %1059 = memref.load %arg3[%c34_517] : memref<64xf32, #tpu.memory_space<smem>>
    %1060 = vector.broadcast %1056 : f32 to vector<8x128xf32>
    %1061 = arith.mulf %1060, %0 : vector<8x128xf32>
    %1062 = vector.broadcast %1057 : f32 to vector<8x128xf32>
    %1063 = arith.mulf %1062, %1 : vector<8x128xf32>
    %1064 = arith.addf %1061, %1063 : vector<8x128xf32>
    %1065 = vector.broadcast %1058 : f32 to vector<8x128xf32>
    %1066 = arith.mulf %1065, %2 : vector<8x128xf32>
    %1067 = arith.addf %1064, %1066 : vector<8x128xf32>
    %1068 = vector.broadcast %1056 : f32 to vector<8x128xf32>
    %1069 = arith.mulf %1068, %1 : vector<8x128xf32>
    %1070 = vector.broadcast %1057 : f32 to vector<8x128xf32>
    %1071 = arith.mulf %1070, %2 : vector<8x128xf32>
    %1072 = arith.addf %1069, %1071 : vector<8x128xf32>
    %1073 = vector.broadcast %1058 : f32 to vector<8x128xf32>
    %1074 = arith.mulf %1073, %3 : vector<8x128xf32>
    %1075 = arith.addf %1072, %1074 : vector<8x128xf32>
    %1076 = arith.maximumf %1067, %1075 : vector<8x128xf32>
    %1077 = vector.broadcast %1059 : f32 to vector<8x128xf32>
    %1078 = arith.addf %1076, %1077 : vector<8x128xf32>
    %cst_518 = arith.constant 0.000000e+00 : f32
    %1079 = vector.broadcast %cst_518 : f32 to vector<8x128xf32>
    %1080 = arith.maximumf %1078, %1079 : vector<8x128xf32>
    %c34_519 = arith.constant 34 : index
    %c0_520 = arith.constant 0 : index
    %c0_521 = arith.constant 0 : index
    %1081 = vector.load %arg4[%c34_519, %c0_520, %c0_521] : memref<64x128x128xf32, #tpu.memory_space<vmem>>, vector<1x128x128xf32>
    %1082 = vector.shape_cast %1081 : vector<1x128x128xf32> to vector<128x128xf32>
    %cst_522 = arith.constant dense<0.000000e+00> : vector<8x128xf32>
    %1083 = tpu.matmul %1080, %1082, %cst_522 {dimension_numbers = #tpu.dot_dimension_numbers<[1], [0], [0], [1], [0, 0, 1, 1], [], []>} : vector<8x128xf32>, vector<128x128xf32>, vector<8x128xf32> -> vector<8x128xf32>
    %c0_523 = arith.constant 0 : index
    %c0_524 = arith.constant 0 : index
    %1084 = vector.load %arg9[%c0_523, %c0_524] : memref<8x128xf32, #tpu.memory_space<vmem>>, vector<8x128xf32>
    %1085 = arith.addf %1084, %1083 : vector<8x128xf32>
    %c0_525 = arith.constant 0 : index
    %c0_526 = arith.constant 0 : index
    %1086 = vector.load %arg9[%c0_525, %c0_526] : memref<8x128xf32, #tpu.memory_space<vmem>>, vector<8x128xf32>
    tpu.vector_store %arg9[%c0_525, %c0_526], %1085 {strides = array<i32>} : memref<8x128xf32, #tpu.memory_space<vmem>>, vector<8x128xf32>,
    %c0_527 = arith.constant 0 : index
    %c35 = arith.constant 35 : index
    %1087 = memref.load %arg2[%c0_527, %c35] : memref<3x64xf32, #tpu.memory_space<smem>>
    %c1_528 = arith.constant 1 : index
    %c35_529 = arith.constant 35 : index
    %1088 = memref.load %arg2[%c1_528, %c35_529] : memref<3x64xf32, #tpu.memory_space<smem>>
    %c2_530 = arith.constant 2 : index
    %c35_531 = arith.constant 35 : index
    %1089 = memref.load %arg2[%c2_530, %c35_531] : memref<3x64xf32, #tpu.memory_space<smem>>
    %c35_532 = arith.constant 35 : index
    %1090 = memref.load %arg3[%c35_532] : memref<64xf32, #tpu.memory_space<smem>>
    %1091 = vector.broadcast %1087 : f32 to vector<8x128xf32>
    %1092 = arith.mulf %1091, %0 : vector<8x128xf32>
    %1093 = vector.broadcast %1088 : f32 to vector<8x128xf32>
    %1094 = arith.mulf %1093, %1 : vector<8x128xf32>
    %1095 = arith.addf %1092, %1094 : vector<8x128xf32>
    %1096 = vector.broadcast %1089 : f32 to vector<8x128xf32>
    %1097 = arith.mulf %1096, %2 : vector<8x128xf32>
    %1098 = arith.addf %1095, %1097 : vector<8x128xf32>
    %1099 = vector.broadcast %1087 : f32 to vector<8x128xf32>
    %1100 = arith.mulf %1099, %1 : vector<8x128xf32>
    %1101 = vector.broadcast %1088 : f32 to vector<8x128xf32>
    %1102 = arith.mulf %1101, %2 : vector<8x128xf32>
    %1103 = arith.addf %1100, %1102 : vector<8x128xf32>
    %1104 = vector.broadcast %1089 : f32 to vector<8x128xf32>
    %1105 = arith.mulf %1104, %3 : vector<8x128xf32>
    %1106 = arith.addf %1103, %1105 : vector<8x128xf32>
    %1107 = arith.maximumf %1098, %1106 : vector<8x128xf32>
    %1108 = vector.broadcast %1090 : f32 to vector<8x128xf32>
    %1109 = arith.addf %1107, %1108 : vector<8x128xf32>
    %cst_533 = arith.constant 0.000000e+00 : f32
    %1110 = vector.broadcast %cst_533 : f32 to vector<8x128xf32>
    %1111 = arith.maximumf %1109, %1110 : vector<8x128xf32>
    %c35_534 = arith.constant 35 : index
    %c0_535 = arith.constant 0 : index
    %c0_536 = arith.constant 0 : index
    %1112 = vector.load %arg4[%c35_534, %c0_535, %c0_536] : memref<64x128x128xf32, #tpu.memory_space<vmem>>, vector<1x128x128xf32>
    %1113 = vector.shape_cast %1112 : vector<1x128x128xf32> to vector<128x128xf32>
    %cst_537 = arith.constant dense<0.000000e+00> : vector<8x128xf32>
    %1114 = tpu.matmul %1111, %1113, %cst_537 {dimension_numbers = #tpu.dot_dimension_numbers<[1], [0], [0], [1], [0, 0, 1, 1], [], []>} : vector<8x128xf32>, vector<128x128xf32>, vector<8x128xf32> -> vector<8x128xf32>
    %c0_538 = arith.constant 0 : index
    %c0_539 = arith.constant 0 : index
    %1115 = vector.load %arg9[%c0_538, %c0_539] : memref<8x128xf32, #tpu.memory_space<vmem>>, vector<8x128xf32>
    %1116 = arith.addf %1115, %1114 : vector<8x128xf32>
    %c0_540 = arith.constant 0 : index
    %c0_541 = arith.constant 0 : index
    %1117 = vector.load %arg9[%c0_540, %c0_541] : memref<8x128xf32, #tpu.memory_space<vmem>>, vector<8x128xf32>
    tpu.vector_store %arg9[%c0_540, %c0_541], %1116 {strides = array<i32>} : memref<8x128xf32, #tpu.memory_space<vmem>>, vector<8x128xf32>,
    %c0_542 = arith.constant 0 : index
    %c36 = arith.constant 36 : index
    %1118 = memref.load %arg2[%c0_542, %c36] : memref<3x64xf32, #tpu.memory_space<smem>>
    %c1_543 = arith.constant 1 : index
    %c36_544 = arith.constant 36 : index
    %1119 = memref.load %arg2[%c1_543, %c36_544] : memref<3x64xf32, #tpu.memory_space<smem>>
    %c2_545 = arith.constant 2 : index
    %c36_546 = arith.constant 36 : index
    %1120 = memref.load %arg2[%c2_545, %c36_546] : memref<3x64xf32, #tpu.memory_space<smem>>
    %c36_547 = arith.constant 36 : index
    %1121 = memref.load %arg3[%c36_547] : memref<64xf32, #tpu.memory_space<smem>>
    %1122 = vector.broadcast %1118 : f32 to vector<8x128xf32>
    %1123 = arith.mulf %1122, %0 : vector<8x128xf32>
    %1124 = vector.broadcast %1119 : f32 to vector<8x128xf32>
    %1125 = arith.mulf %1124, %1 : vector<8x128xf32>
    %1126 = arith.addf %1123, %1125 : vector<8x128xf32>
    %1127 = vector.broadcast %1120 : f32 to vector<8x128xf32>
    %1128 = arith.mulf %1127, %2 : vector<8x128xf32>
    %1129 = arith.addf %1126, %1128 : vector<8x128xf32>
    %1130 = vector.broadcast %1118 : f32 to vector<8x128xf32>
    %1131 = arith.mulf %1130, %1 : vector<8x128xf32>
    %1132 = vector.broadcast %1119 : f32 to vector<8x128xf32>
    %1133 = arith.mulf %1132, %2 : vector<8x128xf32>
    %1134 = arith.addf %1131, %1133 : vector<8x128xf32>
    %1135 = vector.broadcast %1120 : f32 to vector<8x128xf32>
    %1136 = arith.mulf %1135, %3 : vector<8x128xf32>
    %1137 = arith.addf %1134, %1136 : vector<8x128xf32>
    %1138 = arith.maximumf %1129, %1137 : vector<8x128xf32>
    %1139 = vector.broadcast %1121 : f32 to vector<8x128xf32>
    %1140 = arith.addf %1138, %1139 : vector<8x128xf32>
    %cst_548 = arith.constant 0.000000e+00 : f32
    %1141 = vector.broadcast %cst_548 : f32 to vector<8x128xf32>
    %1142 = arith.maximumf %1140, %1141 : vector<8x128xf32>
    %c36_549 = arith.constant 36 : index
    %c0_550 = arith.constant 0 : index
    %c0_551 = arith.constant 0 : index
    %1143 = vector.load %arg4[%c36_549, %c0_550, %c0_551] : memref<64x128x128xf32, #tpu.memory_space<vmem>>, vector<1x128x128xf32>
    %1144 = vector.shape_cast %1143 : vector<1x128x128xf32> to vector<128x128xf32>
    %cst_552 = arith.constant dense<0.000000e+00> : vector<8x128xf32>
    %1145 = tpu.matmul %1142, %1144, %cst_552 {dimension_numbers = #tpu.dot_dimension_numbers<[1], [0], [0], [1], [0, 0, 1, 1], [], []>} : vector<8x128xf32>, vector<128x128xf32>, vector<8x128xf32> -> vector<8x128xf32>
    %c0_553 = arith.constant 0 : index
    %c0_554 = arith.constant 0 : index
    %1146 = vector.load %arg9[%c0_553, %c0_554] : memref<8x128xf32, #tpu.memory_space<vmem>>, vector<8x128xf32>
    %1147 = arith.addf %1146, %1145 : vector<8x128xf32>
    %c0_555 = arith.constant 0 : index
    %c0_556 = arith.constant 0 : index
    %1148 = vector.load %arg9[%c0_555, %c0_556] : memref<8x128xf32, #tpu.memory_space<vmem>>, vector<8x128xf32>
    tpu.vector_store %arg9[%c0_555, %c0_556], %1147 {strides = array<i32>} : memref<8x128xf32, #tpu.memory_space<vmem>>, vector<8x128xf32>,
    %c0_557 = arith.constant 0 : index
    %c37 = arith.constant 37 : index
    %1149 = memref.load %arg2[%c0_557, %c37] : memref<3x64xf32, #tpu.memory_space<smem>>
    %c1_558 = arith.constant 1 : index
    %c37_559 = arith.constant 37 : index
    %1150 = memref.load %arg2[%c1_558, %c37_559] : memref<3x64xf32, #tpu.memory_space<smem>>
    %c2_560 = arith.constant 2 : index
    %c37_561 = arith.constant 37 : index
    %1151 = memref.load %arg2[%c2_560, %c37_561] : memref<3x64xf32, #tpu.memory_space<smem>>
    %c37_562 = arith.constant 37 : index
    %1152 = memref.load %arg3[%c37_562] : memref<64xf32, #tpu.memory_space<smem>>
    %1153 = vector.broadcast %1149 : f32 to vector<8x128xf32>
    %1154 = arith.mulf %1153, %0 : vector<8x128xf32>
    %1155 = vector.broadcast %1150 : f32 to vector<8x128xf32>
    %1156 = arith.mulf %1155, %1 : vector<8x128xf32>
    %1157 = arith.addf %1154, %1156 : vector<8x128xf32>
    %1158 = vector.broadcast %1151 : f32 to vector<8x128xf32>
    %1159 = arith.mulf %1158, %2 : vector<8x128xf32>
    %1160 = arith.addf %1157, %1159 : vector<8x128xf32>
    %1161 = vector.broadcast %1149 : f32 to vector<8x128xf32>
    %1162 = arith.mulf %1161, %1 : vector<8x128xf32>
    %1163 = vector.broadcast %1150 : f32 to vector<8x128xf32>
    %1164 = arith.mulf %1163, %2 : vector<8x128xf32>
    %1165 = arith.addf %1162, %1164 : vector<8x128xf32>
    %1166 = vector.broadcast %1151 : f32 to vector<8x128xf32>
    %1167 = arith.mulf %1166, %3 : vector<8x128xf32>
    %1168 = arith.addf %1165, %1167 : vector<8x128xf32>
    %1169 = arith.maximumf %1160, %1168 : vector<8x128xf32>
    %1170 = vector.broadcast %1152 : f32 to vector<8x128xf32>
    %1171 = arith.addf %1169, %1170 : vector<8x128xf32>
    %cst_563 = arith.constant 0.000000e+00 : f32
    %1172 = vector.broadcast %cst_563 : f32 to vector<8x128xf32>
    %1173 = arith.maximumf %1171, %1172 : vector<8x128xf32>
    %c37_564 = arith.constant 37 : index
    %c0_565 = arith.constant 0 : index
    %c0_566 = arith.constant 0 : index
    %1174 = vector.load %arg4[%c37_564, %c0_565, %c0_566] : memref<64x128x128xf32, #tpu.memory_space<vmem>>, vector<1x128x128xf32>
    %1175 = vector.shape_cast %1174 : vector<1x128x128xf32> to vector<128x128xf32>
    %cst_567 = arith.constant dense<0.000000e+00> : vector<8x128xf32>
    %1176 = tpu.matmul %1173, %1175, %cst_567 {dimension_numbers = #tpu.dot_dimension_numbers<[1], [0], [0], [1], [0, 0, 1, 1], [], []>} : vector<8x128xf32>, vector<128x128xf32>, vector<8x128xf32> -> vector<8x128xf32>
    %c0_568 = arith.constant 0 : index
    %c0_569 = arith.constant 0 : index
    %1177 = vector.load %arg9[%c0_568, %c0_569] : memref<8x128xf32, #tpu.memory_space<vmem>>, vector<8x128xf32>
    %1178 = arith.addf %1177, %1176 : vector<8x128xf32>
    %c0_570 = arith.constant 0 : index
    %c0_571 = arith.constant 0 : index
    %1179 = vector.load %arg9[%c0_570, %c0_571] : memref<8x128xf32, #tpu.memory_space<vmem>>, vector<8x128xf32>
    tpu.vector_store %arg9[%c0_570, %c0_571], %1178 {strides = array<i32>} : memref<8x128xf32, #tpu.memory_space<vmem>>, vector<8x128xf32>,
    %c0_572 = arith.constant 0 : index
    %c38 = arith.constant 38 : index
    %1180 = memref.load %arg2[%c0_572, %c38] : memref<3x64xf32, #tpu.memory_space<smem>>
    %c1_573 = arith.constant 1 : index
    %c38_574 = arith.constant 38 : index
    %1181 = memref.load %arg2[%c1_573, %c38_574] : memref<3x64xf32, #tpu.memory_space<smem>>
    %c2_575 = arith.constant 2 : index
    %c38_576 = arith.constant 38 : index
    %1182 = memref.load %arg2[%c2_575, %c38_576] : memref<3x64xf32, #tpu.memory_space<smem>>
    %c38_577 = arith.constant 38 : index
    %1183 = memref.load %arg3[%c38_577] : memref<64xf32, #tpu.memory_space<smem>>
    %1184 = vector.broadcast %1180 : f32 to vector<8x128xf32>
    %1185 = arith.mulf %1184, %0 : vector<8x128xf32>
    %1186 = vector.broadcast %1181 : f32 to vector<8x128xf32>
    %1187 = arith.mulf %1186, %1 : vector<8x128xf32>
    %1188 = arith.addf %1185, %1187 : vector<8x128xf32>
    %1189 = vector.broadcast %1182 : f32 to vector<8x128xf32>
    %1190 = arith.mulf %1189, %2 : vector<8x128xf32>
    %1191 = arith.addf %1188, %1190 : vector<8x128xf32>
    %1192 = vector.broadcast %1180 : f32 to vector<8x128xf32>
    %1193 = arith.mulf %1192, %1 : vector<8x128xf32>
    %1194 = vector.broadcast %1181 : f32 to vector<8x128xf32>
    %1195 = arith.mulf %1194, %2 : vector<8x128xf32>
    %1196 = arith.addf %1193, %1195 : vector<8x128xf32>
    %1197 = vector.broadcast %1182 : f32 to vector<8x128xf32>
    %1198 = arith.mulf %1197, %3 : vector<8x128xf32>
    %1199 = arith.addf %1196, %1198 : vector<8x128xf32>
    %1200 = arith.maximumf %1191, %1199 : vector<8x128xf32>
    %1201 = vector.broadcast %1183 : f32 to vector<8x128xf32>
    %1202 = arith.addf %1200, %1201 : vector<8x128xf32>
    %cst_578 = arith.constant 0.000000e+00 : f32
    %1203 = vector.broadcast %cst_578 : f32 to vector<8x128xf32>
    %1204 = arith.maximumf %1202, %1203 : vector<8x128xf32>
    %c38_579 = arith.constant 38 : index
    %c0_580 = arith.constant 0 : index
    %c0_581 = arith.constant 0 : index
    %1205 = vector.load %arg4[%c38_579, %c0_580, %c0_581] : memref<64x128x128xf32, #tpu.memory_space<vmem>>, vector<1x128x128xf32>
    %1206 = vector.shape_cast %1205 : vector<1x128x128xf32> to vector<128x128xf32>
    %cst_582 = arith.constant dense<0.000000e+00> : vector<8x128xf32>
    %1207 = tpu.matmul %1204, %1206, %cst_582 {dimension_numbers = #tpu.dot_dimension_numbers<[1], [0], [0], [1], [0, 0, 1, 1], [], []>} : vector<8x128xf32>, vector<128x128xf32>, vector<8x128xf32> -> vector<8x128xf32>
    %c0_583 = arith.constant 0 : index
    %c0_584 = arith.constant 0 : index
    %1208 = vector.load %arg9[%c0_583, %c0_584] : memref<8x128xf32, #tpu.memory_space<vmem>>, vector<8x128xf32>
    %1209 = arith.addf %1208, %1207 : vector<8x128xf32>
    %c0_585 = arith.constant 0 : index
    %c0_586 = arith.constant 0 : index
    %1210 = vector.load %arg9[%c0_585, %c0_586] : memref<8x128xf32, #tpu.memory_space<vmem>>, vector<8x128xf32>
    tpu.vector_store %arg9[%c0_585, %c0_586], %1209 {strides = array<i32>} : memref<8x128xf32, #tpu.memory_space<vmem>>, vector<8x128xf32>,
    %c0_587 = arith.constant 0 : index
    %c39 = arith.constant 39 : index
    %1211 = memref.load %arg2[%c0_587, %c39] : memref<3x64xf32, #tpu.memory_space<smem>>
    %c1_588 = arith.constant 1 : index
    %c39_589 = arith.constant 39 : index
    %1212 = memref.load %arg2[%c1_588, %c39_589] : memref<3x64xf32, #tpu.memory_space<smem>>
    %c2_590 = arith.constant 2 : index
    %c39_591 = arith.constant 39 : index
    %1213 = memref.load %arg2[%c2_590, %c39_591] : memref<3x64xf32, #tpu.memory_space<smem>>
    %c39_592 = arith.constant 39 : index
    %1214 = memref.load %arg3[%c39_592] : memref<64xf32, #tpu.memory_space<smem>>
    %1215 = vector.broadcast %1211 : f32 to vector<8x128xf32>
    %1216 = arith.mulf %1215, %0 : vector<8x128xf32>
    %1217 = vector.broadcast %1212 : f32 to vector<8x128xf32>
    %1218 = arith.mulf %1217, %1 : vector<8x128xf32>
    %1219 = arith.addf %1216, %1218 : vector<8x128xf32>
    %1220 = vector.broadcast %1213 : f32 to vector<8x128xf32>
    %1221 = arith.mulf %1220, %2 : vector<8x128xf32>
    %1222 = arith.addf %1219, %1221 : vector<8x128xf32>
    %1223 = vector.broadcast %1211 : f32 to vector<8x128xf32>
    %1224 = arith.mulf %1223, %1 : vector<8x128xf32>
    %1225 = vector.broadcast %1212 : f32 to vector<8x128xf32>
    %1226 = arith.mulf %1225, %2 : vector<8x128xf32>
    %1227 = arith.addf %1224, %1226 : vector<8x128xf32>
    %1228 = vector.broadcast %1213 : f32 to vector<8x128xf32>
    %1229 = arith.mulf %1228, %3 : vector<8x128xf32>
    %1230 = arith.addf %1227, %1229 : vector<8x128xf32>
    %1231 = arith.maximumf %1222, %1230 : vector<8x128xf32>
    %1232 = vector.broadcast %1214 : f32 to vector<8x128xf32>
    %1233 = arith.addf %1231, %1232 : vector<8x128xf32>
    %cst_593 = arith.constant 0.000000e+00 : f32
    %1234 = vector.broadcast %cst_593 : f32 to vector<8x128xf32>
    %1235 = arith.maximumf %1233, %1234 : vector<8x128xf32>
    %c39_594 = arith.constant 39 : index
    %c0_595 = arith.constant 0 : index
    %c0_596 = arith.constant 0 : index
    %1236 = vector.load %arg4[%c39_594, %c0_595, %c0_596] : memref<64x128x128xf32, #tpu.memory_space<vmem>>, vector<1x128x128xf32>
    %1237 = vector.shape_cast %1236 : vector<1x128x128xf32> to vector<128x128xf32>
    %cst_597 = arith.constant dense<0.000000e+00> : vector<8x128xf32>
    %1238 = tpu.matmul %1235, %1237, %cst_597 {dimension_numbers = #tpu.dot_dimension_numbers<[1], [0], [0], [1], [0, 0, 1, 1], [], []>} : vector<8x128xf32>, vector<128x128xf32>, vector<8x128xf32> -> vector<8x128xf32>
    %c0_598 = arith.constant 0 : index
    %c0_599 = arith.constant 0 : index
    %1239 = vector.load %arg9[%c0_598, %c0_599] : memref<8x128xf32, #tpu.memory_space<vmem>>, vector<8x128xf32>
    %1240 = arith.addf %1239, %1238 : vector<8x128xf32>
    %c0_600 = arith.constant 0 : index
    %c0_601 = arith.constant 0 : index
    %1241 = vector.load %arg9[%c0_600, %c0_601] : memref<8x128xf32, #tpu.memory_space<vmem>>, vector<8x128xf32>
    tpu.vector_store %arg9[%c0_600, %c0_601], %1240 {strides = array<i32>} : memref<8x128xf32, #tpu.memory_space<vmem>>, vector<8x128xf32>,
    %c0_602 = arith.constant 0 : index
    %c40 = arith.constant 40 : index
    %1242 = memref.load %arg2[%c0_602, %c40] : memref<3x64xf32, #tpu.memory_space<smem>>
    %c1_603 = arith.constant 1 : index
    %c40_604 = arith.constant 40 : index
    %1243 = memref.load %arg2[%c1_603, %c40_604] : memref<3x64xf32, #tpu.memory_space<smem>>
    %c2_605 = arith.constant 2 : index
    %c40_606 = arith.constant 40 : index
    %1244 = memref.load %arg2[%c2_605, %c40_606] : memref<3x64xf32, #tpu.memory_space<smem>>
    %c40_607 = arith.constant 40 : index
    %1245 = memref.load %arg3[%c40_607] : memref<64xf32, #tpu.memory_space<smem>>
    %1246 = vector.broadcast %1242 : f32 to vector<8x128xf32>
    %1247 = arith.mulf %1246, %0 : vector<8x128xf32>
    %1248 = vector.broadcast %1243 : f32 to vector<8x128xf32>
    %1249 = arith.mulf %1248, %1 : vector<8x128xf32>
    %1250 = arith.addf %1247, %1249 : vector<8x128xf32>
    %1251 = vector.broadcast %1244 : f32 to vector<8x128xf32>
    %1252 = arith.mulf %1251, %2 : vector<8x128xf32>
    %1253 = arith.addf %1250, %1252 : vector<8x128xf32>
    %1254 = vector.broadcast %1242 : f32 to vector<8x128xf32>
    %1255 = arith.mulf %1254, %1 : vector<8x128xf32>
    %1256 = vector.broadcast %1243 : f32 to vector<8x128xf32>
    %1257 = arith.mulf %1256, %2 : vector<8x128xf32>
    %1258 = arith.addf %1255, %1257 : vector<8x128xf32>
    %1259 = vector.broadcast %1244 : f32 to vector<8x128xf32>
    %1260 = arith.mulf %1259, %3 : vector<8x128xf32>
    %1261 = arith.addf %1258, %1260 : vector<8x128xf32>
    %1262 = arith.maximumf %1253, %1261 : vector<8x128xf32>
    %1263 = vector.broadcast %1245 : f32 to vector<8x128xf32>
    %1264 = arith.addf %1262, %1263 : vector<8x128xf32>
    %cst_608 = arith.constant 0.000000e+00 : f32
    %1265 = vector.broadcast %cst_608 : f32 to vector<8x128xf32>
    %1266 = arith.maximumf %1264, %1265 : vector<8x128xf32>
    %c40_609 = arith.constant 40 : index
    %c0_610 = arith.constant 0 : index
    %c0_611 = arith.constant 0 : index
    %1267 = vector.load %arg4[%c40_609, %c0_610, %c0_611] : memref<64x128x128xf32, #tpu.memory_space<vmem>>, vector<1x128x128xf32>
    %1268 = vector.shape_cast %1267 : vector<1x128x128xf32> to vector<128x128xf32>
    %cst_612 = arith.constant dense<0.000000e+00> : vector<8x128xf32>
    %1269 = tpu.matmul %1266, %1268, %cst_612 {dimension_numbers = #tpu.dot_dimension_numbers<[1], [0], [0], [1], [0, 0, 1, 1], [], []>} : vector<8x128xf32>, vector<128x128xf32>, vector<8x128xf32> -> vector<8x128xf32>
    %c0_613 = arith.constant 0 : index
    %c0_614 = arith.constant 0 : index
    %1270 = vector.load %arg9[%c0_613, %c0_614] : memref<8x128xf32, #tpu.memory_space<vmem>>, vector<8x128xf32>
    %1271 = arith.addf %1270, %1269 : vector<8x128xf32>
    %c0_615 = arith.constant 0 : index
    %c0_616 = arith.constant 0 : index
    %1272 = vector.load %arg9[%c0_615, %c0_616] : memref<8x128xf32, #tpu.memory_space<vmem>>, vector<8x128xf32>
    tpu.vector_store %arg9[%c0_615, %c0_616], %1271 {strides = array<i32>} : memref<8x128xf32, #tpu.memory_space<vmem>>, vector<8x128xf32>,
    %c0_617 = arith.constant 0 : index
    %c41 = arith.constant 41 : index
    %1273 = memref.load %arg2[%c0_617, %c41] : memref<3x64xf32, #tpu.memory_space<smem>>
    %c1_618 = arith.constant 1 : index
    %c41_619 = arith.constant 41 : index
    %1274 = memref.load %arg2[%c1_618, %c41_619] : memref<3x64xf32, #tpu.memory_space<smem>>
    %c2_620 = arith.constant 2 : index
    %c41_621 = arith.constant 41 : index
    %1275 = memref.load %arg2[%c2_620, %c41_621] : memref<3x64xf32, #tpu.memory_space<smem>>
    %c41_622 = arith.constant 41 : index
    %1276 = memref.load %arg3[%c41_622] : memref<64xf32, #tpu.memory_space<smem>>
    %1277 = vector.broadcast %1273 : f32 to vector<8x128xf32>
    %1278 = arith.mulf %1277, %0 : vector<8x128xf32>
    %1279 = vector.broadcast %1274 : f32 to vector<8x128xf32>
    %1280 = arith.mulf %1279, %1 : vector<8x128xf32>
    %1281 = arith.addf %1278, %1280 : vector<8x128xf32>
    %1282 = vector.broadcast %1275 : f32 to vector<8x128xf32>
    %1283 = arith.mulf %1282, %2 : vector<8x128xf32>
    %1284 = arith.addf %1281, %1283 : vector<8x128xf32>
    %1285 = vector.broadcast %1273 : f32 to vector<8x128xf32>
    %1286 = arith.mulf %1285, %1 : vector<8x128xf32>
    %1287 = vector.broadcast %1274 : f32 to vector<8x128xf32>
    %1288 = arith.mulf %1287, %2 : vector<8x128xf32>
    %1289 = arith.addf %1286, %1288 : vector<8x128xf32>
    %1290 = vector.broadcast %1275 : f32 to vector<8x128xf32>
    %1291 = arith.mulf %1290, %3 : vector<8x128xf32>
    %1292 = arith.addf %1289, %1291 : vector<8x128xf32>
    %1293 = arith.maximumf %1284, %1292 : vector<8x128xf32>
    %1294 = vector.broadcast %1276 : f32 to vector<8x128xf32>
    %1295 = arith.addf %1293, %1294 : vector<8x128xf32>
    %cst_623 = arith.constant 0.000000e+00 : f32
    %1296 = vector.broadcast %cst_623 : f32 to vector<8x128xf32>
    %1297 = arith.maximumf %1295, %1296 : vector<8x128xf32>
    %c41_624 = arith.constant 41 : index
    %c0_625 = arith.constant 0 : index
    %c0_626 = arith.constant 0 : index
    %1298 = vector.load %arg4[%c41_624, %c0_625, %c0_626] : memref<64x128x128xf32, #tpu.memory_space<vmem>>, vector<1x128x128xf32>
    %1299 = vector.shape_cast %1298 : vector<1x128x128xf32> to vector<128x128xf32>
    %cst_627 = arith.constant dense<0.000000e+00> : vector<8x128xf32>
    %1300 = tpu.matmul %1297, %1299, %cst_627 {dimension_numbers = #tpu.dot_dimension_numbers<[1], [0], [0], [1], [0, 0, 1, 1], [], []>} : vector<8x128xf32>, vector<128x128xf32>, vector<8x128xf32> -> vector<8x128xf32>
    %c0_628 = arith.constant 0 : index
    %c0_629 = arith.constant 0 : index
    %1301 = vector.load %arg9[%c0_628, %c0_629] : memref<8x128xf32, #tpu.memory_space<vmem>>, vector<8x128xf32>
    %1302 = arith.addf %1301, %1300 : vector<8x128xf32>
    %c0_630 = arith.constant 0 : index
    %c0_631 = arith.constant 0 : index
    %1303 = vector.load %arg9[%c0_630, %c0_631] : memref<8x128xf32, #tpu.memory_space<vmem>>, vector<8x128xf32>
    tpu.vector_store %arg9[%c0_630, %c0_631], %1302 {strides = array<i32>} : memref<8x128xf32, #tpu.memory_space<vmem>>, vector<8x128xf32>,
    %c0_632 = arith.constant 0 : index
    %c42 = arith.constant 42 : index
    %1304 = memref.load %arg2[%c0_632, %c42] : memref<3x64xf32, #tpu.memory_space<smem>>
    %c1_633 = arith.constant 1 : index
    %c42_634 = arith.constant 42 : index
    %1305 = memref.load %arg2[%c1_633, %c42_634] : memref<3x64xf32, #tpu.memory_space<smem>>
    %c2_635 = arith.constant 2 : index
    %c42_636 = arith.constant 42 : index
    %1306 = memref.load %arg2[%c2_635, %c42_636] : memref<3x64xf32, #tpu.memory_space<smem>>
    %c42_637 = arith.constant 42 : index
    %1307 = memref.load %arg3[%c42_637] : memref<64xf32, #tpu.memory_space<smem>>
    %1308 = vector.broadcast %1304 : f32 to vector<8x128xf32>
    %1309 = arith.mulf %1308, %0 : vector<8x128xf32>
    %1310 = vector.broadcast %1305 : f32 to vector<8x128xf32>
    %1311 = arith.mulf %1310, %1 : vector<8x128xf32>
    %1312 = arith.addf %1309, %1311 : vector<8x128xf32>
    %1313 = vector.broadcast %1306 : f32 to vector<8x128xf32>
    %1314 = arith.mulf %1313, %2 : vector<8x128xf32>
    %1315 = arith.addf %1312, %1314 : vector<8x128xf32>
    %1316 = vector.broadcast %1304 : f32 to vector<8x128xf32>
    %1317 = arith.mulf %1316, %1 : vector<8x128xf32>
    %1318 = vector.broadcast %1305 : f32 to vector<8x128xf32>
    %1319 = arith.mulf %1318, %2 : vector<8x128xf32>
    %1320 = arith.addf %1317, %1319 : vector<8x128xf32>
    %1321 = vector.broadcast %1306 : f32 to vector<8x128xf32>
    %1322 = arith.mulf %1321, %3 : vector<8x128xf32>
    %1323 = arith.addf %1320, %1322 : vector<8x128xf32>
    %1324 = arith.maximumf %1315, %1323 : vector<8x128xf32>
    %1325 = vector.broadcast %1307 : f32 to vector<8x128xf32>
    %1326 = arith.addf %1324, %1325 : vector<8x128xf32>
    %cst_638 = arith.constant 0.000000e+00 : f32
    %1327 = vector.broadcast %cst_638 : f32 to vector<8x128xf32>
    %1328 = arith.maximumf %1326, %1327 : vector<8x128xf32>
    %c42_639 = arith.constant 42 : index
    %c0_640 = arith.constant 0 : index
    %c0_641 = arith.constant 0 : index
    %1329 = vector.load %arg4[%c42_639, %c0_640, %c0_641] : memref<64x128x128xf32, #tpu.memory_space<vmem>>, vector<1x128x128xf32>
    %1330 = vector.shape_cast %1329 : vector<1x128x128xf32> to vector<128x128xf32>
    %cst_642 = arith.constant dense<0.000000e+00> : vector<8x128xf32>
    %1331 = tpu.matmul %1328, %1330, %cst_642 {dimension_numbers = #tpu.dot_dimension_numbers<[1], [0], [0], [1], [0, 0, 1, 1], [], []>} : vector<8x128xf32>, vector<128x128xf32>, vector<8x128xf32> -> vector<8x128xf32>
    %c0_643 = arith.constant 0 : index
    %c0_644 = arith.constant 0 : index
    %1332 = vector.load %arg9[%c0_643, %c0_644] : memref<8x128xf32, #tpu.memory_space<vmem>>, vector<8x128xf32>
    %1333 = arith.addf %1332, %1331 : vector<8x128xf32>
    %c0_645 = arith.constant 0 : index
    %c0_646 = arith.constant 0 : index
    %1334 = vector.load %arg9[%c0_645, %c0_646] : memref<8x128xf32, #tpu.memory_space<vmem>>, vector<8x128xf32>
    tpu.vector_store %arg9[%c0_645, %c0_646], %1333 {strides = array<i32>} : memref<8x128xf32, #tpu.memory_space<vmem>>, vector<8x128xf32>,
    %c0_647 = arith.constant 0 : index
    %c43 = arith.constant 43 : index
    %1335 = memref.load %arg2[%c0_647, %c43] : memref<3x64xf32, #tpu.memory_space<smem>>
    %c1_648 = arith.constant 1 : index
    %c43_649 = arith.constant 43 : index
    %1336 = memref.load %arg2[%c1_648, %c43_649] : memref<3x64xf32, #tpu.memory_space<smem>>
    %c2_650 = arith.constant 2 : index
    %c43_651 = arith.constant 43 : index
    %1337 = memref.load %arg2[%c2_650, %c43_651] : memref<3x64xf32, #tpu.memory_space<smem>>
    %c43_652 = arith.constant 43 : index
    %1338 = memref.load %arg3[%c43_652] : memref<64xf32, #tpu.memory_space<smem>>
    %1339 = vector.broadcast %1335 : f32 to vector<8x128xf32>
    %1340 = arith.mulf %1339, %0 : vector<8x128xf32>
    %1341 = vector.broadcast %1336 : f32 to vector<8x128xf32>
    %1342 = arith.mulf %1341, %1 : vector<8x128xf32>
    %1343 = arith.addf %1340, %1342 : vector<8x128xf32>
    %1344 = vector.broadcast %1337 : f32 to vector<8x128xf32>
    %1345 = arith.mulf %1344, %2 : vector<8x128xf32>
    %1346 = arith.addf %1343, %1345 : vector<8x128xf32>
    %1347 = vector.broadcast %1335 : f32 to vector<8x128xf32>
    %1348 = arith.mulf %1347, %1 : vector<8x128xf32>
    %1349 = vector.broadcast %1336 : f32 to vector<8x128xf32>
    %1350 = arith.mulf %1349, %2 : vector<8x128xf32>
    %1351 = arith.addf %1348, %1350 : vector<8x128xf32>
    %1352 = vector.broadcast %1337 : f32 to vector<8x128xf32>
    %1353 = arith.mulf %1352, %3 : vector<8x128xf32>
    %1354 = arith.addf %1351, %1353 : vector<8x128xf32>
    %1355 = arith.maximumf %1346, %1354 : vector<8x128xf32>
    %1356 = vector.broadcast %1338 : f32 to vector<8x128xf32>
    %1357 = arith.addf %1355, %1356 : vector<8x128xf32>
    %cst_653 = arith.constant 0.000000e+00 : f32
    %1358 = vector.broadcast %cst_653 : f32 to vector<8x128xf32>
    %1359 = arith.maximumf %1357, %1358 : vector<8x128xf32>
    %c43_654 = arith.constant 43 : index
    %c0_655 = arith.constant 0 : index
    %c0_656 = arith.constant 0 : index
    %1360 = vector.load %arg4[%c43_654, %c0_655, %c0_656] : memref<64x128x128xf32, #tpu.memory_space<vmem>>, vector<1x128x128xf32>
    %1361 = vector.shape_cast %1360 : vector<1x128x128xf32> to vector<128x128xf32>
    %cst_657 = arith.constant dense<0.000000e+00> : vector<8x128xf32>
    %1362 = tpu.matmul %1359, %1361, %cst_657 {dimension_numbers = #tpu.dot_dimension_numbers<[1], [0], [0], [1], [0, 0, 1, 1], [], []>} : vector<8x128xf32>, vector<128x128xf32>, vector<8x128xf32> -> vector<8x128xf32>
    %c0_658 = arith.constant 0 : index
    %c0_659 = arith.constant 0 : index
    %1363 = vector.load %arg9[%c0_658, %c0_659] : memref<8x128xf32, #tpu.memory_space<vmem>>, vector<8x128xf32>
    %1364 = arith.addf %1363, %1362 : vector<8x128xf32>
    %c0_660 = arith.constant 0 : index
    %c0_661 = arith.constant 0 : index
    %1365 = vector.load %arg9[%c0_660, %c0_661] : memref<8x128xf32, #tpu.memory_space<vmem>>, vector<8x128xf32>
    tpu.vector_store %arg9[%c0_660, %c0_661], %1364 {strides = array<i32>} : memref<8x128xf32, #tpu.memory_space<vmem>>, vector<8x128xf32>,
    %c0_662 = arith.constant 0 : index
    %c44 = arith.constant 44 : index
    %1366 = memref.load %arg2[%c0_662, %c44] : memref<3x64xf32, #tpu.memory_space<smem>>
    %c1_663 = arith.constant 1 : index
    %c44_664 = arith.constant 44 : index
    %1367 = memref.load %arg2[%c1_663, %c44_664] : memref<3x64xf32, #tpu.memory_space<smem>>
    %c2_665 = arith.constant 2 : index
    %c44_666 = arith.constant 44 : index
    %1368 = memref.load %arg2[%c2_665, %c44_666] : memref<3x64xf32, #tpu.memory_space<smem>>
    %c44_667 = arith.constant 44 : index
    %1369 = memref.load %arg3[%c44_667] : memref<64xf32, #tpu.memory_space<smem>>
    %1370 = vector.broadcast %1366 : f32 to vector<8x128xf32>
    %1371 = arith.mulf %1370, %0 : vector<8x128xf32>
    %1372 = vector.broadcast %1367 : f32 to vector<8x128xf32>
    %1373 = arith.mulf %1372, %1 : vector<8x128xf32>
    %1374 = arith.addf %1371, %1373 : vector<8x128xf32>
    %1375 = vector.broadcast %1368 : f32 to vector<8x128xf32>
    %1376 = arith.mulf %1375, %2 : vector<8x128xf32>
    %1377 = arith.addf %1374, %1376 : vector<8x128xf32>
    %1378 = vector.broadcast %1366 : f32 to vector<8x128xf32>
    %1379 = arith.mulf %1378, %1 : vector<8x128xf32>
    %1380 = vector.broadcast %1367 : f32 to vector<8x128xf32>
    %1381 = arith.mulf %1380, %2 : vector<8x128xf32>
    %1382 = arith.addf %1379, %1381 : vector<8x128xf32>
    %1383 = vector.broadcast %1368 : f32 to vector<8x128xf32>
    %1384 = arith.mulf %1383, %3 : vector<8x128xf32>
    %1385 = arith.addf %1382, %1384 : vector<8x128xf32>
    %1386 = arith.maximumf %1377, %1385 : vector<8x128xf32>
    %1387 = vector.broadcast %1369 : f32 to vector<8x128xf32>
    %1388 = arith.addf %1386, %1387 : vector<8x128xf32>
    %cst_668 = arith.constant 0.000000e+00 : f32
    %1389 = vector.broadcast %cst_668 : f32 to vector<8x128xf32>
    %1390 = arith.maximumf %1388, %1389 : vector<8x128xf32>
    %c44_669 = arith.constant 44 : index
    %c0_670 = arith.constant 0 : index
    %c0_671 = arith.constant 0 : index
    %1391 = vector.load %arg4[%c44_669, %c0_670, %c0_671] : memref<64x128x128xf32, #tpu.memory_space<vmem>>, vector<1x128x128xf32>
    %1392 = vector.shape_cast %1391 : vector<1x128x128xf32> to vector<128x128xf32>
    %cst_672 = arith.constant dense<0.000000e+00> : vector<8x128xf32>
    %1393 = tpu.matmul %1390, %1392, %cst_672 {dimension_numbers = #tpu.dot_dimension_numbers<[1], [0], [0], [1], [0, 0, 1, 1], [], []>} : vector<8x128xf32>, vector<128x128xf32>, vector<8x128xf32> -> vector<8x128xf32>
    %c0_673 = arith.constant 0 : index
    %c0_674 = arith.constant 0 : index
    %1394 = vector.load %arg9[%c0_673, %c0_674] : memref<8x128xf32, #tpu.memory_space<vmem>>, vector<8x128xf32>
    %1395 = arith.addf %1394, %1393 : vector<8x128xf32>
    %c0_675 = arith.constant 0 : index
    %c0_676 = arith.constant 0 : index
    %1396 = vector.load %arg9[%c0_675, %c0_676] : memref<8x128xf32, #tpu.memory_space<vmem>>, vector<8x128xf32>
    tpu.vector_store %arg9[%c0_675, %c0_676], %1395 {strides = array<i32>} : memref<8x128xf32, #tpu.memory_space<vmem>>, vector<8x128xf32>,
    %c0_677 = arith.constant 0 : index
    %c45 = arith.constant 45 : index
    %1397 = memref.load %arg2[%c0_677, %c45] : memref<3x64xf32, #tpu.memory_space<smem>>
    %c1_678 = arith.constant 1 : index
    %c45_679 = arith.constant 45 : index
    %1398 = memref.load %arg2[%c1_678, %c45_679] : memref<3x64xf32, #tpu.memory_space<smem>>
    %c2_680 = arith.constant 2 : index
    %c45_681 = arith.constant 45 : index
    %1399 = memref.load %arg2[%c2_680, %c45_681] : memref<3x64xf32, #tpu.memory_space<smem>>
    %c45_682 = arith.constant 45 : index
    %1400 = memref.load %arg3[%c45_682] : memref<64xf32, #tpu.memory_space<smem>>
    %1401 = vector.broadcast %1397 : f32 to vector<8x128xf32>
    %1402 = arith.mulf %1401, %0 : vector<8x128xf32>
    %1403 = vector.broadcast %1398 : f32 to vector<8x128xf32>
    %1404 = arith.mulf %1403, %1 : vector<8x128xf32>
    %1405 = arith.addf %1402, %1404 : vector<8x128xf32>
    %1406 = vector.broadcast %1399 : f32 to vector<8x128xf32>
    %1407 = arith.mulf %1406, %2 : vector<8x128xf32>
    %1408 = arith.addf %1405, %1407 : vector<8x128xf32>
    %1409 = vector.broadcast %1397 : f32 to vector<8x128xf32>
    %1410 = arith.mulf %1409, %1 : vector<8x128xf32>
    %1411 = vector.broadcast %1398 : f32 to vector<8x128xf32>
    %1412 = arith.mulf %1411, %2 : vector<8x128xf32>
    %1413 = arith.addf %1410, %1412 : vector<8x128xf32>
    %1414 = vector.broadcast %1399 : f32 to vector<8x128xf32>
    %1415 = arith.mulf %1414, %3 : vector<8x128xf32>
    %1416 = arith.addf %1413, %1415 : vector<8x128xf32>
    %1417 = arith.maximumf %1408, %1416 : vector<8x128xf32>
    %1418 = vector.broadcast %1400 : f32 to vector<8x128xf32>
    %1419 = arith.addf %1417, %1418 : vector<8x128xf32>
    %cst_683 = arith.constant 0.000000e+00 : f32
    %1420 = vector.broadcast %cst_683 : f32 to vector<8x128xf32>
    %1421 = arith.maximumf %1419, %1420 : vector<8x128xf32>
    %c45_684 = arith.constant 45 : index
    %c0_685 = arith.constant 0 : index
    %c0_686 = arith.constant 0 : index
    %1422 = vector.load %arg4[%c45_684, %c0_685, %c0_686] : memref<64x128x128xf32, #tpu.memory_space<vmem>>, vector<1x128x128xf32>
    %1423 = vector.shape_cast %1422 : vector<1x128x128xf32> to vector<128x128xf32>
    %cst_687 = arith.constant dense<0.000000e+00> : vector<8x128xf32>
    %1424 = tpu.matmul %1421, %1423, %cst_687 {dimension_numbers = #tpu.dot_dimension_numbers<[1], [0], [0], [1], [0, 0, 1, 1], [], []>} : vector<8x128xf32>, vector<128x128xf32>, vector<8x128xf32> -> vector<8x128xf32>
    %c0_688 = arith.constant 0 : index
    %c0_689 = arith.constant 0 : index
    %1425 = vector.load %arg9[%c0_688, %c0_689] : memref<8x128xf32, #tpu.memory_space<vmem>>, vector<8x128xf32>
    %1426 = arith.addf %1425, %1424 : vector<8x128xf32>
    %c0_690 = arith.constant 0 : index
    %c0_691 = arith.constant 0 : index
    %1427 = vector.load %arg9[%c0_690, %c0_691] : memref<8x128xf32, #tpu.memory_space<vmem>>, vector<8x128xf32>
    tpu.vector_store %arg9[%c0_690, %c0_691], %1426 {strides = array<i32>} : memref<8x128xf32, #tpu.memory_space<vmem>>, vector<8x128xf32>,
    %c0_692 = arith.constant 0 : index
    %c46 = arith.constant 46 : index
    %1428 = memref.load %arg2[%c0_692, %c46] : memref<3x64xf32, #tpu.memory_space<smem>>
    %c1_693 = arith.constant 1 : index
    %c46_694 = arith.constant 46 : index
    %1429 = memref.load %arg2[%c1_693, %c46_694] : memref<3x64xf32, #tpu.memory_space<smem>>
    %c2_695 = arith.constant 2 : index
    %c46_696 = arith.constant 46 : index
    %1430 = memref.load %arg2[%c2_695, %c46_696] : memref<3x64xf32, #tpu.memory_space<smem>>
    %c46_697 = arith.constant 46 : index
    %1431 = memref.load %arg3[%c46_697] : memref<64xf32, #tpu.memory_space<smem>>
    %1432 = vector.broadcast %1428 : f32 to vector<8x128xf32>
    %1433 = arith.mulf %1432, %0 : vector<8x128xf32>
    %1434 = vector.broadcast %1429 : f32 to vector<8x128xf32>
    %1435 = arith.mulf %1434, %1 : vector<8x128xf32>
    %1436 = arith.addf %1433, %1435 : vector<8x128xf32>
    %1437 = vector.broadcast %1430 : f32 to vector<8x128xf32>
    %1438 = arith.mulf %1437, %2 : vector<8x128xf32>
    %1439 = arith.addf %1436, %1438 : vector<8x128xf32>
    %1440 = vector.broadcast %1428 : f32 to vector<8x128xf32>
    %1441 = arith.mulf %1440, %1 : vector<8x128xf32>
    %1442 = vector.broadcast %1429 : f32 to vector<8x128xf32>
    %1443 = arith.mulf %1442, %2 : vector<8x128xf32>
    %1444 = arith.addf %1441, %1443 : vector<8x128xf32>
    %1445 = vector.broadcast %1430 : f32 to vector<8x128xf32>
    %1446 = arith.mulf %1445, %3 : vector<8x128xf32>
    %1447 = arith.addf %1444, %1446 : vector<8x128xf32>
    %1448 = arith.maximumf %1439, %1447 : vector<8x128xf32>
    %1449 = vector.broadcast %1431 : f32 to vector<8x128xf32>
    %1450 = arith.addf %1448, %1449 : vector<8x128xf32>
    %cst_698 = arith.constant 0.000000e+00 : f32
    %1451 = vector.broadcast %cst_698 : f32 to vector<8x128xf32>
    %1452 = arith.maximumf %1450, %1451 : vector<8x128xf32>
    %c46_699 = arith.constant 46 : index
    %c0_700 = arith.constant 0 : index
    %c0_701 = arith.constant 0 : index
    %1453 = vector.load %arg4[%c46_699, %c0_700, %c0_701] : memref<64x128x128xf32, #tpu.memory_space<vmem>>, vector<1x128x128xf32>
    %1454 = vector.shape_cast %1453 : vector<1x128x128xf32> to vector<128x128xf32>
    %cst_702 = arith.constant dense<0.000000e+00> : vector<8x128xf32>
    %1455 = tpu.matmul %1452, %1454, %cst_702 {dimension_numbers = #tpu.dot_dimension_numbers<[1], [0], [0], [1], [0, 0, 1, 1], [], []>} : vector<8x128xf32>, vector<128x128xf32>, vector<8x128xf32> -> vector<8x128xf32>
    %c0_703 = arith.constant 0 : index
    %c0_704 = arith.constant 0 : index
    %1456 = vector.load %arg9[%c0_703, %c0_704] : memref<8x128xf32, #tpu.memory_space<vmem>>, vector<8x128xf32>
    %1457 = arith.addf %1456, %1455 : vector<8x128xf32>
    %c0_705 = arith.constant 0 : index
    %c0_706 = arith.constant 0 : index
    %1458 = vector.load %arg9[%c0_705, %c0_706] : memref<8x128xf32, #tpu.memory_space<vmem>>, vector<8x128xf32>
    tpu.vector_store %arg9[%c0_705, %c0_706], %1457 {strides = array<i32>} : memref<8x128xf32, #tpu.memory_space<vmem>>, vector<8x128xf32>,
    %c0_707 = arith.constant 0 : index
    %c47 = arith.constant 47 : index
    %1459 = memref.load %arg2[%c0_707, %c47] : memref<3x64xf32, #tpu.memory_space<smem>>
    %c1_708 = arith.constant 1 : index
    %c47_709 = arith.constant 47 : index
    %1460 = memref.load %arg2[%c1_708, %c47_709] : memref<3x64xf32, #tpu.memory_space<smem>>
    %c2_710 = arith.constant 2 : index
    %c47_711 = arith.constant 47 : index
    %1461 = memref.load %arg2[%c2_710, %c47_711] : memref<3x64xf32, #tpu.memory_space<smem>>
    %c47_712 = arith.constant 47 : index
    %1462 = memref.load %arg3[%c47_712] : memref<64xf32, #tpu.memory_space<smem>>
    %1463 = vector.broadcast %1459 : f32 to vector<8x128xf32>
    %1464 = arith.mulf %1463, %0 : vector<8x128xf32>
    %1465 = vector.broadcast %1460 : f32 to vector<8x128xf32>
    %1466 = arith.mulf %1465, %1 : vector<8x128xf32>
    %1467 = arith.addf %1464, %1466 : vector<8x128xf32>
    %1468 = vector.broadcast %1461 : f32 to vector<8x128xf32>
    %1469 = arith.mulf %1468, %2 : vector<8x128xf32>
    %1470 = arith.addf %1467, %1469 : vector<8x128xf32>
    %1471 = vector.broadcast %1459 : f32 to vector<8x128xf32>
    %1472 = arith.mulf %1471, %1 : vector<8x128xf32>
    %1473 = vector.broadcast %1460 : f32 to vector<8x128xf32>
    %1474 = arith.mulf %1473, %2 : vector<8x128xf32>
    %1475 = arith.addf %1472, %1474 : vector<8x128xf32>
    %1476 = vector.broadcast %1461 : f32 to vector<8x128xf32>
    %1477 = arith.mulf %1476, %3 : vector<8x128xf32>
    %1478 = arith.addf %1475, %1477 : vector<8x128xf32>
    %1479 = arith.maximumf %1470, %1478 : vector<8x128xf32>
    %1480 = vector.broadcast %1462 : f32 to vector<8x128xf32>
    %1481 = arith.addf %1479, %1480 : vector<8x128xf32>
    %cst_713 = arith.constant 0.000000e+00 : f32
    %1482 = vector.broadcast %cst_713 : f32 to vector<8x128xf32>
    %1483 = arith.maximumf %1481, %1482 : vector<8x128xf32>
    %c47_714 = arith.constant 47 : index
    %c0_715 = arith.constant 0 : index
    %c0_716 = arith.constant 0 : index
    %1484 = vector.load %arg4[%c47_714, %c0_715, %c0_716] : memref<64x128x128xf32, #tpu.memory_space<vmem>>, vector<1x128x128xf32>
    %1485 = vector.shape_cast %1484 : vector<1x128x128xf32> to vector<128x128xf32>
    %cst_717 = arith.constant dense<0.000000e+00> : vector<8x128xf32>
    %1486 = tpu.matmul %1483, %1485, %cst_717 {dimension_numbers = #tpu.dot_dimension_numbers<[1], [0], [0], [1], [0, 0, 1, 1], [], []>} : vector<8x128xf32>, vector<128x128xf32>, vector<8x128xf32> -> vector<8x128xf32>
    %c0_718 = arith.constant 0 : index
    %c0_719 = arith.constant 0 : index
    %1487 = vector.load %arg9[%c0_718, %c0_719] : memref<8x128xf32, #tpu.memory_space<vmem>>, vector<8x128xf32>
    %1488 = arith.addf %1487, %1486 : vector<8x128xf32>
    %c0_720 = arith.constant 0 : index
    %c0_721 = arith.constant 0 : index
    %1489 = vector.load %arg9[%c0_720, %c0_721] : memref<8x128xf32, #tpu.memory_space<vmem>>, vector<8x128xf32>
    tpu.vector_store %arg9[%c0_720, %c0_721], %1488 {strides = array<i32>} : memref<8x128xf32, #tpu.memory_space<vmem>>, vector<8x128xf32>,
    %c0_722 = arith.constant 0 : index
    %c48 = arith.constant 48 : index
    %1490 = memref.load %arg2[%c0_722, %c48] : memref<3x64xf32, #tpu.memory_space<smem>>
    %c1_723 = arith.constant 1 : index
    %c48_724 = arith.constant 48 : index
    %1491 = memref.load %arg2[%c1_723, %c48_724] : memref<3x64xf32, #tpu.memory_space<smem>>
    %c2_725 = arith.constant 2 : index
    %c48_726 = arith.constant 48 : index
    %1492 = memref.load %arg2[%c2_725, %c48_726] : memref<3x64xf32, #tpu.memory_space<smem>>
    %c48_727 = arith.constant 48 : index
    %1493 = memref.load %arg3[%c48_727] : memref<64xf32, #tpu.memory_space<smem>>
    %1494 = vector.broadcast %1490 : f32 to vector<8x128xf32>
    %1495 = arith.mulf %1494, %0 : vector<8x128xf32>
    %1496 = vector.broadcast %1491 : f32 to vector<8x128xf32>
    %1497 = arith.mulf %1496, %1 : vector<8x128xf32>
    %1498 = arith.addf %1495, %1497 : vector<8x128xf32>
    %1499 = vector.broadcast %1492 : f32 to vector<8x128xf32>
    %1500 = arith.mulf %1499, %2 : vector<8x128xf32>
    %1501 = arith.addf %1498, %1500 : vector<8x128xf32>
    %1502 = vector.broadcast %1490 : f32 to vector<8x128xf32>
    %1503 = arith.mulf %1502, %1 : vector<8x128xf32>
    %1504 = vector.broadcast %1491 : f32 to vector<8x128xf32>
    %1505 = arith.mulf %1504, %2 : vector<8x128xf32>
    %1506 = arith.addf %1503, %1505 : vector<8x128xf32>
    %1507 = vector.broadcast %1492 : f32 to vector<8x128xf32>
    %1508 = arith.mulf %1507, %3 : vector<8x128xf32>
    %1509 = arith.addf %1506, %1508 : vector<8x128xf32>
    %1510 = arith.maximumf %1501, %1509 : vector<8x128xf32>
    %1511 = vector.broadcast %1493 : f32 to vector<8x128xf32>
    %1512 = arith.addf %1510, %1511 : vector<8x128xf32>
    %cst_728 = arith.constant 0.000000e+00 : f32
    %1513 = vector.broadcast %cst_728 : f32 to vector<8x128xf32>
    %1514 = arith.maximumf %1512, %1513 : vector<8x128xf32>
    %c48_729 = arith.constant 48 : index
    %c0_730 = arith.constant 0 : index
    %c0_731 = arith.constant 0 : index
    %1515 = vector.load %arg4[%c48_729, %c0_730, %c0_731] : memref<64x128x128xf32, #tpu.memory_space<vmem>>, vector<1x128x128xf32>
    %1516 = vector.shape_cast %1515 : vector<1x128x128xf32> to vector<128x128xf32>
    %cst_732 = arith.constant dense<0.000000e+00> : vector<8x128xf32>
    %1517 = tpu.matmul %1514, %1516, %cst_732 {dimension_numbers = #tpu.dot_dimension_numbers<[1], [0], [0], [1], [0, 0, 1, 1], [], []>} : vector<8x128xf32>, vector<128x128xf32>, vector<8x128xf32> -> vector<8x128xf32>
    %c0_733 = arith.constant 0 : index
    %c0_734 = arith.constant 0 : index
    %1518 = vector.load %arg9[%c0_733, %c0_734] : memref<8x128xf32, #tpu.memory_space<vmem>>, vector<8x128xf32>
    %1519 = arith.addf %1518, %1517 : vector<8x128xf32>
    %c0_735 = arith.constant 0 : index
    %c0_736 = arith.constant 0 : index
    %1520 = vector.load %arg9[%c0_735, %c0_736] : memref<8x128xf32, #tpu.memory_space<vmem>>, vector<8x128xf32>
    tpu.vector_store %arg9[%c0_735, %c0_736], %1519 {strides = array<i32>} : memref<8x128xf32, #tpu.memory_space<vmem>>, vector<8x128xf32>,
    %c0_737 = arith.constant 0 : index
    %c49 = arith.constant 49 : index
    %1521 = memref.load %arg2[%c0_737, %c49] : memref<3x64xf32, #tpu.memory_space<smem>>
    %c1_738 = arith.constant 1 : index
    %c49_739 = arith.constant 49 : index
    %1522 = memref.load %arg2[%c1_738, %c49_739] : memref<3x64xf32, #tpu.memory_space<smem>>
    %c2_740 = arith.constant 2 : index
    %c49_741 = arith.constant 49 : index
    %1523 = memref.load %arg2[%c2_740, %c49_741] : memref<3x64xf32, #tpu.memory_space<smem>>
    %c49_742 = arith.constant 49 : index
    %1524 = memref.load %arg3[%c49_742] : memref<64xf32, #tpu.memory_space<smem>>
    %1525 = vector.broadcast %1521 : f32 to vector<8x128xf32>
    %1526 = arith.mulf %1525, %0 : vector<8x128xf32>
    %1527 = vector.broadcast %1522 : f32 to vector<8x128xf32>
    %1528 = arith.mulf %1527, %1 : vector<8x128xf32>
    %1529 = arith.addf %1526, %1528 : vector<8x128xf32>
    %1530 = vector.broadcast %1523 : f32 to vector<8x128xf32>
    %1531 = arith.mulf %1530, %2 : vector<8x128xf32>
    %1532 = arith.addf %1529, %1531 : vector<8x128xf32>
    %1533 = vector.broadcast %1521 : f32 to vector<8x128xf32>
    %1534 = arith.mulf %1533, %1 : vector<8x128xf32>
    %1535 = vector.broadcast %1522 : f32 to vector<8x128xf32>
    %1536 = arith.mulf %1535, %2 : vector<8x128xf32>
    %1537 = arith.addf %1534, %1536 : vector<8x128xf32>
    %1538 = vector.broadcast %1523 : f32 to vector<8x128xf32>
    %1539 = arith.mulf %1538, %3 : vector<8x128xf32>
    %1540 = arith.addf %1537, %1539 : vector<8x128xf32>
    %1541 = arith.maximumf %1532, %1540 : vector<8x128xf32>
    %1542 = vector.broadcast %1524 : f32 to vector<8x128xf32>
    %1543 = arith.addf %1541, %1542 : vector<8x128xf32>
    %cst_743 = arith.constant 0.000000e+00 : f32
    %1544 = vector.broadcast %cst_743 : f32 to vector<8x128xf32>
    %1545 = arith.maximumf %1543, %1544 : vector<8x128xf32>
    %c49_744 = arith.constant 49 : index
    %c0_745 = arith.constant 0 : index
    %c0_746 = arith.constant 0 : index
    %1546 = vector.load %arg4[%c49_744, %c0_745, %c0_746] : memref<64x128x128xf32, #tpu.memory_space<vmem>>, vector<1x128x128xf32>
    %1547 = vector.shape_cast %1546 : vector<1x128x128xf32> to vector<128x128xf32>
    %cst_747 = arith.constant dense<0.000000e+00> : vector<8x128xf32>
    %1548 = tpu.matmul %1545, %1547, %cst_747 {dimension_numbers = #tpu.dot_dimension_numbers<[1], [0], [0], [1], [0, 0, 1, 1], [], []>} : vector<8x128xf32>, vector<128x128xf32>, vector<8x128xf32> -> vector<8x128xf32>
    %c0_748 = arith.constant 0 : index
    %c0_749 = arith.constant 0 : index
    %1549 = vector.load %arg9[%c0_748, %c0_749] : memref<8x128xf32, #tpu.memory_space<vmem>>, vector<8x128xf32>
    %1550 = arith.addf %1549, %1548 : vector<8x128xf32>
    %c0_750 = arith.constant 0 : index
    %c0_751 = arith.constant 0 : index
    %1551 = vector.load %arg9[%c0_750, %c0_751] : memref<8x128xf32, #tpu.memory_space<vmem>>, vector<8x128xf32>
    tpu.vector_store %arg9[%c0_750, %c0_751], %1550 {strides = array<i32>} : memref<8x128xf32, #tpu.memory_space<vmem>>, vector<8x128xf32>,
    %c0_752 = arith.constant 0 : index
    %c50 = arith.constant 50 : index
    %1552 = memref.load %arg2[%c0_752, %c50] : memref<3x64xf32, #tpu.memory_space<smem>>
    %c1_753 = arith.constant 1 : index
    %c50_754 = arith.constant 50 : index
    %1553 = memref.load %arg2[%c1_753, %c50_754] : memref<3x64xf32, #tpu.memory_space<smem>>
    %c2_755 = arith.constant 2 : index
    %c50_756 = arith.constant 50 : index
    %1554 = memref.load %arg2[%c2_755, %c50_756] : memref<3x64xf32, #tpu.memory_space<smem>>
    %c50_757 = arith.constant 50 : index
    %1555 = memref.load %arg3[%c50_757] : memref<64xf32, #tpu.memory_space<smem>>
    %1556 = vector.broadcast %1552 : f32 to vector<8x128xf32>
    %1557 = arith.mulf %1556, %0 : vector<8x128xf32>
    %1558 = vector.broadcast %1553 : f32 to vector<8x128xf32>
    %1559 = arith.mulf %1558, %1 : vector<8x128xf32>
    %1560 = arith.addf %1557, %1559 : vector<8x128xf32>
    %1561 = vector.broadcast %1554 : f32 to vector<8x128xf32>
    %1562 = arith.mulf %1561, %2 : vector<8x128xf32>
    %1563 = arith.addf %1560, %1562 : vector<8x128xf32>
    %1564 = vector.broadcast %1552 : f32 to vector<8x128xf32>
    %1565 = arith.mulf %1564, %1 : vector<8x128xf32>
    %1566 = vector.broadcast %1553 : f32 to vector<8x128xf32>
    %1567 = arith.mulf %1566, %2 : vector<8x128xf32>
    %1568 = arith.addf %1565, %1567 : vector<8x128xf32>
    %1569 = vector.broadcast %1554 : f32 to vector<8x128xf32>
    %1570 = arith.mulf %1569, %3 : vector<8x128xf32>
    %1571 = arith.addf %1568, %1570 : vector<8x128xf32>
    %1572 = arith.maximumf %1563, %1571 : vector<8x128xf32>
    %1573 = vector.broadcast %1555 : f32 to vector<8x128xf32>
    %1574 = arith.addf %1572, %1573 : vector<8x128xf32>
    %cst_758 = arith.constant 0.000000e+00 : f32
    %1575 = vector.broadcast %cst_758 : f32 to vector<8x128xf32>
    %1576 = arith.maximumf %1574, %1575 : vector<8x128xf32>
    %c50_759 = arith.constant 50 : index
    %c0_760 = arith.constant 0 : index
    %c0_761 = arith.constant 0 : index
    %1577 = vector.load %arg4[%c50_759, %c0_760, %c0_761] : memref<64x128x128xf32, #tpu.memory_space<vmem>>, vector<1x128x128xf32>
    %1578 = vector.shape_cast %1577 : vector<1x128x128xf32> to vector<128x128xf32>
    %cst_762 = arith.constant dense<0.000000e+00> : vector<8x128xf32>
    %1579 = tpu.matmul %1576, %1578, %cst_762 {dimension_numbers = #tpu.dot_dimension_numbers<[1], [0], [0], [1], [0, 0, 1, 1], [], []>} : vector<8x128xf32>, vector<128x128xf32>, vector<8x128xf32> -> vector<8x128xf32>
    %c0_763 = arith.constant 0 : index
    %c0_764 = arith.constant 0 : index
    %1580 = vector.load %arg9[%c0_763, %c0_764] : memref<8x128xf32, #tpu.memory_space<vmem>>, vector<8x128xf32>
    %1581 = arith.addf %1580, %1579 : vector<8x128xf32>
    %c0_765 = arith.constant 0 : index
    %c0_766 = arith.constant 0 : index
    %1582 = vector.load %arg9[%c0_765, %c0_766] : memref<8x128xf32, #tpu.memory_space<vmem>>, vector<8x128xf32>
    tpu.vector_store %arg9[%c0_765, %c0_766], %1581 {strides = array<i32>} : memref<8x128xf32, #tpu.memory_space<vmem>>, vector<8x128xf32>,
    %c0_767 = arith.constant 0 : index
    %c51 = arith.constant 51 : index
    %1583 = memref.load %arg2[%c0_767, %c51] : memref<3x64xf32, #tpu.memory_space<smem>>
    %c1_768 = arith.constant 1 : index
    %c51_769 = arith.constant 51 : index
    %1584 = memref.load %arg2[%c1_768, %c51_769] : memref<3x64xf32, #tpu.memory_space<smem>>
    %c2_770 = arith.constant 2 : index
    %c51_771 = arith.constant 51 : index
    %1585 = memref.load %arg2[%c2_770, %c51_771] : memref<3x64xf32, #tpu.memory_space<smem>>
    %c51_772 = arith.constant 51 : index
    %1586 = memref.load %arg3[%c51_772] : memref<64xf32, #tpu.memory_space<smem>>
    %1587 = vector.broadcast %1583 : f32 to vector<8x128xf32>
    %1588 = arith.mulf %1587, %0 : vector<8x128xf32>
    %1589 = vector.broadcast %1584 : f32 to vector<8x128xf32>
    %1590 = arith.mulf %1589, %1 : vector<8x128xf32>
    %1591 = arith.addf %1588, %1590 : vector<8x128xf32>
    %1592 = vector.broadcast %1585 : f32 to vector<8x128xf32>
    %1593 = arith.mulf %1592, %2 : vector<8x128xf32>
    %1594 = arith.addf %1591, %1593 : vector<8x128xf32>
    %1595 = vector.broadcast %1583 : f32 to vector<8x128xf32>
    %1596 = arith.mulf %1595, %1 : vector<8x128xf32>
    %1597 = vector.broadcast %1584 : f32 to vector<8x128xf32>
    %1598 = arith.mulf %1597, %2 : vector<8x128xf32>
    %1599 = arith.addf %1596, %1598 : vector<8x128xf32>
    %1600 = vector.broadcast %1585 : f32 to vector<8x128xf32>
    %1601 = arith.mulf %1600, %3 : vector<8x128xf32>
    %1602 = arith.addf %1599, %1601 : vector<8x128xf32>
    %1603 = arith.maximumf %1594, %1602 : vector<8x128xf32>
    %1604 = vector.broadcast %1586 : f32 to vector<8x128xf32>
    %1605 = arith.addf %1603, %1604 : vector<8x128xf32>
    %cst_773 = arith.constant 0.000000e+00 : f32
    %1606 = vector.broadcast %cst_773 : f32 to vector<8x128xf32>
    %1607 = arith.maximumf %1605, %1606 : vector<8x128xf32>
    %c51_774 = arith.constant 51 : index
    %c0_775 = arith.constant 0 : index
    %c0_776 = arith.constant 0 : index
    %1608 = vector.load %arg4[%c51_774, %c0_775, %c0_776] : memref<64x128x128xf32, #tpu.memory_space<vmem>>, vector<1x128x128xf32>
    %1609 = vector.shape_cast %1608 : vector<1x128x128xf32> to vector<128x128xf32>
    %cst_777 = arith.constant dense<0.000000e+00> : vector<8x128xf32>
    %1610 = tpu.matmul %1607, %1609, %cst_777 {dimension_numbers = #tpu.dot_dimension_numbers<[1], [0], [0], [1], [0, 0, 1, 1], [], []>} : vector<8x128xf32>, vector<128x128xf32>, vector<8x128xf32> -> vector<8x128xf32>
    %c0_778 = arith.constant 0 : index
    %c0_779 = arith.constant 0 : index
    %1611 = vector.load %arg9[%c0_778, %c0_779] : memref<8x128xf32, #tpu.memory_space<vmem>>, vector<8x128xf32>
    %1612 = arith.addf %1611, %1610 : vector<8x128xf32>
    %c0_780 = arith.constant 0 : index
    %c0_781 = arith.constant 0 : index
    %1613 = vector.load %arg9[%c0_780, %c0_781] : memref<8x128xf32, #tpu.memory_space<vmem>>, vector<8x128xf32>
    tpu.vector_store %arg9[%c0_780, %c0_781], %1612 {strides = array<i32>} : memref<8x128xf32, #tpu.memory_space<vmem>>, vector<8x128xf32>,
    %c0_782 = arith.constant 0 : index
    %c52 = arith.constant 52 : index
    %1614 = memref.load %arg2[%c0_782, %c52] : memref<3x64xf32, #tpu.memory_space<smem>>
    %c1_783 = arith.constant 1 : index
    %c52_784 = arith.constant 52 : index
    %1615 = memref.load %arg2[%c1_783, %c52_784] : memref<3x64xf32, #tpu.memory_space<smem>>
    %c2_785 = arith.constant 2 : index
    %c52_786 = arith.constant 52 : index
    %1616 = memref.load %arg2[%c2_785, %c52_786] : memref<3x64xf32, #tpu.memory_space<smem>>
    %c52_787 = arith.constant 52 : index
    %1617 = memref.load %arg3[%c52_787] : memref<64xf32, #tpu.memory_space<smem>>
    %1618 = vector.broadcast %1614 : f32 to vector<8x128xf32>
    %1619 = arith.mulf %1618, %0 : vector<8x128xf32>
    %1620 = vector.broadcast %1615 : f32 to vector<8x128xf32>
    %1621 = arith.mulf %1620, %1 : vector<8x128xf32>
    %1622 = arith.addf %1619, %1621 : vector<8x128xf32>
    %1623 = vector.broadcast %1616 : f32 to vector<8x128xf32>
    %1624 = arith.mulf %1623, %2 : vector<8x128xf32>
    %1625 = arith.addf %1622, %1624 : vector<8x128xf32>
    %1626 = vector.broadcast %1614 : f32 to vector<8x128xf32>
    %1627 = arith.mulf %1626, %1 : vector<8x128xf32>
    %1628 = vector.broadcast %1615 : f32 to vector<8x128xf32>
    %1629 = arith.mulf %1628, %2 : vector<8x128xf32>
    %1630 = arith.addf %1627, %1629 : vector<8x128xf32>
    %1631 = vector.broadcast %1616 : f32 to vector<8x128xf32>
    %1632 = arith.mulf %1631, %3 : vector<8x128xf32>
    %1633 = arith.addf %1630, %1632 : vector<8x128xf32>
    %1634 = arith.maximumf %1625, %1633 : vector<8x128xf32>
    %1635 = vector.broadcast %1617 : f32 to vector<8x128xf32>
    %1636 = arith.addf %1634, %1635 : vector<8x128xf32>
    %cst_788 = arith.constant 0.000000e+00 : f32
    %1637 = vector.broadcast %cst_788 : f32 to vector<8x128xf32>
    %1638 = arith.maximumf %1636, %1637 : vector<8x128xf32>
    %c52_789 = arith.constant 52 : index
    %c0_790 = arith.constant 0 : index
    %c0_791 = arith.constant 0 : index
    %1639 = vector.load %arg4[%c52_789, %c0_790, %c0_791] : memref<64x128x128xf32, #tpu.memory_space<vmem>>, vector<1x128x128xf32>
    %1640 = vector.shape_cast %1639 : vector<1x128x128xf32> to vector<128x128xf32>
    %cst_792 = arith.constant dense<0.000000e+00> : vector<8x128xf32>
    %1641 = tpu.matmul %1638, %1640, %cst_792 {dimension_numbers = #tpu.dot_dimension_numbers<[1], [0], [0], [1], [0, 0, 1, 1], [], []>} : vector<8x128xf32>, vector<128x128xf32>, vector<8x128xf32> -> vector<8x128xf32>
    %c0_793 = arith.constant 0 : index
    %c0_794 = arith.constant 0 : index
    %1642 = vector.load %arg9[%c0_793, %c0_794] : memref<8x128xf32, #tpu.memory_space<vmem>>, vector<8x128xf32>
    %1643 = arith.addf %1642, %1641 : vector<8x128xf32>
    %c0_795 = arith.constant 0 : index
    %c0_796 = arith.constant 0 : index
    %1644 = vector.load %arg9[%c0_795, %c0_796] : memref<8x128xf32, #tpu.memory_space<vmem>>, vector<8x128xf32>
    tpu.vector_store %arg9[%c0_795, %c0_796], %1643 {strides = array<i32>} : memref<8x128xf32, #tpu.memory_space<vmem>>, vector<8x128xf32>,
    %c0_797 = arith.constant 0 : index
    %c53 = arith.constant 53 : index
    %1645 = memref.load %arg2[%c0_797, %c53] : memref<3x64xf32, #tpu.memory_space<smem>>
    %c1_798 = arith.constant 1 : index
    %c53_799 = arith.constant 53 : index
    %1646 = memref.load %arg2[%c1_798, %c53_799] : memref<3x64xf32, #tpu.memory_space<smem>>
    %c2_800 = arith.constant 2 : index
    %c53_801 = arith.constant 53 : index
    %1647 = memref.load %arg2[%c2_800, %c53_801] : memref<3x64xf32, #tpu.memory_space<smem>>
    %c53_802 = arith.constant 53 : index
    %1648 = memref.load %arg3[%c53_802] : memref<64xf32, #tpu.memory_space<smem>>
    %1649 = vector.broadcast %1645 : f32 to vector<8x128xf32>
    %1650 = arith.mulf %1649, %0 : vector<8x128xf32>
    %1651 = vector.broadcast %1646 : f32 to vector<8x128xf32>
    %1652 = arith.mulf %1651, %1 : vector<8x128xf32>
    %1653 = arith.addf %1650, %1652 : vector<8x128xf32>
    %1654 = vector.broadcast %1647 : f32 to vector<8x128xf32>
    %1655 = arith.mulf %1654, %2 : vector<8x128xf32>
    %1656 = arith.addf %1653, %1655 : vector<8x128xf32>
    %1657 = vector.broadcast %1645 : f32 to vector<8x128xf32>
    %1658 = arith.mulf %1657, %1 : vector<8x128xf32>
    %1659 = vector.broadcast %1646 : f32 to vector<8x128xf32>
    %1660 = arith.mulf %1659, %2 : vector<8x128xf32>
    %1661 = arith.addf %1658, %1660 : vector<8x128xf32>
    %1662 = vector.broadcast %1647 : f32 to vector<8x128xf32>
    %1663 = arith.mulf %1662, %3 : vector<8x128xf32>
    %1664 = arith.addf %1661, %1663 : vector<8x128xf32>
    %1665 = arith.maximumf %1656, %1664 : vector<8x128xf32>
    %1666 = vector.broadcast %1648 : f32 to vector<8x128xf32>
    %1667 = arith.addf %1665, %1666 : vector<8x128xf32>
    %cst_803 = arith.constant 0.000000e+00 : f32
    %1668 = vector.broadcast %cst_803 : f32 to vector<8x128xf32>
    %1669 = arith.maximumf %1667, %1668 : vector<8x128xf32>
    %c53_804 = arith.constant 53 : index
    %c0_805 = arith.constant 0 : index
    %c0_806 = arith.constant 0 : index
    %1670 = vector.load %arg4[%c53_804, %c0_805, %c0_806] : memref<64x128x128xf32, #tpu.memory_space<vmem>>, vector<1x128x128xf32>
    %1671 = vector.shape_cast %1670 : vector<1x128x128xf32> to vector<128x128xf32>
    %cst_807 = arith.constant dense<0.000000e+00> : vector<8x128xf32>
    %1672 = tpu.matmul %1669, %1671, %cst_807 {dimension_numbers = #tpu.dot_dimension_numbers<[1], [0], [0], [1], [0, 0, 1, 1], [], []>} : vector<8x128xf32>, vector<128x128xf32>, vector<8x128xf32> -> vector<8x128xf32>
    %c0_808 = arith.constant 0 : index
    %c0_809 = arith.constant 0 : index
    %1673 = vector.load %arg9[%c0_808, %c0_809] : memref<8x128xf32, #tpu.memory_space<vmem>>, vector<8x128xf32>
    %1674 = arith.addf %1673, %1672 : vector<8x128xf32>
    %c0_810 = arith.constant 0 : index
    %c0_811 = arith.constant 0 : index
    %1675 = vector.load %arg9[%c0_810, %c0_811] : memref<8x128xf32, #tpu.memory_space<vmem>>, vector<8x128xf32>
    tpu.vector_store %arg9[%c0_810, %c0_811], %1674 {strides = array<i32>} : memref<8x128xf32, #tpu.memory_space<vmem>>, vector<8x128xf32>,
    %c0_812 = arith.constant 0 : index
    %c54 = arith.constant 54 : index
    %1676 = memref.load %arg2[%c0_812, %c54] : memref<3x64xf32, #tpu.memory_space<smem>>
    %c1_813 = arith.constant 1 : index
    %c54_814 = arith.constant 54 : index
    %1677 = memref.load %arg2[%c1_813, %c54_814] : memref<3x64xf32, #tpu.memory_space<smem>>
    %c2_815 = arith.constant 2 : index
    %c54_816 = arith.constant 54 : index
    %1678 = memref.load %arg2[%c2_815, %c54_816] : memref<3x64xf32, #tpu.memory_space<smem>>
    %c54_817 = arith.constant 54 : index
    %1679 = memref.load %arg3[%c54_817] : memref<64xf32, #tpu.memory_space<smem>>
    %1680 = vector.broadcast %1676 : f32 to vector<8x128xf32>
    %1681 = arith.mulf %1680, %0 : vector<8x128xf32>
    %1682 = vector.broadcast %1677 : f32 to vector<8x128xf32>
    %1683 = arith.mulf %1682, %1 : vector<8x128xf32>
    %1684 = arith.addf %1681, %1683 : vector<8x128xf32>
    %1685 = vector.broadcast %1678 : f32 to vector<8x128xf32>
    %1686 = arith.mulf %1685, %2 : vector<8x128xf32>
    %1687 = arith.addf %1684, %1686 : vector<8x128xf32>
    %1688 = vector.broadcast %1676 : f32 to vector<8x128xf32>
    %1689 = arith.mulf %1688, %1 : vector<8x128xf32>
    %1690 = vector.broadcast %1677 : f32 to vector<8x128xf32>
    %1691 = arith.mulf %1690, %2 : vector<8x128xf32>
    %1692 = arith.addf %1689, %1691 : vector<8x128xf32>
    %1693 = vector.broadcast %1678 : f32 to vector<8x128xf32>
    %1694 = arith.mulf %1693, %3 : vector<8x128xf32>
    %1695 = arith.addf %1692, %1694 : vector<8x128xf32>
    %1696 = arith.maximumf %1687, %1695 : vector<8x128xf32>
    %1697 = vector.broadcast %1679 : f32 to vector<8x128xf32>
    %1698 = arith.addf %1696, %1697 : vector<8x128xf32>
    %cst_818 = arith.constant 0.000000e+00 : f32
    %1699 = vector.broadcast %cst_818 : f32 to vector<8x128xf32>
    %1700 = arith.maximumf %1698, %1699 : vector<8x128xf32>
    %c54_819 = arith.constant 54 : index
    %c0_820 = arith.constant 0 : index
    %c0_821 = arith.constant 0 : index
    %1701 = vector.load %arg4[%c54_819, %c0_820, %c0_821] : memref<64x128x128xf32, #tpu.memory_space<vmem>>, vector<1x128x128xf32>
    %1702 = vector.shape_cast %1701 : vector<1x128x128xf32> to vector<128x128xf32>
    %cst_822 = arith.constant dense<0.000000e+00> : vector<8x128xf32>
    %1703 = tpu.matmul %1700, %1702, %cst_822 {dimension_numbers = #tpu.dot_dimension_numbers<[1], [0], [0], [1], [0, 0, 1, 1], [], []>} : vector<8x128xf32>, vector<128x128xf32>, vector<8x128xf32> -> vector<8x128xf32>
    %c0_823 = arith.constant 0 : index
    %c0_824 = arith.constant 0 : index
    %1704 = vector.load %arg9[%c0_823, %c0_824] : memref<8x128xf32, #tpu.memory_space<vmem>>, vector<8x128xf32>
    %1705 = arith.addf %1704, %1703 : vector<8x128xf32>
    %c0_825 = arith.constant 0 : index
    %c0_826 = arith.constant 0 : index
    %1706 = vector.load %arg9[%c0_825, %c0_826] : memref<8x128xf32, #tpu.memory_space<vmem>>, vector<8x128xf32>
    tpu.vector_store %arg9[%c0_825, %c0_826], %1705 {strides = array<i32>} : memref<8x128xf32, #tpu.memory_space<vmem>>, vector<8x128xf32>,
    %c0_827 = arith.constant 0 : index
    %c55 = arith.constant 55 : index
    %1707 = memref.load %arg2[%c0_827, %c55] : memref<3x64xf32, #tpu.memory_space<smem>>
    %c1_828 = arith.constant 1 : index
    %c55_829 = arith.constant 55 : index
    %1708 = memref.load %arg2[%c1_828, %c55_829] : memref<3x64xf32, #tpu.memory_space<smem>>
    %c2_830 = arith.constant 2 : index
    %c55_831 = arith.constant 55 : index
    %1709 = memref.load %arg2[%c2_830, %c55_831] : memref<3x64xf32, #tpu.memory_space<smem>>
    %c55_832 = arith.constant 55 : index
    %1710 = memref.load %arg3[%c55_832] : memref<64xf32, #tpu.memory_space<smem>>
    %1711 = vector.broadcast %1707 : f32 to vector<8x128xf32>
    %1712 = arith.mulf %1711, %0 : vector<8x128xf32>
    %1713 = vector.broadcast %1708 : f32 to vector<8x128xf32>
    %1714 = arith.mulf %1713, %1 : vector<8x128xf32>
    %1715 = arith.addf %1712, %1714 : vector<8x128xf32>
    %1716 = vector.broadcast %1709 : f32 to vector<8x128xf32>
    %1717 = arith.mulf %1716, %2 : vector<8x128xf32>
    %1718 = arith.addf %1715, %1717 : vector<8x128xf32>
    %1719 = vector.broadcast %1707 : f32 to vector<8x128xf32>
    %1720 = arith.mulf %1719, %1 : vector<8x128xf32>
    %1721 = vector.broadcast %1708 : f32 to vector<8x128xf32>
    %1722 = arith.mulf %1721, %2 : vector<8x128xf32>
    %1723 = arith.addf %1720, %1722 : vector<8x128xf32>
    %1724 = vector.broadcast %1709 : f32 to vector<8x128xf32>
    %1725 = arith.mulf %1724, %3 : vector<8x128xf32>
    %1726 = arith.addf %1723, %1725 : vector<8x128xf32>
    %1727 = arith.maximumf %1718, %1726 : vector<8x128xf32>
    %1728 = vector.broadcast %1710 : f32 to vector<8x128xf32>
    %1729 = arith.addf %1727, %1728 : vector<8x128xf32>
    %cst_833 = arith.constant 0.000000e+00 : f32
    %1730 = vector.broadcast %cst_833 : f32 to vector<8x128xf32>
    %1731 = arith.maximumf %1729, %1730 : vector<8x128xf32>
    %c55_834 = arith.constant 55 : index
    %c0_835 = arith.constant 0 : index
    %c0_836 = arith.constant 0 : index
    %1732 = vector.load %arg4[%c55_834, %c0_835, %c0_836] : memref<64x128x128xf32, #tpu.memory_space<vmem>>, vector<1x128x128xf32>
    %1733 = vector.shape_cast %1732 : vector<1x128x128xf32> to vector<128x128xf32>
    %cst_837 = arith.constant dense<0.000000e+00> : vector<8x128xf32>
    %1734 = tpu.matmul %1731, %1733, %cst_837 {dimension_numbers = #tpu.dot_dimension_numbers<[1], [0], [0], [1], [0, 0, 1, 1], [], []>} : vector<8x128xf32>, vector<128x128xf32>, vector<8x128xf32> -> vector<8x128xf32>
    %c0_838 = arith.constant 0 : index
    %c0_839 = arith.constant 0 : index
    %1735 = vector.load %arg9[%c0_838, %c0_839] : memref<8x128xf32, #tpu.memory_space<vmem>>, vector<8x128xf32>
    %1736 = arith.addf %1735, %1734 : vector<8x128xf32>
    %c0_840 = arith.constant 0 : index
    %c0_841 = arith.constant 0 : index
    %1737 = vector.load %arg9[%c0_840, %c0_841] : memref<8x128xf32, #tpu.memory_space<vmem>>, vector<8x128xf32>
    tpu.vector_store %arg9[%c0_840, %c0_841], %1736 {strides = array<i32>} : memref<8x128xf32, #tpu.memory_space<vmem>>, vector<8x128xf32>,
    %c0_842 = arith.constant 0 : index
    %c56 = arith.constant 56 : index
    %1738 = memref.load %arg2[%c0_842, %c56] : memref<3x64xf32, #tpu.memory_space<smem>>
    %c1_843 = arith.constant 1 : index
    %c56_844 = arith.constant 56 : index
    %1739 = memref.load %arg2[%c1_843, %c56_844] : memref<3x64xf32, #tpu.memory_space<smem>>
    %c2_845 = arith.constant 2 : index
    %c56_846 = arith.constant 56 : index
    %1740 = memref.load %arg2[%c2_845, %c56_846] : memref<3x64xf32, #tpu.memory_space<smem>>
    %c56_847 = arith.constant 56 : index
    %1741 = memref.load %arg3[%c56_847] : memref<64xf32, #tpu.memory_space<smem>>
    %1742 = vector.broadcast %1738 : f32 to vector<8x128xf32>
    %1743 = arith.mulf %1742, %0 : vector<8x128xf32>
    %1744 = vector.broadcast %1739 : f32 to vector<8x128xf32>
    %1745 = arith.mulf %1744, %1 : vector<8x128xf32>
    %1746 = arith.addf %1743, %1745 : vector<8x128xf32>
    %1747 = vector.broadcast %1740 : f32 to vector<8x128xf32>
    %1748 = arith.mulf %1747, %2 : vector<8x128xf32>
    %1749 = arith.addf %1746, %1748 : vector<8x128xf32>
    %1750 = vector.broadcast %1738 : f32 to vector<8x128xf32>
    %1751 = arith.mulf %1750, %1 : vector<8x128xf32>
    %1752 = vector.broadcast %1739 : f32 to vector<8x128xf32>
    %1753 = arith.mulf %1752, %2 : vector<8x128xf32>
    %1754 = arith.addf %1751, %1753 : vector<8x128xf32>
    %1755 = vector.broadcast %1740 : f32 to vector<8x128xf32>
    %1756 = arith.mulf %1755, %3 : vector<8x128xf32>
    %1757 = arith.addf %1754, %1756 : vector<8x128xf32>
    %1758 = arith.maximumf %1749, %1757 : vector<8x128xf32>
    %1759 = vector.broadcast %1741 : f32 to vector<8x128xf32>
    %1760 = arith.addf %1758, %1759 : vector<8x128xf32>
    %cst_848 = arith.constant 0.000000e+00 : f32
    %1761 = vector.broadcast %cst_848 : f32 to vector<8x128xf32>
    %1762 = arith.maximumf %1760, %1761 : vector<8x128xf32>
    %c56_849 = arith.constant 56 : index
    %c0_850 = arith.constant 0 : index
    %c0_851 = arith.constant 0 : index
    %1763 = vector.load %arg4[%c56_849, %c0_850, %c0_851] : memref<64x128x128xf32, #tpu.memory_space<vmem>>, vector<1x128x128xf32>
    %1764 = vector.shape_cast %1763 : vector<1x128x128xf32> to vector<128x128xf32>
    %cst_852 = arith.constant dense<0.000000e+00> : vector<8x128xf32>
    %1765 = tpu.matmul %1762, %1764, %cst_852 {dimension_numbers = #tpu.dot_dimension_numbers<[1], [0], [0], [1], [0, 0, 1, 1], [], []>} : vector<8x128xf32>, vector<128x128xf32>, vector<8x128xf32> -> vector<8x128xf32>
    %c0_853 = arith.constant 0 : index
    %c0_854 = arith.constant 0 : index
    %1766 = vector.load %arg9[%c0_853, %c0_854] : memref<8x128xf32, #tpu.memory_space<vmem>>, vector<8x128xf32>
    %1767 = arith.addf %1766, %1765 : vector<8x128xf32>
    %c0_855 = arith.constant 0 : index
    %c0_856 = arith.constant 0 : index
    %1768 = vector.load %arg9[%c0_855, %c0_856] : memref<8x128xf32, #tpu.memory_space<vmem>>, vector<8x128xf32>
    tpu.vector_store %arg9[%c0_855, %c0_856], %1767 {strides = array<i32>} : memref<8x128xf32, #tpu.memory_space<vmem>>, vector<8x128xf32>,
    %c0_857 = arith.constant 0 : index
    %c57 = arith.constant 57 : index
    %1769 = memref.load %arg2[%c0_857, %c57] : memref<3x64xf32, #tpu.memory_space<smem>>
    %c1_858 = arith.constant 1 : index
    %c57_859 = arith.constant 57 : index
    %1770 = memref.load %arg2[%c1_858, %c57_859] : memref<3x64xf32, #tpu.memory_space<smem>>
    %c2_860 = arith.constant 2 : index
    %c57_861 = arith.constant 57 : index
    %1771 = memref.load %arg2[%c2_860, %c57_861] : memref<3x64xf32, #tpu.memory_space<smem>>
    %c57_862 = arith.constant 57 : index
    %1772 = memref.load %arg3[%c57_862] : memref<64xf32, #tpu.memory_space<smem>>
    %1773 = vector.broadcast %1769 : f32 to vector<8x128xf32>
    %1774 = arith.mulf %1773, %0 : vector<8x128xf32>
    %1775 = vector.broadcast %1770 : f32 to vector<8x128xf32>
    %1776 = arith.mulf %1775, %1 : vector<8x128xf32>
    %1777 = arith.addf %1774, %1776 : vector<8x128xf32>
    %1778 = vector.broadcast %1771 : f32 to vector<8x128xf32>
    %1779 = arith.mulf %1778, %2 : vector<8x128xf32>
    %1780 = arith.addf %1777, %1779 : vector<8x128xf32>
    %1781 = vector.broadcast %1769 : f32 to vector<8x128xf32>
    %1782 = arith.mulf %1781, %1 : vector<8x128xf32>
    %1783 = vector.broadcast %1770 : f32 to vector<8x128xf32>
    %1784 = arith.mulf %1783, %2 : vector<8x128xf32>
    %1785 = arith.addf %1782, %1784 : vector<8x128xf32>
    %1786 = vector.broadcast %1771 : f32 to vector<8x128xf32>
    %1787 = arith.mulf %1786, %3 : vector<8x128xf32>
    %1788 = arith.addf %1785, %1787 : vector<8x128xf32>
    %1789 = arith.maximumf %1780, %1788 : vector<8x128xf32>
    %1790 = vector.broadcast %1772 : f32 to vector<8x128xf32>
    %1791 = arith.addf %1789, %1790 : vector<8x128xf32>
    %cst_863 = arith.constant 0.000000e+00 : f32
    %1792 = vector.broadcast %cst_863 : f32 to vector<8x128xf32>
    %1793 = arith.maximumf %1791, %1792 : vector<8x128xf32>
    %c57_864 = arith.constant 57 : index
    %c0_865 = arith.constant 0 : index
    %c0_866 = arith.constant 0 : index
    %1794 = vector.load %arg4[%c57_864, %c0_865, %c0_866] : memref<64x128x128xf32, #tpu.memory_space<vmem>>, vector<1x128x128xf32>
    %1795 = vector.shape_cast %1794 : vector<1x128x128xf32> to vector<128x128xf32>
    %cst_867 = arith.constant dense<0.000000e+00> : vector<8x128xf32>
    %1796 = tpu.matmul %1793, %1795, %cst_867 {dimension_numbers = #tpu.dot_dimension_numbers<[1], [0], [0], [1], [0, 0, 1, 1], [], []>} : vector<8x128xf32>, vector<128x128xf32>, vector<8x128xf32> -> vector<8x128xf32>
    %c0_868 = arith.constant 0 : index
    %c0_869 = arith.constant 0 : index
    %1797 = vector.load %arg9[%c0_868, %c0_869] : memref<8x128xf32, #tpu.memory_space<vmem>>, vector<8x128xf32>
    %1798 = arith.addf %1797, %1796 : vector<8x128xf32>
    %c0_870 = arith.constant 0 : index
    %c0_871 = arith.constant 0 : index
    %1799 = vector.load %arg9[%c0_870, %c0_871] : memref<8x128xf32, #tpu.memory_space<vmem>>, vector<8x128xf32>
    tpu.vector_store %arg9[%c0_870, %c0_871], %1798 {strides = array<i32>} : memref<8x128xf32, #tpu.memory_space<vmem>>, vector<8x128xf32>,
    %c0_872 = arith.constant 0 : index
    %c58 = arith.constant 58 : index
    %1800 = memref.load %arg2[%c0_872, %c58] : memref<3x64xf32, #tpu.memory_space<smem>>
    %c1_873 = arith.constant 1 : index
    %c58_874 = arith.constant 58 : index
    %1801 = memref.load %arg2[%c1_873, %c58_874] : memref<3x64xf32, #tpu.memory_space<smem>>
    %c2_875 = arith.constant 2 : index
    %c58_876 = arith.constant 58 : index
    %1802 = memref.load %arg2[%c2_875, %c58_876] : memref<3x64xf32, #tpu.memory_space<smem>>
    %c58_877 = arith.constant 58 : index
    %1803 = memref.load %arg3[%c58_877] : memref<64xf32, #tpu.memory_space<smem>>
    %1804 = vector.broadcast %1800 : f32 to vector<8x128xf32>
    %1805 = arith.mulf %1804, %0 : vector<8x128xf32>
    %1806 = vector.broadcast %1801 : f32 to vector<8x128xf32>
    %1807 = arith.mulf %1806, %1 : vector<8x128xf32>
    %1808 = arith.addf %1805, %1807 : vector<8x128xf32>
    %1809 = vector.broadcast %1802 : f32 to vector<8x128xf32>
    %1810 = arith.mulf %1809, %2 : vector<8x128xf32>
    %1811 = arith.addf %1808, %1810 : vector<8x128xf32>
    %1812 = vector.broadcast %1800 : f32 to vector<8x128xf32>
    %1813 = arith.mulf %1812, %1 : vector<8x128xf32>
    %1814 = vector.broadcast %1801 : f32 to vector<8x128xf32>
    %1815 = arith.mulf %1814, %2 : vector<8x128xf32>
    %1816 = arith.addf %1813, %1815 : vector<8x128xf32>
    %1817 = vector.broadcast %1802 : f32 to vector<8x128xf32>
    %1818 = arith.mulf %1817, %3 : vector<8x128xf32>
    %1819 = arith.addf %1816, %1818 : vector<8x128xf32>
    %1820 = arith.maximumf %1811, %1819 : vector<8x128xf32>
    %1821 = vector.broadcast %1803 : f32 to vector<8x128xf32>
    %1822 = arith.addf %1820, %1821 : vector<8x128xf32>
    %cst_878 = arith.constant 0.000000e+00 : f32
    %1823 = vector.broadcast %cst_878 : f32 to vector<8x128xf32>
    %1824 = arith.maximumf %1822, %1823 : vector<8x128xf32>
    %c58_879 = arith.constant 58 : index
    %c0_880 = arith.constant 0 : index
    %c0_881 = arith.constant 0 : index
    %1825 = vector.load %arg4[%c58_879, %c0_880, %c0_881] : memref<64x128x128xf32, #tpu.memory_space<vmem>>, vector<1x128x128xf32>
    %1826 = vector.shape_cast %1825 : vector<1x128x128xf32> to vector<128x128xf32>
    %cst_882 = arith.constant dense<0.000000e+00> : vector<8x128xf32>
    %1827 = tpu.matmul %1824, %1826, %cst_882 {dimension_numbers = #tpu.dot_dimension_numbers<[1], [0], [0], [1], [0, 0, 1, 1], [], []>} : vector<8x128xf32>, vector<128x128xf32>, vector<8x128xf32> -> vector<8x128xf32>
    %c0_883 = arith.constant 0 : index
    %c0_884 = arith.constant 0 : index
    %1828 = vector.load %arg9[%c0_883, %c0_884] : memref<8x128xf32, #tpu.memory_space<vmem>>, vector<8x128xf32>
    %1829 = arith.addf %1828, %1827 : vector<8x128xf32>
    %c0_885 = arith.constant 0 : index
    %c0_886 = arith.constant 0 : index
    %1830 = vector.load %arg9[%c0_885, %c0_886] : memref<8x128xf32, #tpu.memory_space<vmem>>, vector<8x128xf32>
    tpu.vector_store %arg9[%c0_885, %c0_886], %1829 {strides = array<i32>} : memref<8x128xf32, #tpu.memory_space<vmem>>, vector<8x128xf32>,
    %c0_887 = arith.constant 0 : index
    %c59 = arith.constant 59 : index
    %1831 = memref.load %arg2[%c0_887, %c59] : memref<3x64xf32, #tpu.memory_space<smem>>
    %c1_888 = arith.constant 1 : index
    %c59_889 = arith.constant 59 : index
    %1832 = memref.load %arg2[%c1_888, %c59_889] : memref<3x64xf32, #tpu.memory_space<smem>>
    %c2_890 = arith.constant 2 : index
    %c59_891 = arith.constant 59 : index
    %1833 = memref.load %arg2[%c2_890, %c59_891] : memref<3x64xf32, #tpu.memory_space<smem>>
    %c59_892 = arith.constant 59 : index
    %1834 = memref.load %arg3[%c59_892] : memref<64xf32, #tpu.memory_space<smem>>
    %1835 = vector.broadcast %1831 : f32 to vector<8x128xf32>
    %1836 = arith.mulf %1835, %0 : vector<8x128xf32>
    %1837 = vector.broadcast %1832 : f32 to vector<8x128xf32>
    %1838 = arith.mulf %1837, %1 : vector<8x128xf32>
    %1839 = arith.addf %1836, %1838 : vector<8x128xf32>
    %1840 = vector.broadcast %1833 : f32 to vector<8x128xf32>
    %1841 = arith.mulf %1840, %2 : vector<8x128xf32>
    %1842 = arith.addf %1839, %1841 : vector<8x128xf32>
    %1843 = vector.broadcast %1831 : f32 to vector<8x128xf32>
    %1844 = arith.mulf %1843, %1 : vector<8x128xf32>
    %1845 = vector.broadcast %1832 : f32 to vector<8x128xf32>
    %1846 = arith.mulf %1845, %2 : vector<8x128xf32>
    %1847 = arith.addf %1844, %1846 : vector<8x128xf32>
    %1848 = vector.broadcast %1833 : f32 to vector<8x128xf32>
    %1849 = arith.mulf %1848, %3 : vector<8x128xf32>
    %1850 = arith.addf %1847, %1849 : vector<8x128xf32>
    %1851 = arith.maximumf %1842, %1850 : vector<8x128xf32>
    %1852 = vector.broadcast %1834 : f32 to vector<8x128xf32>
    %1853 = arith.addf %1851, %1852 : vector<8x128xf32>
    %cst_893 = arith.constant 0.000000e+00 : f32
    %1854 = vector.broadcast %cst_893 : f32 to vector<8x128xf32>
    %1855 = arith.maximumf %1853, %1854 : vector<8x128xf32>
    %c59_894 = arith.constant 59 : index
    %c0_895 = arith.constant 0 : index
    %c0_896 = arith.constant 0 : index
    %1856 = vector.load %arg4[%c59_894, %c0_895, %c0_896] : memref<64x128x128xf32, #tpu.memory_space<vmem>>, vector<1x128x128xf32>
    %1857 = vector.shape_cast %1856 : vector<1x128x128xf32> to vector<128x128xf32>
    %cst_897 = arith.constant dense<0.000000e+00> : vector<8x128xf32>
    %1858 = tpu.matmul %1855, %1857, %cst_897 {dimension_numbers = #tpu.dot_dimension_numbers<[1], [0], [0], [1], [0, 0, 1, 1], [], []>} : vector<8x128xf32>, vector<128x128xf32>, vector<8x128xf32> -> vector<8x128xf32>
    %c0_898 = arith.constant 0 : index
    %c0_899 = arith.constant 0 : index
    %1859 = vector.load %arg9[%c0_898, %c0_899] : memref<8x128xf32, #tpu.memory_space<vmem>>, vector<8x128xf32>
    %1860 = arith.addf %1859, %1858 : vector<8x128xf32>
    %c0_900 = arith.constant 0 : index
    %c0_901 = arith.constant 0 : index
    %1861 = vector.load %arg9[%c0_900, %c0_901] : memref<8x128xf32, #tpu.memory_space<vmem>>, vector<8x128xf32>
    tpu.vector_store %arg9[%c0_900, %c0_901], %1860 {strides = array<i32>} : memref<8x128xf32, #tpu.memory_space<vmem>>, vector<8x128xf32>,
    %c0_902 = arith.constant 0 : index
    %c60 = arith.constant 60 : index
    %1862 = memref.load %arg2[%c0_902, %c60] : memref<3x64xf32, #tpu.memory_space<smem>>
    %c1_903 = arith.constant 1 : index
    %c60_904 = arith.constant 60 : index
    %1863 = memref.load %arg2[%c1_903, %c60_904] : memref<3x64xf32, #tpu.memory_space<smem>>
    %c2_905 = arith.constant 2 : index
    %c60_906 = arith.constant 60 : index
    %1864 = memref.load %arg2[%c2_905, %c60_906] : memref<3x64xf32, #tpu.memory_space<smem>>
    %c60_907 = arith.constant 60 : index
    %1865 = memref.load %arg3[%c60_907] : memref<64xf32, #tpu.memory_space<smem>>
    %1866 = vector.broadcast %1862 : f32 to vector<8x128xf32>
    %1867 = arith.mulf %1866, %0 : vector<8x128xf32>
    %1868 = vector.broadcast %1863 : f32 to vector<8x128xf32>
    %1869 = arith.mulf %1868, %1 : vector<8x128xf32>
    %1870 = arith.addf %1867, %1869 : vector<8x128xf32>
    %1871 = vector.broadcast %1864 : f32 to vector<8x128xf32>
    %1872 = arith.mulf %1871, %2 : vector<8x128xf32>
    %1873 = arith.addf %1870, %1872 : vector<8x128xf32>
    %1874 = vector.broadcast %1862 : f32 to vector<8x128xf32>
    %1875 = arith.mulf %1874, %1 : vector<8x128xf32>
    %1876 = vector.broadcast %1863 : f32 to vector<8x128xf32>
    %1877 = arith.mulf %1876, %2 : vector<8x128xf32>
    %1878 = arith.addf %1875, %1877 : vector<8x128xf32>
    %1879 = vector.broadcast %1864 : f32 to vector<8x128xf32>
    %1880 = arith.mulf %1879, %3 : vector<8x128xf32>
    %1881 = arith.addf %1878, %1880 : vector<8x128xf32>
    %1882 = arith.maximumf %1873, %1881 : vector<8x128xf32>
    %1883 = vector.broadcast %1865 : f32 to vector<8x128xf32>
    %1884 = arith.addf %1882, %1883 : vector<8x128xf32>
    %cst_908 = arith.constant 0.000000e+00 : f32
    %1885 = vector.broadcast %cst_908 : f32 to vector<8x128xf32>
    %1886 = arith.maximumf %1884, %1885 : vector<8x128xf32>
    %c60_909 = arith.constant 60 : index
    %c0_910 = arith.constant 0 : index
    %c0_911 = arith.constant 0 : index
    %1887 = vector.load %arg4[%c60_909, %c0_910, %c0_911] : memref<64x128x128xf32, #tpu.memory_space<vmem>>, vector<1x128x128xf32>
    %1888 = vector.shape_cast %1887 : vector<1x128x128xf32> to vector<128x128xf32>
    %cst_912 = arith.constant dense<0.000000e+00> : vector<8x128xf32>
    %1889 = tpu.matmul %1886, %1888, %cst_912 {dimension_numbers = #tpu.dot_dimension_numbers<[1], [0], [0], [1], [0, 0, 1, 1], [], []>} : vector<8x128xf32>, vector<128x128xf32>, vector<8x128xf32> -> vector<8x128xf32>
    %c0_913 = arith.constant 0 : index
    %c0_914 = arith.constant 0 : index
    %1890 = vector.load %arg9[%c0_913, %c0_914] : memref<8x128xf32, #tpu.memory_space<vmem>>, vector<8x128xf32>
    %1891 = arith.addf %1890, %1889 : vector<8x128xf32>
    %c0_915 = arith.constant 0 : index
    %c0_916 = arith.constant 0 : index
    %1892 = vector.load %arg9[%c0_915, %c0_916] : memref<8x128xf32, #tpu.memory_space<vmem>>, vector<8x128xf32>
    tpu.vector_store %arg9[%c0_915, %c0_916], %1891 {strides = array<i32>} : memref<8x128xf32, #tpu.memory_space<vmem>>, vector<8x128xf32>,
    %c0_917 = arith.constant 0 : index
    %c61 = arith.constant 61 : index
    %1893 = memref.load %arg2[%c0_917, %c61] : memref<3x64xf32, #tpu.memory_space<smem>>
    %c1_918 = arith.constant 1 : index
    %c61_919 = arith.constant 61 : index
    %1894 = memref.load %arg2[%c1_918, %c61_919] : memref<3x64xf32, #tpu.memory_space<smem>>
    %c2_920 = arith.constant 2 : index
    %c61_921 = arith.constant 61 : index
    %1895 = memref.load %arg2[%c2_920, %c61_921] : memref<3x64xf32, #tpu.memory_space<smem>>
    %c61_922 = arith.constant 61 : index
    %1896 = memref.load %arg3[%c61_922] : memref<64xf32, #tpu.memory_space<smem>>
    %1897 = vector.broadcast %1893 : f32 to vector<8x128xf32>
    %1898 = arith.mulf %1897, %0 : vector<8x128xf32>
    %1899 = vector.broadcast %1894 : f32 to vector<8x128xf32>
    %1900 = arith.mulf %1899, %1 : vector<8x128xf32>
    %1901 = arith.addf %1898, %1900 : vector<8x128xf32>
    %1902 = vector.broadcast %1895 : f32 to vector<8x128xf32>
    %1903 = arith.mulf %1902, %2 : vector<8x128xf32>
    %1904 = arith.addf %1901, %1903 : vector<8x128xf32>
    %1905 = vector.broadcast %1893 : f32 to vector<8x128xf32>
    %1906 = arith.mulf %1905, %1 : vector<8x128xf32>
    %1907 = vector.broadcast %1894 : f32 to vector<8x128xf32>
    %1908 = arith.mulf %1907, %2 : vector<8x128xf32>
    %1909 = arith.addf %1906, %1908 : vector<8x128xf32>
    %1910 = vector.broadcast %1895 : f32 to vector<8x128xf32>
    %1911 = arith.mulf %1910, %3 : vector<8x128xf32>
    %1912 = arith.addf %1909, %1911 : vector<8x128xf32>
    %1913 = arith.maximumf %1904, %1912 : vector<8x128xf32>
    %1914 = vector.broadcast %1896 : f32 to vector<8x128xf32>
    %1915 = arith.addf %1913, %1914 : vector<8x128xf32>
    %cst_923 = arith.constant 0.000000e+00 : f32
    %1916 = vector.broadcast %cst_923 : f32 to vector<8x128xf32>
    %1917 = arith.maximumf %1915, %1916 : vector<8x128xf32>
    %c61_924 = arith.constant 61 : index
    %c0_925 = arith.constant 0 : index
    %c0_926 = arith.constant 0 : index
    %1918 = vector.load %arg4[%c61_924, %c0_925, %c0_926] : memref<64x128x128xf32, #tpu.memory_space<vmem>>, vector<1x128x128xf32>
    %1919 = vector.shape_cast %1918 : vector<1x128x128xf32> to vector<128x128xf32>
    %cst_927 = arith.constant dense<0.000000e+00> : vector<8x128xf32>
    %1920 = tpu.matmul %1917, %1919, %cst_927 {dimension_numbers = #tpu.dot_dimension_numbers<[1], [0], [0], [1], [0, 0, 1, 1], [], []>} : vector<8x128xf32>, vector<128x128xf32>, vector<8x128xf32> -> vector<8x128xf32>
    %c0_928 = arith.constant 0 : index
    %c0_929 = arith.constant 0 : index
    %1921 = vector.load %arg9[%c0_928, %c0_929] : memref<8x128xf32, #tpu.memory_space<vmem>>, vector<8x128xf32>
    %1922 = arith.addf %1921, %1920 : vector<8x128xf32>
    %c0_930 = arith.constant 0 : index
    %c0_931 = arith.constant 0 : index
    %1923 = vector.load %arg9[%c0_930, %c0_931] : memref<8x128xf32, #tpu.memory_space<vmem>>, vector<8x128xf32>
    tpu.vector_store %arg9[%c0_930, %c0_931], %1922 {strides = array<i32>} : memref<8x128xf32, #tpu.memory_space<vmem>>, vector<8x128xf32>,
    %c0_932 = arith.constant 0 : index
    %c62 = arith.constant 62 : index
    %1924 = memref.load %arg2[%c0_932, %c62] : memref<3x64xf32, #tpu.memory_space<smem>>
    %c1_933 = arith.constant 1 : index
    %c62_934 = arith.constant 62 : index
    %1925 = memref.load %arg2[%c1_933, %c62_934] : memref<3x64xf32, #tpu.memory_space<smem>>
    %c2_935 = arith.constant 2 : index
    %c62_936 = arith.constant 62 : index
    %1926 = memref.load %arg2[%c2_935, %c62_936] : memref<3x64xf32, #tpu.memory_space<smem>>
    %c62_937 = arith.constant 62 : index
    %1927 = memref.load %arg3[%c62_937] : memref<64xf32, #tpu.memory_space<smem>>
    %1928 = vector.broadcast %1924 : f32 to vector<8x128xf32>
    %1929 = arith.mulf %1928, %0 : vector<8x128xf32>
    %1930 = vector.broadcast %1925 : f32 to vector<8x128xf32>
    %1931 = arith.mulf %1930, %1 : vector<8x128xf32>
    %1932 = arith.addf %1929, %1931 : vector<8x128xf32>
    %1933 = vector.broadcast %1926 : f32 to vector<8x128xf32>
    %1934 = arith.mulf %1933, %2 : vector<8x128xf32>
    %1935 = arith.addf %1932, %1934 : vector<8x128xf32>
    %1936 = vector.broadcast %1924 : f32 to vector<8x128xf32>
    %1937 = arith.mulf %1936, %1 : vector<8x128xf32>
    %1938 = vector.broadcast %1925 : f32 to vector<8x128xf32>
    %1939 = arith.mulf %1938, %2 : vector<8x128xf32>
    %1940 = arith.addf %1937, %1939 : vector<8x128xf32>
    %1941 = vector.broadcast %1926 : f32 to vector<8x128xf32>
    %1942 = arith.mulf %1941, %3 : vector<8x128xf32>
    %1943 = arith.addf %1940, %1942 : vector<8x128xf32>
    %1944 = arith.maximumf %1935, %1943 : vector<8x128xf32>
    %1945 = vector.broadcast %1927 : f32 to vector<8x128xf32>
    %1946 = arith.addf %1944, %1945 : vector<8x128xf32>
    %cst_938 = arith.constant 0.000000e+00 : f32
    %1947 = vector.broadcast %cst_938 : f32 to vector<8x128xf32>
    %1948 = arith.maximumf %1946, %1947 : vector<8x128xf32>
    %c62_939 = arith.constant 62 : index
    %c0_940 = arith.constant 0 : index
    %c0_941 = arith.constant 0 : index
    %1949 = vector.load %arg4[%c62_939, %c0_940, %c0_941] : memref<64x128x128xf32, #tpu.memory_space<vmem>>, vector<1x128x128xf32>
    %1950 = vector.shape_cast %1949 : vector<1x128x128xf32> to vector<128x128xf32>
    %cst_942 = arith.constant dense<0.000000e+00> : vector<8x128xf32>
    %1951 = tpu.matmul %1948, %1950, %cst_942 {dimension_numbers = #tpu.dot_dimension_numbers<[1], [0], [0], [1], [0, 0, 1, 1], [], []>} : vector<8x128xf32>, vector<128x128xf32>, vector<8x128xf32> -> vector<8x128xf32>
    %c0_943 = arith.constant 0 : index
    %c0_944 = arith.constant 0 : index
    %1952 = vector.load %arg9[%c0_943, %c0_944] : memref<8x128xf32, #tpu.memory_space<vmem>>, vector<8x128xf32>
    %1953 = arith.addf %1952, %1951 : vector<8x128xf32>
    %c0_945 = arith.constant 0 : index
    %c0_946 = arith.constant 0 : index
    %1954 = vector.load %arg9[%c0_945, %c0_946] : memref<8x128xf32, #tpu.memory_space<vmem>>, vector<8x128xf32>
    tpu.vector_store %arg9[%c0_945, %c0_946], %1953 {strides = array<i32>} : memref<8x128xf32, #tpu.memory_space<vmem>>, vector<8x128xf32>,
    %c0_947 = arith.constant 0 : index
    %c63 = arith.constant 63 : index
    %1955 = memref.load %arg2[%c0_947, %c63] : memref<3x64xf32, #tpu.memory_space<smem>>
    %c1_948 = arith.constant 1 : index
    %c63_949 = arith.constant 63 : index
    %1956 = memref.load %arg2[%c1_948, %c63_949] : memref<3x64xf32, #tpu.memory_space<smem>>
    %c2_950 = arith.constant 2 : index
    %c63_951 = arith.constant 63 : index
    %1957 = memref.load %arg2[%c2_950, %c63_951] : memref<3x64xf32, #tpu.memory_space<smem>>
    %c63_952 = arith.constant 63 : index
    %1958 = memref.load %arg3[%c63_952] : memref<64xf32, #tpu.memory_space<smem>>
    %1959 = vector.broadcast %1955 : f32 to vector<8x128xf32>
    %1960 = arith.mulf %1959, %0 : vector<8x128xf32>
    %1961 = vector.broadcast %1956 : f32 to vector<8x128xf32>
    %1962 = arith.mulf %1961, %1 : vector<8x128xf32>
    %1963 = arith.addf %1960, %1962 : vector<8x128xf32>
    %1964 = vector.broadcast %1957 : f32 to vector<8x128xf32>
    %1965 = arith.mulf %1964, %2 : vector<8x128xf32>
    %1966 = arith.addf %1963, %1965 : vector<8x128xf32>
    %1967 = vector.broadcast %1955 : f32 to vector<8x128xf32>
    %1968 = arith.mulf %1967, %1 : vector<8x128xf32>
    %1969 = vector.broadcast %1956 : f32 to vector<8x128xf32>
    %1970 = arith.mulf %1969, %2 : vector<8x128xf32>
    %1971 = arith.addf %1968, %1970 : vector<8x128xf32>
    %1972 = vector.broadcast %1957 : f32 to vector<8x128xf32>
    %1973 = arith.mulf %1972, %3 : vector<8x128xf32>
    %1974 = arith.addf %1971, %1973 : vector<8x128xf32>
    %1975 = arith.maximumf %1966, %1974 : vector<8x128xf32>
    %1976 = vector.broadcast %1958 : f32 to vector<8x128xf32>
    %1977 = arith.addf %1975, %1976 : vector<8x128xf32>
    %cst_953 = arith.constant 0.000000e+00 : f32
    %1978 = vector.broadcast %cst_953 : f32 to vector<8x128xf32>
    %1979 = arith.maximumf %1977, %1978 : vector<8x128xf32>
    %c63_954 = arith.constant 63 : index
    %c0_955 = arith.constant 0 : index
    %c0_956 = arith.constant 0 : index
    %1980 = vector.load %arg4[%c63_954, %c0_955, %c0_956] : memref<64x128x128xf32, #tpu.memory_space<vmem>>, vector<1x128x128xf32>
    %1981 = vector.shape_cast %1980 : vector<1x128x128xf32> to vector<128x128xf32>
    %cst_957 = arith.constant dense<0.000000e+00> : vector<8x128xf32>
    %1982 = tpu.matmul %1979, %1981, %cst_957 {dimension_numbers = #tpu.dot_dimension_numbers<[1], [0], [0], [1], [0, 0, 1, 1], [], []>} : vector<8x128xf32>, vector<128x128xf32>, vector<8x128xf32> -> vector<8x128xf32>
    %c0_958 = arith.constant 0 : index
    %c0_959 = arith.constant 0 : index
    %1983 = vector.load %arg9[%c0_958, %c0_959] : memref<8x128xf32, #tpu.memory_space<vmem>>, vector<8x128xf32>
    %1984 = arith.addf %1983, %1982 : vector<8x128xf32>
    %c0_960 = arith.constant 0 : index
    %c0_961 = arith.constant 0 : index
    %1985 = vector.load %arg9[%c0_960, %c0_961] : memref<8x128xf32, #tpu.memory_space<vmem>>, vector<8x128xf32>
    tpu.vector_store %arg9[%c0_960, %c0_961], %1984 {strides = array<i32>} : memref<8x128xf32, #tpu.memory_space<vmem>>, vector<8x128xf32>,
    %c0_962 = arith.constant 0 : index
    %c0_963 = arith.constant 0 : index
    %1986 = vector.load %arg9[%c0_962, %c0_963] : memref<8x128xf32, #tpu.memory_space<vmem>>, vector<8x128xf32>
    %c0_964 = arith.constant 0 : index
    %c0_965 = arith.constant 0 : index
    %1987 = vector.load %arg5[%c0_964, %c0_965] : memref<1x128xf32, #tpu.memory_space<vmem>>, vector<1x128xf32>
    %1988 = vector.broadcast %1987 : vector<1x128xf32> to vector<8x128xf32>
    %1989 = arith.addf %1986, %1988 : vector<8x128xf32>
    %cst_966 = arith.constant 0.000000e+00 : f32
    %1990 = vector.broadcast %cst_966 : f32 to vector<8x128xf32>
    %1991 = arith.maximumf %1989, %1990 : vector<8x128xf32>
    %c0_967 = arith.constant 0 : index
    %c0_968 = arith.constant 0 : index
    %1992 = vector.load %arg6[%c0_967, %c0_968] : memref<128x128xf32, #tpu.memory_space<vmem>>, vector<128x128xf32>
    %cst_969 = arith.constant dense<0.000000e+00> : vector<8x128xf32>
    %1993 = tpu.matmul %1991, %1992, %cst_969 {dimension_numbers = #tpu.dot_dimension_numbers<[1], [0], [0], [1], [0, 0, 1, 1], [], []>} : vector<8x128xf32>, vector<128x128xf32>, vector<8x128xf32> -> vector<8x128xf32>
    %c0_970 = arith.constant 0 : index
    %c0_971 = arith.constant 0 : index
    %1994 = vector.load %arg7[%c0_970, %c0_971] : memref<1x128xf32, #tpu.memory_space<vmem>>, vector<1x128xf32>
    %1995 = vector.broadcast %1994 : vector<1x128xf32> to vector<8x128xf32>
    %1996 = arith.addf %1993, %1995 : vector<8x128xf32>
    %c0_972 = arith.constant 0 : index
    %c0_973 = arith.constant 0 : index
    %1997 = vector.load %arg8[%c0_972, %c0_973] : memref<8x128xf32, #tpu.memory_space<vmem>>, vector<8x128xf32>
    tpu.vector_store %arg8[%c0_972, %c0_973], %1996 {strides = array<i32>} : memref<8x128xf32, #tpu.memory_space<vmem>>, vector<8x128xf32>,
    return
  }
  func.func @transform_0(%arg0: i32) -> (i32, i32) {
    %c0_i32 = arith.constant 0 : i32
    %c0_i32_0 = arith.constant 0 : i32
    return %arg0, %c0_i32 : i32, i32
  }
  func.func @transform_1(%arg0: i32) -> (i32, i32) {
    %c0_i32 = arith.constant 0 : i32
    %c0_i32_0 = arith.constant 0 : i32
    %c0_i32_1 = arith.constant 0 : i32
    return %c0_i32, %c0_i32_0 : i32, i32
  }
  func.func @transform_2(%arg0: i32) -> i32 {
    %c0_i32 = arith.constant 0 : i32
    %c0_i32_0 = arith.constant 0 : i32
    return %c0_i32 : i32
  }
  func.func @transform_3(%arg0: i32) -> (i32, i32, i32) {
    %c0_i32 = arith.constant 0 : i32
    %c0_i32_0 = arith.constant 0 : i32
    %c0_i32_1 = arith.constant 0 : i32
    %c0_i32_2 = arith.constant 0 : i32
    return %c0_i32, %c0_i32_0, %c0_i32_1 : i32, i32, i32
  }
  func.func @transform_4(%arg0: i32) -> (i32, i32) {
    %c0_i32 = arith.constant 0 : i32
    %c0_i32_0 = arith.constant 0 : i32
    %c0_i32_1 = arith.constant 0 : i32
    return %c0_i32, %c0_i32_0 : i32, i32
  }
  func.func @transform_5(%arg0: i32) -> (i32, i32) {
    %c0_i32 = arith.constant 0 : i32
    %c0_i32_0 = arith.constant 0 : i32
    %c0_i32_1 = arith.constant 0 : i32
    return %c0_i32, %c0_i32_0 : i32, i32
  }
  func.func @transform_6(%arg0: i32) -> (i32, i32) {
    %c0_i32 = arith.constant 0 : i32
    %c0_i32_0 = arith.constant 0 : i32
    %c0_i32_1 = arith.constant 0 : i32
    return %c0_i32, %c0_i32_0 : i32, i32
  }
  func.func @transform_7(%arg0: i32) -> (i32, i32) {
    %c0_i32 = arith.constant 0 : i32
    %c0_i32_0 = arith.constant 0 : i32
    return %arg0, %c0_i32 : i32, i32
  }
}

</mosaic_0001>

<llo_original>
// kernel: cnn_forecast_forward.1
$region0: #{cnn_forecast_forward.1}
  #allocation0 [shape = 'u32[]', space=smem, size = 0x4, offset = 0x4, fixed_abs, tag = 'smem constant byte address 0x4 - core index']
  #allocation1 [shape = 'u32[144,128]{1,0:T(1,128)}', space=vmem, size = 0x12000, scoped, tag = 'internal scratch']
  #allocation2 [shape = 'f32[8,128]{1,0:T(8,128)}', space=vmem, size = 0x1000, scoped, tag = 'scratch operand']
  %s0 = inlined_call_operand.vmem [shape: f32[8,512], index: 0, kind: input, shape index: {}]
  %s1 = inlined_call_operand.vmem [shape: f32[3,64], index: 1, kind: input, shape index: {}]
  %s2 = inlined_call_operand.vmem [shape: f32[64], index: 2, kind: input, shape index: {}]
  %s3 = inlined_call_operand.vmem [shape: f32[64,128,128], index: 3, kind: input, shape index: {}]
  %s4 = inlined_call_operand.vmem [shape: f32[1,128], index: 4, kind: input, shape index: {}]
  %s5 = inlined_call_operand.vmem [shape: f32[128,128], index: 5, kind: input, shape index: {}]
  %s6 = inlined_call_operand.vmem [shape: f32[1,128], index: 6, kind: input, shape index: {}]
  %s7 = inlined_call_operand.vmem [shape: f32[8,128], index: 7, kind: output, shape index: {}]
  %s8 = sld [smem:[#allocation0]]
  $region46: #{cnn_forecast_forward.1} parent=0
    _
  %s10 = ssub.s32 1, %s8
  %s11 = scalar_select 0, %s10, %s8
  $region1: #{cnn_forecast_forward.1} parent=0
    #allocation3 [shape = 'u8[2048]{0}', space=smem, size = 0x800, scoped, tag = 'input window, operand 1, single buffered']
    #allocation4 [shape = 's32[1]{0}', space=sflag, size = 0x4, scoped, tag = 'scoped memory for cnn_forecast_forward.1']
    #allocation5 [shape = 'u8[512]{0}', space=smem, size = 0x200, scoped, tag = 'input window, operand 2, single buffered']
    #allocation6 [shape = 's32[1]{0}', space=sflag, size = 0x4, scoped, tag = 'scoped memory for cnn_forecast_forward.1']
    %12 = vsyncpa [#allocation4], 0
    %13 = vsyncpa [#allocation6], 0
    // Predicated region
    $region2: #{cnn_forecast_forward.1} parent=1 // pred_check
      _
    $region3: #{cnn_forecast_forward.1} parent=1 // pred_check_branch
      %15 = sbr.rel (0) target = $region5
    $region4: #{cnn_forecast_forward.1} parent=1 // pred_region
      _
    $region5: #{cnn_forecast_forward.1} parent=1 // pred_fallthru
      _
    // Predicated region
    $region6: #{cnn_forecast_forward.1} parent=1 // pred_check
      _
    $region7: #{cnn_forecast_forward.1} parent=1 // pred_check_branch
      %17 = sbr.rel (0) target = $region9
    $region8: #{cnn_forecast_forward.1} parent=1 // pred_region
      %s19 = ssub.s32 64, 64
      %20 = vsyncadd [#allocation4], %s19
      %s22 = sshll.u32 %s1, 4
      %s23 = int_to_ptr.vmem [resolvable:$true] %s22
      %25 = dma.vmem_to_smem %s23, 64, [#allocation3], [#allocation4]
    $region9: #{cnn_forecast_forward.1} parent=1 // pred_fallthru
      _
    // Predicated region
    $region10: #{cnn_forecast_forward.1} parent=1 // pred_check
      _
    $region11: #{cnn_forecast_forward.1} parent=1 // pred_check_branch
      %27 = sbr.rel (0) target = $region13
    $region12: #{cnn_forecast_forward.1} parent=1 // pred_region
      %s29 = ssub.s32 16, 16
      %30 = vsyncadd [#allocation6], %s29
      %s32 = sshll.u32 %s2, 4
      %s33 = int_to_ptr.vmem [resolvable:$true] %s32
      %35 = dma.vmem_to_smem %s33, 16, [#allocation5], [#allocation6]
    $region13: #{cnn_forecast_forward.1} parent=1 // pred_fallthru
      _
    // Predicated region
    $region14: #{cnn_forecast_forward.1} parent=1 // pred_check
      _
    $region15: #{cnn_forecast_forward.1} parent=1 // pred_check_branch
      %37 = sbr.rel (0) target = $region17
    $region16: #{cnn_forecast_forward.1} parent=1 // pred_region
      _
    $region17: #{cnn_forecast_forward.1} parent=1 // pred_fallthru
      _
    // Predicated region
    $region18: #{cnn_forecast_forward.1} parent=1 // pred_check
      _
    $region19: #{cnn_forecast_forward.1} parent=1 // pred_check_branch
      %39 = sbr.rel (0) target = $region21
    $region20: #{cnn_forecast_forward.1} parent=1 // pred_region
      _
    $region21: #{cnn_forecast_forward.1} parent=1 // pred_fallthru
      _
    // Predicated region
    $region22: #{cnn_forecast_forward.1} parent=1 // pred_check
      _
    $region23: #{cnn_forecast_forward.1} parent=1 // pred_check_branch
      %41 = sbr.rel (0) target = $region25
    $region24: #{cnn_forecast_forward.1} parent=1 // pred_region
      _
    $region25: #{cnn_forecast_forward.1} parent=1 // pred_fallthru
      _
    // Predicated region
    $region26: #{cnn_forecast_forward.1} parent=1 // pred_check
      _
    $region27: #{cnn_forecast_forward.1} parent=1 // pred_check_branch
      %43 = sbr.rel (0) target = $region29
    $region28: #{cnn_forecast_forward.1} parent=1 // pred_region
      _
    $region29: #{cnn_forecast_forward.1} parent=1 // pred_fallthru
      _
    // Predicated region
    $region30: #{cnn_forecast_forward.1} parent=1 // pred_check
      _
    $region31: #{cnn_forecast_forward.1} parent=1 // pred_check_branch
      %45 = sbr.rel (0) target = $region33
    $region32: #{cnn_forecast_forward.1} parent=1 // pred_region
      %46 = dma.done [#allocation4], 64
    $region33: #{cnn_forecast_forward.1} parent=1 // pred_fallthru
      _
    // Predicated region
    $region34: #{cnn_forecast_forward.1} parent=1 // pred_check
      _
    $region35: #{cnn_forecast_forward.1} parent=1 // pred_check_branch
      %48 = sbr.rel (0) target = $region37
    $region36: #{cnn_forecast_forward.1} parent=1 // pred_region
      %49 = dma.done [#allocation6], 16
    $region37: #{cnn_forecast_forward.1} parent=1 // pred_fallthru
      _
    %50 = sfence
    %v51 = vld [vmem:[%s0] sm:$0xff]
    %v52 = vld [vmem:[%s0 + $0x8] sm:$0xff]
    %v53 = vld [vmem:[%s0 + $0x10] sm:$0xff]
    %v54 = vld [vmem:[%s0 + $0x18] sm:$0xff]
    %s55 = sld [smem:[#allocation3]]
    %s56 = sld [smem:[#allocation3 + $0x80]]
    %s57 = sld [smem:[#allocation3 + $0x100]]
    %s58 = sld [smem:[#allocation5]]
    %v59 = vstv %s55
    %v60 = vmul.f32 %v59, %v51
    %v61 = vstv %s56
    %v62 = vmul.f32 %v61, %v52
    %v63 = vadd.f32 %v60, %v62
    %v64 = vstv %s57
    %v65 = vmul.f32 %v64, %v53
    %v66 = vadd.f32 %v63, %v65
    %v67 = vmul.f32 %v59, %v52
    %v68 = vmul.f32 %v61, %v53
    %v69 = vadd.f32 %v67, %v68
    %v70 = vmul.f32 %v64, %v54
    %v71 = vadd.f32 %v69, %v70
    %v72 = vmax.f32 %v66, %v71
    %v73 = vstv %s58
    %v74 = vadd.f32 %v72, %v73
    %v75 = vmax.f32 %v74, 0.0
    %v76 = vld [vmem:[%s3] sm:$0xff]
    %v77 = vld [vmem:[%s3 + $0x8] sm:$0xff]
    %v78 = vld [vmem:[%s3 + $0x10] sm:$0xff]
    %v79 = vld [vmem:[%s3 + $0x18] sm:$0xff]
    %v80 = vld [vmem:[%s3 + $0x20] sm:$0xff]
    %v81 = vld [vmem:[%s3 + $0x28] sm:$0xff]
    %v82 = vld [vmem:[%s3 + $0x30] sm:$0xff]
    %v83 = vld [vmem:[%s3 + $0x38] sm:$0xff]
    %v84 = vld [vmem:[%s3 + $0x40] sm:$0xff]
    %v85 = vld [vmem:[%s3 + $0x48] sm:$0xff]
    %v86 = vld [vmem:[%s3 + $0x50] sm:$0xff]
    %v87 = vld [vmem:[%s3 + $0x58] sm:$0xff]
    %v88 = vld [vmem:[%s3 + $0x60] sm:$0xff]
    %v89 = vld [vmem:[%s3 + $0x68] sm:$0xff]
    %v90 = vld [vmem:[%s3 + $0x70] sm:$0xff]
    %v91 = vld [vmem:[%s3 + $0x78] sm:$0xff]
    %92 = vmatprep.subr.mxu0 0.0
    %93 = vmatpush1.msra.mxu0 %v91
    %94 = vmatprep.subr.mxu0 0.0
    %95 = vmatpush1.msra.mxu0 %v90
    %96 = vmatprep.subr.mxu0 0.0
    %97 = vmatpush1.msra.mxu0 %v89
    %98 = vmatprep.subr.mxu0 0.0
    %99 = vmatpush1.msra.mxu0 %v88
    %100 = vmatprep.subr.mxu0 0.0
    %101 = vmatpush1.msra.mxu0 %v87
    %102 = vmatprep.subr.mxu0 0.0
    %103 = vmatpush1.msra.mxu0 %v86
    %104 = vmatprep.subr.mxu0 0.0
    %105 = vmatpush1.msra.mxu0 %v85
    %106 = vmatprep.subr.mxu0 0.0
    %107 = vmatpush1.msra.mxu0 %v84
    %108 = vmatprep.subr.mxu0 0.0
    %109 = vmatpush1.msra.mxu0 %v83
    %110 = vmatprep.subr.mxu0 0.0
    %111 = vmatpush1.msra.mxu0 %v82
    %112 = vmatprep.subr.mxu0 0.0
    %113 = vmatpush1.msra.mxu0 %v81
    %114 = vmatprep.subr.mxu0 0.0
    %115 = vmatpush1.msra.mxu0 %v80
    %116 = vmatprep.subr.mxu0 0.0
    %117 = vmatpush1.msra.mxu0 %v79
    %118 = vmatprep.subr.mxu0 0.0
    %119 = vmatpush1.msra.mxu0 %v78
    %120 = vmatprep.subr.mxu0 0.0
    %121 = vmatpush1.msra.mxu0 %v77
    %122 = vmatprep.subr.mxu0 0.0
    %123 = vmatpush1.msra.mxu0 %v76
    %124 = vmatprep.subr.mxu0 0.0
    %125 = vmatpush2.msra.mxu0 0.0
    %126 = vmatprep.subr.mxu0 0.0
    %127 = vmatpush2.msra.mxu0 0.0
    %128 = vmatprep.subr.mxu0 0.0
    %129 = vmatpush2.msra.mxu0 0.0
    %130 = vmatprep.subr.mxu0 0.0
    %131 = vmatpush2.msra.mxu0 0.0
    %132 = vmatprep.subr.mxu0 0.0
    %133 = vmatpush2.msra.mxu0 0.0
    %134 = vmatprep.subr.mxu0 0.0
    %135 = vmatpush2.msra.mxu0 0.0
    %136 = vmatprep.subr.mxu0 0.0
    %137 = vmatpush2.msra.mxu0 0.0
    %138 = vmatprep.subr.mxu0 0.0
    %139 = vmatpush2.msra.mxu0 0.0
    %140 = vmatprep.subr.mxu0 0.0
    %141 = vmatpush2.msra.mxu0 0.0
    %142 = vmatprep.subr.mxu0 0.0
    %143 = vmatpush2.msra.mxu0 0.0
    %144 = vmatprep.subr.mxu0 0.0
    %145 = vmatpush2.msra.mxu0 0.0
    %146 = vmatprep.subr.mxu0 0.0
    %147 = vmatpush2.msra.mxu0 0.0
    %148 = vmatprep.subr.mxu0 0.0
    %149 = vmatpush2.msra.mxu0 0.0
    %150 = vmatprep.subr.mxu0 0.0
    %151 = vmatpush2.msra.mxu0 0.0
    %152 = vmatprep.subr.mxu0 0.0
    %153 = vmatpush2.msra.mxu0 0.0
    %154 = vmatprep.subr.mxu0 0.0
    %155 = vmatpush2.msra.mxu0 0.0
    %156 = vmatprep.mubr.f32.mxu0 0.0
    %157 = vmatmul.mubr.f32.gmra.mxu0 %v75
    %v158 = vpop.f32.mrf.mxu0
    %v159 = vadd.f32 0.0, %v158
    %v160 = vpop.f32.mrf.mxu0
    %161 = vdwg.mxu0
    %162 = vst [vmem:[#allocation2] sm:$0xff] %v159
    %s163 = sld [smem:[#allocation3 + $0x1]]
    %s164 = sld [smem:[#allocation3 + $0x81]]
    %s165 = sld [smem:[#allocation3 + $0x101]]
    %s166 = sld [smem:[#allocation5 + $0x1]]
    %v167 = vstv %s163
    %v168 = vmul.f32 %v167, %v51
    %v169 = vstv %s164
    %v170 = vmul.f32 %v169, %v52
    %v171 = vadd.f32 %v168, %v170
    %v172 = vstv %s165
    %v173 = vmul.f32 %v172, %v53
    %v174 = vadd.f32 %v171, %v173
    %v175 = vmul.f32 %v167, %v52
    %v176 = vmul.f32 %v169, %v53
    %v177 = vadd.f32 %v175, %v176
    %v178 = vmul.f32 %v172, %v54
    %v179 = vadd.f32 %v177, %v178
    %v180 = vmax.f32 %v174, %v179
    %v181 = vstv %s166
    %v182 = vadd.f32 %v180, %v181
    %v183 = vmax.f32 %v182, 0.0
    %s184 = scalar_lea.vmem %s3, 128
    %v185 = vld [vmem:[%s184] sm:$0xff]
    %v186 = vld [vmem:[%s184 + $0x8] sm:$0xff]
    %v187 = vld [vmem:[%s184 + $0x10] sm:$0xff]
    %v188 = vld [vmem:[%s184 + $0x18] sm:$0xff]
    %v189 = vld [vmem:[%s184 + $0x20] sm:$0xff]
    %v190 = vld [vmem:[%s184 + $0x28] sm:$0xff]
    %v191 = vld [vmem:[%s184 + $0x30] sm:$0xff]
    %v192 = vld [vmem:[%s184 + $0x38] sm:$0xff]
    %v193 = vld [vmem:[%s184 + $0x40] sm:$0xff]
    %v194 = vld [vmem:[%s184 + $0x48] sm:$0xff]
    %v195 = vld [vmem:[%s184 + $0x50] sm:$0xff]
    %v196 = vld [vmem:[%s184 + $0x58] sm:$0xff]
    %v197 = vld [vmem:[%s184 + $0x60] sm:$0xff]
    %v198 = vld [vmem:[%s184 + $0x68] sm:$0xff]
    %v199 = vld [vmem:[%s184 + $0x70] sm:$0xff]
    %v200 = vld [vmem:[%s184 + $0x78] sm:$0xff]
    %201 = vmatprep.subr.mxu0 0.0
    %202 = vmatpush1.msra.mxu0 %v200
    %203 = vmatprep.subr.mxu0 0.0
    %204 = vmatpush1.msra.mxu0 %v199
    %205 = vmatprep.subr.mxu0 0.0
    %206 = vmatpush1.msra.mxu0 %v198
    %207 = vmatprep.subr.mxu0 0.0
    %208 = vmatpush1.msra.mxu0 %v197
    %209 = vmatprep.subr.mxu0 0.0
    %210 = vmatpush1.msra.mxu0 %v196
    %211 = vmatprep.subr.mxu0 0.0
    %212 = vmatpush1.msra.mxu0 %v195
    %213 = vmatprep.subr.mxu0 0.0
    %214 = vmatpush1.msra.mxu0 %v194
    %215 = vmatprep.subr.mxu0 0.0
    %216 = vmatpush1.msra.mxu0 %v193
    %217 = vmatprep.subr.mxu0 0.0
    %218 = vmatpush1.msra.mxu0 %v192
    %219 = vmatprep.subr.mxu0 0.0
    %220 = vmatpush1.msra.mxu0 %v191
    %221 = vmatprep.subr.mxu0 0.0
    %222 = vmatpush1.msra.mxu0 %v190
    %223 = vmatprep.subr.mxu0 0.0
    %224 = vmatpush1.msra.mxu0 %v189
    %225 = vmatprep.subr.mxu0 0.0
    %226 = vmatpush1.msra.mxu0 %v188
    %227 = vmatprep.subr.mxu0 0.0
    %228 = vmatpush1.msra.mxu0 %v187
    %229 = vmatprep.subr.mxu0 0.0
    %230 = vmatpush1.msra.mxu0 %v186
    %231 = vmatprep.subr.mxu0 0.0
    %232 = vmatpush1.msra.mxu0 %v185
    %233 = vmatprep.subr.mxu0 0.0
    %234 = vmatpush2.msra.mxu0 0.0
    %235 = vmatprep.subr.mxu0 0.0
    %236 = vmatpush2.msra.mxu0 0.0
    %237 = vmatprep.subr.mxu0 0.0
    %238 = vmatpush2.msra.mxu0 0.0
    %239 = vmatprep.subr.mxu0 0.0
    %240 = vmatpush2.msra.mxu0 0.0
    %241 = vmatprep.subr.mxu0 0.0
    %242 = vmatpush2.msra.mxu0 0.0
    %243 = vmatprep.subr.mxu0 0.0
    %244 = vmatpush2.msra.mxu0 0.0
    %245 = vmatprep.subr.mxu0 0.0
    %246 = vmatpush2.msra.mxu0 0.0
    %247 = vmatprep.subr.mxu0 0.0
    %248 = vmatpush2.msra.mxu0 0.0
    %249 = vmatprep.subr.mxu0 0.0
    %250 = vmatpush2.msra.mxu0 0.0
    %251 = vmatprep.subr.mxu0 0.0
    %252 = vmatpush2.msra.mxu0 0.0
    %253 = vmatprep.subr.mxu0 0.0
    %254 = vmatpush2.msra.mxu0 0.0
    %255 = vmatprep.subr.mxu0 0.0
    %256 = vmatpush2.msra.mxu0 0.0
    %257 = vmatprep.subr.mxu0 0.0
    %258 = vmatpush2.msra.mxu0 0.0
    %259 = vmatprep.subr.mxu0 0.0
    %260 = vmatpush2.msra.mxu0 0.0
    %261 = vmatprep.subr.mxu0 0.0
    %262 = vmatpush2.msra.mxu0 0.0
    %263 = vmatprep.subr.mxu0 0.0
    %264 = vmatpush2.msra.mxu0 0.0
    %265 = vmatprep.mubr.f32.mxu0 0.0
    %266 = vmatmul.mubr.f32.gmra.mxu0 %v183
    %v267 = vpop.f32.mrf.mxu0
    %v268 = vadd.f32 0.0, %v267
    %v269 = vpop.f32.mrf.mxu0
    %270 = vdwg.mxu0
    %v271 = vld [vmem:[#allocation2] sm:$0xff]
    %v272 = vadd.f32 %v271, %v268
    %273 = vst [vmem:[#allocation2] sm:$0xff] %v272
    %s274 = sld [smem:[#allocation3 + $0x2]]
    %s275 = sld [smem:[#allocation3 + $0x82]]
    %s276 = sld [smem:[#allocation3 + $0x102]]
    %s277 = sld [smem:[#allocation5 + $0x2]]
    %v278 = vstv %s274
    %v279 = vmul.f32 %v278, %v51
    %v280 = vstv %s275
    %v281 = vmul.f32 %v280, %v52
    %v282 = vadd.f32 %v279, %v281
    %v283 = vstv %s276
    %v284 = vmul.f32 %v283, %v53
    %v285 = vadd.f32 %v282, %v284
    %v286 = vmul.f32 %v278, %v52
    %v287 = vmul.f32 %v280, %v53
    %v288 = vadd.f32 %v286, %v287
    %v289 = vmul.f32 %v283, %v54
    %v290 = vadd.f32 %v288, %v289
    %v291 = vmax.f32 %v285, %v290
    %v292 = vstv %s277
    %v293 = vadd.f32 %v291, %v292
    %v294 = vmax.f32 %v293, 0.0
    %s295 = scalar_lea.vmem %s3, 256
    %v296 = vld [vmem:[%s295] sm:$0xff]
    %v297 = vld [vmem:[%s295 + $0x8] sm:$0xff]
    %v298 = vld [vmem:[%s295 + $0x10] sm:$0xff]
    %v299 = vld [vmem:[%s295 + $0x18] sm:$0xff]
    %v300 = vld [vmem:[%s295 + $0x20] sm:$0xff]
    %v301 = vld [vmem:[%s295 + $0x28] sm:$0xff]
    %v302 = vld [vmem:[%s295 + $0x30] sm:$0xff]
    %v303 = vld [vmem:[%s295 + $0x38] sm:$0xff]
    %v304 = vld [vmem:[%s295 + $0x40] sm:$0xff]
    %v305 = vld [vmem:[%s295 + $0x48] sm:$0xff]
    %v306 = vld [vmem:[%s295 + $0x50] sm:$0xff]
    %v307 = vld [vmem:[%s295 + $0x58] sm:$0xff]
    %v308 = vld [vmem:[%s295 + $0x60] sm:$0xff]
    %v309 = vld [vmem:[%s295 + $0x68] sm:$0xff]
    %v310 = vld [vmem:[%s295 + $0x70] sm:$0xff]
    %v311 = vld [vmem:[%s295 + $0x78] sm:$0xff]
    %312 = vmatprep.subr.mxu0 0.0
    %313 = vmatpush1.msra.mxu0 %v311
    %314 = vmatprep.subr.mxu0 0.0
    %315 = vmatpush1.msra.mxu0 %v310
    %316 = vmatprep.subr.mxu0 0.0
    %317 = vmatpush1.msra.mxu0 %v309
    %318 = vmatprep.subr.mxu0 0.0
    %319 = vmatpush1.msra.mxu0 %v308
    %320 = vmatprep.subr.mxu0 0.0
    %321 = vmatpush1.msra.mxu0 %v307
    %322 = vmatprep.subr.mxu0 0.0
    %323 = vmatpush1.msra.mxu0 %v306
    %324 = vmatprep.subr.mxu0 0.0
    %325 = vmatpush1.msra.mxu0 %v305
    %326 = vmatprep.subr.mxu0 0.0
    %327 = vmatpush1.msra.mxu0 %v304
    %328 = vmatprep.subr.mxu0 0.0
    %329 = vmatpush1.msra.mxu0 %v303
    %330 = vmatprep.subr.mxu0 0.0
    %331 = vmatpush1.msra.mxu0 %v302
    %332 = vmatprep.subr.mxu0 0.0
    %333 = vmatpush1.msra.mxu0 %v301
    %334 = vmatprep.subr.mxu0 0.0
    %335 = vmatpush1.msra.mxu0 %v300
    %336 = vmatprep.subr.mxu0 0.0
    %337 = vmatpush1.msra.mxu0 %v299
    %338 = vmatprep.subr.mxu0 0.0
    %339 = vmatpush1.msra.mxu0 %v298
    %340 = vmatprep.subr.mxu0 0.0
    %341 = vmatpush1.msra.mxu0 %v297
    %342 = vmatprep.subr.mxu0 0.0
    %343 = vmatpush1.msra.mxu0 %v296
    %344 = vmatprep.subr.mxu0 0.0
    %345 = vmatpush2.msra.mxu0 0.0
    %346 = vmatprep.subr.mxu0 0.0
    %347 = vmatpush2.msra.mxu0 0.0
    %348 = vmatprep.subr.mxu0 0.0
    %349 = vmatpush2.msra.mxu0 0.0
    %350 = vmatprep.subr.mxu0 0.0
    %351 = vmatpush2.msra.mxu0 0.0
    %352 = vmatprep.subr.mxu0 0.0
    %353 = vmatpush2.msra.mxu0 0.0
    %354 = vmatprep.subr.mxu0 0.0
    %355 = vmatpush2.msra.mxu0 0.0
    %356 = vmatprep.subr.mxu0 0.0
    %357 = vmatpush2.msra.mxu0 0.0
    %358 = vmatprep.subr.mxu0 0.0
    %359 = vmatpush2.msra.mxu0 0.0
    %360 = vmatprep.subr.mxu0 0.0
    %361 = vmatpush2.msra.mxu0 0.0
    %362 = vmatprep.subr.mxu0 0.0
    %363 = vmatpush2.msra.mxu0 0.0
    %364 = vmatprep.subr.mxu0 0.0
    %365 = vmatpush2.msra.mxu0 0.0
    %366 = vmatprep.subr.mxu0 0.0
    %367 = vmatpush2.msra.mxu0 0.0
    %368 = vmatprep.subr.mxu0 0.0
    %369 = vmatpush2.msra.mxu0 0.0
    %370 = vmatprep.subr.mxu0 0.0
    %371 = vmatpush2.msra.mxu0 0.0
    %372 = vmatprep.subr.mxu0 0.0
    %373 = vmatpush2.msra.mxu0 0.0
    %374 = vmatprep.subr.mxu0 0.0
    %375 = vmatpush2.msra.mxu0 0.0
    %376 = vmatprep.mubr.f32.mxu0 0.0
    %377 = vmatmul.mubr.f32.gmra.mxu0 %v294
    %v378 = vpop.f32.mrf.mxu0
    %v379 = vadd.f32 0.0, %v378
    %v380 = vpop.f32.mrf.mxu0
    %381 = vdwg.mxu0
    %v382 = vld [vmem:[#allocation2] sm:$0xff]
    %v383 = vadd.f32 %v382, %v379
    %384 = vst [vmem:[#allocation2] sm:$0xff] %v383
    %s385 = sld [smem:[#allocation3 + $0x3]]
    %s386 = sld [smem:[#allocation3 + $0x83]]
    %s387 = sld [smem:[#allocation3 + $0x103]]
    %s388 = sld [smem:[#allocation5 + $0x3]]
    %v389 = vstv %s385
    %v390 = vmul.f32 %v389, %v51
    %v391 = vstv %s386
    %v392 = vmul.f32 %v391, %v52
    %v393 = vadd.f32 %v390, %v392
    %v394 = vstv %s387
    %v395 = vmul.f32 %v394, %v53
    %v396 = vadd.f32 %v393, %v395
    %v397 = vmul.f32 %v389, %v52
    %v398 = vmul.f32 %v391, %v53
    %v399 = vadd.f32 %v397, %v398
    %v400 = vmul.f32 %v394, %v54
    %v401 = vadd.f32 %v399, %v400
    %v402 = vmax.f32 %v396, %v401
    %v403 = vstv %s388
    %v404 = vadd.f32 %v402, %v403
    %v405 = vmax.f32 %v404, 0.0
    %s406 = scalar_lea.vmem %s3, 384
    %v407 = vld [vmem:[%s406] sm:$0xff]
    %v408 = vld [vmem:[%s406 + $0x8] sm:$0xff]
    %v409 = vld [vmem:[%s406 + $0x10] sm:$0xff]
    %v410 = vld [vmem:[%s406 + $0x18] sm:$0xff]
    %v411 = vld [vmem:[%s406 + $0x20] sm:$0xff]
    %v412 = vld [vmem:[%s406 + $0x28] sm:$0xff]
    %v413 = vld [vmem:[%s406 + $0x30] sm:$0xff]
    %v414 = vld [vmem:[%s406 + $0x38] sm:$0xff]
    %v415 = vld [vmem:[%s406 + $0x40] sm:$0xff]
    %v416 = vld [vmem:[%s406 + $0x48] sm:$0xff]
    %v417 = vld [vmem:[%s406 + $0x50] sm:$0xff]
    %v418 = vld [vmem:[%s406 + $0x58] sm:$0xff]
    %v419 = vld [vmem:[%s406 + $0x60] sm:$0xff]
    %v420 = vld [vmem:[%s406 + $0x68] sm:$0xff]
    %v421 = vld [vmem:[%s406 + $0x70] sm:$0xff]
    %v422 = vld [vmem:[%s406 + $0x78] sm:$0xff]
    %423 = vmatprep.subr.mxu0 0.0
    %424 = vmatpush1.msra.mxu0 %v422
    %425 = vmatprep.subr.mxu0 0.0
    %426 = vmatpush1.msra.mxu0 %v421
    %427 = vmatprep.subr.mxu0 0.0
    %428 = vmatpush1.msra.mxu0 %v420
    %429 = vmatprep.subr.mxu0 0.0
    %430 = vmatpush1.msra.mxu0 %v419
    %431 = vmatprep.subr.mxu0 0.0
    %432 = vmatpush1.msra.mxu0 %v418
    %433 = vmatprep.subr.mxu0 0.0
    %434 = vmatpush1.msra.mxu0 %v417
    %435 = vmatprep.subr.mxu0 0.0
    %436 = vmatpush1.msra.mxu0 %v416
    %437 = vmatprep.subr.mxu0 0.0
    %438 = vmatpush1.msra.mxu0 %v415
    %439 = vmatprep.subr.mxu0 0.0
    %440 = vmatpush1.msra.mxu0 %v414
    %441 = vmatprep.subr.mxu0 0.0
    %442 = vmatpush1.msra.mxu0 %v413
    %443 = vmatprep.subr.mxu0 0.0
    %444 = vmatpush1.msra.mxu0 %v412
    %445 = vmatprep.subr.mxu0 0.0
    %446 = vmatpush1.msra.mxu0 %v411
    %447 = vmatprep.subr.mxu0 0.0
    %448 = vmatpush1.msra.mxu0 %v410
    %449 = vmatprep.subr.mxu0 0.0
    %450 = vmatpush1.msra.mxu0 %v409
    %451 = vmatprep.subr.mxu0 0.0
    %452 = vmatpush1.msra.mxu0 %v408
    %453 = vmatprep.subr.mxu0 0.0
    %454 = vmatpush1.msra.mxu0 %v407
    %455 = vmatprep.subr.mxu0 0.0
    %456 = vmatpush2.msra.mxu0 0.0
    %457 = vmatprep.subr.mxu0 0.0
    %458 = vmatpush2.msra.mxu0 0.0
    %459 = vmatprep.subr.mxu0 0.0
    %460 = vmatpush2.msra.mxu0 0.0
    %461 = vmatprep.subr.mxu0 0.0
    %462 = vmatpush2.msra.mxu0 0.0
    %463 = vmatprep.subr.mxu0 0.0
    %464 = vmatpush2.msra.mxu0 0.0
    %465 = vmatprep.subr.mxu0 0.0
    %466 = vmatpush2.msra.mxu0 0.0
    %467 = vmatprep.subr.mxu0 0.0
    %468 = vmatpush2.msra.mxu0 0.0
    %469 = vmatprep.subr.mxu0 0.0
    %470 = vmatpush2.msra.mxu0 0.0
    %471 = vmatprep.subr.mxu0 0.0
    %472 = vmatpush2.msra.mxu0 0.0
    %473 = vmatprep.subr.mxu0 0.0
    %474 = vmatpush2.msra.mxu0 0.0
    %475 = vmatprep.subr.mxu0 0.0
    %476 = vmatpush2.msra.mxu0 0.0
    %477 = vmatprep.subr.mxu0 0.0
    %478 = vmatpush2.msra.mxu0 0.0
    %479 = vmatprep.subr.mxu0 0.0
    %480 = vmatpush2.msra.mxu0 0.0
    %481 = vmatprep.subr.mxu0 0.0
    %482 = vmatpush2.msra.mxu0 0.0
    %483 = vmatprep.subr.mxu0 0.0
    %484 = vmatpush2.msra.mxu0 0.0
    %485 = vmatprep.subr.mxu0 0.0
    %486 = vmatpush2.msra.mxu0 0.0
    %487 = vmatprep.mubr.f32.mxu0 0.0
    %488 = vmatmul.mubr.f32.gmra.mxu0 %v405
    %v489 = vpop.f32.mrf.mxu0
    %v490 = vadd.f32 0.0, %v489
    %v491 = vpop.f32.mrf.mxu0
    %492 = vdwg.mxu0
    %v493 = vld [vmem:[#allocation2] sm:$0xff]
    %v494 = vadd.f32 %v493, %v490
    %495 = vst [vmem:[#allocation2] sm:$0xff] %v494
    %s496 = sld [smem:[#allocation3 + $0x4]]
    %s497 = sld [smem:[#allocation3 + $0x84]]
    %s498 = sld [smem:[#allocation3 + $0x104]]
    %s499 = sld [smem:[#allocation5 + $0x4]]
    %v500 = vstv %s496
    %v501 = vmul.f32 %v500, %v51
    %v502 = vstv %s497
    %v503 = vmul.f32 %v502, %v52
    %v504 = vadd.f32 %v501, %v503
    %v505 = vstv %s498
    %v506 = vmul.f32 %v505, %v53
    %v507 = vadd.f32 %v504, %v506
    %v508 = vmul.f32 %v500, %v52
    %v509 = vmul.f32 %v502, %v53
    %v510 = vadd.f32 %v508, %v509
    %v511 = vmul.f32 %v505, %v54
    %v512 = vadd.f32 %v510, %v511
    %v513 = vmax.f32 %v507, %v512
    %v514 = vstv %s499
    %v515 = vadd.f32 %v513, %v514
    %v516 = vmax.f32 %v515, 0.0
    %s517 = scalar_lea.vmem %s3, 512
    %v518 = vld [vmem:[%s517] sm:$0xff]
    %v519 = vld [vmem:[%s517 + $0x8] sm:$0xff]
    %v520 = vld [vmem:[%s517 + $0x10] sm:$0xff]
    %v521 = vld [vmem:[%s517 + $0x18] sm:$0xff]
    %v522 = vld [vmem:[%s517 + $0x20] sm:$0xff]
    %v523 = vld [vmem:[%s517 + $0x28] sm:$0xff]
    %v524 = vld [vmem:[%s517 + $0x30] sm:$0xff]
    %v525 = vld [vmem:[%s517 + $0x38] sm:$0xff]
    %v526 = vld [vmem:[%s517 + $0x40] sm:$0xff]
    %v527 = vld [vmem:[%s517 + $0x48] sm:$0xff]
    %v528 = vld [vmem:[%s517 + $0x50] sm:$0xff]
    %v529 = vld [vmem:[%s517 + $0x58] sm:$0xff]
    %v530 = vld [vmem:[%s517 + $0x60] sm:$0xff]
    %v531 = vld [vmem:[%s517 + $0x68] sm:$0xff]
    %v532 = vld [vmem:[%s517 + $0x70] sm:$0xff]
    %v533 = vld [vmem:[%s517 + $0x78] sm:$0xff]
    %534 = vmatprep.subr.mxu0 0.0
    %535 = vmatpush1.msra.mxu0 %v533
    %536 = vmatprep.subr.mxu0 0.0
    %537 = vmatpush1.msra.mxu0 %v532
    %538 = vmatprep.subr.mxu0 0.0
    %539 = vmatpush1.msra.mxu0 %v531
    %540 = vmatprep.subr.mxu0 0.0
    %541 = vmatpush1.msra.mxu0 %v530
    %542 = vmatprep.subr.mxu0 0.0
    %543 = vmatpush1.msra.mxu0 %v529
    %544 = vmatprep.subr.mxu0 0.0
    %545 = vmatpush1.msra.mxu0 %v528
    %546 = vmatprep.subr.mxu0 0.0
    %547 = vmatpush1.msra.mxu0 %v527
    %548 = vmatprep.subr.mxu0 0.0
    %549 = vmatpush1.msra.mxu0 %v526
    %550 = vmatprep.subr.mxu0 0.0
    %551 = vmatpush1.msra.mxu0 %v525
    %552 = vmatprep.subr.mxu0 0.0
    %553 = vmatpush1.msra.mxu0 %v524
    %554 = vmatprep.subr.mxu0 0.0
    %555 = vmatpush1.msra.mxu0 %v523
    %556 = vmatprep.subr.mxu0 0.0
    %557 = vmatpush1.msra.mxu0 %v522
    %558 = vmatprep.subr.mxu0 0.0
    %559 = vmatpush1.msra.mxu0 %v521
    %560 = vmatprep.subr.mxu0 0.0
    %561 = vmatpush1.msra.mxu0 %v520
    %562 = vmatprep.subr.mxu0 0.0
    %563 = vmatpush1.msra.mxu0 %v519
    %564 = vmatprep.subr.mxu0 0.0
    %565 = vmatpush1.msra.mxu0 %v518
    %566 = vmatprep.subr.mxu0 0.0
    %567 = vmatpush2.msra.mxu0 0.0
    %568 = vmatprep.subr.mxu0 0.0
    %569 = vmatpush2.msra.mxu0 0.0
    %570 = vmatprep.subr.mxu0 0.0
    %571 = vmatpush2.msra.mxu0 0.0
    %572 = vmatprep.subr.mxu0 0.0
    %573 = vmatpush2.msra.mxu0 0.0
    %574 = vmatprep.subr.mxu0 0.0
    %575 = vmatpush2.msra.mxu0 0.0
    %576 = vmatprep.subr.mxu0 0.0
    %577 = vmatpush2.msra.mxu0 0.0
    %578 = vmatprep.subr.mxu0 0.0
    %579 = vmatpush2.msra.mxu0 0.0
    %580 = vmatprep.subr.mxu0 0.0
    %581 = vmatpush2.msra.mxu0 0.0
    %582 = vmatprep.subr.mxu0 0.0
    %583 = vmatpush2.msra.mxu0 0.0
    %584 = vmatprep.subr.mxu0 0.0
    %585 = vmatpush2.msra.mxu0 0.0
    %586 = vmatprep.subr.mxu0 0.0
    %587 = vmatpush2.msra.mxu0 0.0
    %588 = vmatprep.subr.mxu0 0.0
    %589 = vmatpush2.msra.mxu0 0.0
    %590 = vmatprep.subr.mxu0 0.0
    %591 = vmatpush2.msra.mxu0 0.0
    %592 = vmatprep.subr.mxu0 0.0
    %593 = vmatpush2.msra.mxu0 0.0
    %594 = vmatprep.subr.mxu0 0.0
    %595 = vmatpush2.msra.mxu0 0.0
    %596 = vmatprep.subr.mxu0 0.0
    %597 = vmatpush2.msra.mxu0 0.0
    %598 = vmatprep.mubr.f32.mxu0 0.0
    %599 = vmatmul.mubr.f32.gmra.mxu0 %v516
    %v600 = vpop.f32.mrf.mxu0
    %v601 = vadd.f32 0.0, %v600
    %v602 = vpop.f32.mrf.mxu0
    %603 = vdwg.mxu0
    %v604 = vld [vmem:[#allocation2] sm:$0xff]
    %v605 = vadd.f32 %v604, %v601
    %606 = vst [vmem:[#allocation2] sm:$0xff] %v605
    %s607 = sld [smem:[#allocation3 + $0x5]]
    %s608 = sld [smem:[#allocation3 + $0x85]]
    %s609 = sld [smem:[#allocation3 + $0x105]]
    %s610 = sld [smem:[#allocation5 + $0x5]]
    %v611 = vstv %s607
    %v612 = vmul.f32 %v611, %v51
    %v613 = vstv %s608
    %v614 = vmul.f32 %v613, %v52
    %v615 = vadd.f32 %v612, %v614
    %v616 = vstv %s609
    %v617 = vmul.f32 %v616, %v53
    %v618 = vadd.f32 %v615, %v617
    %v619 = vmul.f32 %v611, %v52
    %v620 = vmul.f32 %v613, %v53
    %v621 = vadd.f32 %v619, %v620
    %v622 = vmul.f32 %v616, %v54
    %v623 = vadd.f32 %v621, %v622
    %v624 = vmax.f32 %v618, %v623
    %v625 = vstv %s610
    %v626 = vadd.f32 %v624, %v625
    %v627 = vmax.f32 %v626, 0.0
    %s628 = scalar_lea.vmem %s3, 640
    %v629 = vld [vmem:[%s628] sm:$0xff]
    %v630 = vld [vmem:[%s628 + $0x8] sm:$0xff]
    %v631 = vld [vmem:[%s628 + $0x10] sm:$0xff]
    %v632 = vld [vmem:[%s628 + $0x18] sm:$0xff]
    %v633 = vld [vmem:[%s628 + $0x20] sm:$0xff]
    %v634 = vld [vmem:[%s628 + $0x28] sm:$0xff]
    %v635 = vld [vmem:[%s628 + $0x30] sm:$0xff]
    %v636 = vld [vmem:[%s628 + $0x38] sm:$0xff]
    %v637 = vld [vmem:[%s628 + $0x40] sm:$0xff]
    %v638 = vld [vmem:[%s628 + $0x48] sm:$0xff]
    %v639 = vld [vmem:[%s628 + $0x50] sm:$0xff]
    %v640 = vld [vmem:[%s628 + $0x58] sm:$0xff]
    %v641 = vld [vmem:[%s628 + $0x60] sm:$0xff]
    %v642 = vld [vmem:[%s628 + $0x68] sm:$0xff]
    %v643 = vld [vmem:[%s628 + $0x70] sm:$0xff]
    %v644 = vld [vmem:[%s628 + $0x78] sm:$0xff]
    %645 = vmatprep.subr.mxu0 0.0
    %646 = vmatpush1.msra.mxu0 %v644
    %647 = vmatprep.subr.mxu0 0.0
    %648 = vmatpush1.msra.mxu0 %v643
    %649 = vmatprep.subr.mxu0 0.0
    %650 = vmatpush1.msra.mxu0 %v642
    %651 = vmatprep.subr.mxu0 0.0
    %652 = vmatpush1.msra.mxu0 %v641
    %653 = vmatprep.subr.mxu0 0.0
    %654 = vmatpush1.msra.mxu0 %v640
    %655 = vmatprep.subr.mxu0 0.0
    %656 = vmatpush1.msra.mxu0 %v639
    %657 = vmatprep.subr.mxu0 0.0
    %658 = vmatpush1.msra.mxu0 %v638
    %659 = vmatprep.subr.mxu0 0.0
    %660 = vmatpush1.msra.mxu0 %v637
    %661 = vmatprep.subr.mxu0 0.0
    %662 = vmatpush1.msra.mxu0 %v636
    %663 = vmatprep.subr.mxu0 0.0
    %664 = vmatpush1.msra.mxu0 %v635
    %665 = vmatprep.subr.mxu0 0.0
    %666 = vmatpush1.msra.mxu0 %v634
    %667 = vmatprep.subr.mxu0 0.0
    %668 = vmatpush1.msra.mxu0 %v633
    %669 = vmatprep.subr.mxu0 0.0
    %670 = vmatpush1.msra.mxu0 %v632
    %671 = vmatprep.subr.mxu0 0.0
    %672 = vmatpush1.msra.mxu0 %v631
    %673 = vmatprep.subr.mxu0 0.0
    %674 = vmatpush1.msra.mxu0 %v630
    %675 = vmatprep.subr.mxu0 0.0
    %676 = vmatpush1.msra.mxu0 %v629
    %677 = vmatprep.subr.mxu0 0.0
    %678 = vmatpush2.msra.mxu0 0.0
    %679 = vmatprep.subr.mxu0 0.0
    %680 = vmatpush2.msra.mxu0 0.0
    %681 = vmatprep.subr.mxu0 0.0
    %682 = vmatpush2.msra.mxu0 0.0
    %683 = vmatprep.subr.mxu0 0.0
    %684 = vmatpush2.msra.mxu0 0.0
    %685 = vmatprep.subr.mxu0 0.0
    %686 = vmatpush2.msra.mxu0 0.0
    %687 = vmatprep.subr.mxu0 0.0
    %688 = vmatpush2.msra.mxu0 0.0
    %689 = vmatprep.subr.mxu0 0.0
    %690 = vmatpush2.msra.mxu0 0.0
    %691 = vmatprep.subr.mxu0 0.0
    %692 = vmatpush2.msra.mxu0 0.0
    %693 = vmatprep.subr.mxu0 0.0
    %694 = vmatpush2.msra.mxu0 0.0
    %695 = vmatprep.subr.mxu0 0.0
    %696 = vmatpush2.msra.mxu0 0.0
    %697 = vmatprep.subr.mxu0 0.0
    %698 = vmatpush2.msra.mxu0 0.0
    %699 = vmatprep.subr.mxu0 0.0
    %700 = vmatpush2.msra.mxu0 0.0
    %701 = vmatprep.subr.mxu0 0.0
    %702 = vmatpush2.msra.mxu0 0.0
    %703 = vmatprep.subr.mxu0 0.0
    %704 = vmatpush2.msra.mxu0 0.0
    %705 = vmatprep.subr.mxu0 0.0
    %706 = vmatpush2.msra.mxu0 0.0
    %707 = vmatprep.subr.mxu0 0.0
    %708 = vmatpush2.msra.mxu0 0.0
    %709 = vmatprep.mubr.f32.mxu0 0.0
    %710 = vmatmul.mubr.f32.gmra.mxu0 %v627
    %v711 = vpop.f32.mrf.mxu0
    %v712 = vadd.f32 0.0, %v711
    %v713 = vpop.f32.mrf.mxu0
    %714 = vdwg.mxu0
    %v715 = vld [vmem:[#allocation2] sm:$0xff]
    %v716 = vadd.f32 %v715, %v712
    %717 = vst [vmem:[#allocation2] sm:$0xff] %v716
    %s718 = sld [smem:[#allocation3 + $0x6]]
    %s719 = sld [smem:[#allocation3 + $0x86]]
    %s720 = sld [smem:[#allocation3 + $0x106]]
    %s721 = sld [smem:[#allocation5 + $0x6]]
    %v722 = vstv %s718
    %v723 = vmul.f32 %v722, %v51
    %v724 = vstv %s719
    %v725 = vmul.f32 %v724, %v52
    %v726 = vadd.f32 %v723, %v725
    %v727 = vstv %s720
    %v728 = vmul.f32 %v727, %v53
    %v729 = vadd.f32 %v726, %v728
    %v730 = vmul.f32 %v722, %v52
    %v731 = vmul.f32 %v724, %v53
    %v732 = vadd.f32 %v730, %v731
    %v733 = vmul.f32 %v727, %v54
    %v734 = vadd.f32 %v732, %v733
    %v735 = vmax.f32 %v729, %v734
    %v736 = vstv %s721
    %v737 = vadd.f32 %v735, %v736
    %v738 = vmax.f32 %v737, 0.0
    %s739 = scalar_lea.vmem %s3, 768
    %v740 = vld [vmem:[%s739] sm:$0xff]
    %v741 = vld [vmem:[%s739 + $0x8] sm:$0xff]
    %v742 = vld [vmem:[%s739 + $0x10] sm:$0xff]
    %v743 = vld [vmem:[%s739 + $0x18] sm:$0xff]
    %v744 = vld [vmem:[%s739 + $0x20] sm:$0xff]
    %v745 = vld [vmem:[%s739 + $0x28] sm:$0xff]
    %v746 = vld [vmem:[%s739 + $0x30] sm:$0xff]
    %v747 = vld [vmem:[%s739 + $0x38] sm:$0xff]
    %v748 = vld [vmem:[%s739 + $0x40] sm:$0xff]
    %v749 = vld [vmem:[%s739 + $0x48] sm:$0xff]
    %v750 = vld [vmem:[%s739 + $0x50] sm:$0xff]
    %v751 = vld [vmem:[%s739 + $0x58] sm:$0xff]
    %v752 = vld [vmem:[%s739 + $0x60] sm:$0xff]
    %v753 = vld [vmem:[%s739 + $0x68] sm:$0xff]
    %v754 = vld [vmem:[%s739 + $0x70] sm:$0xff]
    %v755 = vld [vmem:[%s739 + $0x78] sm:$0xff]
    %756 = vmatprep.subr.mxu0 0.0
    %757 = vmatpush1.msra.mxu0 %v755
    %758 = vmatprep.subr.mxu0 0.0
    %759 = vmatpush1.msra.mxu0 %v754
    %760 = vmatprep.subr.mxu0 0.0
    %761 = vmatpush1.msra.mxu0 %v753
    %762 = vmatprep.subr.mxu0 0.0
    %763 = vmatpush1.msra.mxu0 %v752
    %764 = vmatprep.subr.mxu0 0.0
    %765 = vmatpush1.msra.mxu0 %v751
    %766 = vmatprep.subr.mxu0 0.0
    %767 = vmatpush1.msra.mxu0 %v750
    %768 = vmatprep.subr.mxu0 0.0
    %769 = vmatpush1.msra.mxu0 %v749
    %770 = vmatprep.subr.mxu0 0.0
    %771 = vmatpush1.msra.mxu0 %v748
    %772 = vmatprep.subr.mxu0 0.0
    %773 = vmatpush1.msra.mxu0 %v747
    %774 = vmatprep.subr.mxu0 0.0
    %775 = vmatpush1.msra.mxu0 %v746
    %776 = vmatprep.subr.mxu0 0.0
    %777 = vmatpush1.msra.mxu0 %v745
    %778 = vmatprep.subr.mxu0 0.0
    %779 = vmatpush1.msra.mxu0 %v744
    %780 = vmatprep.subr.mxu0 0.0
    %781 = vmatpush1.msra.mxu0 %v743
    %782 = vmatprep.subr.mxu0 0.0
    %783 = vmatpush1.msra.mxu0 %v742
    %784 = vmatprep.subr.mxu0 0.0
    %785 = vmatpush1.msra.mxu0 %v741
    %786 = vmatprep.subr.mxu0 0.0
    %787 = vmatpush1.msra.mxu0 %v740
    %788 = vmatprep.subr.mxu0 0.0
    %789 = vmatpush2.msra.mxu0 0.0
    %790 = vmatprep.subr.mxu0 0.0
    %791 = vmatpush2.msra.mxu0 0.0
    %792 = vmatprep.subr.mxu0 0.0
    %793 = vmatpush2.msra.mxu0 0.0
    %794 = vmatprep.subr.mxu0 0.0
    %795 = vmatpush2.msra.mxu0 0.0
    %796 = vmatprep.subr.mxu0 0.0
    %797 = vmatpush2.msra.mxu0 0.0
    %798 = vmatprep.subr.mxu0 0.0
    %799 = vmatpush2.msra.mxu0 0.0
    %800 = vmatprep.subr.mxu0 0.0
    %801 = vmatpush2.msra.mxu0 0.0
    %802 = vmatprep.subr.mxu0 0.0
    %803 = vmatpush2.msra.mxu0 0.0
    %804 = vmatprep.subr.mxu0 0.0
    %805 = vmatpush2.msra.mxu0 0.0
    %806 = vmatprep.subr.mxu0 0.0
    %807 = vmatpush2.msra.mxu0 0.0
    %808 = vmatprep.subr.mxu0 0.0
    %809 = vmatpush2.msra.mxu0 0.0
    %810 = vmatprep.subr.mxu0 0.0
    %811 = vmatpush2.msra.mxu0 0.0
    %812 = vmatprep.subr.mxu0 0.0
    %813 = vmatpush2.msra.mxu0 0.0
    %814 = vmatprep.subr.mxu0 0.0
    %815 = vmatpush2.msra.mxu0 0.0
    %816 = vmatprep.subr.mxu0 0.0
    %817 = vmatpush2.msra.mxu0 0.0
    %818 = vmatprep.subr.mxu0 0.0
    %819 = vmatpush2.msra.mxu0 0.0
    %820 = vmatprep.mubr.f32.mxu0 0.0
    %821 = vmatmul.mubr.f32.gmra.mxu0 %v738
    %v822 = vpop.f32.mrf.mxu0
    %v823 = vadd.f32 0.0, %v822
    %v824 = vpop.f32.mrf.mxu0
    %825 = vdwg.mxu0
    %v826 = vld [vmem:[#allocation2] sm:$0xff]
    %v827 = vadd.f32 %v826, %v823
    %828 = vst [vmem:[#allocation2] sm:$0xff] %v827
    %s829 = sld [smem:[#allocation3 + $0x7]]
    %s830 = sld [smem:[#allocation3 + $0x87]]
    %s831 = sld [smem:[#allocation3 + $0x107]]
    %s832 = sld [smem:[#allocation5 + $0x7]]
    %v833 = vstv %s829
    %v834 = vmul.f32 %v833, %v51
    %v835 = vstv %s830
    %v836 = vmul.f32 %v835, %v52
    %v837 = vadd.f32 %v834, %v836
    %v838 = vstv %s831
    %v839 = vmul.f32 %v838, %v53
    %v840 = vadd.f32 %v837, %v839
    %v841 = vmul.f32 %v833, %v52
    %v842 = vmul.f32 %v835, %v53
    %v843 = vadd.f32 %v841, %v842
    %v844 = vmul.f32 %v838, %v54
    %v845 = vadd.f32 %v843, %v844
    %v846 = vmax.f32 %v840, %v845
    %v847 = vstv %s832
    %v848 = vadd.f32 %v846, %v847
    %v849 = vmax.f32 %v848, 0.0
    %s850 = scalar_lea.vmem %s3, 896
    %v851 = vld [vmem:[%s850] sm:$0xff]
    %v852 = vld [vmem:[%s850 + $0x8] sm:$0xff]
    %v853 = vld [vmem:[%s850 + $0x10] sm:$0xff]
    %v854 = vld [vmem:[%s850 + $0x18] sm:$0xff]
    %v855 = vld [vmem:[%s850 + $0x20] sm:$0xff]
    %v856 = vld [vmem:[%s850 + $0x28] sm:$0xff]
    %v857 = vld [vmem:[%s850 + $0x30] sm:$0xff]
    %v858 = vld [vmem:[%s850 + $0x38] sm:$0xff]
    %v859 = vld [vmem:[%s850 + $0x40] sm:$0xff]
    %v860 = vld [vmem:[%s850 + $0x48] sm:$0xff]
    %v861 = vld [vmem:[%s850 + $0x50] sm:$0xff]
    %v862 = vld [vmem:[%s850 + $0x58] sm:$0xff]
    %v863 = vld [vmem:[%s850 + $0x60] sm:$0xff]
    %v864 = vld [vmem:[%s850 + $0x68] sm:$0xff]
    %v865 = vld [vmem:[%s850 + $0x70] sm:$0xff]
    %v866 = vld [vmem:[%s850 + $0x78] sm:$0xff]
    %867 = vmatprep.subr.mxu0 0.0
    %868 = vmatpush1.msra.mxu0 %v866
    %869 = vmatprep.subr.mxu0 0.0
    %870 = vmatpush1.msra.mxu0 %v865
    %871 = vmatprep.subr.mxu0 0.0
    %872 = vmatpush1.msra.mxu0 %v864
    %873 = vmatprep.subr.mxu0 0.0
    %874 = vmatpush1.msra.mxu0 %v863
    %875 = vmatprep.subr.mxu0 0.0
    %876 = vmatpush1.msra.mxu0 %v862
    %877 = vmatprep.subr.mxu0 0.0
    %878 = vmatpush1.msra.mxu0 %v861
    %879 = vmatprep.subr.mxu0 0.0
    %880 = vmatpush1.msra.mxu0 %v860
    %881 = vmatprep.subr.mxu0 0.0
    %882 = vmatpush1.msra.mxu0 %v859
    %883 = vmatprep.subr.mxu0 0.0
    %884 = vmatpush1.msra.mxu0 %v858
    %885 = vmatprep.subr.mxu0 0.0
    %886 = vmatpush1.msra.mxu0 %v857
    %887 = vmatprep.subr.mxu0 0.0
    %888 = vmatpush1.msra.mxu0 %v856
    %889 = vmatprep.subr.mxu0 0.0
    %890 = vmatpush1.msra.mxu0 %v855
    %891 = vmatprep.subr.mxu0 0.0
    %892 = vmatpush1.msra.mxu0 %v854
    %893 = vmatprep.subr.mxu0 0.0
    %894 = vmatpush1.msra.mxu0 %v853
    %895 = vmatprep.subr.mxu0 0.0
    %896 = vmatpush1.msra.mxu0 %v852
    %897 = vmatprep.subr.mxu0 0.0
    %898 = vmatpush1.msra.mxu0 %v851
    %899 = vmatprep.subr.mxu0 0.0
    %900 = vmatpush2.msra.mxu0 0.0
    %901 = vmatprep.subr.mxu0 0.0
    %902 = vmatpush2.msra.mxu0 0.0
    %903 = vmatprep.subr.mxu0 0.0
    %904 = vmatpush2.msra.mxu0 0.0
    %905 = vmatprep.subr.mxu0 0.0
    %906 = vmatpush2.msra.mxu0 0.0
    %907 = vmatprep.subr.mxu0 0.0
    %908 = vmatpush2.msra.mxu0 0.0
    %909 = vmatprep.subr.mxu0 0.0
    %910 = vmatpush2.msra.mxu0 0.0
    %911 = vmatprep.subr.mxu0 0.0
    %912 = vmatpush2.msra.mxu0 0.0
    %913 = vmatprep.subr.mxu0 0.0
    %914 = vmatpush2.msra.mxu0 0.0
    %915 = vmatprep.subr.mxu0 0.0
    %916 = vmatpush2.msra.mxu0 0.0
    %917 = vmatprep.subr.mxu0 0.0
    %918 = vmatpush2.msra.mxu0 0.0
    %919 = vmatprep.subr.mxu0 0.0
    %920 = vmatpush2.msra.mxu0 0.0
    %921 = vmatprep.subr.mxu0 0.0
    %922 = vmatpush2.msra.mxu0 0.0
    %923 = vmatprep.subr.mxu0 0.0
    %924 = vmatpush2.msra.mxu0 0.0
    %925 = vmatprep.subr.mxu0 0.0
    %926 = vmatpush2.msra.mxu0 0.0
    %927 = vmatprep.subr.mxu0 0.0
    %928 = vmatpush2.msra.mxu0 0.0
    %929 = vmatprep.subr.mxu0 0.0
    %930 = vmatpush2.msra.mxu0 0.0
    %931 = vmatprep.mubr.f32.mxu0 0.0
    %932 = vmatmul.mubr.f32.gmra.mxu0 %v849
    %v933 = vpop.f32.mrf.mxu0
    %v934 = vadd.f32 0.0, %v933
    %v935 = vpop.f32.mrf.mxu0
    %936 = vdwg.mxu0
    %v937 = vld [vmem:[#allocation2] sm:$0xff]
    %v938 = vadd.f32 %v937, %v934
    %939 = vst [vmem:[#allocation2] sm:$0xff] %v938
    %s940 = sld [smem:[#allocation3 + $0x8]]
    %s941 = sld [smem:[#allocation3 + $0x88]]
    %s942 = sld [smem:[#allocation3 + $0x108]]
    %s943 = sld [smem:[#allocation5 + $0x8]]
    %v944 = vstv %s940
    %v945 = vmul.f32 %v944, %v51
    %v946 = vstv %s941
    %v947 = vmul.f32 %v946, %v52
    %v948 = vadd.f32 %v945, %v947
    %v949 = vstv %s942
    %v950 = vmul.f32 %v949, %v53
    %v951 = vadd.f32 %v948, %v950
    %v952 = vmul.f32 %v944, %v52
    %v953 = vmul.f32 %v946, %v53
    %v954 = vadd.f32 %v952, %v953
    %v955 = vmul.f32 %v949, %v54
    %v956 = vadd.f32 %v954, %v955
    %v957 = vmax.f32 %v951, %v956
    %v958 = vstv %s943
    %v959 = vadd.f32 %v957, %v958
    %v960 = vmax.f32 %v959, 0.0
    %s961 = scalar_lea.vmem %s3, 1024
    %v962 = vld [vmem:[%s961] sm:$0xff]
    %v963 = vld [vmem:[%s961 + $0x8] sm:$0xff]
    %v964 = vld [vmem:[%s961 + $0x10] sm:$0xff]
    %v965 = vld [vmem:[%s961 + $0x18] sm:$0xff]
    %v966 = vld [vmem:[%s961 + $0x20] sm:$0xff]
    %v967 = vld [vmem:[%s961 + $0x28] sm:$0xff]
    %v968 = vld [vmem:[%s961 + $0x30] sm:$0xff]
    %v969 = vld [vmem:[%s961 + $0x38] sm:$0xff]
    %v970 = vld [vmem:[%s961 + $0x40] sm:$0xff]
    %v971 = vld [vmem:[%s961 + $0x48] sm:$0xff]
    %v972 = vld [vmem:[%s961 + $0x50] sm:$0xff]
    %v973 = vld [vmem:[%s961 + $0x58] sm:$0xff]
    %v974 = vld [vmem:[%s961 + $0x60] sm:$0xff]
    %v975 = vld [vmem:[%s961 + $0x68] sm:$0xff]
    %v976 = vld [vmem:[%s961 + $0x70] sm:$0xff]
    %v977 = vld [vmem:[%s961 + $0x78] sm:$0xff]
    %978 = vmatprep.subr.mxu0 0.0
    %979 = vmatpush1.msra.mxu0 %v977
    %980 = vmatprep.subr.mxu0 0.0
    %981 = vmatpush1.msra.mxu0 %v976
    %982 = vmatprep.subr.mxu0 0.0
    %983 = vmatpush1.msra.mxu0 %v975
    %984 = vmatprep.subr.mxu0 0.0
    %985 = vmatpush1.msra.mxu0 %v974
    %986 = vmatprep.subr.mxu0 0.0
    %987 = vmatpush1.msra.mxu0 %v973
    %988 = vmatprep.subr.mxu0 0.0
    %989 = vmatpush1.msra.mxu0 %v972
    %990 = vmatprep.subr.mxu0 0.0
    %991 = vmatpush1.msra.mxu0 %v971
    %992 = vmatprep.subr.mxu0 0.0
    %993 = vmatpush1.msra.mxu0 %v970
    %994 = vmatprep.subr.mxu0 0.0
    %995 = vmatpush1.msra.mxu0 %v969
    %996 = vmatprep.subr.mxu0 0.0
    %997 = vmatpush1.msra.mxu0 %v968
    %998 = vmatprep.subr.mxu0 0.0
    %999 = vmatpush1.msra.mxu0 %v967
    %1000 = vmatprep.subr.mxu0 0.0
    %1001 = vmatpush1.msra.mxu0 %v966
    %1002 = vmatprep.subr.mxu0 0.0
    %1003 = vmatpush1.msra.mxu0 %v965
    %1004 = vmatprep.subr.mxu0 0.0
    %1005 = vmatpush1.msra.mxu0 %v964
    %1006 = vmatprep.subr.mxu0 0.0
    %1007 = vmatpush1.msra.mxu0 %v963
    %1008 = vmatprep.subr.mxu0 0.0
    %1009 = vmatpush1.msra.mxu0 %v962
    %1010 = vmatprep.subr.mxu0 0.0
    %1011 = vmatpush2.msra.mxu0 0.0
    %1012 = vmatprep.subr.mxu0 0.0
    %1013 = vmatpush2.msra.mxu0 0.0
    %1014 = vmatprep.subr.mxu0 0.0
    %1015 = vmatpush2.msra.mxu0 0.0
    %1016 = vmatprep.subr.mxu0 0.0
    %1017 = vmatpush2.msra.mxu0 0.0
    %1018 = vmatprep.subr.mxu0 0.0
    %1019 = vmatpush2.msra.mxu0 0.0
    %1020 = vmatprep.subr.mxu0 0.0
    %1021 = vmatpush2.msra.mxu0 0.0
    %1022 = vmatprep.subr.mxu0 0.0
    %1023 = vmatpush2.msra.mxu0 0.0
    %1024 = vmatprep.subr.mxu0 0.0
    %1025 = vmatpush2.msra.mxu0 0.0
    %1026 = vmatprep.subr.mxu0 0.0
    %1027 = vmatpush2.msra.mxu0 0.0
    %1028 = vmatprep.subr.mxu0 0.0
    %1029 = vmatpush2.msra.mxu0 0.0
    %1030 = vmatprep.subr.mxu0 0.0
    %1031 = vmatpush2.msra.mxu0 0.0
    %1032 = vmatprep.subr.mxu0 0.0
    %1033 = vmatpush2.msra.mxu0 0.0
    %1034 = vmatprep.subr.mxu0 0.0
    %1035 = vmatpush2.msra.mxu0 0.0
    %1036 = vmatprep.subr.mxu0 0.0
    %1037 = vmatpush2.msra.mxu0 0.0
    %1038 = vmatprep.subr.mxu0 0.0
    %1039 = vmatpush2.msra.mxu0 0.0
    %1040 = vmatprep.subr.mxu0 0.0
    %1041 = vmatpush2.msra.mxu0 0.0
    %1042 = vmatprep.mubr.f32.mxu0 0.0
    %1043 = vmatmul.mubr.f32.gmra.mxu0 %v960
    %v1044 = vpop.f32.mrf.mxu0
    %v1045 = vadd.f32 0.0, %v1044
    %v1046 = vpop.f32.mrf.mxu0
    %1047 = vdwg.mxu0
    %v1048 = vld [vmem:[#allocation2] sm:$0xff]
    %v1049 = vadd.f32 %v1048, %v1045
    %1050 = vst [vmem:[#allocation2] sm:$0xff] %v1049
    %s1051 = sld [smem:[#allocation3 + $0x9]]
    %s1052 = sld [smem:[#allocation3 + $0x89]]
    %s1053 = sld [smem:[#allocation3 + $0x109]]
    %s1054 = sld [smem:[#allocation5 + $0x9]]
    %v1055 = vstv %s1051
    %v1056 = vmul.f32 %v1055, %v51
    %v1057 = vstv %s1052
    %v1058 = vmul.f32 %v1057, %v52
    %v1059 = vadd.f32 %v1056, %v1058
    %v1060 = vstv %s1053
    %v1061 = vmul.f32 %v1060, %v53
    %v1062 = vadd.f32 %v1059, %v1061
    %v1063 = vmul.f32 %v1055, %v52
    %v1064 = vmul.f32 %v1057, %v53
    %v1065 = vadd.f32 %v1063, %v1064
    %v1066 = vmul.f32 %v1060, %v54
    %v1067 = vadd.f32 %v1065, %v1066
    %v1068 = vmax.f32 %v1062, %v1067
    %v1069 = vstv %s1054
    %v1070 = vadd.f32 %v1068, %v1069
    %v1071 = vmax.f32 %v1070, 0.0
    %s1072 = scalar_lea.vmem %s3, 1152
    %v1073 = vld [vmem:[%s1072] sm:$0xff]
    %v1074 = vld [vmem:[%s1072 + $0x8] sm:$0xff]
    %v1075 = vld [vmem:[%s1072 + $0x10] sm:$0xff]
    %v1076 = vld [vmem:[%s1072 + $0x18] sm:$0xff]
    %v1077 = vld [vmem:[%s1072 + $0x20] sm:$0xff]
    %v1078 = vld [vmem:[%s1072 + $0x28] sm:$0xff]
    %v1079 = vld [vmem:[%s1072 + $0x30] sm:$0xff]
    %v1080 = vld [vmem:[%s1072 + $0x38] sm:$0xff]
    %v1081 = vld [vmem:[%s1072 + $0x40] sm:$0xff]
    %v1082 = vld [vmem:[%s1072 + $0x48] sm:$0xff]
    %v1083 = vld [vmem:[%s1072 + $0x50] sm:$0xff]
    %v1084 = vld [vmem:[%s1072 + $0x58] sm:$0xff]
    %v1085 = vld [vmem:[%s1072 + $0x60] sm:$0xff]
    %v1086 = vld [vmem:[%s1072 + $0x68] sm:$0xff]
    %v1087 = vld [vmem:[%s1072 + $0x70] sm:$0xff]
    %v1088 = vld [vmem:[%s1072 + $0x78] sm:$0xff]
    %1089 = vmatprep.subr.mxu0 0.0
    %1090 = vmatpush1.msra.mxu0 %v1088
    %1091 = vmatprep.subr.mxu0 0.0
    %1092 = vmatpush1.msra.mxu0 %v1087
    %1093 = vmatprep.subr.mxu0 0.0
    %1094 = vmatpush1.msra.mxu0 %v1086
    %1095 = vmatprep.subr.mxu0 0.0
    %1096 = vmatpush1.msra.mxu0 %v1085
    %1097 = vmatprep.subr.mxu0 0.0
    %1098 = vmatpush1.msra.mxu0 %v1084
    %1099 = vmatprep.subr.mxu0 0.0
    %1100 = vmatpush1.msra.mxu0 %v1083
    %1101 = vmatprep.subr.mxu0 0.0
    %1102 = vmatpush1.msra.mxu0 %v1082
    %1103 = vmatprep.subr.mxu0 0.0
    %1104 = vmatpush1.msra.mxu0 %v1081
    %1105 = vmatprep.subr.mxu0 0.0
    %1106 = vmatpush1.msra.mxu0 %v1080
    %1107 = vmatprep.subr.mxu0 0.0
    %1108 = vmatpush1.msra.mxu0 %v1079
    %1109 = vmatprep.subr.mxu0 0.0
    %1110 = vmatpush1.msra.mxu0 %v1078
    %1111 = vmatprep.subr.mxu0 0.0
    %1112 = vmatpush1.msra.mxu0 %v1077
    %1113 = vmatprep.subr.mxu0 0.0
    %1114 = vmatpush1.msra.mxu0 %v1076
    %1115 = vmatprep.subr.mxu0 0.0
    %1116 = vmatpush1.msra.mxu0 %v1075
    %1117 = vmatprep.subr.mxu0 0.0
    %1118 = vmatpush1.msra.mxu0 %v1074
    %1119 = vmatprep.subr.mxu0 0.0
    %1120 = vmatpush1.msra.mxu0 %v1073
    %1121 = vmatprep.subr.mxu0 0.0
    %1122 = vmatpush2.msra.mxu0 0.0
    %1123 = vmatprep.subr.mxu0 0.0
    %1124 = vmatpush2.msra.mxu0 0.0
    %1125 = vmatprep.subr.mxu0 0.0
    %1126 = vmatpush2.msra.mxu0 0.0
    %1127 = vmatprep.subr.mxu0 0.0
    %1128 = vmatpush2.msra.mxu0 0.0
    %1129 = vmatprep.subr.mxu0 0.0
    %1130 = vmatpush2.msra.mxu0 0.0
    %1131 = vmatprep.subr.mxu0 0.0
    %1132 = vmatpush2.msra.mxu0 0.0
    %1133 = vmatprep.subr.mxu0 0.0
    %1134 = vmatpush2.msra.mxu0 0.0
    %1135 = vmatprep.subr.mxu0 0.0
    %1136 = vmatpush2.msra.mxu0 0.0
    %1137 = vmatprep.subr.mxu0 0.0
    %1138 = vmatpush2.msra.mxu0 0.0
    %1139 = vmatprep.subr.mxu0 0.0
    %1140 = vmatpush2.msra.mxu0 0.0
    %1141 = vmatprep.subr.mxu0 0.0
    %1142 = vmatpush2.msra.mxu0 0.0
    %1143 = vmatprep.subr.mxu0 0.0
    %1144 = vmatpush2.msra.mxu0 0.0
    %1145 = vmatprep.subr.mxu0 0.0
    %1146 = vmatpush2.msra.mxu0 0.0
    %1147 = vmatprep.subr.mxu0 0.0
    %1148 = vmatpush2.msra.mxu0 0.0
    %1149 = vmatprep.subr.mxu0 0.0
    %1150 = vmatpush2.msra.mxu0 0.0
    %1151 = vmatprep.subr.mxu0 0.0
    %1152 = vmatpush2.msra.mxu0 0.0
    %1153 = vmatprep.mubr.f32.mxu0 0.0
    %1154 = vmatmul.mubr.f32.gmra.mxu0 %v1071
    %v1155 = vpop.f32.mrf.mxu0
    %v1156 = vadd.f32 0.0, %v1155
    %v1157 = vpop.f32.mrf.mxu0
    %1158 = vdwg.mxu0
    %v1159 = vld [vmem:[#allocation2] sm:$0xff]
    %v1160 = vadd.f32 %v1159, %v1156
    %1161 = vst [vmem:[#allocation2] sm:$0xff] %v1160
    %s1162 = sld [smem:[#allocation3 + $0xa]]
    %s1163 = sld [smem:[#allocation3 + $0x8a]]
    %s1164 = sld [smem:[#allocation3 + $0x10a]]
    %s1165 = sld [smem:[#allocation5 + $0xa]]
    %v1166 = vstv %s1162
    %v1167 = vmul.f32 %v1166, %v51
    %v1168 = vstv %s1163
    %v1169 = vmul.f32 %v1168, %v52
    %v1170 = vadd.f32 %v1167, %v1169
    %v1171 = vstv %s1164
    %v1172 = vmul.f32 %v1171, %v53
    %v1173 = vadd.f32 %v1170, %v1172
    %v1174 = vmul.f32 %v1166, %v52
    %v1175 = vmul.f32 %v1168, %v53
    %v1176 = vadd.f32 %v1174, %v1175
    %v1177 = vmul.f32 %v1171, %v54
    %v1178 = vadd.f32 %v1176, %v1177
    %v1179 = vmax.f32 %v1173, %v1178
    %v1180 = vstv %s1165
    %v1181 = vadd.f32 %v1179, %v1180
    %v1182 = vmax.f32 %v1181, 0.0
    %s1183 = scalar_lea.vmem %s3, 1280
    %v1184 = vld [vmem:[%s1183] sm:$0xff]
    %v1185 = vld [vmem:[%s1183 + $0x8] sm:$0xff]
    %v1186 = vld [vmem:[%s1183 + $0x10] sm:$0xff]
    %v1187 = vld [vmem:[%s1183 + $0x18] sm:$0xff]
    %v1188 = vld [vmem:[%s1183 + $0x20] sm:$0xff]
    %v1189 = vld [vmem:[%s1183 + $0x28] sm:$0xff]
    %v1190 = vld [vmem:[%s1183 + $0x30] sm:$0xff]
    %v1191 = vld [vmem:[%s1183 + $0x38] sm:$0xff]
    %v1192 = vld [vmem:[%s1183 + $0x40] sm:$0xff]
    %v1193 = vld [vmem:[%s1183 + $0x48] sm:$0xff]
    %v1194 = vld [vmem:[%s1183 + $0x50] sm:$0xff]
    %v1195 = vld [vmem:[%s1183 + $0x58] sm:$0xff]
    %v1196 = vld [vmem:[%s1183 + $0x60] sm:$0xff]
    %v1197 = vld [vmem:[%s1183 + $0x68] sm:$0xff]
    %v1198 = vld [vmem:[%s1183 + $0x70] sm:$0xff]
    %v1199 = vld [vmem:[%s1183 + $0x78] sm:$0xff]
    %1200 = vmatprep.subr.mxu0 0.0
    %1201 = vmatpush1.msra.mxu0 %v1199
    %1202 = vmatprep.subr.mxu0 0.0
    %1203 = vmatpush1.msra.mxu0 %v1198
    %1204 = vmatprep.subr.mxu0 0.0
    %1205 = vmatpush1.msra.mxu0 %v1197
    %1206 = vmatprep.subr.mxu0 0.0
    %1207 = vmatpush1.msra.mxu0 %v1196
    %1208 = vmatprep.subr.mxu0 0.0
    %1209 = vmatpush1.msra.mxu0 %v1195
    %1210 = vmatprep.subr.mxu0 0.0
    %1211 = vmatpush1.msra.mxu0 %v1194
    %1212 = vmatprep.subr.mxu0 0.0
    %1213 = vmatpush1.msra.mxu0 %v1193
    %1214 = vmatprep.subr.mxu0 0.0
    %1215 = vmatpush1.msra.mxu0 %v1192
    %1216 = vmatprep.subr.mxu0 0.0
    %1217 = vmatpush1.msra.mxu0 %v1191
    %1218 = vmatprep.subr.mxu0 0.0
    %1219 = vmatpush1.msra.mxu0 %v1190
    %1220 = vmatprep.subr.mxu0 0.0
    %1221 = vmatpush1.msra.mxu0 %v1189
    %1222 = vmatprep.subr.mxu0 0.0
    %1223 = vmatpush1.msra.mxu0 %v1188
    %1224 = vmatprep.subr.mxu0 0.0
    %1225 = vmatpush1.msra.mxu0 %v1187
    %1226 = vmatprep.subr.mxu0 0.0
    %1227 = vmatpush1.msra.mxu0 %v1186
    %1228 = vmatprep.subr.mxu0 0.0
    %1229 = vmatpush1.msra.mxu0 %v1185
    %1230 = vmatprep.subr.mxu0 0.0
    %1231 = vmatpush1.msra.mxu0 %v1184
    %1232 = vmatprep.subr.mxu0 0.0
    %1233 = vmatpush2.msra.mxu0 0.0
    %1234 = vmatprep.subr.mxu0 0.0
    %1235 = vmatpush2.msra.mxu0 0.0
    %1236 = vmatprep.subr.mxu0 0.0
    %1237 = vmatpush2.msra.mxu0 0.0
    %1238 = vmatprep.subr.mxu0 0.0
    %1239 = vmatpush2.msra.mxu0 0.0
    %1240 = vmatprep.subr.mxu0 0.0
    %1241 = vmatpush2.msra.mxu0 0.0
    %1242 = vmatprep.subr.mxu0 0.0
    %1243 = vmatpush2.msra.mxu0 0.0
    %1244 = vmatprep.subr.mxu0 0.0
    %1245 = vmatpush2.msra.mxu0 0.0
    %1246 = vmatprep.subr.mxu0 0.0
    %1247 = vmatpush2.msra.mxu0 0.0
    %1248 = vmatprep.subr.mxu0 0.0
    %1249 = vmatpush2.msra.mxu0 0.0
    %1250 = vmatprep.subr.mxu0 0.0
    %1251 = vmatpush2.msra.mxu0 0.0
    %1252 = vmatprep.subr.mxu0 0.0
    %1253 = vmatpush2.msra.mxu0 0.0
    %1254 = vmatprep.subr.mxu0 0.0
    %1255 = vmatpush2.msra.mxu0 0.0
    %1256 = vmatprep.subr.mxu0 0.0
    %1257 = vmatpush2.msra.mxu0 0.0
    %1258 = vmatprep.subr.mxu0 0.0
    %1259 = vmatpush2.msra.mxu0 0.0
    %1260 = vmatprep.subr.mxu0 0.0
    %1261 = vmatpush2.msra.mxu0 0.0
    %1262 = vmatprep.subr.mxu0 0.0
    %1263 = vmatpush2.msra.mxu0 0.0
    %1264 = vmatprep.mubr.f32.mxu0 0.0
    %1265 = vmatmul.mubr.f32.gmra.mxu0 %v1182
    %v1266 = vpop.f32.mrf.mxu0
    %v1267 = vadd.f32 0.0, %v1266
    %v1268 = vpop.f32.mrf.mxu0
    %1269 = vdwg.mxu0
    %v1270 = vld [vmem:[#allocation2] sm:$0xff]
    %v1271 = vadd.f32 %v1270, %v1267
    %1272 = vst [vmem:[#allocation2] sm:$0xff] %v1271
    %s1273 = sld [smem:[#allocation3 + $0xb]]
    %s1274 = sld [smem:[#allocation3 + $0x8b]]
    %s1275 = sld [smem:[#allocation3 + $0x10b]]
    %s1276 = sld [smem:[#allocation5 + $0xb]]
    %v1277 = vstv %s1273
    %v1278 = vmul.f32 %v1277, %v51
    %v1279 = vstv %s1274
    %v1280 = vmul.f32 %v1279, %v52
    %v1281 = vadd.f32 %v1278, %v1280
    %v1282 = vstv %s1275
    %v1283 = vmul.f32 %v1282, %v53
    %v1284 = vadd.f32 %v1281, %v1283
    %v1285 = vmul.f32 %v1277, %v52
    %v1286 = vmul.f32 %v1279, %v53
    %v1287 = vadd.f32 %v1285, %v1286
    %v1288 = vmul.f32 %v1282, %v54
    %v1289 = vadd.f32 %v1287, %v1288
    %v1290 = vmax.f32 %v1284, %v1289
    %v1291 = vstv %s1276
    %v1292 = vadd.f32 %v1290, %v1291
    %v1293 = vmax.f32 %v1292, 0.0
    %s1294 = scalar_lea.vmem %s3, 1408
    %v1295 = vld [vmem:[%s1294] sm:$0xff]
    %v1296 = vld [vmem:[%s1294 + $0x8] sm:$0xff]
    %v1297 = vld [vmem:[%s1294 + $0x10] sm:$0xff]
    %v1298 = vld [vmem:[%s1294 + $0x18] sm:$0xff]
    %v1299 = vld [vmem:[%s1294 + $0x20] sm:$0xff]
    %v1300 = vld [vmem:[%s1294 + $0x28] sm:$0xff]
    %v1301 = vld [vmem:[%s1294 + $0x30] sm:$0xff]
    %v1302 = vld [vmem:[%s1294 + $0x38] sm:$0xff]
    %v1303 = vld [vmem:[%s1294 + $0x40] sm:$0xff]
    %v1304 = vld [vmem:[%s1294 + $0x48] sm:$0xff]
    %v1305 = vld [vmem:[%s1294 + $0x50] sm:$0xff]
    %v1306 = vld [vmem:[%s1294 + $0x58] sm:$0xff]
    %v1307 = vld [vmem:[%s1294 + $0x60] sm:$0xff]
    %v1308 = vld [vmem:[%s1294 + $0x68] sm:$0xff]
    %v1309 = vld [vmem:[%s1294 + $0x70] sm:$0xff]
    %v1310 = vld [vmem:[%s1294 + $0x78] sm:$0xff]
    %1311 = vmatprep.subr.mxu0 0.0
    %1312 = vmatpush1.msra.mxu0 %v1310
    %1313 = vmatprep.subr.mxu0 0.0
    %1314 = vmatpush1.msra.mxu0 %v1309
    %1315 = vmatprep.subr.mxu0 0.0
    %1316 = vmatpush1.msra.mxu0 %v1308
    %1317 = vmatprep.subr.mxu0 0.0
    %1318 = vmatpush1.msra.mxu0 %v1307
    %1319 = vmatprep.subr.mxu0 0.0
    %1320 = vmatpush1.msra.mxu0 %v1306
    %1321 = vmatprep.subr.mxu0 0.0
    %1322 = vmatpush1.msra.mxu0 %v1305
    %1323 = vmatprep.subr.mxu0 0.0
    %1324 = vmatpush1.msra.mxu0 %v1304
    %1325 = vmatprep.subr.mxu0 0.0
    %1326 = vmatpush1.msra.mxu0 %v1303
    %1327 = vmatprep.subr.mxu0 0.0
    %1328 = vmatpush1.msra.mxu0 %v1302
    %1329 = vmatprep.subr.mxu0 0.0
    %1330 = vmatpush1.msra.mxu0 %v1301
    %1331 = vmatprep.subr.mxu0 0.0
    %1332 = vmatpush1.msra.mxu0 %v1300
    %1333 = vmatprep.subr.mxu0 0.0
    %1334 = vmatpush1.msra.mxu0 %v1299
    %1335 = vmatprep.subr.mxu0 0.0
    %1336 = vmatpush1.msra.mxu0 %v1298
    %1337 = vmatprep.subr.mxu0 0.0
    %1338 = vmatpush1.msra.mxu0 %v1297
    %1339 = vmatprep.subr.mxu0 0.0
    %1340 = vmatpush1.msra.mxu0 %v1296
    %1341 = vmatprep.subr.mxu0 0.0
    %1342 = vmatpush1.msra.mxu0 %v1295
    %1343 = vmatprep.subr.mxu0 0.0
    %1344 = vmatpush2.msra.mxu0 0.0
    %1345 = vmatprep.subr.mxu0 0.0
    %1346 = vmatpush2.msra.mxu0 0.0
    %1347 = vmatprep.subr.mxu0 0.0
    %1348 = vmatpush2.msra.mxu0 0.0
    %1349 = vmatprep.subr.mxu0 0.0
    %1350 = vmatpush2.msra.mxu0 0.0
    %1351 = vmatprep.subr.mxu0 0.0
    %1352 = vmatpush2.msra.mxu0 0.0
    %1353 = vmatprep.subr.mxu0 0.0
    %1354 = vmatpush2.msra.mxu0 0.0
    %1355 = vmatprep.subr.mxu0 0.0
    %1356 = vmatpush2.msra.mxu0 0.0
    %1357 = vmatprep.subr.mxu0 0.0
    %1358 = vmatpush2.msra.mxu0 0.0
    %1359 = vmatprep.subr.mxu0 0.0
    %1360 = vmatpush2.msra.mxu0 0.0
    %1361 = vmatprep.subr.mxu0 0.0
    %1362 = vmatpush2.msra.mxu0 0.0
    %1363 = vmatprep.subr.mxu0 0.0
    %1364 = vmatpush2.msra.mxu0 0.0
    %1365 = vmatprep.subr.mxu0 0.0
    %1366 = vmatpush2.msra.mxu0 0.0
    %1367 = vmatprep.subr.mxu0 0.0
    %1368 = vmatpush2.msra.mxu0 0.0
    %1369 = vmatprep.subr.mxu0 0.0
    %1370 = vmatpush2.msra.mxu0 0.0
    %1371 = vmatprep.subr.mxu0 0.0
    %1372 = vmatpush2.msra.mxu0 0.0
    %1373 = vmatprep.subr.mxu0 0.0
    %1374 = vmatpush2.msra.mxu0 0.0
    %1375 = vmatprep.mubr.f32.mxu0 0.0
    %1376 = vmatmul.mubr.f32.gmra.mxu0 %v1293
    %v1377 = vpop.f32.mrf.mxu0
    %v1378 = vadd.f32 0.0, %v1377
    %v1379 = vpop.f32.mrf.mxu0
    %1380 = vdwg.mxu0
    %v1381 = vld [vmem:[#allocation2] sm:$0xff]
    %v1382 = vadd.f32 %v1381, %v1378
    %1383 = vst [vmem:[#allocation2] sm:$0xff] %v1382
    %s1384 = sld [smem:[#allocation3 + $0xc]]
    %s1385 = sld [smem:[#allocation3 + $0x8c]]
    %s1386 = sld [smem:[#allocation3 + $0x10c]]
    %s1387 = sld [smem:[#allocation5 + $0xc]]
    %v1388 = vstv %s1384
    %v1389 = vmul.f32 %v1388, %v51
    %v1390 = vstv %s1385
    %v1391 = vmul.f32 %v1390, %v52
    %v1392 = vadd.f32 %v1389, %v1391
    %v1393 = vstv %s1386
    %v1394 = vmul.f32 %v1393, %v53
    %v1395 = vadd.f32 %v1392, %v1394
    %v1396 = vmul.f32 %v1388, %v52
    %v1397 = vmul.f32 %v1390, %v53
    %v1398 = vadd.f32 %v1396, %v1397
    %v1399 = vmul.f32 %v1393, %v54
    %v1400 = vadd.f32 %v1398, %v1399
    %v1401 = vmax.f32 %v1395, %v1400
    %v1402 = vstv %s1387
    %v1403 = vadd.f32 %v1401, %v1402
    %v1404 = vmax.f32 %v1403, 0.0
    %s1405 = scalar_lea.vmem %s3, 1536
    %v1406 = vld [vmem:[%s1405] sm:$0xff]
    %v1407 = vld [vmem:[%s1405 + $0x8] sm:$0xff]
    %v1408 = vld [vmem:[%s1405 + $0x10] sm:$0xff]
    %v1409 = vld [vmem:[%s1405 + $0x18] sm:$0xff]
    %v1410 = vld [vmem:[%s1405 + $0x20] sm:$0xff]
    %v1411 = vld [vmem:[%s1405 + $0x28] sm:$0xff]
    %v1412 = vld [vmem:[%s1405 + $0x30] sm:$0xff]
    %v1413 = vld [vmem:[%s1405 + $0x38] sm:$0xff]
    %v1414 = vld [vmem:[%s1405 + $0x40] sm:$0xff]
    %v1415 = vld [vmem:[%s1405 + $0x48] sm:$0xff]
    %v1416 = vld [vmem:[%s1405 + $0x50] sm:$0xff]
    %v1417 = vld [vmem:[%s1405 + $0x58] sm:$0xff]
    %v1418 = vld [vmem:[%s1405 + $0x60] sm:$0xff]
    %v1419 = vld [vmem:[%s1405 + $0x68] sm:$0xff]
    %v1420 = vld [vmem:[%s1405 + $0x70] sm:$0xff]
    %v1421 = vld [vmem:[%s1405 + $0x78] sm:$0xff]
    %1422 = vmatprep.subr.mxu0 0.0
    %1423 = vmatpush1.msra.mxu0 %v1421
    %1424 = vmatprep.subr.mxu0 0.0
    %1425 = vmatpush1.msra.mxu0 %v1420
    %1426 = vmatprep.subr.mxu0 0.0
    %1427 = vmatpush1.msra.mxu0 %v1419
    %1428 = vmatprep.subr.mxu0 0.0
    %1429 = vmatpush1.msra.mxu0 %v1418
    %1430 = vmatprep.subr.mxu0 0.0
    %1431 = vmatpush1.msra.mxu0 %v1417
    %1432 = vmatprep.subr.mxu0 0.0
    %1433 = vmatpush1.msra.mxu0 %v1416
    %1434 = vmatprep.subr.mxu0 0.0
    %1435 = vmatpush1.msra.mxu0 %v1415
    %1436 = vmatprep.subr.mxu0 0.0
    %1437 = vmatpush1.msra.mxu0 %v1414
    %1438 = vmatprep.subr.mxu0 0.0
    %1439 = vmatpush1.msra.mxu0 %v1413
    %1440 = vmatprep.subr.mxu0 0.0
    %1441 = vmatpush1.msra.mxu0 %v1412
    %1442 = vmatprep.subr.mxu0 0.0
    %1443 = vmatpush1.msra.mxu0 %v1411
    %1444 = vmatprep.subr.mxu0 0.0
    %1445 = vmatpush1.msra.mxu0 %v1410
    %1446 = vmatprep.subr.mxu0 0.0
    %1447 = vmatpush1.msra.mxu0 %v1409
    %1448 = vmatprep.subr.mxu0 0.0
    %1449 = vmatpush1.msra.mxu0 %v1408
    %1450 = vmatprep.subr.mxu0 0.0
    %1451 = vmatpush1.msra.mxu0 %v1407
    %1452 = vmatprep.subr.mxu0 0.0
    %1453 = vmatpush1.msra.mxu0 %v1406
    %1454 = vmatprep.subr.mxu0 0.0
    %1455 = vmatpush2.msra.mxu0 0.0
    %1456 = vmatprep.subr.mxu0 0.0
    %1457 = vmatpush2.msra.mxu0 0.0
    %1458 = vmatprep.subr.mxu0 0.0
    %1459 = vmatpush2.msra.mxu0 0.0
    %1460 = vmatprep.subr.mxu0 0.0
    %1461 = vmatpush2.msra.mxu0 0.0
    %1462 = vmatprep.subr.mxu0 0.0
    %1463 = vmatpush2.msra.mxu0 0.0
    %1464 = vmatprep.subr.mxu0 0.0
    %1465 = vmatpush2.msra.mxu0 0.0
    %1466 = vmatprep.subr.mxu0 0.0
    %1467 = vmatpush2.msra.mxu0 0.0
    %1468 = vmatprep.subr.mxu0 0.0
    %1469 = vmatpush2.msra.mxu0 0.0
    %1470 = vmatprep.subr.mxu0 0.0
    %1471 = vmatpush2.msra.mxu0 0.0
    %1472 = vmatprep.subr.mxu0 0.0
    %1473 = vmatpush2.msra.mxu0 0.0
    %1474 = vmatprep.subr.mxu0 0.0
    %1475 = vmatpush2.msra.mxu0 0.0
    %1476 = vmatprep.subr.mxu0 0.0
    %1477 = vmatpush2.msra.mxu0 0.0
    %1478 = vmatprep.subr.mxu0 0.0
    %1479 = vmatpush2.msra.mxu0 0.0
    %1480 = vmatprep.subr.mxu0 0.0
    %1481 = vmatpush2.msra.mxu0 0.0
    %1482 = vmatprep.subr.mxu0 0.0
    %1483 = vmatpush2.msra.mxu0 0.0
    %1484 = vmatprep.subr.mxu0 0.0
    %1485 = vmatpush2.msra.mxu0 0.0
    %1486 = vmatprep.mubr.f32.mxu0 0.0
    %1487 = vmatmul.mubr.f32.gmra.mxu0 %v1404
    %v1488 = vpop.f32.mrf.mxu0
    %v1489 = vadd.f32 0.0, %v1488
    %v1490 = vpop.f32.mrf.mxu0
    %1491 = vdwg.mxu0
    %v1492 = vld [vmem:[#allocation2] sm:$0xff]
    %v1493 = vadd.f32 %v1492, %v1489
    %1494 = vst [vmem:[#allocation2] sm:$0xff] %v1493
    %s1495 = sld [smem:[#allocation3 + $0xd]]
    %s1496 = sld [smem:[#allocation3 + $0x8d]]
    %s1497 = sld [smem:[#allocation3 + $0x10d]]
    %s1498 = sld [smem:[#allocation5 + $0xd]]
    %v1499 = vstv %s1495
    %v1500 = vmul.f32 %v1499, %v51
    %v1501 = vstv %s1496
    %v1502 = vmul.f32 %v1501, %v52
    %v1503 = vadd.f32 %v1500, %v1502
    %v1504 = vstv %s1497
    %v1505 = vmul.f32 %v1504, %v53
    %v1506 = vadd.f32 %v1503, %v1505
    %v1507 = vmul.f32 %v1499, %v52
    %v1508 = vmul.f32 %v1501, %v53
    %v1509 = vadd.f32 %v1507, %v1508
    %v1510 = vmul.f32 %v1504, %v54
    %v1511 = vadd.f32 %v1509, %v1510
    %v1512 = vmax.f32 %v1506, %v1511
    %v1513 = vstv %s1498
    %v1514 = vadd.f32 %v1512, %v1513
    %v1515 = vmax.f32 %v1514, 0.0
    %s1516 = scalar_lea.vmem %s3, 1664
    %v1517 = vld [vmem:[%s1516] sm:$0xff]
    %v1518 = vld [vmem:[%s1516 + $0x8] sm:$0xff]
    %v1519 = vld [vmem:[%s1516 + $0x10] sm:$0xff]
    %v1520 = vld [vmem:[%s1516 + $0x18] sm:$0xff]
    %v1521 = vld [vmem:[%s1516 + $0x20] sm:$0xff]
    %v1522 = vld [vmem:[%s1516 + $0x28] sm:$0xff]
    %v1523 = vld [vmem:[%s1516 + $0x30] sm:$0xff]
    %v1524 = vld [vmem:[%s1516 + $0x38] sm:$0xff]
    %v1525 = vld [vmem:[%s1516 + $0x40] sm:$0xff]
    %v1526 = vld [vmem:[%s1516 + $0x48] sm:$0xff]
    %v1527 = vld [vmem:[%s1516 + $0x50] sm:$0xff]
    %v1528 = vld [vmem:[%s1516 + $0x58] sm:$0xff]
    %v1529 = vld [vmem:[%s1516 + $0x60] sm:$0xff]
    %v1530 = vld [vmem:[%s1516 + $0x68] sm:$0xff]
    %v1531 = vld [vmem:[%s1516 + $0x70] sm:$0xff]
    %v1532 = vld [vmem:[%s1516 + $0x78] sm:$0xff]
    %1533 = vmatprep.subr.mxu0 0.0
    %1534 = vmatpush1.msra.mxu0 %v1532
    %1535 = vmatprep.subr.mxu0 0.0
    %1536 = vmatpush1.msra.mxu0 %v1531
    %1537 = vmatprep.subr.mxu0 0.0
    %1538 = vmatpush1.msra.mxu0 %v1530
    %1539 = vmatprep.subr.mxu0 0.0
    %1540 = vmatpush1.msra.mxu0 %v1529
    %1541 = vmatprep.subr.mxu0 0.0
    %1542 = vmatpush1.msra.mxu0 %v1528
    %1543 = vmatprep.subr.mxu0 0.0
    %1544 = vmatpush1.msra.mxu0 %v1527
    %1545 = vmatprep.subr.mxu0 0.0
    %1546 = vmatpush1.msra.mxu0 %v1526
    %1547 = vmatprep.subr.mxu0 0.0
    %1548 = vmatpush1.msra.mxu0 %v1525
    %1549 = vmatprep.subr.mxu0 0.0
    %1550 = vmatpush1.msra.mxu0 %v1524
    %1551 = vmatprep.subr.mxu0 0.0
    %1552 = vmatpush1.msra.mxu0 %v1523
    %1553 = vmatprep.subr.mxu0 0.0
    %1554 = vmatpush1.msra.mxu0 %v1522
    %1555 = vmatprep.subr.mxu0 0.0
    %1556 = vmatpush1.msra.mxu0 %v1521
    %1557 = vmatprep.subr.mxu0 0.0
    %1558 = vmatpush1.msra.mxu0 %v1520
    %1559 = vmatprep.subr.mxu0 0.0
    %1560 = vmatpush1.msra.mxu0 %v1519
    %1561 = vmatprep.subr.mxu0 0.0
    %1562 = vmatpush1.msra.mxu0 %v1518
    %1563 = vmatprep.subr.mxu0 0.0
    %1564 = vmatpush1.msra.mxu0 %v1517
    %1565 = vmatprep.subr.mxu0 0.0
    %1566 = vmatpush2.msra.mxu0 0.0
    %1567 = vmatprep.subr.mxu0 0.0
    %1568 = vmatpush2.msra.mxu0 0.0
    %1569 = vmatprep.subr.mxu0 0.0
    %1570 = vmatpush2.msra.mxu0 0.0
    %1571 = vmatprep.subr.mxu0 0.0
    %1572 = vmatpush2.msra.mxu0 0.0
    %1573 = vmatprep.subr.mxu0 0.0
    %1574 = vmatpush2.msra.mxu0 0.0
    %1575 = vmatprep.subr.mxu0 0.0
    %1576 = vmatpush2.msra.mxu0 0.0
    %1577 = vmatprep.subr.mxu0 0.0
    %1578 = vmatpush2.msra.mxu0 0.0
    %1579 = vmatprep.subr.mxu0 0.0
    %1580 = vmatpush2.msra.mxu0 0.0
    %1581 = vmatprep.subr.mxu0 0.0
    %1582 = vmatpush2.msra.mxu0 0.0
    %1583 = vmatprep.subr.mxu0 0.0
    %1584 = vmatpush2.msra.mxu0 0.0
    %1585 = vmatprep.subr.mxu0 0.0
    %1586 = vmatpush2.msra.mxu0 0.0
    %1587 = vmatprep.subr.mxu0 0.0
    %1588 = vmatpush2.msra.mxu0 0.0
    %1589 = vmatprep.subr.mxu0 0.0
    %1590 = vmatpush2.msra.mxu0 0.0
    %1591 = vmatprep.subr.mxu0 0.0
    %1592 = vmatpush2.msra.mxu0 0.0
    %1593 = vmatprep.subr.mxu0 0.0
    %1594 = vmatpush2.msra.mxu0 0.0
    %1595 = vmatprep.subr.mxu0 0.0
    %1596 = vmatpush2.msra.mxu0 0.0
    %1597 = vmatprep.mubr.f32.mxu0 0.0
    %1598 = vmatmul.mubr.f32.gmra.mxu0 %v1515
    %v1599 = vpop.f32.mrf.mxu0
    %v1600 = vadd.f32 0.0, %v1599
    %v1601 = vpop.f32.mrf.mxu0
    %1602 = vdwg.mxu0
    %v1603 = vld [vmem:[#allocation2] sm:$0xff]
    %v1604 = vadd.f32 %v1603, %v1600
    %1605 = vst [vmem:[#allocation2] sm:$0xff] %v1604
    %s1606 = sld [smem:[#allocation3 + $0xe]]
    %s1607 = sld [smem:[#allocation3 + $0x8e]]
    %s1608 = sld [smem:[#allocation3 + $0x10e]]
    %s1609 = sld [smem:[#allocation5 + $0xe]]
    %v1610 = vstv %s1606
    %v1611 = vmul.f32 %v1610, %v51
    %v1612 = vstv %s1607
    %v1613 = vmul.f32 %v1612, %v52
    %v1614 = vadd.f32 %v1611, %v1613
    %v1615 = vstv %s1608
    %v1616 = vmul.f32 %v1615, %v53
    %v1617 = vadd.f32 %v1614, %v1616
    %v1618 = vmul.f32 %v1610, %v52
    %v1619 = vmul.f32 %v1612, %v53
    %v1620 = vadd.f32 %v1618, %v1619
    %v1621 = vmul.f32 %v1615, %v54
    %v1622 = vadd.f32 %v1620, %v1621
    %v1623 = vmax.f32 %v1617, %v1622
    %v1624 = vstv %s1609
    %v1625 = vadd.f32 %v1623, %v1624
    %v1626 = vmax.f32 %v1625, 0.0
    %s1627 = scalar_lea.vmem %s3, 1792
    %v1628 = vld [vmem:[%s1627] sm:$0xff]
    %v1629 = vld [vmem:[%s1627 + $0x8] sm:$0xff]
    %v1630 = vld [vmem:[%s1627 + $0x10] sm:$0xff]
    %v1631 = vld [vmem:[%s1627 + $0x18] sm:$0xff]
    %v1632 = vld [vmem:[%s1627 + $0x20] sm:$0xff]
    %v1633 = vld [vmem:[%s1627 + $0x28] sm:$0xff]
    %v1634 = vld [vmem:[%s1627 + $0x30] sm:$0xff]
    %v1635 = vld [vmem:[%s1627 + $0x38] sm:$0xff]
    %v1636 = vld [vmem:[%s1627 + $0x40] sm:$0xff]
    %v1637 = vld [vmem:[%s1627 + $0x48] sm:$0xff]
    %v1638 = vld [vmem:[%s1627 + $0x50] sm:$0xff]
    %v1639 = vld [vmem:[%s1627 + $0x58] sm:$0xff]
    %v1640 = vld [vmem:[%s1627 + $0x60] sm:$0xff]
    %v1641 = vld [vmem:[%s1627 + $0x68] sm:$0xff]
    %v1642 = vld [vmem:[%s1627 + $0x70] sm:$0xff]
    %v1643 = vld [vmem:[%s1627 + $0x78] sm:$0xff]
    %1644 = vmatprep.subr.mxu0 0.0
    %1645 = vmatpush1.msra.mxu0 %v1643
    %1646 = vmatprep.subr.mxu0 0.0
    %1647 = vmatpush1.msra.mxu0 %v1642
    %1648 = vmatprep.subr.mxu0 0.0
    %1649 = vmatpush1.msra.mxu0 %v1641
    %1650 = vmatprep.subr.mxu0 0.0
    %1651 = vmatpush1.msra.mxu0 %v1640
    %1652 = vmatprep.subr.mxu0 0.0
    %1653 = vmatpush1.msra.mxu0 %v1639
    %1654 = vmatprep.subr.mxu0 0.0
    %1655 = vmatpush1.msra.mxu0 %v1638
    %1656 = vmatprep.subr.mxu0 0.0
    %1657 = vmatpush1.msra.mxu0 %v1637
    %1658 = vmatprep.subr.mxu0 0.0
    %1659 = vmatpush1.msra.mxu0 %v1636
    %1660 = vmatprep.subr.mxu0 0.0
    %1661 = vmatpush1.msra.mxu0 %v1635
    %1662 = vmatprep.subr.mxu0 0.0
    %1663 = vmatpush1.msra.mxu0 %v1634
    %1664 = vmatprep.subr.mxu0 0.0
    %1665 = vmatpush1.msra.mxu0 %v1633
    %1666 = vmatprep.subr.mxu0 0.0
    %1667 = vmatpush1.msra.mxu0 %v1632
    %1668 = vmatprep.subr.mxu0 0.0
    %1669 = vmatpush1.msra.mxu0 %v1631
    %1670 = vmatprep.subr.mxu0 0.0
    %1671 = vmatpush1.msra.mxu0 %v1630
    %1672 = vmatprep.subr.mxu0 0.0
    %1673 = vmatpush1.msra.mxu0 %v1629
    %1674 = vmatprep.subr.mxu0 0.0
    %1675 = vmatpush1.msra.mxu0 %v1628
    %1676 = vmatprep.subr.mxu0 0.0
    %1677 = vmatpush2.msra.mxu0 0.0
    %1678 = vmatprep.subr.mxu0 0.0
    %1679 = vmatpush2.msra.mxu0 0.0
    %1680 = vmatprep.subr.mxu0 0.0
    %1681 = vmatpush2.msra.mxu0 0.0
    %1682 = vmatprep.subr.mxu0 0.0
    %1683 = vmatpush2.msra.mxu0 0.0
    %1684 = vmatprep.subr.mxu0 0.0
    %1685 = vmatpush2.msra.mxu0 0.0
    %1686 = vmatprep.subr.mxu0 0.0
    %1687 = vmatpush2.msra.mxu0 0.0
    %1688 = vmatprep.subr.mxu0 0.0
    %1689 = vmatpush2.msra.mxu0 0.0
    %1690 = vmatprep.subr.mxu0 0.0
    %1691 = vmatpush2.msra.mxu0 0.0
    %1692 = vmatprep.subr.mxu0 0.0
    %1693 = vmatpush2.msra.mxu0 0.0
    %1694 = vmatprep.subr.mxu0 0.0
    %1695 = vmatpush2.msra.mxu0 0.0
    %1696 = vmatprep.subr.mxu0 0.0
    %1697 = vmatpush2.msra.mxu0 0.0
    %1698 = vmatprep.subr.mxu0 0.0
    %1699 = vmatpush2.msra.mxu0 0.0
    %1700 = vmatprep.subr.mxu0 0.0
    %1701 = vmatpush2.msra.mxu0 0.0
    %1702 = vmatprep.subr.mxu0 0.0
    %1703 = vmatpush2.msra.mxu0 0.0
    %1704 = vmatprep.subr.mxu0 0.0
    %1705 = vmatpush2.msra.mxu0 0.0
    %1706 = vmatprep.subr.mxu0 0.0
    %1707 = vmatpush2.msra.mxu0 0.0
    %1708 = vmatprep.mubr.f32.mxu0 0.0
    %1709 = vmatmul.mubr.f32.gmra.mxu0 %v1626
    %v1710 = vpop.f32.mrf.mxu0
    %v1711 = vadd.f32 0.0, %v1710
    %v1712 = vpop.f32.mrf.mxu0
    %1713 = vdwg.mxu0
    %v1714 = vld [vmem:[#allocation2] sm:$0xff]
    %v1715 = vadd.f32 %v1714, %v1711
    %1716 = vst [vmem:[#allocation2] sm:$0xff] %v1715
    %s1717 = sld [smem:[#allocation3 + $0xf]]
    %s1718 = sld [smem:[#allocation3 + $0x8f]]
    %s1719 = sld [smem:[#allocation3 + $0x10f]]
    %s1720 = sld [smem:[#allocation5 + $0xf]]
    %v1721 = vstv %s1717
    %v1722 = vmul.f32 %v1721, %v51
    %v1723 = vstv %s1718
    %v1724 = vmul.f32 %v1723, %v52
    %v1725 = vadd.f32 %v1722, %v1724
    %v1726 = vstv %s1719
    %v1727 = vmul.f32 %v1726, %v53
    %v1728 = vadd.f32 %v1725, %v1727
    %v1729 = vmul.f32 %v1721, %v52
    %v1730 = vmul.f32 %v1723, %v53
    %v1731 = vadd.f32 %v1729, %v1730
    %v1732 = vmul.f32 %v1726, %v54
    %v1733 = vadd.f32 %v1731, %v1732
    %v1734 = vmax.f32 %v1728, %v1733
    %v1735 = vstv %s1720
    %v1736 = vadd.f32 %v1734, %v1735
    %v1737 = vmax.f32 %v1736, 0.0
    %s1738 = scalar_lea.vmem %s3, 1920
    %v1739 = vld [vmem:[%s1738] sm:$0xff]
    %v1740 = vld [vmem:[%s1738 + $0x8] sm:$0xff]
    %v1741 = vld [vmem:[%s1738 + $0x10] sm:$0xff]
    %v1742 = vld [vmem:[%s1738 + $0x18] sm:$0xff]
    %v1743 = vld [vmem:[%s1738 + $0x20] sm:$0xff]
    %v1744 = vld [vmem:[%s1738 + $0x28] sm:$0xff]
    %v1745 = vld [vmem:[%s1738 + $0x30] sm:$0xff]
    %v1746 = vld [vmem:[%s1738 + $0x38] sm:$0xff]
    %v1747 = vld [vmem:[%s1738 + $0x40] sm:$0xff]
    %v1748 = vld [vmem:[%s1738 + $0x48] sm:$0xff]
    %v1749 = vld [vmem:[%s1738 + $0x50] sm:$0xff]
    %v1750 = vld [vmem:[%s1738 + $0x58] sm:$0xff]
    %v1751 = vld [vmem:[%s1738 + $0x60] sm:$0xff]
    %v1752 = vld [vmem:[%s1738 + $0x68] sm:$0xff]
    %v1753 = vld [vmem:[%s1738 + $0x70] sm:$0xff]
    %v1754 = vld [vmem:[%s1738 + $0x78] sm:$0xff]
    %1755 = vmatprep.subr.mxu0 0.0
    %1756 = vmatpush1.msra.mxu0 %v1754
    %1757 = vmatprep.subr.mxu0 0.0
    %1758 = vmatpush1.msra.mxu0 %v1753
    %1759 = vmatprep.subr.mxu0 0.0
    %1760 = vmatpush1.msra.mxu0 %v1752
    %1761 = vmatprep.subr.mxu0 0.0
    %1762 = vmatpush1.msra.mxu0 %v1751
    %1763 = vmatprep.subr.mxu0 0.0
    %1764 = vmatpush1.msra.mxu0 %v1750
    %1765 = vmatprep.subr.mxu0 0.0
    %1766 = vmatpush1.msra.mxu0 %v1749
    %1767 = vmatprep.subr.mxu0 0.0
    %1768 = vmatpush1.msra.mxu0 %v1748
    %1769 = vmatprep.subr.mxu0 0.0
    %1770 = vmatpush1.msra.mxu0 %v1747
    %1771 = vmatprep.subr.mxu0 0.0
    %1772 = vmatpush1.msra.mxu0 %v1746
    %1773 = vmatprep.subr.mxu0 0.0
    %1774 = vmatpush1.msra.mxu0 %v1745
    %1775 = vmatprep.subr.mxu0 0.0
    %1776 = vmatpush1.msra.mxu0 %v1744
    %1777 = vmatprep.subr.mxu0 0.0
    %1778 = vmatpush1.msra.mxu0 %v1743
    %1779 = vmatprep.subr.mxu0 0.0
    %1780 = vmatpush1.msra.mxu0 %v1742
    %1781 = vmatprep.subr.mxu0 0.0
    %1782 = vmatpush1.msra.mxu0 %v1741
    %1783 = vmatprep.subr.mxu0 0.0
    %1784 = vmatpush1.msra.mxu0 %v1740
    %1785 = vmatprep.subr.mxu0 0.0
    %1786 = vmatpush1.msra.mxu0 %v1739
    %1787 = vmatprep.subr.mxu0 0.0
    %1788 = vmatpush2.msra.mxu0 0.0
    %1789 = vmatprep.subr.mxu0 0.0
    %1790 = vmatpush2.msra.mxu0 0.0
    %1791 = vmatprep.subr.mxu0 0.0
    %1792 = vmatpush2.msra.mxu0 0.0
    %1793 = vmatprep.subr.mxu0 0.0
    %1794 = vmatpush2.msra.mxu0 0.0
    %1795 = vmatprep.subr.mxu0 0.0
    %1796 = vmatpush2.msra.mxu0 0.0
    %1797 = vmatprep.subr.mxu0 0.0
    %1798 = vmatpush2.msra.mxu0 0.0
    %1799 = vmatprep.subr.mxu0 0.0
    %1800 = vmatpush2.msra.mxu0 0.0
    %1801 = vmatprep.subr.mxu0 0.0
    %1802 = vmatpush2.msra.mxu0 0.0
    %1803 = vmatprep.subr.mxu0 0.0
    %1804 = vmatpush2.msra.mxu0 0.0
    %1805 = vmatprep.subr.mxu0 0.0
    %1806 = vmatpush2.msra.mxu0 0.0
    %1807 = vmatprep.subr.mxu0 0.0
    %1808 = vmatpush2.msra.mxu0 0.0
    %1809 = vmatprep.subr.mxu0 0.0
    %1810 = vmatpush2.msra.mxu0 0.0
    %1811 = vmatprep.subr.mxu0 0.0
    %1812 = vmatpush2.msra.mxu0 0.0
    %1813 = vmatprep.subr.mxu0 0.0
    %1814 = vmatpush2.msra.mxu0 0.0
    %1815 = vmatprep.subr.mxu0 0.0
    %1816 = vmatpush2.msra.mxu0 0.0
    %1817 = vmatprep.subr.mxu0 0.0
    %1818 = vmatpush2.msra.mxu0 0.0
    %1819 = vmatprep.mubr.f32.mxu0 0.0
    %1820 = vmatmul.mubr.f32.gmra.mxu0 %v1737
    %v1821 = vpop.f32.mrf.mxu0
    %v1822 = vadd.f32 0.0, %v1821
    %v1823 = vpop.f32.mrf.mxu0
    %1824 = vdwg.mxu0
    %v1825 = vld [vmem:[#allocation2] sm:$0xff]
    %v1826 = vadd.f32 %v1825, %v1822
    %1827 = vst [vmem:[#allocation2] sm:$0xff] %v1826
    %s1828 = sld [smem:[#allocation3 + $0x10]]
    %s1829 = sld [smem:[#allocation3 + $0x90]]
    %s1830 = sld [smem:[#allocation3 + $0x110]]
    %s1831 = sld [smem:[#allocation5 + $0x10]]
    %v1832 = vstv %s1828
    %v1833 = vmul.f32 %v1832, %v51
    %v1834 = vstv %s1829
    %v1835 = vmul.f32 %v1834, %v52
    %v1836 = vadd.f32 %v1833, %v1835
    %v1837 = vstv %s1830
    %v1838 = vmul.f32 %v1837, %v53
    %v1839 = vadd.f32 %v1836, %v1838
    %v1840 = vmul.f32 %v1832, %v52
    %v1841 = vmul.f32 %v1834, %v53
    %v1842 = vadd.f32 %v1840, %v1841
    %v1843 = vmul.f32 %v1837, %v54
    %v1844 = vadd.f32 %v1842, %v1843
    %v1845 = vmax.f32 %v1839, %v1844
    %v1846 = vstv %s1831
    %v1847 = vadd.f32 %v1845, %v1846
    %v1848 = vmax.f32 %v1847, 0.0
    %s1849 = scalar_lea.vmem %s3, 2048
    %v1850 = vld [vmem:[%s1849] sm:$0xff]
    %v1851 = vld [vmem:[%s1849 + $0x8] sm:$0xff]
    %v1852 = vld [vmem:[%s1849 + $0x10] sm:$0xff]
    %v1853 = vld [vmem:[%s1849 + $0x18] sm:$0xff]
    %v1854 = vld [vmem:[%s1849 + $0x20] sm:$0xff]
    %v1855 = vld [vmem:[%s1849 + $0x28] sm:$0xff]
    %v1856 = vld [vmem:[%s1849 + $0x30] sm:$0xff]
    %v1857 = vld [vmem:[%s1849 + $0x38] sm:$0xff]
    %v1858 = vld [vmem:[%s1849 + $0x40] sm:$0xff]
    %v1859 = vld [vmem:[%s1849 + $0x48] sm:$0xff]
    %v1860 = vld [vmem:[%s1849 + $0x50] sm:$0xff]
    %v1861 = vld [vmem:[%s1849 + $0x58] sm:$0xff]
    %v1862 = vld [vmem:[%s1849 + $0x60] sm:$0xff]
    %v1863 = vld [vmem:[%s1849 + $0x68] sm:$0xff]
    %v1864 = vld [vmem:[%s1849 + $0x70] sm:$0xff]
    %v1865 = vld [vmem:[%s1849 + $0x78] sm:$0xff]
    %1866 = vmatprep.subr.mxu0 0.0
    %1867 = vmatpush1.msra.mxu0 %v1865
    %1868 = vmatprep.subr.mxu0 0.0
    %1869 = vmatpush1.msra.mxu0 %v1864
    %1870 = vmatprep.subr.mxu0 0.0
    %1871 = vmatpush1.msra.mxu0 %v1863
    %1872 = vmatprep.subr.mxu0 0.0
    %1873 = vmatpush1.msra.mxu0 %v1862
    %1874 = vmatprep.subr.mxu0 0.0
    %1875 = vmatpush1.msra.mxu0 %v1861
    %1876 = vmatprep.subr.mxu0 0.0
    %1877 = vmatpush1.msra.mxu0 %v1860
    %1878 = vmatprep.subr.mxu0 0.0
    %1879 = vmatpush1.msra.mxu0 %v1859
    %1880 = vmatprep.subr.mxu0 0.0
    %1881 = vmatpush1.msra.mxu0 %v1858
    %1882 = vmatprep.subr.mxu0 0.0
    %1883 = vmatpush1.msra.mxu0 %v1857
    %1884 = vmatprep.subr.mxu0 0.0
    %1885 = vmatpush1.msra.mxu0 %v1856
    %1886 = vmatprep.subr.mxu0 0.0
    %1887 = vmatpush1.msra.mxu0 %v1855
    %1888 = vmatprep.subr.mxu0 0.0
    %1889 = vmatpush1.msra.mxu0 %v1854
    %1890 = vmatprep.subr.mxu0 0.0
    %1891 = vmatpush1.msra.mxu0 %v1853
    %1892 = vmatprep.subr.mxu0 0.0
    %1893 = vmatpush1.msra.mxu0 %v1852
    %1894 = vmatprep.subr.mxu0 0.0
    %1895 = vmatpush1.msra.mxu0 %v1851
    %1896 = vmatprep.subr.mxu0 0.0
    %1897 = vmatpush1.msra.mxu0 %v1850
    %1898 = vmatprep.subr.mxu0 0.0
    %1899 = vmatpush2.msra.mxu0 0.0
    %1900 = vmatprep.subr.mxu0 0.0
    %1901 = vmatpush2.msra.mxu0 0.0
    %1902 = vmatprep.subr.mxu0 0.0
    %1903 = vmatpush2.msra.mxu0 0.0
    %1904 = vmatprep.subr.mxu0 0.0
    %1905 = vmatpush2.msra.mxu0 0.0
    %1906 = vmatprep.subr.mxu0 0.0
    %1907 = vmatpush2.msra.mxu0 0.0
    %1908 = vmatprep.subr.mxu0 0.0
    %1909 = vmatpush2.msra.mxu0 0.0
    %1910 = vmatprep.subr.mxu0 0.0
    %1911 = vmatpush2.msra.mxu0 0.0
    %1912 = vmatprep.subr.mxu0 0.0
    %1913 = vmatpush2.msra.mxu0 0.0
    %1914 = vmatprep.subr.mxu0 0.0
    %1915 = vmatpush2.msra.mxu0 0.0
    %1916 = vmatprep.subr.mxu0 0.0
    %1917 = vmatpush2.msra.mxu0 0.0
    %1918 = vmatprep.subr.mxu0 0.0
    %1919 = vmatpush2.msra.mxu0 0.0
    %1920 = vmatprep.subr.mxu0 0.0
    %1921 = vmatpush2.msra.mxu0 0.0
    %1922 = vmatprep.subr.mxu0 0.0
    %1923 = vmatpush2.msra.mxu0 0.0
    %1924 = vmatprep.subr.mxu0 0.0
    %1925 = vmatpush2.msra.mxu0 0.0
    %1926 = vmatprep.subr.mxu0 0.0
    %1927 = vmatpush2.msra.mxu0 0.0
    %1928 = vmatprep.subr.mxu0 0.0
    %1929 = vmatpush2.msra.mxu0 0.0
    %1930 = vmatprep.mubr.f32.mxu0 0.0
    %1931 = vmatmul.mubr.f32.gmra.mxu0 %v1848
    %v1932 = vpop.f32.mrf.mxu0
    %v1933 = vadd.f32 0.0, %v1932
    %v1934 = vpop.f32.mrf.mxu0
    %1935 = vdwg.mxu0
    %v1936 = vld [vmem:[#allocation2] sm:$0xff]
    %v1937 = vadd.f32 %v1936, %v1933
    %1938 = vst [vmem:[#allocation2] sm:$0xff] %v1937
    %s1939 = sld [smem:[#allocation3 + $0x11]]
    %s1940 = sld [smem:[#allocation3 + $0x91]]
    %s1941 = sld [smem:[#allocation3 + $0x111]]
    %s1942 = sld [smem:[#allocation5 + $0x11]]
    %v1943 = vstv %s1939
    %v1944 = vmul.f32 %v1943, %v51
    %v1945 = vstv %s1940
    %v1946 = vmul.f32 %v1945, %v52
    %v1947 = vadd.f32 %v1944, %v1946
    %v1948 = vstv %s1941
    %v1949 = vmul.f32 %v1948, %v53
    %v1950 = vadd.f32 %v1947, %v1949
    %v1951 = vmul.f32 %v1943, %v52
    %v1952 = vmul.f32 %v1945, %v53
    %v1953 = vadd.f32 %v1951, %v1952
    %v1954 = vmul.f32 %v1948, %v54
    %v1955 = vadd.f32 %v1953, %v1954
    %v1956 = vmax.f32 %v1950, %v1955
    %v1957 = vstv %s1942
    %v1958 = vadd.f32 %v1956, %v1957
    %v1959 = vmax.f32 %v1958, 0.0
    %s1960 = scalar_lea.vmem %s3, 2176
    %v1961 = vld [vmem:[%s1960] sm:$0xff]
    %v1962 = vld [vmem:[%s1960 + $0x8] sm:$0xff]
    %v1963 = vld [vmem:[%s1960 + $0x10] sm:$0xff]
    %v1964 = vld [vmem:[%s1960 + $0x18] sm:$0xff]
    %v1965 = vld [vmem:[%s1960 + $0x20] sm:$0xff]
    %v1966 = vld [vmem:[%s1960 + $0x28] sm:$0xff]
    %v1967 = vld [vmem:[%s1960 + $0x30] sm:$0xff]
    %v1968 = vld [vmem:[%s1960 + $0x38] sm:$0xff]
    %v1969 = vld [vmem:[%s1960 + $0x40] sm:$0xff]
    %v1970 = vld [vmem:[%s1960 + $0x48] sm:$0xff]
    %v1971 = vld [vmem:[%s1960 + $0x50] sm:$0xff]
    %v1972 = vld [vmem:[%s1960 + $0x58] sm:$0xff]
    %v1973 = vld [vmem:[%s1960 + $0x60] sm:$0xff]
    %v1974 = vld [vmem:[%s1960 + $0x68] sm:$0xff]
    %v1975 = vld [vmem:[%s1960 + $0x70] sm:$0xff]
    %v1976 = vld [vmem:[%s1960 + $0x78] sm:$0xff]
    %1977 = vmatprep.subr.mxu0 0.0
    %1978 = vmatpush1.msra.mxu0 %v1976
    %1979 = vmatprep.subr.mxu0 0.0
    %1980 = vmatpush1.msra.mxu0 %v1975
    %1981 = vmatprep.subr.mxu0 0.0
    %1982 = vmatpush1.msra.mxu0 %v1974
    %1983 = vmatprep.subr.mxu0 0.0
    %1984 = vmatpush1.msra.mxu0 %v1973
    %1985 = vmatprep.subr.mxu0 0.0
    %1986 = vmatpush1.msra.mxu0 %v1972
    %1987 = vmatprep.subr.mxu0 0.0
    %1988 = vmatpush1.msra.mxu0 %v1971
    %1989 = vmatprep.subr.mxu0 0.0
    %1990 = vmatpush1.msra.mxu0 %v1970
    %1991 = vmatprep.subr.mxu0 0.0
    %1992 = vmatpush1.msra.mxu0 %v1969
    %1993 = vmatprep.subr.mxu0 0.0
    %1994 = vmatpush1.msra.mxu0 %v1968
    %1995 = vmatprep.subr.mxu0 0.0
    %1996 = vmatpush1.msra.mxu0 %v1967
    %1997 = vmatprep.subr.mxu0 0.0
    %1998 = vmatpush1.msra.mxu0 %v1966
    %1999 = vmatprep.subr.mxu0 0.0
    %2000 = vmatpush1.msra.mxu0 %v1965
    %2001 = vmatprep.subr.mxu0 0.0
    %2002 = vmatpush1.msra.mxu0 %v1964
    %2003 = vmatprep.subr.mxu0 0.0
    %2004 = vmatpush1.msra.mxu0 %v1963
    %2005 = vmatprep.subr.mxu0 0.0
    %2006 = vmatpush1.msra.mxu0 %v1962
    %2007 = vmatprep.subr.mxu0 0.0
    %2008 = vmatpush1.msra.mxu0 %v1961
    %2009 = vmatprep.subr.mxu0 0.0
    %2010 = vmatpush2.msra.mxu0 0.0
    %2011 = vmatprep.subr.mxu0 0.0
    %2012 = vmatpush2.msra.mxu0 0.0
    %2013 = vmatprep.subr.mxu0 0.0
    %2014 = vmatpush2.msra.mxu0 0.0
    %2015 = vmatprep.subr.mxu0 0.0
    %2016 = vmatpush2.msra.mxu0 0.0
    %2017 = vmatprep.subr.mxu0 0.0
    %2018 = vmatpush2.msra.mxu0 0.0
    %2019 = vmatprep.subr.mxu0 0.0
    %2020 = vmatpush2.msra.mxu0 0.0
    %2021 = vmatprep.subr.mxu0 0.0
    %2022 = vmatpush2.msra.mxu0 0.0
    %2023 = vmatprep.subr.mxu0 0.0
    %2024 = vmatpush2.msra.mxu0 0.0
    %2025 = vmatprep.subr.mxu0 0.0
    %2026 = vmatpush2.msra.mxu0 0.0
    %2027 = vmatprep.subr.mxu0 0.0
    %2028 = vmatpush2.msra.mxu0 0.0
    %2029 = vmatprep.subr.mxu0 0.0
    %2030 = vmatpush2.msra.mxu0 0.0
    %2031 = vmatprep.subr.mxu0 0.0
    %2032 = vmatpush2.msra.mxu0 0.0
    %2033 = vmatprep.subr.mxu0 0.0
    %2034 = vmatpush2.msra.mxu0 0.0
    %2035 = vmatprep.subr.mxu0 0.0
    %2036 = vmatpush2.msra.mxu0 0.0
    %2037 = vmatprep.subr.mxu0 0.0
    %2038 = vmatpush2.msra.mxu0 0.0
    %2039 = vmatprep.subr.mxu0 0.0
    %2040 = vmatpush2.msra.mxu0 0.0
    %2041 = vmatprep.mubr.f32.mxu0 0.0
    %2042 = vmatmul.mubr.f32.gmra.mxu0 %v1959
    %v2043 = vpop.f32.mrf.mxu0
    %v2044 = vadd.f32 0.0, %v2043
    %v2045 = vpop.f32.mrf.mxu0
    %2046 = vdwg.mxu0
    %v2047 = vld [vmem:[#allocation2] sm:$0xff]
    %v2048 = vadd.f32 %v2047, %v2044
    %2049 = vst [vmem:[#allocation2] sm:$0xff] %v2048
    %s2050 = sld [smem:[#allocation3 + $0x12]]
    %s2051 = sld [smem:[#allocation3 + $0x92]]
    %s2052 = sld [smem:[#allocation3 + $0x112]]
    %s2053 = sld [smem:[#allocation5 + $0x12]]
    %v2054 = vstv %s2050
    %v2055 = vmul.f32 %v2054, %v51
    %v2056 = vstv %s2051
    %v2057 = vmul.f32 %v2056, %v52
    %v2058 = vadd.f32 %v2055, %v2057
    %v2059 = vstv %s2052
    %v2060 = vmul.f32 %v2059, %v53
    %v2061 = vadd.f32 %v2058, %v2060
    %v2062 = vmul.f32 %v2054, %v52
    %v2063 = vmul.f32 %v2056, %v53
    %v2064 = vadd.f32 %v2062, %v2063
    %v2065 = vmul.f32 %v2059, %v54
    %v2066 = vadd.f32 %v2064, %v2065
    %v2067 = vmax.f32 %v2061, %v2066
    %v2068 = vstv %s2053
    %v2069 = vadd.f32 %v2067, %v2068
    %v2070 = vmax.f32 %v2069, 0.0
    %s2071 = scalar_lea.vmem %s3, 2304
    %v2072 = vld [vmem:[%s2071] sm:$0xff]
    %v2073 = vld [vmem:[%s2071 + $0x8] sm:$0xff]
    %v2074 = vld [vmem:[%s2071 + $0x10] sm:$0xff]
    %v2075 = vld [vmem:[%s2071 + $0x18] sm:$0xff]
    %v2076 = vld [vmem:[%s2071 + $0x20] sm:$0xff]
    %v2077 = vld [vmem:[%s2071 + $0x28] sm:$0xff]
    %v2078 = vld [vmem:[%s2071 + $0x30] sm:$0xff]
    %v2079 = vld [vmem:[%s2071 + $0x38] sm:$0xff]
    %v2080 = vld [vmem:[%s2071 + $0x40] sm:$0xff]
    %v2081 = vld [vmem:[%s2071 + $0x48] sm:$0xff]
    %v2082 = vld [vmem:[%s2071 + $0x50] sm:$0xff]
    %v2083 = vld [vmem:[%s2071 + $0x58] sm:$0xff]
    %v2084 = vld [vmem:[%s2071 + $0x60] sm:$0xff]
    %v2085 = vld [vmem:[%s2071 + $0x68] sm:$0xff]
    %v2086 = vld [vmem:[%s2071 + $0x70] sm:$0xff]
    %v2087 = vld [vmem:[%s2071 + $0x78] sm:$0xff]
    %2088 = vmatprep.subr.mxu0 0.0
    %2089 = vmatpush1.msra.mxu0 %v2087
    %2090 = vmatprep.subr.mxu0 0.0
    %2091 = vmatpush1.msra.mxu0 %v2086
    %2092 = vmatprep.subr.mxu0 0.0
    %2093 = vmatpush1.msra.mxu0 %v2085
    %2094 = vmatprep.subr.mxu0 0.0
    %2095 = vmatpush1.msra.mxu0 %v2084
    %2096 = vmatprep.subr.mxu0 0.0
    %2097 = vmatpush1.msra.mxu0 %v2083
    %2098 = vmatprep.subr.mxu0 0.0
    %2099 = vmatpush1.msra.mxu0 %v2082
    %2100 = vmatprep.subr.mxu0 0.0
    %2101 = vmatpush1.msra.mxu0 %v2081
    %2102 = vmatprep.subr.mxu0 0.0
    %2103 = vmatpush1.msra.mxu0 %v2080
    %2104 = vmatprep.subr.mxu0 0.0
    %2105 = vmatpush1.msra.mxu0 %v2079
    %2106 = vmatprep.subr.mxu0 0.0
    %2107 = vmatpush1.msra.mxu0 %v2078
    %2108 = vmatprep.subr.mxu0 0.0
    %2109 = vmatpush1.msra.mxu0 %v2077
    %2110 = vmatprep.subr.mxu0 0.0
    %2111 = vmatpush1.msra.mxu0 %v2076
    %2112 = vmatprep.subr.mxu0 0.0
    %2113 = vmatpush1.msra.mxu0 %v2075
    %2114 = vmatprep.subr.mxu0 0.0
    %2115 = vmatpush1.msra.mxu0 %v2074
    %2116 = vmatprep.subr.mxu0 0.0
    %2117 = vmatpush1.msra.mxu0 %v2073
    %2118 = vmatprep.subr.mxu0 0.0
    %2119 = vmatpush1.msra.mxu0 %v2072
    %2120 = vmatprep.subr.mxu0 0.0
    %2121 = vmatpush2.msra.mxu0 0.0
    %2122 = vmatprep.subr.mxu0 0.0
    %2123 = vmatpush2.msra.mxu0 0.0
    %2124 = vmatprep.subr.mxu0 0.0
    %2125 = vmatpush2.msra.mxu0 0.0
    %2126 = vmatprep.subr.mxu0 0.0
    %2127 = vmatpush2.msra.mxu0 0.0
    %2128 = vmatprep.subr.mxu0 0.0
    %2129 = vmatpush2.msra.mxu0 0.0
    %2130 = vmatprep.subr.mxu0 0.0
    %2131 = vmatpush2.msra.mxu0 0.0
    %2132 = vmatprep.subr.mxu0 0.0
    %2133 = vmatpush2.msra.mxu0 0.0
    %2134 = vmatprep.subr.mxu0 0.0
    %2135 = vmatpush2.msra.mxu0 0.0
    %2136 = vmatprep.subr.mxu0 0.0
    %2137 = vmatpush2.msra.mxu0 0.0
    %2138 = vmatprep.subr.mxu0 0.0
    %2139 = vmatpush2.msra.mxu0 0.0
    %2140 = vmatprep.subr.mxu0 0.0
    %2141 = vmatpush2.msra.mxu0 0.0
    %2142 = vmatprep.subr.mxu0 0.0
    %2143 = vmatpush2.msra.mxu0 0.0
    %2144 = vmatprep.subr.mxu0 0.0
    %2145 = vmatpush2.msra.mxu0 0.0
    %2146 = vmatprep.subr.mxu0 0.0
    %2147 = vmatpush2.msra.mxu0 0.0
    %2148 = vmatprep.subr.mxu0 0.0
    %2149 = vmatpush2.msra.mxu0 0.0
    %2150 = vmatprep.subr.mxu0 0.0
    %2151 = vmatpush2.msra.mxu0 0.0
    %2152 = vmatprep.mubr.f32.mxu0 0.0
    %2153 = vmatmul.mubr.f32.gmra.mxu0 %v2070
    %v2154 = vpop.f32.mrf.mxu0
    %v2155 = vadd.f32 0.0, %v2154
    %v2156 = vpop.f32.mrf.mxu0
    %2157 = vdwg.mxu0
    %v2158 = vld [vmem:[#allocation2] sm:$0xff]
    %v2159 = vadd.f32 %v2158, %v2155
    %2160 = vst [vmem:[#allocation2] sm:$0xff] %v2159
    %s2161 = sld [smem:[#allocation3 + $0x13]]
    %s2162 = sld [smem:[#allocation3 + $0x93]]
    %s2163 = sld [smem:[#allocation3 + $0x113]]
    %s2164 = sld [smem:[#allocation5 + $0x13]]
    %v2165 = vstv %s2161
    %v2166 = vmul.f32 %v2165, %v51
    %v2167 = vstv %s2162
    %v2168 = vmul.f32 %v2167, %v52
    %v2169 = vadd.f32 %v2166, %v2168
    %v2170 = vstv %s2163
    %v2171 = vmul.f32 %v2170, %v53
    %v2172 = vadd.f32 %v2169, %v2171
    %v2173 = vmul.f32 %v2165, %v52
    %v2174 = vmul.f32 %v2167, %v53
    %v2175 = vadd.f32 %v2173, %v2174
    %v2176 = vmul.f32 %v2170, %v54
    %v2177 = vadd.f32 %v2175, %v2176
    %v2178 = vmax.f32 %v2172, %v2177
    %v2179 = vstv %s2164
    %v2180 = vadd.f32 %v2178, %v2179
    %v2181 = vmax.f32 %v2180, 0.0
    %s2182 = scalar_lea.vmem %s3, 2432
    %v2183 = vld [vmem:[%s2182] sm:$0xff]
    %v2184 = vld [vmem:[%s2182 + $0x8] sm:$0xff]
    %v2185 = vld [vmem:[%s2182 + $0x10] sm:$0xff]
    %v2186 = vld [vmem:[%s2182 + $0x18] sm:$0xff]
    %v2187 = vld [vmem:[%s2182 + $0x20] sm:$0xff]
    %v2188 = vld [vmem:[%s2182 + $0x28] sm:$0xff]
    %v2189 = vld [vmem:[%s2182 + $0x30] sm:$0xff]
    %v2190 = vld [vmem:[%s2182 + $0x38] sm:$0xff]
    %v2191 = vld [vmem:[%s2182 + $0x40] sm:$0xff]
    %v2192 = vld [vmem:[%s2182 + $0x48] sm:$0xff]
    %v2193 = vld [vmem:[%s2182 + $0x50] sm:$0xff]
    %v2194 = vld [vmem:[%s2182 + $0x58] sm:$0xff]
    %v2195 = vld [vmem:[%s2182 + $0x60] sm:$0xff]
    %v2196 = vld [vmem:[%s2182 + $0x68] sm:$0xff]
    %v2197 = vld [vmem:[%s2182 + $0x70] sm:$0xff]
    %v2198 = vld [vmem:[%s2182 + $0x78] sm:$0xff]
    %2199 = vmatprep.subr.mxu0 0.0
    %2200 = vmatpush1.msra.mxu0 %v2198
    %2201 = vmatprep.subr.mxu0 0.0
    %2202 = vmatpush1.msra.mxu0 %v2197
    %2203 = vmatprep.subr.mxu0 0.0
    %2204 = vmatpush1.msra.mxu0 %v2196
    %2205 = vmatprep.subr.mxu0 0.0
    %2206 = vmatpush1.msra.mxu0 %v2195
    %2207 = vmatprep.subr.mxu0 0.0
    %2208 = vmatpush1.msra.mxu0 %v2194
    %2209 = vmatprep.subr.mxu0 0.0
    %2210 = vmatpush1.msra.mxu0 %v2193
    %2211 = vmatprep.subr.mxu0 0.0
    %2212 = vmatpush1.msra.mxu0 %v2192
    %2213 = vmatprep.subr.mxu0 0.0
    %2214 = vmatpush1.msra.mxu0 %v2191
    %2215 = vmatprep.subr.mxu0 0.0
    %2216 = vmatpush1.msra.mxu0 %v2190
    %2217 = vmatprep.subr.mxu0 0.0
    %2218 = vmatpush1.msra.mxu0 %v2189
    %2219 = vmatprep.subr.mxu0 0.0
    %2220 = vmatpush1.msra.mxu0 %v2188
    %2221 = vmatprep.subr.mxu0 0.0
    %2222 = vmatpush1.msra.mxu0 %v2187
    %2223 = vmatprep.subr.mxu0 0.0
    %2224 = vmatpush1.msra.mxu0 %v2186
    %2225 = vmatprep.subr.mxu0 0.0
    %2226 = vmatpush1.msra.mxu0 %v2185
    %2227 = vmatprep.subr.mxu0 0.0
    %2228 = vmatpush1.msra.mxu0 %v2184
    %2229 = vmatprep.subr.mxu0 0.0
    %2230 = vmatpush1.msra.mxu0 %v2183
    %2231 = vmatprep.subr.mxu0 0.0
    %2232 = vmatpush2.msra.mxu0 0.0
    %2233 = vmatprep.subr.mxu0 0.0
    %2234 = vmatpush2.msra.mxu0 0.0
    %2235 = vmatprep.subr.mxu0 0.0
    %2236 = vmatpush2.msra.mxu0 0.0
    %2237 = vmatprep.subr.mxu0 0.0
    %2238 = vmatpush2.msra.mxu0 0.0
    %2239 = vmatprep.subr.mxu0 0.0
    %2240 = vmatpush2.msra.mxu0 0.0
    %2241 = vmatprep.subr.mxu0 0.0
    %2242 = vmatpush2.msra.mxu0 0.0
    %2243 = vmatprep.subr.mxu0 0.0
    %2244 = vmatpush2.msra.mxu0 0.0
    %2245 = vmatprep.subr.mxu0 0.0
    %2246 = vmatpush2.msra.mxu0 0.0
    %2247 = vmatprep.subr.mxu0 0.0
    %2248 = vmatpush2.msra.mxu0 0.0
    %2249 = vmatprep.subr.mxu0 0.0
    %2250 = vmatpush2.msra.mxu0 0.0
    %2251 = vmatprep.subr.mxu0 0.0
    %2252 = vmatpush2.msra.mxu0 0.0
    %2253 = vmatprep.subr.mxu0 0.0
    %2254 = vmatpush2.msra.mxu0 0.0
    %2255 = vmatprep.subr.mxu0 0.0
    %2256 = vmatpush2.msra.mxu0 0.0
    %2257 = vmatprep.subr.mxu0 0.0
    %2258 = vmatpush2.msra.mxu0 0.0
    %2259 = vmatprep.subr.mxu0 0.0
    %2260 = vmatpush2.msra.mxu0 0.0
    %2261 = vmatprep.subr.mxu0 0.0
    %2262 = vmatpush2.msra.mxu0 0.0
    %2263 = vmatprep.mubr.f32.mxu0 0.0
    %2264 = vmatmul.mubr.f32.gmra.mxu0 %v2181
    %v2265 = vpop.f32.mrf.mxu0
    %v2266 = vadd.f32 0.0, %v2265
    %v2267 = vpop.f32.mrf.mxu0
    %2268 = vdwg.mxu0
    %v2269 = vld [vmem:[#allocation2] sm:$0xff]
    %v2270 = vadd.f32 %v2269, %v2266
    %2271 = vst [vmem:[#allocation2] sm:$0xff] %v2270
    %s2272 = sld [smem:[#allocation3 + $0x14]]
    %s2273 = sld [smem:[#allocation3 + $0x94]]
    %s2274 = sld [smem:[#allocation3 + $0x114]]
    %s2275 = sld [smem:[#allocation5 + $0x14]]
    %v2276 = vstv %s2272
    %v2277 = vmul.f32 %v2276, %v51
    %v2278 = vstv %s2273
    %v2279 = vmul.f32 %v2278, %v52
    %v2280 = vadd.f32 %v2277, %v2279
    %v2281 = vstv %s2274
    %v2282 = vmul.f32 %v2281, %v53
    %v2283 = vadd.f32 %v2280, %v2282
    %v2284 = vmul.f32 %v2276, %v52
    %v2285 = vmul.f32 %v2278, %v53
    %v2286 = vadd.f32 %v2284, %v2285
    %v2287 = vmul.f32 %v2281, %v54
    %v2288 = vadd.f32 %v2286, %v2287
    %v2289 = vmax.f32 %v2283, %v2288
    %v2290 = vstv %s2275
    %v2291 = vadd.f32 %v2289, %v2290
    %v2292 = vmax.f32 %v2291, 0.0
    %s2293 = scalar_lea.vmem %s3, 2560
    %v2294 = vld [vmem:[%s2293] sm:$0xff]
    %v2295 = vld [vmem:[%s2293 + $0x8] sm:$0xff]
    %v2296 = vld [vmem:[%s2293 + $0x10] sm:$0xff]
    %v2297 = vld [vmem:[%s2293 + $0x18] sm:$0xff]
    %v2298 = vld [vmem:[%s2293 + $0x20] sm:$0xff]
    %v2299 = vld [vmem:[%s2293 + $0x28] sm:$0xff]
    %v2300 = vld [vmem:[%s2293 + $0x30] sm:$0xff]
    %v2301 = vld [vmem:[%s2293 + $0x38] sm:$0xff]
    %v2302 = vld [vmem:[%s2293 + $0x40] sm:$0xff]
    %v2303 = vld [vmem:[%s2293 + $0x48] sm:$0xff]
    %v2304 = vld [vmem:[%s2293 + $0x50] sm:$0xff]
    %v2305 = vld [vmem:[%s2293 + $0x58] sm:$0xff]
    %v2306 = vld [vmem:[%s2293 + $0x60] sm:$0xff]
    %v2307 = vld [vmem:[%s2293 + $0x68] sm:$0xff]
    %v2308 = vld [vmem:[%s2293 + $0x70] sm:$0xff]
    %v2309 = vld [vmem:[%s2293 + $0x78] sm:$0xff]
    %2310 = vmatprep.subr.mxu0 0.0
    %2311 = vmatpush1.msra.mxu0 %v2309
    %2312 = vmatprep.subr.mxu0 0.0
    %2313 = vmatpush1.msra.mxu0 %v2308
    %2314 = vmatprep.subr.mxu0 0.0
    %2315 = vmatpush1.msra.mxu0 %v2307
    %2316 = vmatprep.subr.mxu0 0.0
    %2317 = vmatpush1.msra.mxu0 %v2306
    %2318 = vmatprep.subr.mxu0 0.0
    %2319 = vmatpush1.msra.mxu0 %v2305
    %2320 = vmatprep.subr.mxu0 0.0
    %2321 = vmatpush1.msra.mxu0 %v2304
    %2322 = vmatprep.subr.mxu0 0.0
    %2323 = vmatpush1.msra.mxu0 %v2303
    %2324 = vmatprep.subr.mxu0 0.0
    %2325 = vmatpush1.msra.mxu0 %v2302
    %2326 = vmatprep.subr.mxu0 0.0
    %2327 = vmatpush1.msra.mxu0 %v2301
    %2328 = vmatprep.subr.mxu0 0.0
    %2329 = vmatpush1.msra.mxu0 %v2300
    %2330 = vmatprep.subr.mxu0 0.0
    %2331 = vmatpush1.msra.mxu0 %v2299
    %2332 = vmatprep.subr.mxu0 0.0
    %2333 = vmatpush1.msra.mxu0 %v2298
    %2334 = vmatprep.subr.mxu0 0.0
    %2335 = vmatpush1.msra.mxu0 %v2297
    %2336 = vmatprep.subr.mxu0 0.0
    %2337 = vmatpush1.msra.mxu0 %v2296
    %2338 = vmatprep.subr.mxu0 0.0
    %2339 = vmatpush1.msra.mxu0 %v2295
    %2340 = vmatprep.subr.mxu0 0.0
    %2341 = vmatpush1.msra.mxu0 %v2294
    %2342 = vmatprep.subr.mxu0 0.0
    %2343 = vmatpush2.msra.mxu0 0.0
    %2344 = vmatprep.subr.mxu0 0.0
    %2345 = vmatpush2.msra.mxu0 0.0
    %2346 = vmatprep.subr.mxu0 0.0
    %2347 = vmatpush2.msra.mxu0 0.0
    %2348 = vmatprep.subr.mxu0 0.0
    %2349 = vmatpush2.msra.mxu0 0.0
    %2350 = vmatprep.subr.mxu0 0.0
    %2351 = vmatpush2.msra.mxu0 0.0
    %2352 = vmatprep.subr.mxu0 0.0
    %2353 = vmatpush2.msra.mxu0 0.0
    %2354 = vmatprep.subr.mxu0 0.0
    %2355 = vmatpush2.msra.mxu0 0.0
    %2356 = vmatprep.subr.mxu0 0.0
    %2357 = vmatpush2.msra.mxu0 0.0
    %2358 = vmatprep.subr.mxu0 0.0
    %2359 = vmatpush2.msra.mxu0 0.0
    %2360 = vmatprep.subr.mxu0 0.0
    %2361 = vmatpush2.msra.mxu0 0.0
    %2362 = vmatprep.subr.mxu0 0.0
    %2363 = vmatpush2.msra.mxu0 0.0
    %2364 = vmatprep.subr.mxu0 0.0
    %2365 = vmatpush2.msra.mxu0 0.0
    %2366 = vmatprep.subr.mxu0 0.0
    %2367 = vmatpush2.msra.mxu0 0.0
    %2368 = vmatprep.subr.mxu0 0.0
    %2369 = vmatpush2.msra.mxu0 0.0
    %2370 = vmatprep.subr.mxu0 0.0
    %2371 = vmatpush2.msra.mxu0 0.0
    %2372 = vmatprep.subr.mxu0 0.0
    %2373 = vmatpush2.msra.mxu0 0.0
    %2374 = vmatprep.mubr.f32.mxu0 0.0
    %2375 = vmatmul.mubr.f32.gmra.mxu0 %v2292
    %v2376 = vpop.f32.mrf.mxu0
    %v2377 = vadd.f32 0.0, %v2376
    %v2378 = vpop.f32.mrf.mxu0
    %2379 = vdwg.mxu0
    %v2380 = vld [vmem:[#allocation2] sm:$0xff]
    %v2381 = vadd.f32 %v2380, %v2377
    %2382 = vst [vmem:[#allocation2] sm:$0xff] %v2381
    %s2383 = sld [smem:[#allocation3 + $0x15]]
    %s2384 = sld [smem:[#allocation3 + $0x95]]
    %s2385 = sld [smem:[#allocation3 + $0x115]]
    %s2386 = sld [smem:[#allocation5 + $0x15]]
    %v2387 = vstv %s2383
    %v2388 = vmul.f32 %v2387, %v51
    %v2389 = vstv %s2384
    %v2390 = vmul.f32 %v2389, %v52
    %v2391 = vadd.f32 %v2388, %v2390
    %v2392 = vstv %s2385
    %v2393 = vmul.f32 %v2392, %v53
    %v2394 = vadd.f32 %v2391, %v2393
    %v2395 = vmul.f32 %v2387, %v52
    %v2396 = vmul.f32 %v2389, %v53
    %v2397 = vadd.f32 %v2395, %v2396
    %v2398 = vmul.f32 %v2392, %v54
    %v2399 = vadd.f32 %v2397, %v2398
    %v2400 = vmax.f32 %v2394, %v2399
    %v2401 = vstv %s2386
    %v2402 = vadd.f32 %v2400, %v2401
    %v2403 = vmax.f32 %v2402, 0.0
    %s2404 = scalar_lea.vmem %s3, 2688
    %v2405 = vld [vmem:[%s2404] sm:$0xff]
    %v2406 = vld [vmem:[%s2404 + $0x8] sm:$0xff]
    %v2407 = vld [vmem:[%s2404 + $0x10] sm:$0xff]
    %v2408 = vld [vmem:[%s2404 + $0x18] sm:$0xff]
    %v2409 = vld [vmem:[%s2404 + $0x20] sm:$0xff]
    %v2410 = vld [vmem:[%s2404 + $0x28] sm:$0xff]
    %v2411 = vld [vmem:[%s2404 + $0x30] sm:$0xff]
    %v2412 = vld [vmem:[%s2404 + $0x38] sm:$0xff]
    %v2413 = vld [vmem:[%s2404 + $0x40] sm:$0xff]
    %v2414 = vld [vmem:[%s2404 + $0x48] sm:$0xff]
    %v2415 = vld [vmem:[%s2404 + $0x50] sm:$0xff]
    %v2416 = vld [vmem:[%s2404 + $0x58] sm:$0xff]
    %v2417 = vld [vmem:[%s2404 + $0x60] sm:$0xff]
    %v2418 = vld [vmem:[%s2404 + $0x68] sm:$0xff]
    %v2419 = vld [vmem:[%s2404 + $0x70] sm:$0xff]
    %v2420 = vld [vmem:[%s2404 + $0x78] sm:$0xff]
    %2421 = vmatprep.subr.mxu0 0.0
    %2422 = vmatpush1.msra.mxu0 %v2420
    %2423 = vmatprep.subr.mxu0 0.0
    %2424 = vmatpush1.msra.mxu0 %v2419
    %2425 = vmatprep.subr.mxu0 0.0
    %2426 = vmatpush1.msra.mxu0 %v2418
    %2427 = vmatprep.subr.mxu0 0.0
    %2428 = vmatpush1.msra.mxu0 %v2417
    %2429 = vmatprep.subr.mxu0 0.0
    %2430 = vmatpush1.msra.mxu0 %v2416
    %2431 = vmatprep.subr.mxu0 0.0
    %2432 = vmatpush1.msra.mxu0 %v2415
    %2433 = vmatprep.subr.mxu0 0.0
    %2434 = vmatpush1.msra.mxu0 %v2414
    %2435 = vmatprep.subr.mxu0 0.0
    %2436 = vmatpush1.msra.mxu0 %v2413
    %2437 = vmatprep.subr.mxu0 0.0
    %2438 = vmatpush1.msra.mxu0 %v2412
    %2439 = vmatprep.subr.mxu0 0.0
    %2440 = vmatpush1.msra.mxu0 %v2411
    %2441 = vmatprep.subr.mxu0 0.0
    %2442 = vmatpush1.msra.mxu0 %v2410
    %2443 = vmatprep.subr.mxu0 0.0
    %2444 = vmatpush1.msra.mxu0 %v2409
    %2445 = vmatprep.subr.mxu0 0.0
    %2446 = vmatpush1.msra.mxu0 %v2408
    %2447 = vmatprep.subr.mxu0 0.0
    %2448 = vmatpush1.msra.mxu0 %v2407
    %2449 = vmatprep.subr.mxu0 0.0
    %2450 = vmatpush1.msra.mxu0 %v2406
    %2451 = vmatprep.subr.mxu0 0.0
    %2452 = vmatpush1.msra.mxu0 %v2405
    %2453 = vmatprep.subr.mxu0 0.0
    %2454 = vmatpush2.msra.mxu0 0.0
    %2455 = vmatprep.subr.mxu0 0.0
    %2456 = vmatpush2.msra.mxu0 0.0
    %2457 = vmatprep.subr.mxu0 0.0
    %2458 = vmatpush2.msra.mxu0 0.0
    %2459 = vmatprep.subr.mxu0 0.0
    %2460 = vmatpush2.msra.mxu0 0.0
    %2461 = vmatprep.subr.mxu0 0.0
    %2462 = vmatpush2.msra.mxu0 0.0
    %2463 = vmatprep.subr.mxu0 0.0
    %2464 = vmatpush2.msra.mxu0 0.0
    %2465 = vmatprep.subr.mxu0 0.0
    %2466 = vmatpush2.msra.mxu0 0.0
    %2467 = vmatprep.subr.mxu0 0.0
    %2468 = vmatpush2.msra.mxu0 0.0
    %2469 = vmatprep.subr.mxu0 0.0
    %2470 = vmatpush2.msra.mxu0 0.0
    %2471 = vmatprep.subr.mxu0 0.0
    %2472 = vmatpush2.msra.mxu0 0.0
    %2473 = vmatprep.subr.mxu0 0.0
    %2474 = vmatpush2.msra.mxu0 0.0
    %2475 = vmatprep.subr.mxu0 0.0
    %2476 = vmatpush2.msra.mxu0 0.0
    %2477 = vmatprep.subr.mxu0 0.0
    %2478 = vmatpush2.msra.mxu0 0.0
    %2479 = vmatprep.subr.mxu0 0.0
    %2480 = vmatpush2.msra.mxu0 0.0
    %2481 = vmatprep.subr.mxu0 0.0
    %2482 = vmatpush2.msra.mxu0 0.0
    %2483 = vmatprep.subr.mxu0 0.0
    %2484 = vmatpush2.msra.mxu0 0.0
    %2485 = vmatprep.mubr.f32.mxu0 0.0
    %2486 = vmatmul.mubr.f32.gmra.mxu0 %v2403
    %v2487 = vpop.f32.mrf.mxu0
    %v2488 = vadd.f32 0.0, %v2487
    %v2489 = vpop.f32.mrf.mxu0
    %2490 = vdwg.mxu0
    %v2491 = vld [vmem:[#allocation2] sm:$0xff]
    %v2492 = vadd.f32 %v2491, %v2488
    %2493 = vst [vmem:[#allocation2] sm:$0xff] %v2492
    %s2494 = sld [smem:[#allocation3 + $0x16]]
    %s2495 = sld [smem:[#allocation3 + $0x96]]
    %s2496 = sld [smem:[#allocation3 + $0x116]]
    %s2497 = sld [smem:[#allocation5 + $0x16]]
    %v2498 = vstv %s2494
    %v2499 = vmul.f32 %v2498, %v51
    %v2500 = vstv %s2495
    %v2501 = vmul.f32 %v2500, %v52
    %v2502 = vadd.f32 %v2499, %v2501
    %v2503 = vstv %s2496
    %v2504 = vmul.f32 %v2503, %v53
    %v2505 = vadd.f32 %v2502, %v2504
    %v2506 = vmul.f32 %v2498, %v52
    %v2507 = vmul.f32 %v2500, %v53
    %v2508 = vadd.f32 %v2506, %v2507
    %v2509 = vmul.f32 %v2503, %v54
    %v2510 = vadd.f32 %v2508, %v2509
    %v2511 = vmax.f32 %v2505, %v2510
    %v2512 = vstv %s2497
    %v2513 = vadd.f32 %v2511, %v2512
    %v2514 = vmax.f32 %v2513, 0.0
    %s2515 = scalar_lea.vmem %s3, 2816
    %v2516 = vld [vmem:[%s2515] sm:$0xff]
    %v2517 = vld [vmem:[%s2515 + $0x8] sm:$0xff]
    %v2518 = vld [vmem:[%s2515 + $0x10] sm:$0xff]
    %v2519 = vld [vmem:[%s2515 + $0x18] sm:$0xff]
    %v2520 = vld [vmem:[%s2515 + $0x20] sm:$0xff]
    %v2521 = vld [vmem:[%s2515 + $0x28] sm:$0xff]
    %v2522 = vld [vmem:[%s2515 + $0x30] sm:$0xff]
    %v2523 = vld [vmem:[%s2515 + $0x38] sm:$0xff]
    %v2524 = vld [vmem:[%s2515 + $0x40] sm:$0xff]
    %v2525 = vld [vmem:[%s2515 + $0x48] sm:$0xff]
    %v2526 = vld [vmem:[%s2515 + $0x50] sm:$0xff]
    %v2527 = vld [vmem:[%s2515 + $0x58] sm:$0xff]
    %v2528 = vld [vmem:[%s2515 + $0x60] sm:$0xff]
    %v2529 = vld [vmem:[%s2515 + $0x68] sm:$0xff]
    %v2530 = vld [vmem:[%s2515 + $0x70] sm:$0xff]
    %v2531 = vld [vmem:[%s2515 + $0x78] sm:$0xff]
    %2532 = vmatprep.subr.mxu0 0.0
    %2533 = vmatpush1.msra.mxu0 %v2531
    %2534 = vmatprep.subr.mxu0 0.0
    %2535 = vmatpush1.msra.mxu0 %v2530
    %2536 = vmatprep.subr.mxu0 0.0
    %2537 = vmatpush1.msra.mxu0 %v2529
    %2538 = vmatprep.subr.mxu0 0.0
    %2539 = vmatpush1.msra.mxu0 %v2528
    %2540 = vmatprep.subr.mxu0 0.0
    %2541 = vmatpush1.msra.mxu0 %v2527
    %2542 = vmatprep.subr.mxu0 0.0
    %2543 = vmatpush1.msra.mxu0 %v2526
    %2544 = vmatprep.subr.mxu0 0.0
    %2545 = vmatpush1.msra.mxu0 %v2525
    %2546 = vmatprep.subr.mxu0 0.0
    %2547 = vmatpush1.msra.mxu0 %v2524
    %2548 = vmatprep.subr.mxu0 0.0
    %2549 = vmatpush1.msra.mxu0 %v2523
    %2550 = vmatprep.subr.mxu0 0.0
    %2551 = vmatpush1.msra.mxu0 %v2522
    %2552 = vmatprep.subr.mxu0 0.0
    %2553 = vmatpush1.msra.mxu0 %v2521
    %2554 = vmatprep.subr.mxu0 0.0
    %2555 = vmatpush1.msra.mxu0 %v2520
    %2556 = vmatprep.subr.mxu0 0.0
    %2557 = vmatpush1.msra.mxu0 %v2519
    %2558 = vmatprep.subr.mxu0 0.0
    %2559 = vmatpush1.msra.mxu0 %v2518
    %2560 = vmatprep.subr.mxu0 0.0
    %2561 = vmatpush1.msra.mxu0 %v2517
    %2562 = vmatprep.subr.mxu0 0.0
    %2563 = vmatpush1.msra.mxu0 %v2516
    %2564 = vmatprep.subr.mxu0 0.0
    %2565 = vmatpush2.msra.mxu0 0.0
    %2566 = vmatprep.subr.mxu0 0.0
    %2567 = vmatpush2.msra.mxu0 0.0
    %2568 = vmatprep.subr.mxu0 0.0
    %2569 = vmatpush2.msra.mxu0 0.0
    %2570 = vmatprep.subr.mxu0 0.0
    %2571 = vmatpush2.msra.mxu0 0.0
    %2572 = vmatprep.subr.mxu0 0.0
    %2573 = vmatpush2.msra.mxu0 0.0
    %2574 = vmatprep.subr.mxu0 0.0
    %2575 = vmatpush2.msra.mxu0 0.0
    %2576 = vmatprep.subr.mxu0 0.0
    %2577 = vmatpush2.msra.mxu0 0.0
    %2578 = vmatprep.subr.mxu0 0.0
    %2579 = vmatpush2.msra.mxu0 0.0
    %2580 = vmatprep.subr.mxu0 0.0
    %2581 = vmatpush2.msra.mxu0 0.0
    %2582 = vmatprep.subr.mxu0 0.0
    %2583 = vmatpush2.msra.mxu0 0.0
    %2584 = vmatprep.subr.mxu0 0.0
    %2585 = vmatpush2.msra.mxu0 0.0
    %2586 = vmatprep.subr.mxu0 0.0
    %2587 = vmatpush2.msra.mxu0 0.0
    %2588 = vmatprep.subr.mxu0 0.0
    %2589 = vmatpush2.msra.mxu0 0.0
    %2590 = vmatprep.subr.mxu0 0.0
    %2591 = vmatpush2.msra.mxu0 0.0
    %2592 = vmatprep.subr.mxu0 0.0
    %2593 = vmatpush2.msra.mxu0 0.0
    %2594 = vmatprep.subr.mxu0 0.0
    %2595 = vmatpush2.msra.mxu0 0.0
    %2596 = vmatprep.mubr.f32.mxu0 0.0
    %2597 = vmatmul.mubr.f32.gmra.mxu0 %v2514
    %v2598 = vpop.f32.mrf.mxu0
    %v2599 = vadd.f32 0.0, %v2598
    %v2600 = vpop.f32.mrf.mxu0
    %2601 = vdwg.mxu0
    %v2602 = vld [vmem:[#allocation2] sm:$0xff]
    %v2603 = vadd.f32 %v2602, %v2599
    %2604 = vst [vmem:[#allocation2] sm:$0xff] %v2603
    %s2605 = sld [smem:[#allocation3 + $0x17]]
    %s2606 = sld [smem:[#allocation3 + $0x97]]
    %s2607 = sld [smem:[#allocation3 + $0x117]]
    %s2608 = sld [smem:[#allocation5 + $0x17]]
    %v2609 = vstv %s2605
    %v2610 = vmul.f32 %v2609, %v51
    %v2611 = vstv %s2606
    %v2612 = vmul.f32 %v2611, %v52
    %v2613 = vadd.f32 %v2610, %v2612
    %v2614 = vstv %s2607
    %v2615 = vmul.f32 %v2614, %v53
    %v2616 = vadd.f32 %v2613, %v2615
    %v2617 = vmul.f32 %v2609, %v52
    %v2618 = vmul.f32 %v2611, %v53
    %v2619 = vadd.f32 %v2617, %v2618
    %v2620 = vmul.f32 %v2614, %v54
    %v2621 = vadd.f32 %v2619, %v2620
    %v2622 = vmax.f32 %v2616, %v2621
    %v2623 = vstv %s2608
    %v2624 = vadd.f32 %v2622, %v2623
    %v2625 = vmax.f32 %v2624, 0.0
    %s2626 = scalar_lea.vmem %s3, 2944
    %v2627 = vld [vmem:[%s2626] sm:$0xff]
    %v2628 = vld [vmem:[%s2626 + $0x8] sm:$0xff]
    %v2629 = vld [vmem:[%s2626 + $0x10] sm:$0xff]
    %v2630 = vld [vmem:[%s2626 + $0x18] sm:$0xff]
    %v2631 = vld [vmem:[%s2626 + $0x20] sm:$0xff]
    %v2632 = vld [vmem:[%s2626 + $0x28] sm:$0xff]
    %v2633 = vld [vmem:[%s2626 + $0x30] sm:$0xff]
    %v2634 = vld [vmem:[%s2626 + $0x38] sm:$0xff]
    %v2635 = vld [vmem:[%s2626 + $0x40] sm:$0xff]
    %v2636 = vld [vmem:[%s2626 + $0x48] sm:$0xff]
    %v2637 = vld [vmem:[%s2626 + $0x50] sm:$0xff]
    %v2638 = vld [vmem:[%s2626 + $0x58] sm:$0xff]
    %v2639 = vld [vmem:[%s2626 + $0x60] sm:$0xff]
    %v2640 = vld [vmem:[%s2626 + $0x68] sm:$0xff]
    %v2641 = vld [vmem:[%s2626 + $0x70] sm:$0xff]
    %v2642 = vld [vmem:[%s2626 + $0x78] sm:$0xff]
    %2643 = vmatprep.subr.mxu0 0.0
    %2644 = vmatpush1.msra.mxu0 %v2642
    %2645 = vmatprep.subr.mxu0 0.0
    %2646 = vmatpush1.msra.mxu0 %v2641
    %2647 = vmatprep.subr.mxu0 0.0
    %2648 = vmatpush1.msra.mxu0 %v2640
    %2649 = vmatprep.subr.mxu0 0.0
    %2650 = vmatpush1.msra.mxu0 %v2639
    %2651 = vmatprep.subr.mxu0 0.0
    %2652 = vmatpush1.msra.mxu0 %v2638
    %2653 = vmatprep.subr.mxu0 0.0
    %2654 = vmatpush1.msra.mxu0 %v2637
    %2655 = vmatprep.subr.mxu0 0.0
    %2656 = vmatpush1.msra.mxu0 %v2636
    %2657 = vmatprep.subr.mxu0 0.0
    %2658 = vmatpush1.msra.mxu0 %v2635
    %2659 = vmatprep.subr.mxu0 0.0
    %2660 = vmatpush1.msra.mxu0 %v2634
    %2661 = vmatprep.subr.mxu0 0.0
    %2662 = vmatpush1.msra.mxu0 %v2633
    %2663 = vmatprep.subr.mxu0 0.0
    %2664 = vmatpush1.msra.mxu0 %v2632
    %2665 = vmatprep.subr.mxu0 0.0
    %2666 = vmatpush1.msra.mxu0 %v2631
    %2667 = vmatprep.subr.mxu0 0.0
    %2668 = vmatpush1.msra.mxu0 %v2630
    %2669 = vmatprep.subr.mxu0 0.0
    %2670 = vmatpush1.msra.mxu0 %v2629
    %2671 = vmatprep.subr.mxu0 0.0
    %2672 = vmatpush1.msra.mxu0 %v2628
    %2673 = vmatprep.subr.mxu0 0.0
    %2674 = vmatpush1.msra.mxu0 %v2627
    %2675 = vmatprep.subr.mxu0 0.0
    %2676 = vmatpush2.msra.mxu0 0.0
    %2677 = vmatprep.subr.mxu0 0.0
    %2678 = vmatpush2.msra.mxu0 0.0
    %2679 = vmatprep.subr.mxu0 0.0
    %2680 = vmatpush2.msra.mxu0 0.0
    %2681 = vmatprep.subr.mxu0 0.0
    %2682 = vmatpush2.msra.mxu0 0.0
    %2683 = vmatprep.subr.mxu0 0.0
    %2684 = vmatpush2.msra.mxu0 0.0
    %2685 = vmatprep.subr.mxu0 0.0
    %2686 = vmatpush2.msra.mxu0 0.0
    %2687 = vmatprep.subr.mxu0 0.0
    %2688 = vmatpush2.msra.mxu0 0.0
    %2689 = vmatprep.subr.mxu0 0.0
    %2690 = vmatpush2.msra.mxu0 0.0
    %2691 = vmatprep.subr.mxu0 0.0
    %2692 = vmatpush2.msra.mxu0 0.0
    %2693 = vmatprep.subr.mxu0 0.0
    %2694 = vmatpush2.msra.mxu0 0.0
    %2695 = vmatprep.subr.mxu0 0.0
    %2696 = vmatpush2.msra.mxu0 0.0
    %2697 = vmatprep.subr.mxu0 0.0
    %2698 = vmatpush2.msra.mxu0 0.0
    %2699 = vmatprep.subr.mxu0 0.0
    %2700 = vmatpush2.msra.mxu0 0.0
    %2701 = vmatprep.subr.mxu0 0.0
    %2702 = vmatpush2.msra.mxu0 0.0
    %2703 = vmatprep.subr.mxu0 0.0
    %2704 = vmatpush2.msra.mxu0 0.0
    %2705 = vmatprep.subr.mxu0 0.0
    %2706 = vmatpush2.msra.mxu0 0.0
    %2707 = vmatprep.mubr.f32.mxu0 0.0
    %2708 = vmatmul.mubr.f32.gmra.mxu0 %v2625
    %v2709 = vpop.f32.mrf.mxu0
    %v2710 = vadd.f32 0.0, %v2709
    %v2711 = vpop.f32.mrf.mxu0
    %2712 = vdwg.mxu0
    %v2713 = vld [vmem:[#allocation2] sm:$0xff]
    %v2714 = vadd.f32 %v2713, %v2710
    %2715 = vst [vmem:[#allocation2] sm:$0xff] %v2714
    %s2716 = sld [smem:[#allocation3 + $0x18]]
    %s2717 = sld [smem:[#allocation3 + $0x98]]
    %s2718 = sld [smem:[#allocation3 + $0x118]]
    %s2719 = sld [smem:[#allocation5 + $0x18]]
    %v2720 = vstv %s2716
    %v2721 = vmul.f32 %v2720, %v51
    %v2722 = vstv %s2717
    %v2723 = vmul.f32 %v2722, %v52
    %v2724 = vadd.f32 %v2721, %v2723
    %v2725 = vstv %s2718
    %v2726 = vmul.f32 %v2725, %v53
    %v2727 = vadd.f32 %v2724, %v2726
    %v2728 = vmul.f32 %v2720, %v52
    %v2729 = vmul.f32 %v2722, %v53
    %v2730 = vadd.f32 %v2728, %v2729
    %v2731 = vmul.f32 %v2725, %v54
    %v2732 = vadd.f32 %v2730, %v2731
    %v2733 = vmax.f32 %v2727, %v2732
    %v2734 = vstv %s2719
    %v2735 = vadd.f32 %v2733, %v2734
    %v2736 = vmax.f32 %v2735, 0.0
    %s2737 = scalar_lea.vmem %s3, 3072
    %v2738 = vld [vmem:[%s2737] sm:$0xff]
    %v2739 = vld [vmem:[%s2737 + $0x8] sm:$0xff]
    %v2740 = vld [vmem:[%s2737 + $0x10] sm:$0xff]
    %v2741 = vld [vmem:[%s2737 + $0x18] sm:$0xff]
    %v2742 = vld [vmem:[%s2737 + $0x20] sm:$0xff]
    %v2743 = vld [vmem:[%s2737 + $0x28] sm:$0xff]
    %v2744 = vld [vmem:[%s2737 + $0x30] sm:$0xff]
    %v2745 = vld [vmem:[%s2737 + $0x38] sm:$0xff]
    %v2746 = vld [vmem:[%s2737 + $0x40] sm:$0xff]
    %v2747 = vld [vmem:[%s2737 + $0x48] sm:$0xff]
    %v2748 = vld [vmem:[%s2737 + $0x50] sm:$0xff]
    %v2749 = vld [vmem:[%s2737 + $0x58] sm:$0xff]
    %v2750 = vld [vmem:[%s2737 + $0x60] sm:$0xff]
    %v2751 = vld [vmem:[%s2737 + $0x68] sm:$0xff]
    %v2752 = vld [vmem:[%s2737 + $0x70] sm:$0xff]
    %v2753 = vld [vmem:[%s2737 + $0x78] sm:$0xff]
    %2754 = vmatprep.subr.mxu0 0.0
    %2755 = vmatpush1.msra.mxu0 %v2753
    %2756 = vmatprep.subr.mxu0 0.0
    %2757 = vmatpush1.msra.mxu0 %v2752
    %2758 = vmatprep.subr.mxu0 0.0
    %2759 = vmatpush1.msra.mxu0 %v2751
    %2760 = vmatprep.subr.mxu0 0.0
    %2761 = vmatpush1.msra.mxu0 %v2750
    %2762 = vmatprep.subr.mxu0 0.0
    %2763 = vmatpush1.msra.mxu0 %v2749
    %2764 = vmatprep.subr.mxu0 0.0
    %2765 = vmatpush1.msra.mxu0 %v2748
    %2766 = vmatprep.subr.mxu0 0.0
    %2767 = vmatpush1.msra.mxu0 %v2747
    %2768 = vmatprep.subr.mxu0 0.0
    %2769 = vmatpush1.msra.mxu0 %v2746
    %2770 = vmatprep.subr.mxu0 0.0
    %2771 = vmatpush1.msra.mxu0 %v2745
    %2772 = vmatprep.subr.mxu0 0.0
    %2773 = vmatpush1.msra.mxu0 %v2744
    %2774 = vmatprep.subr.mxu0 0.0
    %2775 = vmatpush1.msra.mxu0 %v2743
    %2776 = vmatprep.subr.mxu0 0.0
    %2777 = vmatpush1.msra.mxu0 %v2742
    %2778 = vmatprep.subr.mxu0 0.0
    %2779 = vmatpush1.msra.mxu0 %v2741
    %2780 = vmatprep.subr.mxu0 0.0
    %2781 = vmatpush1.msra.mxu0 %v2740
    %2782 = vmatprep.subr.mxu0 0.0
    %2783 = vmatpush1.msra.mxu0 %v2739
    %2784 = vmatprep.subr.mxu0 0.0
    %2785 = vmatpush1.msra.mxu0 %v2738
    %2786 = vmatprep.subr.mxu0 0.0
    %2787 = vmatpush2.msra.mxu0 0.0
    %2788 = vmatprep.subr.mxu0 0.0
    %2789 = vmatpush2.msra.mxu0 0.0
    %2790 = vmatprep.subr.mxu0 0.0
    %2791 = vmatpush2.msra.mxu0 0.0
    %2792 = vmatprep.subr.mxu0 0.0
    %2793 = vmatpush2.msra.mxu0 0.0
    %2794 = vmatprep.subr.mxu0 0.0
    %2795 = vmatpush2.msra.mxu0 0.0
    %2796 = vmatprep.subr.mxu0 0.0
    %2797 = vmatpush2.msra.mxu0 0.0
    %2798 = vmatprep.subr.mxu0 0.0
    %2799 = vmatpush2.msra.mxu0 0.0
    %2800 = vmatprep.subr.mxu0 0.0
    %2801 = vmatpush2.msra.mxu0 0.0
    %2802 = vmatprep.subr.mxu0 0.0
    %2803 = vmatpush2.msra.mxu0 0.0
    %2804 = vmatprep.subr.mxu0 0.0
    %2805 = vmatpush2.msra.mxu0 0.0
    %2806 = vmatprep.subr.mxu0 0.0
    %2807 = vmatpush2.msra.mxu0 0.0
    %2808 = vmatprep.subr.mxu0 0.0
    %2809 = vmatpush2.msra.mxu0 0.0
    %2810 = vmatprep.subr.mxu0 0.0
    %2811 = vmatpush2.msra.mxu0 0.0
    %2812 = vmatprep.subr.mxu0 0.0
    %2813 = vmatpush2.msra.mxu0 0.0
    %2814 = vmatprep.subr.mxu0 0.0
    %2815 = vmatpush2.msra.mxu0 0.0
    %2816 = vmatprep.subr.mxu0 0.0
    %2817 = vmatpush2.msra.mxu0 0.0
    %2818 = vmatprep.mubr.f32.mxu0 0.0
    %2819 = vmatmul.mubr.f32.gmra.mxu0 %v2736
    %v2820 = vpop.f32.mrf.mxu0
    %v2821 = vadd.f32 0.0, %v2820
    %v2822 = vpop.f32.mrf.mxu0
    %2823 = vdwg.mxu0
    %v2824 = vld [vmem:[#allocation2] sm:$0xff]
    %v2825 = vadd.f32 %v2824, %v2821
    %2826 = vst [vmem:[#allocation2] sm:$0xff] %v2825
    %s2827 = sld [smem:[#allocation3 + $0x19]]
    %s2828 = sld [smem:[#allocation3 + $0x99]]
    %s2829 = sld [smem:[#allocation3 + $0x119]]
    %s2830 = sld [smem:[#allocation5 + $0x19]]
    %v2831 = vstv %s2827
    %v2832 = vmul.f32 %v2831, %v51
    %v2833 = vstv %s2828
    %v2834 = vmul.f32 %v2833, %v52
    %v2835 = vadd.f32 %v2832, %v2834
    %v2836 = vstv %s2829
    %v2837 = vmul.f32 %v2836, %v53
    %v2838 = vadd.f32 %v2835, %v2837
    %v2839 = vmul.f32 %v2831, %v52
    %v2840 = vmul.f32 %v2833, %v53
    %v2841 = vadd.f32 %v2839, %v2840
    %v2842 = vmul.f32 %v2836, %v54
    %v2843 = vadd.f32 %v2841, %v2842
    %v2844 = vmax.f32 %v2838, %v2843
    %v2845 = vstv %s2830
    %v2846 = vadd.f32 %v2844, %v2845
    %v2847 = vmax.f32 %v2846, 0.0
    %s2848 = scalar_lea.vmem %s3, 3200
    %v2849 = vld [vmem:[%s2848] sm:$0xff]
    %v2850 = vld [vmem:[%s2848 + $0x8] sm:$0xff]
    %v2851 = vld [vmem:[%s2848 + $0x10] sm:$0xff]
    %v2852 = vld [vmem:[%s2848 + $0x18] sm:$0xff]
    %v2853 = vld [vmem:[%s2848 + $0x20] sm:$0xff]
    %v2854 = vld [vmem:[%s2848 + $0x28] sm:$0xff]
    %v2855 = vld [vmem:[%s2848 + $0x30] sm:$0xff]
    %v2856 = vld [vmem:[%s2848 + $0x38] sm:$0xff]
    %v2857 = vld [vmem:[%s2848 + $0x40] sm:$0xff]
    %v2858 = vld [vmem:[%s2848 + $0x48] sm:$0xff]
    %v2859 = vld [vmem:[%s2848 + $0x50] sm:$0xff]
    %v2860 = vld [vmem:[%s2848 + $0x58] sm:$0xff]
    %v2861 = vld [vmem:[%s2848 + $0x60] sm:$0xff]
    %v2862 = vld [vmem:[%s2848 + $0x68] sm:$0xff]
    %v2863 = vld [vmem:[%s2848 + $0x70] sm:$0xff]
    %v2864 = vld [vmem:[%s2848 + $0x78] sm:$0xff]
    %2865 = vmatprep.subr.mxu0 0.0
    %2866 = vmatpush1.msra.mxu0 %v2864
    %2867 = vmatprep.subr.mxu0 0.0
    %2868 = vmatpush1.msra.mxu0 %v2863
    %2869 = vmatprep.subr.mxu0 0.0
    %2870 = vmatpush1.msra.mxu0 %v2862
    %2871 = vmatprep.subr.mxu0 0.0
    %2872 = vmatpush1.msra.mxu0 %v2861
    %2873 = vmatprep.subr.mxu0 0.0
    %2874 = vmatpush1.msra.mxu0 %v2860
    %2875 = vmatprep.subr.mxu0 0.0
    %2876 = vmatpush1.msra.mxu0 %v2859
    %2877 = vmatprep.subr.mxu0 0.0
    %2878 = vmatpush1.msra.mxu0 %v2858
    %2879 = vmatprep.subr.mxu0 0.0
    %2880 = vmatpush1.msra.mxu0 %v2857
    %2881 = vmatprep.subr.mxu0 0.0
    %2882 = vmatpush1.msra.mxu0 %v2856
    %2883 = vmatprep.subr.mxu0 0.0
    %2884 = vmatpush1.msra.mxu0 %v2855
    %2885 = vmatprep.subr.mxu0 0.0
    %2886 = vmatpush1.msra.mxu0 %v2854
    %2887 = vmatprep.subr.mxu0 0.0
    %2888 = vmatpush1.msra.mxu0 %v2853
    %2889 = vmatprep.subr.mxu0 0.0
    %2890 = vmatpush1.msra.mxu0 %v2852
    %2891 = vmatprep.subr.mxu0 0.0
    %2892 = vmatpush1.msra.mxu0 %v2851
    %2893 = vmatprep.subr.mxu0 0.0
    %2894 = vmatpush1.msra.mxu0 %v2850
    %2895 = vmatprep.subr.mxu0 0.0
    %2896 = vmatpush1.msra.mxu0 %v2849
    %2897 = vmatprep.subr.mxu0 0.0
    %2898 = vmatpush2.msra.mxu0 0.0
    %2899 = vmatprep.subr.mxu0 0.0
    %2900 = vmatpush2.msra.mxu0 0.0
    %2901 = vmatprep.subr.mxu0 0.0
    %2902 = vmatpush2.msra.mxu0 0.0
    %2903 = vmatprep.subr.mxu0 0.0
    %2904 = vmatpush2.msra.mxu0 0.0
    %2905 = vmatprep.subr.mxu0 0.0
    %2906 = vmatpush2.msra.mxu0 0.0
    %2907 = vmatprep.subr.mxu0 0.0
    %2908 = vmatpush2.msra.mxu0 0.0
    %2909 = vmatprep.subr.mxu0 0.0
    %2910 = vmatpush2.msra.mxu0 0.0
    %2911 = vmatprep.subr.mxu0 0.0
    %2912 = vmatpush2.msra.mxu0 0.0
    %2913 = vmatprep.subr.mxu0 0.0
    %2914 = vmatpush2.msra.mxu0 0.0
    %2915 = vmatprep.subr.mxu0 0.0
    %2916 = vmatpush2.msra.mxu0 0.0
    %2917 = vmatprep.subr.mxu0 0.0
    %2918 = vmatpush2.msra.mxu0 0.0
    %2919 = vmatprep.subr.mxu0 0.0
    %2920 = vmatpush2.msra.mxu0 0.0
    %2921 = vmatprep.subr.mxu0 0.0
    %2922 = vmatpush2.msra.mxu0 0.0
    %2923 = vmatprep.subr.mxu0 0.0
    %2924 = vmatpush2.msra.mxu0 0.0
    %2925 = vmatprep.subr.mxu0 0.0
    %2926 = vmatpush2.msra.mxu0 0.0
    %2927 = vmatprep.subr.mxu0 0.0
    %2928 = vmatpush2.msra.mxu0 0.0
    %2929 = vmatprep.mubr.f32.mxu0 0.0
    %2930 = vmatmul.mubr.f32.gmra.mxu0 %v2847
    %v2931 = vpop.f32.mrf.mxu0
    %v2932 = vadd.f32 0.0, %v2931
    %v2933 = vpop.f32.mrf.mxu0
    %2934 = vdwg.mxu0
    %v2935 = vld [vmem:[#allocation2] sm:$0xff]
    %v2936 = vadd.f32 %v2935, %v2932
    %2937 = vst [vmem:[#allocation2] sm:$0xff] %v2936
    %s2938 = sld [smem:[#allocation3 + $0x1a]]
    %s2939 = sld [smem:[#allocation3 + $0x9a]]
    %s2940 = sld [smem:[#allocation3 + $0x11a]]
    %s2941 = sld [smem:[#allocation5 + $0x1a]]
    %v2942 = vstv %s2938
    %v2943 = vmul.f32 %v2942, %v51
    %v2944 = vstv %s2939
    %v2945 = vmul.f32 %v2944, %v52
    %v2946 = vadd.f32 %v2943, %v2945
    %v2947 = vstv %s2940
    %v2948 = vmul.f32 %v2947, %v53
    %v2949 = vadd.f32 %v2946, %v2948
    %v2950 = vmul.f32 %v2942, %v52
    %v2951 = vmul.f32 %v2944, %v53
    %v2952 = vadd.f32 %v2950, %v2951
    %v2953 = vmul.f32 %v2947, %v54
    %v2954 = vadd.f32 %v2952, %v2953
    %v2955 = vmax.f32 %v2949, %v2954
    %v2956 = vstv %s2941
    %v2957 = vadd.f32 %v2955, %v2956
    %v2958 = vmax.f32 %v2957, 0.0
    %s2959 = scalar_lea.vmem %s3, 3328
    %v2960 = vld [vmem:[%s2959] sm:$0xff]
    %v2961 = vld [vmem:[%s2959 + $0x8] sm:$0xff]
    %v2962 = vld [vmem:[%s2959 + $0x10] sm:$0xff]
    %v2963 = vld [vmem:[%s2959 + $0x18] sm:$0xff]
    %v2964 = vld [vmem:[%s2959 + $0x20] sm:$0xff]
    %v2965 = vld [vmem:[%s2959 + $0x28] sm:$0xff]
    %v2966 = vld [vmem:[%s2959 + $0x30] sm:$0xff]
    %v2967 = vld [vmem:[%s2959 + $0x38] sm:$0xff]
    %v2968 = vld [vmem:[%s2959 + $0x40] sm:$0xff]
    %v2969 = vld [vmem:[%s2959 + $0x48] sm:$0xff]
    %v2970 = vld [vmem:[%s2959 + $0x50] sm:$0xff]
    %v2971 = vld [vmem:[%s2959 + $0x58] sm:$0xff]
    %v2972 = vld [vmem:[%s2959 + $0x60] sm:$0xff]
    %v2973 = vld [vmem:[%s2959 + $0x68] sm:$0xff]
    %v2974 = vld [vmem:[%s2959 + $0x70] sm:$0xff]
    %v2975 = vld [vmem:[%s2959 + $0x78] sm:$0xff]
    %2976 = vmatprep.subr.mxu0 0.0
    %2977 = vmatpush1.msra.mxu0 %v2975
    %2978 = vmatprep.subr.mxu0 0.0
    %2979 = vmatpush1.msra.mxu0 %v2974
    %2980 = vmatprep.subr.mxu0 0.0
    %2981 = vmatpush1.msra.mxu0 %v2973
    %2982 = vmatprep.subr.mxu0 0.0
    %2983 = vmatpush1.msra.mxu0 %v2972
    %2984 = vmatprep.subr.mxu0 0.0
    %2985 = vmatpush1.msra.mxu0 %v2971
    %2986 = vmatprep.subr.mxu0 0.0
    %2987 = vmatpush1.msra.mxu0 %v2970
    %2988 = vmatprep.subr.mxu0 0.0
    %2989 = vmatpush1.msra.mxu0 %v2969
    %2990 = vmatprep.subr.mxu0 0.0
    %2991 = vmatpush1.msra.mxu0 %v2968
    %2992 = vmatprep.subr.mxu0 0.0
    %2993 = vmatpush1.msra.mxu0 %v2967
    %2994 = vmatprep.subr.mxu0 0.0
    %2995 = vmatpush1.msra.mxu0 %v2966
    %2996 = vmatprep.subr.mxu0 0.0
    %2997 = vmatpush1.msra.mxu0 %v2965
    %2998 = vmatprep.subr.mxu0 0.0
    %2999 = vmatpush1.msra.mxu0 %v2964
    %3000 = vmatprep.subr.mxu0 0.0
    %3001 = vmatpush1.msra.mxu0 %v2963
    %3002 = vmatprep.subr.mxu0 0.0
    %3003 = vmatpush1.msra.mxu0 %v2962
    %3004 = vmatprep.subr.mxu0 0.0
    %3005 = vmatpush1.msra.mxu0 %v2961
    %3006 = vmatprep.subr.mxu0 0.0
    %3007 = vmatpush1.msra.mxu0 %v2960
    %3008 = vmatprep.subr.mxu0 0.0
    %3009 = vmatpush2.msra.mxu0 0.0
    %3010 = vmatprep.subr.mxu0 0.0
    %3011 = vmatpush2.msra.mxu0 0.0
    %3012 = vmatprep.subr.mxu0 0.0
    %3013 = vmatpush2.msra.mxu0 0.0
    %3014 = vmatprep.subr.mxu0 0.0
    %3015 = vmatpush2.msra.mxu0 0.0
    %3016 = vmatprep.subr.mxu0 0.0
    %3017 = vmatpush2.msra.mxu0 0.0
    %3018 = vmatprep.subr.mxu0 0.0
    %3019 = vmatpush2.msra.mxu0 0.0
    %3020 = vmatprep.subr.mxu0 0.0
    %3021 = vmatpush2.msra.mxu0 0.0
    %3022 = vmatprep.subr.mxu0 0.0
    %3023 = vmatpush2.msra.mxu0 0.0
    %3024 = vmatprep.subr.mxu0 0.0
    %3025 = vmatpush2.msra.mxu0 0.0
    %3026 = vmatprep.subr.mxu0 0.0
    %3027 = vmatpush2.msra.mxu0 0.0
    %3028 = vmatprep.subr.mxu0 0.0
    %3029 = vmatpush2.msra.mxu0 0.0
    %3030 = vmatprep.subr.mxu0 0.0
    %3031 = vmatpush2.msra.mxu0 0.0
    %3032 = vmatprep.subr.mxu0 0.0
    %3033 = vmatpush2.msra.mxu0 0.0
    %3034 = vmatprep.subr.mxu0 0.0
    %3035 = vmatpush2.msra.mxu0 0.0
    %3036 = vmatprep.subr.mxu0 0.0
    %3037 = vmatpush2.msra.mxu0 0.0
    %3038 = vmatprep.subr.mxu0 0.0
    %3039 = vmatpush2.msra.mxu0 0.0
    %3040 = vmatprep.mubr.f32.mxu0 0.0
    %3041 = vmatmul.mubr.f32.gmra.mxu0 %v2958
    %v3042 = vpop.f32.mrf.mxu0
    %v3043 = vadd.f32 0.0, %v3042
    %v3044 = vpop.f32.mrf.mxu0
    %3045 = vdwg.mxu0
    %v3046 = vld [vmem:[#allocation2] sm:$0xff]
    %v3047 = vadd.f32 %v3046, %v3043
    %3048 = vst [vmem:[#allocation2] sm:$0xff] %v3047
    %s3049 = sld [smem:[#allocation3 + $0x1b]]
    %s3050 = sld [smem:[#allocation3 + $0x9b]]
    %s3051 = sld [smem:[#allocation3 + $0x11b]]
    %s3052 = sld [smem:[#allocation5 + $0x1b]]
    %v3053 = vstv %s3049
    %v3054 = vmul.f32 %v3053, %v51
    %v3055 = vstv %s3050
    %v3056 = vmul.f32 %v3055, %v52
    %v3057 = vadd.f32 %v3054, %v3056
    %v3058 = vstv %s3051
    %v3059 = vmul.f32 %v3058, %v53
    %v3060 = vadd.f32 %v3057, %v3059
    %v3061 = vmul.f32 %v3053, %v52
    %v3062 = vmul.f32 %v3055, %v53
    %v3063 = vadd.f32 %v3061, %v3062
    %v3064 = vmul.f32 %v3058, %v54
    %v3065 = vadd.f32 %v3063, %v3064
    %v3066 = vmax.f32 %v3060, %v3065
    %v3067 = vstv %s3052
    %v3068 = vadd.f32 %v3066, %v3067
    %v3069 = vmax.f32 %v3068, 0.0
    %s3070 = scalar_lea.vmem %s3, 3456
    %v3071 = vld [vmem:[%s3070] sm:$0xff]
    %v3072 = vld [vmem:[%s3070 + $0x8] sm:$0xff]
    %v3073 = vld [vmem:[%s3070 + $0x10] sm:$0xff]
    %v3074 = vld [vmem:[%s3070 + $0x18] sm:$0xff]
    %v3075 = vld [vmem:[%s3070 + $0x20] sm:$0xff]
    %v3076 = vld [vmem:[%s3070 + $0x28] sm:$0xff]
    %v3077 = vld [vmem:[%s3070 + $0x30] sm:$0xff]
    %v3078 = vld [vmem:[%s3070 + $0x38] sm:$0xff]
    %v3079 = vld [vmem:[%s3070 + $0x40] sm:$0xff]
    %v3080 = vld [vmem:[%s3070 + $0x48] sm:$0xff]
    %v3081 = vld [vmem:[%s3070 + $0x50] sm:$0xff]
    %v3082 = vld [vmem:[%s3070 + $0x58] sm:$0xff]
    %v3083 = vld [vmem:[%s3070 + $0x60] sm:$0xff]
    %v3084 = vld [vmem:[%s3070 + $0x68] sm:$0xff]
    %v3085 = vld [vmem:[%s3070 + $0x70] sm:$0xff]
    %v3086 = vld [vmem:[%s3070 + $0x78] sm:$0xff]
    %3087 = vmatprep.subr.mxu0 0.0
    %3088 = vmatpush1.msra.mxu0 %v3086
    %3089 = vmatprep.subr.mxu0 0.0
    %3090 = vmatpush1.msra.mxu0 %v3085
    %3091 = vmatprep.subr.mxu0 0.0
    %3092 = vmatpush1.msra.mxu0 %v3084
    %3093 = vmatprep.subr.mxu0 0.0
    %3094 = vmatpush1.msra.mxu0 %v3083
    %3095 = vmatprep.subr.mxu0 0.0
    %3096 = vmatpush1.msra.mxu0 %v3082
    %3097 = vmatprep.subr.mxu0 0.0
    %3098 = vmatpush1.msra.mxu0 %v3081
    %3099 = vmatprep.subr.mxu0 0.0
    %3100 = vmatpush1.msra.mxu0 %v3080
    %3101 = vmatprep.subr.mxu0 0.0
    %3102 = vmatpush1.msra.mxu0 %v3079
    %3103 = vmatprep.subr.mxu0 0.0
    %3104 = vmatpush1.msra.mxu0 %v3078
    %3105 = vmatprep.subr.mxu0 0.0
    %3106 = vmatpush1.msra.mxu0 %v3077
    %3107 = vmatprep.subr.mxu0 0.0
    %3108 = vmatpush1.msra.mxu0 %v3076
    %3109 = vmatprep.subr.mxu0 0.0
    %3110 = vmatpush1.msra.mxu0 %v3075
    %3111 = vmatprep.subr.mxu0 0.0
    %3112 = vmatpush1.msra.mxu0 %v3074
    %3113 = vmatprep.subr.mxu0 0.0
    %3114 = vmatpush1.msra.mxu0 %v3073
    %3115 = vmatprep.subr.mxu0 0.0
    %3116 = vmatpush1.msra.mxu0 %v3072
    %3117 = vmatprep.subr.mxu0 0.0
    %3118 = vmatpush1.msra.mxu0 %v3071
    %3119 = vmatprep.subr.mxu0 0.0
    %3120 = vmatpush2.msra.mxu0 0.0
    %3121 = vmatprep.subr.mxu0 0.0
    %3122 = vmatpush2.msra.mxu0 0.0
    %3123 = vmatprep.subr.mxu0 0.0
    %3124 = vmatpush2.msra.mxu0 0.0
    %3125 = vmatprep.subr.mxu0 0.0
    %3126 = vmatpush2.msra.mxu0 0.0
    %3127 = vmatprep.subr.mxu0 0.0
    %3128 = vmatpush2.msra.mxu0 0.0
    %3129 = vmatprep.subr.mxu0 0.0
    %3130 = vmatpush2.msra.mxu0 0.0
    %3131 = vmatprep.subr.mxu0 0.0
    %3132 = vmatpush2.msra.mxu0 0.0
    %3133 = vmatprep.subr.mxu0 0.0
    %3134 = vmatpush2.msra.mxu0 0.0
    %3135 = vmatprep.subr.mxu0 0.0
    %3136 = vmatpush2.msra.mxu0 0.0
    %3137 = vmatprep.subr.mxu0 0.0
    %3138 = vmatpush2.msra.mxu0 0.0
    %3139 = vmatprep.subr.mxu0 0.0
    %3140 = vmatpush2.msra.mxu0 0.0
    %3141 = vmatprep.subr.mxu0 0.0
    %3142 = vmatpush2.msra.mxu0 0.0
    %3143 = vmatprep.subr.mxu0 0.0
    %3144 = vmatpush2.msra.mxu0 0.0
    %3145 = vmatprep.subr.mxu0 0.0
    %3146 = vmatpush2.msra.mxu0 0.0
    %3147 = vmatprep.subr.mxu0 0.0
    %3148 = vmatpush2.msra.mxu0 0.0
    %3149 = vmatprep.subr.mxu0 0.0
    %3150 = vmatpush2.msra.mxu0 0.0
    %3151 = vmatprep.mubr.f32.mxu0 0.0
    %3152 = vmatmul.mubr.f32.gmra.mxu0 %v3069
    %v3153 = vpop.f32.mrf.mxu0
    %v3154 = vadd.f32 0.0, %v3153
    %v3155 = vpop.f32.mrf.mxu0
    %3156 = vdwg.mxu0
    %v3157 = vld [vmem:[#allocation2] sm:$0xff]
    %v3158 = vadd.f32 %v3157, %v3154
    %3159 = vst [vmem:[#allocation2] sm:$0xff] %v3158
    %s3160 = sld [smem:[#allocation3 + $0x1c]]
    %s3161 = sld [smem:[#allocation3 + $0x9c]]
    %s3162 = sld [smem:[#allocation3 + $0x11c]]
    %s3163 = sld [smem:[#allocation5 + $0x1c]]
    %v3164 = vstv %s3160
    %v3165 = vmul.f32 %v3164, %v51
    %v3166 = vstv %s3161
    %v3167 = vmul.f32 %v3166, %v52
    %v3168 = vadd.f32 %v3165, %v3167
    %v3169 = vstv %s3162
    %v3170 = vmul.f32 %v3169, %v53
    %v3171 = vadd.f32 %v3168, %v3170
    %v3172 = vmul.f32 %v3164, %v52
    %v3173 = vmul.f32 %v3166, %v53
    %v3174 = vadd.f32 %v3172, %v3173
    %v3175 = vmul.f32 %v3169, %v54
    %v3176 = vadd.f32 %v3174, %v3175
    %v3177 = vmax.f32 %v3171, %v3176
    %v3178 = vstv %s3163
    %v3179 = vadd.f32 %v3177, %v3178
    %v3180 = vmax.f32 %v3179, 0.0
    %s3181 = scalar_lea.vmem %s3, 3584
    %v3182 = vld [vmem:[%s3181] sm:$0xff]
    %v3183 = vld [vmem:[%s3181 + $0x8] sm:$0xff]
    %v3184 = vld [vmem:[%s3181 + $0x10] sm:$0xff]
    %v3185 = vld [vmem:[%s3181 + $0x18] sm:$0xff]
    %v3186 = vld [vmem:[%s3181 + $0x20] sm:$0xff]
    %v3187 = vld [vmem:[%s3181 + $0x28] sm:$0xff]
    %v3188 = vld [vmem:[%s3181 + $0x30] sm:$0xff]
    %v3189 = vld [vmem:[%s3181 + $0x38] sm:$0xff]
    %v3190 = vld [vmem:[%s3181 + $0x40] sm:$0xff]
    %v3191 = vld [vmem:[%s3181 + $0x48] sm:$0xff]
    %v3192 = vld [vmem:[%s3181 + $0x50] sm:$0xff]
    %v3193 = vld [vmem:[%s3181 + $0x58] sm:$0xff]
    %v3194 = vld [vmem:[%s3181 + $0x60] sm:$0xff]
    %v3195 = vld [vmem:[%s3181 + $0x68] sm:$0xff]
    %v3196 = vld [vmem:[%s3181 + $0x70] sm:$0xff]
    %v3197 = vld [vmem:[%s3181 + $0x78] sm:$0xff]
    %3198 = vmatprep.subr.mxu0 0.0
    %3199 = vmatpush1.msra.mxu0 %v3197
    %3200 = vmatprep.subr.mxu0 0.0
    %3201 = vmatpush1.msra.mxu0 %v3196
    %3202 = vmatprep.subr.mxu0 0.0
    %3203 = vmatpush1.msra.mxu0 %v3195
    %3204 = vmatprep.subr.mxu0 0.0
    %3205 = vmatpush1.msra.mxu0 %v3194
    %3206 = vmatprep.subr.mxu0 0.0
    %3207 = vmatpush1.msra.mxu0 %v3193
    %3208 = vmatprep.subr.mxu0 0.0
    %3209 = vmatpush1.msra.mxu0 %v3192
    %3210 = vmatprep.subr.mxu0 0.0
    %3211 = vmatpush1.msra.mxu0 %v3191
    %3212 = vmatprep.subr.mxu0 0.0
    %3213 = vmatpush1.msra.mxu0 %v3190
    %3214 = vmatprep.subr.mxu0 0.0
    %3215 = vmatpush1.msra.mxu0 %v3189
    %3216 = vmatprep.subr.mxu0 0.0
    %3217 = vmatpush1.msra.mxu0 %v3188
    %3218 = vmatprep.subr.mxu0 0.0
    %3219 = vmatpush1.msra.mxu0 %v3187
    %3220 = vmatprep.subr.mxu0 0.0
    %3221 = vmatpush1.msra.mxu0 %v3186
    %3222 = vmatprep.subr.mxu0 0.0
    %3223 = vmatpush1.msra.mxu0 %v3185
    %3224 = vmatprep.subr.mxu0 0.0
    %3225 = vmatpush1.msra.mxu0 %v3184
    %3226 = vmatprep.subr.mxu0 0.0
    %3227 = vmatpush1.msra.mxu0 %v3183
    %3228 = vmatprep.subr.mxu0 0.0
    %3229 = vmatpush1.msra.mxu0 %v3182
    %3230 = vmatprep.subr.mxu0 0.0
    %3231 = vmatpush2.msra.mxu0 0.0
    %3232 = vmatprep.subr.mxu0 0.0
    %3233 = vmatpush2.msra.mxu0 0.0
    %3234 = vmatprep.subr.mxu0 0.0
    %3235 = vmatpush2.msra.mxu0 0.0
    %3236 = vmatprep.subr.mxu0 0.0
    %3237 = vmatpush2.msra.mxu0 0.0
    %3238 = vmatprep.subr.mxu0 0.0
    %3239 = vmatpush2.msra.mxu0 0.0
    %3240 = vmatprep.subr.mxu0 0.0
    %3241 = vmatpush2.msra.mxu0 0.0
    %3242 = vmatprep.subr.mxu0 0.0
    %3243 = vmatpush2.msra.mxu0 0.0
    %3244 = vmatprep.subr.mxu0 0.0
    %3245 = vmatpush2.msra.mxu0 0.0
    %3246 = vmatprep.subr.mxu0 0.0
    %3247 = vmatpush2.msra.mxu0 0.0
    %3248 = vmatprep.subr.mxu0 0.0
    %3249 = vmatpush2.msra.mxu0 0.0
    %3250 = vmatprep.subr.mxu0 0.0
    %3251 = vmatpush2.msra.mxu0 0.0
    %3252 = vmatprep.subr.mxu0 0.0
    %3253 = vmatpush2.msra.mxu0 0.0
    %3254 = vmatprep.subr.mxu0 0.0
    %3255 = vmatpush2.msra.mxu0 0.0
    %3256 = vmatprep.subr.mxu0 0.0
    %3257 = vmatpush2.msra.mxu0 0.0
    %3258 = vmatprep.subr.mxu0 0.0
    %3259 = vmatpush2.msra.mxu0 0.0
    %3260 = vmatprep.subr.mxu0 0.0
    %3261 = vmatpush2.msra.mxu0 0.0
    %3262 = vmatprep.mubr.f32.mxu0 0.0
    %3263 = vmatmul.mubr.f32.gmra.mxu0 %v3180
    %v3264 = vpop.f32.mrf.mxu0
    %v3265 = vadd.f32 0.0, %v3264
    %v3266 = vpop.f32.mrf.mxu0
    %3267 = vdwg.mxu0
    %v3268 = vld [vmem:[#allocation2] sm:$0xff]
    %v3269 = vadd.f32 %v3268, %v3265
    %3270 = vst [vmem:[#allocation2] sm:$0xff] %v3269
    %s3271 = sld [smem:[#allocation3 + $0x1d]]
    %s3272 = sld [smem:[#allocation3 + $0x9d]]
    %s3273 = sld [smem:[#allocation3 + $0x11d]]
    %s3274 = sld [smem:[#allocation5 + $0x1d]]
    %v3275 = vstv %s3271
    %v3276 = vmul.f32 %v3275, %v51
    %v3277 = vstv %s3272
    %v3278 = vmul.f32 %v3277, %v52
    %v3279 = vadd.f32 %v3276, %v3278
    %v3280 = vstv %s3273
    %v3281 = vmul.f32 %v3280, %v53
    %v3282 = vadd.f32 %v3279, %v3281
    %v3283 = vmul.f32 %v3275, %v52
    %v3284 = vmul.f32 %v3277, %v53
    %v3285 = vadd.f32 %v3283, %v3284
    %v3286 = vmul.f32 %v3280, %v54
    %v3287 = vadd.f32 %v3285, %v3286
    %v3288 = vmax.f32 %v3282, %v3287
    %v3289 = vstv %s3274
    %v3290 = vadd.f32 %v3288, %v3289
    %v3291 = vmax.f32 %v3290, 0.0
    %s3292 = scalar_lea.vmem %s3, 3712
    %v3293 = vld [vmem:[%s3292] sm:$0xff]
    %v3294 = vld [vmem:[%s3292 + $0x8] sm:$0xff]
    %v3295 = vld [vmem:[%s3292 + $0x10] sm:$0xff]
    %v3296 = vld [vmem:[%s3292 + $0x18] sm:$0xff]
    %v3297 = vld [vmem:[%s3292 + $0x20] sm:$0xff]
    %v3298 = vld [vmem:[%s3292 + $0x28] sm:$0xff]
    %v3299 = vld [vmem:[%s3292 + $0x30] sm:$0xff]
    %v3300 = vld [vmem:[%s3292 + $0x38] sm:$0xff]
    %v3301 = vld [vmem:[%s3292 + $0x40] sm:$0xff]
    %v3302 = vld [vmem:[%s3292 + $0x48] sm:$0xff]
    %v3303 = vld [vmem:[%s3292 + $0x50] sm:$0xff]
    %v3304 = vld [vmem:[%s3292 + $0x58] sm:$0xff]
    %v3305 = vld [vmem:[%s3292 + $0x60] sm:$0xff]
    %v3306 = vld [vmem:[%s3292 + $0x68] sm:$0xff]
    %v3307 = vld [vmem:[%s3292 + $0x70] sm:$0xff]
    %v3308 = vld [vmem:[%s3292 + $0x78] sm:$0xff]
    %3309 = vmatprep.subr.mxu0 0.0
    %3310 = vmatpush1.msra.mxu0 %v3308
    %3311 = vmatprep.subr.mxu0 0.0
    %3312 = vmatpush1.msra.mxu0 %v3307
    %3313 = vmatprep.subr.mxu0 0.0
    %3314 = vmatpush1.msra.mxu0 %v3306
    %3315 = vmatprep.subr.mxu0 0.0
    %3316 = vmatpush1.msra.mxu0 %v3305
    %3317 = vmatprep.subr.mxu0 0.0
    %3318 = vmatpush1.msra.mxu0 %v3304
    %3319 = vmatprep.subr.mxu0 0.0
    %3320 = vmatpush1.msra.mxu0 %v3303
    %3321 = vmatprep.subr.mxu0 0.0
    %3322 = vmatpush1.msra.mxu0 %v3302
    %3323 = vmatprep.subr.mxu0 0.0
    %3324 = vmatpush1.msra.mxu0 %v3301
    %3325 = vmatprep.subr.mxu0 0.0
    %3326 = vmatpush1.msra.mxu0 %v3300
    %3327 = vmatprep.subr.mxu0 0.0
    %3328 = vmatpush1.msra.mxu0 %v3299
    %3329 = vmatprep.subr.mxu0 0.0
    %3330 = vmatpush1.msra.mxu0 %v3298
    %3331 = vmatprep.subr.mxu0 0.0
    %3332 = vmatpush1.msra.mxu0 %v3297
    %3333 = vmatprep.subr.mxu0 0.0
    %3334 = vmatpush1.msra.mxu0 %v3296
    %3335 = vmatprep.subr.mxu0 0.0
    %3336 = vmatpush1.msra.mxu0 %v3295
    %3337 = vmatprep.subr.mxu0 0.0
    %3338 = vmatpush1.msra.mxu0 %v3294
    %3339 = vmatprep.subr.mxu0 0.0
    %3340 = vmatpush1.msra.mxu0 %v3293
    %3341 = vmatprep.subr.mxu0 0.0
    %3342 = vmatpush2.msra.mxu0 0.0
    %3343 = vmatprep.subr.mxu0 0.0
    %3344 = vmatpush2.msra.mxu0 0.0
    %3345 = vmatprep.subr.mxu0 0.0
    %3346 = vmatpush2.msra.mxu0 0.0
    %3347 = vmatprep.subr.mxu0 0.0
    %3348 = vmatpush2.msra.mxu0 0.0
    %3349 = vmatprep.subr.mxu0 0.0
    %3350 = vmatpush2.msra.mxu0 0.0
    %3351 = vmatprep.subr.mxu0 0.0
    %3352 = vmatpush2.msra.mxu0 0.0
    %3353 = vmatprep.subr.mxu0 0.0
    %3354 = vmatpush2.msra.mxu0 0.0
    %3355 = vmatprep.subr.mxu0 0.0
    %3356 = vmatpush2.msra.mxu0 0.0
    %3357 = vmatprep.subr.mxu0 0.0
    %3358 = vmatpush2.msra.mxu0 0.0
    %3359 = vmatprep.subr.mxu0 0.0
    %3360 = vmatpush2.msra.mxu0 0.0
    %3361 = vmatprep.subr.mxu0 0.0
    %3362 = vmatpush2.msra.mxu0 0.0
    %3363 = vmatprep.subr.mxu0 0.0
    %3364 = vmatpush2.msra.mxu0 0.0
    %3365 = vmatprep.subr.mxu0 0.0
    %3366 = vmatpush2.msra.mxu0 0.0
    %3367 = vmatprep.subr.mxu0 0.0
    %3368 = vmatpush2.msra.mxu0 0.0
    %3369 = vmatprep.subr.mxu0 0.0
    %3370 = vmatpush2.msra.mxu0 0.0
    %3371 = vmatprep.subr.mxu0 0.0
    %3372 = vmatpush2.msra.mxu0 0.0
    %3373 = vmatprep.mubr.f32.mxu0 0.0
    %3374 = vmatmul.mubr.f32.gmra.mxu0 %v3291
    %v3375 = vpop.f32.mrf.mxu0
    %v3376 = vadd.f32 0.0, %v3375
    %v3377 = vpop.f32.mrf.mxu0
    %3378 = vdwg.mxu0
    %v3379 = vld [vmem:[#allocation2] sm:$0xff]
    %v3380 = vadd.f32 %v3379, %v3376
    %3381 = vst [vmem:[#allocation2] sm:$0xff] %v3380
    %s3382 = sld [smem:[#allocation3 + $0x1e]]
    %s3383 = sld [smem:[#allocation3 + $0x9e]]
    %s3384 = sld [smem:[#allocation3 + $0x11e]]
    %s3385 = sld [smem:[#allocation5 + $0x1e]]
    %v3386 = vstv %s3382
    %v3387 = vmul.f32 %v3386, %v51
    %v3388 = vstv %s3383
    %v3389 = vmul.f32 %v3388, %v52
    %v3390 = vadd.f32 %v3387, %v3389
    %v3391 = vstv %s3384
    %v3392 = vmul.f32 %v3391, %v53
    %v3393 = vadd.f32 %v3390, %v3392
    %v3394 = vmul.f32 %v3386, %v52
    %v3395 = vmul.f32 %v3388, %v53
    %v3396 = vadd.f32 %v3394, %v3395
    %v3397 = vmul.f32 %v3391, %v54
    %v3398 = vadd.f32 %v3396, %v3397
    %v3399 = vmax.f32 %v3393, %v3398
    %v3400 = vstv %s3385
    %v3401 = vadd.f32 %v3399, %v3400
    %v3402 = vmax.f32 %v3401, 0.0
    %s3403 = scalar_lea.vmem %s3, 3840
    %v3404 = vld [vmem:[%s3403] sm:$0xff]
    %v3405 = vld [vmem:[%s3403 + $0x8] sm:$0xff]
    %v3406 = vld [vmem:[%s3403 + $0x10] sm:$0xff]
    %v3407 = vld [vmem:[%s3403 + $0x18] sm:$0xff]
    %v3408 = vld [vmem:[%s3403 + $0x20] sm:$0xff]
    %v3409 = vld [vmem:[%s3403 + $0x28] sm:$0xff]
    %v3410 = vld [vmem:[%s3403 + $0x30] sm:$0xff]
    %v3411 = vld [vmem:[%s3403 + $0x38] sm:$0xff]
    %v3412 = vld [vmem:[%s3403 + $0x40] sm:$0xff]
    %v3413 = vld [vmem:[%s3403 + $0x48] sm:$0xff]
    %v3414 = vld [vmem:[%s3403 + $0x50] sm:$0xff]
    %v3415 = vld [vmem:[%s3403 + $0x58] sm:$0xff]
    %v3416 = vld [vmem:[%s3403 + $0x60] sm:$0xff]
    %v3417 = vld [vmem:[%s3403 + $0x68] sm:$0xff]
    %v3418 = vld [vmem:[%s3403 + $0x70] sm:$0xff]
    %v3419 = vld [vmem:[%s3403 + $0x78] sm:$0xff]
    %3420 = vmatprep.subr.mxu0 0.0
    %3421 = vmatpush1.msra.mxu0 %v3419
    %3422 = vmatprep.subr.mxu0 0.0
    %3423 = vmatpush1.msra.mxu0 %v3418
    %3424 = vmatprep.subr.mxu0 0.0
    %3425 = vmatpush1.msra.mxu0 %v3417
    %3426 = vmatprep.subr.mxu0 0.0
    %3427 = vmatpush1.msra.mxu0 %v3416
    %3428 = vmatprep.subr.mxu0 0.0
    %3429 = vmatpush1.msra.mxu0 %v3415
    %3430 = vmatprep.subr.mxu0 0.0
    %3431 = vmatpush1.msra.mxu0 %v3414
    %3432 = vmatprep.subr.mxu0 0.0
    %3433 = vmatpush1.msra.mxu0 %v3413
    %3434 = vmatprep.subr.mxu0 0.0
    %3435 = vmatpush1.msra.mxu0 %v3412
    %3436 = vmatprep.subr.mxu0 0.0
    %3437 = vmatpush1.msra.mxu0 %v3411
    %3438 = vmatprep.subr.mxu0 0.0
    %3439 = vmatpush1.msra.mxu0 %v3410
    %3440 = vmatprep.subr.mxu0 0.0
    %3441 = vmatpush1.msra.mxu0 %v3409
    %3442 = vmatprep.subr.mxu0 0.0
    %3443 = vmatpush1.msra.mxu0 %v3408
    %3444 = vmatprep.subr.mxu0 0.0
    %3445 = vmatpush1.msra.mxu0 %v3407
    %3446 = vmatprep.subr.mxu0 0.0
    %3447 = vmatpush1.msra.mxu0 %v3406
    %3448 = vmatprep.subr.mxu0 0.0
    %3449 = vmatpush1.msra.mxu0 %v3405
    %3450 = vmatprep.subr.mxu0 0.0
    %3451 = vmatpush1.msra.mxu0 %v3404
    %3452 = vmatprep.subr.mxu0 0.0
    %3453 = vmatpush2.msra.mxu0 0.0
    %3454 = vmatprep.subr.mxu0 0.0
    %3455 = vmatpush2.msra.mxu0 0.0
    %3456 = vmatprep.subr.mxu0 0.0
    %3457 = vmatpush2.msra.mxu0 0.0
    %3458 = vmatprep.subr.mxu0 0.0
    %3459 = vmatpush2.msra.mxu0 0.0
    %3460 = vmatprep.subr.mxu0 0.0
    %3461 = vmatpush2.msra.mxu0 0.0
    %3462 = vmatprep.subr.mxu0 0.0
    %3463 = vmatpush2.msra.mxu0 0.0
    %3464 = vmatprep.subr.mxu0 0.0
    %3465 = vmatpush2.msra.mxu0 0.0
    %3466 = vmatprep.subr.mxu0 0.0
    %3467 = vmatpush2.msra.mxu0 0.0
    %3468 = vmatprep.subr.mxu0 0.0
    %3469 = vmatpush2.msra.mxu0 0.0
    %3470 = vmatprep.subr.mxu0 0.0
    %3471 = vmatpush2.msra.mxu0 0.0
    %3472 = vmatprep.subr.mxu0 0.0
    %3473 = vmatpush2.msra.mxu0 0.0
    %3474 = vmatprep.subr.mxu0 0.0
    %3475 = vmatpush2.msra.mxu0 0.0
    %3476 = vmatprep.subr.mxu0 0.0
    %3477 = vmatpush2.msra.mxu0 0.0
    %3478 = vmatprep.subr.mxu0 0.0
    %3479 = vmatpush2.msra.mxu0 0.0
    %3480 = vmatprep.subr.mxu0 0.0
    %3481 = vmatpush2.msra.mxu0 0.0
    %3482 = vmatprep.subr.mxu0 0.0
    %3483 = vmatpush2.msra.mxu0 0.0
    %3484 = vmatprep.mubr.f32.mxu0 0.0
    %3485 = vmatmul.mubr.f32.gmra.mxu0 %v3402
    %v3486 = vpop.f32.mrf.mxu0
    %v3487 = vadd.f32 0.0, %v3486
    %v3488 = vpop.f32.mrf.mxu0
    %3489 = vdwg.mxu0
    %v3490 = vld [vmem:[#allocation2] sm:$0xff]
    %v3491 = vadd.f32 %v3490, %v3487
    %3492 = vst [vmem:[#allocation2] sm:$0xff] %v3491
    %s3493 = sld [smem:[#allocation3 + $0x1f]]
    %s3494 = sld [smem:[#allocation3 + $0x9f]]
    %s3495 = sld [smem:[#allocation3 + $0x11f]]
    %s3496 = sld [smem:[#allocation5 + $0x1f]]
    %v3497 = vstv %s3493
    %v3498 = vmul.f32 %v3497, %v51
    %v3499 = vstv %s3494
    %v3500 = vmul.f32 %v3499, %v52
    %v3501 = vadd.f32 %v3498, %v3500
    %v3502 = vstv %s3495
    %v3503 = vmul.f32 %v3502, %v53
    %v3504 = vadd.f32 %v3501, %v3503
    %v3505 = vmul.f32 %v3497, %v52
    %v3506 = vmul.f32 %v3499, %v53
    %v3507 = vadd.f32 %v3505, %v3506
    %v3508 = vmul.f32 %v3502, %v54
    %v3509 = vadd.f32 %v3507, %v3508
    %v3510 = vmax.f32 %v3504, %v3509
    %v3511 = vstv %s3496
    %v3512 = vadd.f32 %v3510, %v3511
    %v3513 = vmax.f32 %v3512, 0.0
    %s3514 = scalar_lea.vmem %s3, 3968
    %v3515 = vld [vmem:[%s3514] sm:$0xff]
    %v3516 = vld [vmem:[%s3514 + $0x8] sm:$0xff]
    %v3517 = vld [vmem:[%s3514 + $0x10] sm:$0xff]
    %v3518 = vld [vmem:[%s3514 + $0x18] sm:$0xff]
    %v3519 = vld [vmem:[%s3514 + $0x20] sm:$0xff]
    %v3520 = vld [vmem:[%s3514 + $0x28] sm:$0xff]
    %v3521 = vld [vmem:[%s3514 + $0x30] sm:$0xff]
    %v3522 = vld [vmem:[%s3514 + $0x38] sm:$0xff]
    %v3523 = vld [vmem:[%s3514 + $0x40] sm:$0xff]
    %v3524 = vld [vmem:[%s3514 + $0x48] sm:$0xff]
    %v3525 = vld [vmem:[%s3514 + $0x50] sm:$0xff]
    %v3526 = vld [vmem:[%s3514 + $0x58] sm:$0xff]
    %v3527 = vld [vmem:[%s3514 + $0x60] sm:$0xff]
    %v3528 = vld [vmem:[%s3514 + $0x68] sm:$0xff]
    %v3529 = vld [vmem:[%s3514 + $0x70] sm:$0xff]
    %v3530 = vld [vmem:[%s3514 + $0x78] sm:$0xff]
    %3531 = vmatprep.subr.mxu0 0.0
    %3532 = vmatpush1.msra.mxu0 %v3530
    %3533 = vmatprep.subr.mxu0 0.0
    %3534 = vmatpush1.msra.mxu0 %v3529
    %3535 = vmatprep.subr.mxu0 0.0
    %3536 = vmatpush1.msra.mxu0 %v3528
    %3537 = vmatprep.subr.mxu0 0.0
    %3538 = vmatpush1.msra.mxu0 %v3527
    %3539 = vmatprep.subr.mxu0 0.0
    %3540 = vmatpush1.msra.mxu0 %v3526
    %3541 = vmatprep.subr.mxu0 0.0
    %3542 = vmatpush1.msra.mxu0 %v3525
    %3543 = vmatprep.subr.mxu0 0.0
    %3544 = vmatpush1.msra.mxu0 %v3524
    %3545 = vmatprep.subr.mxu0 0.0
    %3546 = vmatpush1.msra.mxu0 %v3523
    %3547 = vmatprep.subr.mxu0 0.0
    %3548 = vmatpush1.msra.mxu0 %v3522
    %3549 = vmatprep.subr.mxu0 0.0
    %3550 = vmatpush1.msra.mxu0 %v3521
    %3551 = vmatprep.subr.mxu0 0.0
    %3552 = vmatpush1.msra.mxu0 %v3520
    %3553 = vmatprep.subr.mxu0 0.0
    %3554 = vmatpush1.msra.mxu0 %v3519
    %3555 = vmatprep.subr.mxu0 0.0
    %3556 = vmatpush1.msra.mxu0 %v3518
    %3557 = vmatprep.subr.mxu0 0.0
    %3558 = vmatpush1.msra.mxu0 %v3517
    %3559 = vmatprep.subr.mxu0 0.0
    %3560 = vmatpush1.msra.mxu0 %v3516
    %3561 = vmatprep.subr.mxu0 0.0
    %3562 = vmatpush1.msra.mxu0 %v3515
    %3563 = vmatprep.subr.mxu0 0.0
    %3564 = vmatpush2.msra.mxu0 0.0
    %3565 = vmatprep.subr.mxu0 0.0
    %3566 = vmatpush2.msra.mxu0 0.0
    %3567 = vmatprep.subr.mxu0 0.0
    %3568 = vmatpush2.msra.mxu0 0.0
    %3569 = vmatprep.subr.mxu0 0.0
    %3570 = vmatpush2.msra.mxu0 0.0
    %3571 = vmatprep.subr.mxu0 0.0
    %3572 = vmatpush2.msra.mxu0 0.0
    %3573 = vmatprep.subr.mxu0 0.0
    %3574 = vmatpush2.msra.mxu0 0.0
    %3575 = vmatprep.subr.mxu0 0.0
    %3576 = vmatpush2.msra.mxu0 0.0
    %3577 = vmatprep.subr.mxu0 0.0
    %3578 = vmatpush2.msra.mxu0 0.0
    %3579 = vmatprep.subr.mxu0 0.0
    %3580 = vmatpush2.msra.mxu0 0.0
    %3581 = vmatprep.subr.mxu0 0.0
    %3582 = vmatpush2.msra.mxu0 0.0
    %3583 = vmatprep.subr.mxu0 0.0
    %3584 = vmatpush2.msra.mxu0 0.0
    %3585 = vmatprep.subr.mxu0 0.0
    %3586 = vmatpush2.msra.mxu0 0.0
    %3587 = vmatprep.subr.mxu0 0.0
    %3588 = vmatpush2.msra.mxu0 0.0
    %3589 = vmatprep.subr.mxu0 0.0
    %3590 = vmatpush2.msra.mxu0 0.0
    %3591 = vmatprep.subr.mxu0 0.0
    %3592 = vmatpush2.msra.mxu0 0.0
    %3593 = vmatprep.subr.mxu0 0.0
    %3594 = vmatpush2.msra.mxu0 0.0
    %3595 = vmatprep.mubr.f32.mxu0 0.0
    %3596 = vmatmul.mubr.f32.gmra.mxu0 %v3513
    %v3597 = vpop.f32.mrf.mxu0
    %v3598 = vadd.f32 0.0, %v3597
    %v3599 = vpop.f32.mrf.mxu0
    %3600 = vdwg.mxu0
    %v3601 = vld [vmem:[#allocation2] sm:$0xff]
    %v3602 = vadd.f32 %v3601, %v3598
    %3603 = vst [vmem:[#allocation2] sm:$0xff] %v3602
    %s3604 = sld [smem:[#allocation3 + $0x20]]
    %s3605 = sld [smem:[#allocation3 + $0xa0]]
    %s3606 = sld [smem:[#allocation3 + $0x120]]
    %s3607 = sld [smem:[#allocation5 + $0x20]]
    %v3608 = vstv %s3604
    %v3609 = vmul.f32 %v3608, %v51
    %v3610 = vstv %s3605
    %v3611 = vmul.f32 %v3610, %v52
    %v3612 = vadd.f32 %v3609, %v3611
    %v3613 = vstv %s3606
    %v3614 = vmul.f32 %v3613, %v53
    %v3615 = vadd.f32 %v3612, %v3614
    %v3616 = vmul.f32 %v3608, %v52
    %v3617 = vmul.f32 %v3610, %v53
    %v3618 = vadd.f32 %v3616, %v3617
    %v3619 = vmul.f32 %v3613, %v54
    %v3620 = vadd.f32 %v3618, %v3619
    %v3621 = vmax.f32 %v3615, %v3620
    %v3622 = vstv %s3607
    %v3623 = vadd.f32 %v3621, %v3622
    %v3624 = vmax.f32 %v3623, 0.0
    %s3625 = scalar_lea.vmem %s3, 4096
    %v3626 = vld [vmem:[%s3625] sm:$0xff]
    %v3627 = vld [vmem:[%s3625 + $0x8] sm:$0xff]
    %v3628 = vld [vmem:[%s3625 + $0x10] sm:$0xff]
    %v3629 = vld [vmem:[%s3625 + $0x18] sm:$0xff]
    %v3630 = vld [vmem:[%s3625 + $0x20] sm:$0xff]
    %v3631 = vld [vmem:[%s3625 + $0x28] sm:$0xff]
    %v3632 = vld [vmem:[%s3625 + $0x30] sm:$0xff]
    %v3633 = vld [vmem:[%s3625 + $0x38] sm:$0xff]
    %v3634 = vld [vmem:[%s3625 + $0x40] sm:$0xff]
    %v3635 = vld [vmem:[%s3625 + $0x48] sm:$0xff]
    %v3636 = vld [vmem:[%s3625 + $0x50] sm:$0xff]
    %v3637 = vld [vmem:[%s3625 + $0x58] sm:$0xff]
    %v3638 = vld [vmem:[%s3625 + $0x60] sm:$0xff]
    %v3639 = vld [vmem:[%s3625 + $0x68] sm:$0xff]
    %v3640 = vld [vmem:[%s3625 + $0x70] sm:$0xff]
    %v3641 = vld [vmem:[%s3625 + $0x78] sm:$0xff]
    %3642 = vmatprep.subr.mxu0 0.0
    %3643 = vmatpush1.msra.mxu0 %v3641
    %3644 = vmatprep.subr.mxu0 0.0
    %3645 = vmatpush1.msra.mxu0 %v3640
    %3646 = vmatprep.subr.mxu0 0.0
    %3647 = vmatpush1.msra.mxu0 %v3639
    %3648 = vmatprep.subr.mxu0 0.0
    %3649 = vmatpush1.msra.mxu0 %v3638
    %3650 = vmatprep.subr.mxu0 0.0
    %3651 = vmatpush1.msra.mxu0 %v3637
    %3652 = vmatprep.subr.mxu0 0.0
    %3653 = vmatpush1.msra.mxu0 %v3636
    %3654 = vmatprep.subr.mxu0 0.0
    %3655 = vmatpush1.msra.mxu0 %v3635
    %3656 = vmatprep.subr.mxu0 0.0
    %3657 = vmatpush1.msra.mxu0 %v3634
    %3658 = vmatprep.subr.mxu0 0.0
    %3659 = vmatpush1.msra.mxu0 %v3633
    %3660 = vmatprep.subr.mxu0 0.0
    %3661 = vmatpush1.msra.mxu0 %v3632
    %3662 = vmatprep.subr.mxu0 0.0
    %3663 = vmatpush1.msra.mxu0 %v3631
    %3664 = vmatprep.subr.mxu0 0.0
    %3665 = vmatpush1.msra.mxu0 %v3630
    %3666 = vmatprep.subr.mxu0 0.0
    %3667 = vmatpush1.msra.mxu0 %v3629
    %3668 = vmatprep.subr.mxu0 0.0
    %3669 = vmatpush1.msra.mxu0 %v3628
    %3670 = vmatprep.subr.mxu0 0.0
    %3671 = vmatpush1.msra.mxu0 %v3627
    %3672 = vmatprep.subr.mxu0 0.0
    %3673 = vmatpush1.msra.mxu0 %v3626
    %3674 = vmatprep.subr.mxu0 0.0
    %3675 = vmatpush2.msra.mxu0 0.0
    %3676 = vmatprep.subr.mxu0 0.0
    %3677 = vmatpush2.msra.mxu0 0.0
    %3678 = vmatprep.subr.mxu0 0.0
    %3679 = vmatpush2.msra.mxu0 0.0
    %3680 = vmatprep.subr.mxu0 0.0
    %3681 = vmatpush2.msra.mxu0 0.0
    %3682 = vmatprep.subr.mxu0 0.0
    %3683 = vmatpush2.msra.mxu0 0.0
    %3684 = vmatprep.subr.mxu0 0.0
    %3685 = vmatpush2.msra.mxu0 0.0
    %3686 = vmatprep.subr.mxu0 0.0
    %3687 = vmatpush2.msra.mxu0 0.0
    %3688 = vmatprep.subr.mxu0 0.0
    %3689 = vmatpush2.msra.mxu0 0.0
    %3690 = vmatprep.subr.mxu0 0.0
    %3691 = vmatpush2.msra.mxu0 0.0
    %3692 = vmatprep.subr.mxu0 0.0
    %3693 = vmatpush2.msra.mxu0 0.0
    %3694 = vmatprep.subr.mxu0 0.0
    %3695 = vmatpush2.msra.mxu0 0.0
    %3696 = vmatprep.subr.mxu0 0.0
    %3697 = vmatpush2.msra.mxu0 0.0
    %3698 = vmatprep.subr.mxu0 0.0
    %3699 = vmatpush2.msra.mxu0 0.0
    %3700 = vmatprep.subr.mxu0 0.0
    %3701 = vmatpush2.msra.mxu0 0.0
    %3702 = vmatprep.subr.mxu0 0.0
    %3703 = vmatpush2.msra.mxu0 0.0
    %3704 = vmatprep.subr.mxu0 0.0
    %3705 = vmatpush2.msra.mxu0 0.0
    %3706 = vmatprep.mubr.f32.mxu0 0.0
    %3707 = vmatmul.mubr.f32.gmra.mxu0 %v3624
    %v3708 = vpop.f32.mrf.mxu0
    %v3709 = vadd.f32 0.0, %v3708
    %v3710 = vpop.f32.mrf.mxu0
    %3711 = vdwg.mxu0
    %v3712 = vld [vmem:[#allocation2] sm:$0xff]
    %v3713 = vadd.f32 %v3712, %v3709
    %3714 = vst [vmem:[#allocation2] sm:$0xff] %v3713
    %s3715 = sld [smem:[#allocation3 + $0x21]]
    %s3716 = sld [smem:[#allocation3 + $0xa1]]
    %s3717 = sld [smem:[#allocation3 + $0x121]]
    %s3718 = sld [smem:[#allocation5 + $0x21]]
    %v3719 = vstv %s3715
    %v3720 = vmul.f32 %v3719, %v51
    %v3721 = vstv %s3716
    %v3722 = vmul.f32 %v3721, %v52
    %v3723 = vadd.f32 %v3720, %v3722
    %v3724 = vstv %s3717
    %v3725 = vmul.f32 %v3724, %v53
    %v3726 = vadd.f32 %v3723, %v3725
    %v3727 = vmul.f32 %v3719, %v52
    %v3728 = vmul.f32 %v3721, %v53
    %v3729 = vadd.f32 %v3727, %v3728
    %v3730 = vmul.f32 %v3724, %v54
    %v3731 = vadd.f32 %v3729, %v3730
    %v3732 = vmax.f32 %v3726, %v3731
    %v3733 = vstv %s3718
    %v3734 = vadd.f32 %v3732, %v3733
    %v3735 = vmax.f32 %v3734, 0.0
    %s3736 = scalar_lea.vmem %s3, 4224
    %v3737 = vld [vmem:[%s3736] sm:$0xff]
    %v3738 = vld [vmem:[%s3736 + $0x8] sm:$0xff]
    %v3739 = vld [vmem:[%s3736 + $0x10] sm:$0xff]
    %v3740 = vld [vmem:[%s3736 + $0x18] sm:$0xff]
    %v3741 = vld [vmem:[%s3736 + $0x20] sm:$0xff]
    %v3742 = vld [vmem:[%s3736 + $0x28] sm:$0xff]
    %v3743 = vld [vmem:[%s3736 + $0x30] sm:$0xff]
    %v3744 = vld [vmem:[%s3736 + $0x38] sm:$0xff]
    %v3745 = vld [vmem:[%s3736 + $0x40] sm:$0xff]
    %v3746 = vld [vmem:[%s3736 + $0x48] sm:$0xff]
    %v3747 = vld [vmem:[%s3736 + $0x50] sm:$0xff]
    %v3748 = vld [vmem:[%s3736 + $0x58] sm:$0xff]
    %v3749 = vld [vmem:[%s3736 + $0x60] sm:$0xff]
    %v3750 = vld [vmem:[%s3736 + $0x68] sm:$0xff]
    %v3751 = vld [vmem:[%s3736 + $0x70] sm:$0xff]
    %v3752 = vld [vmem:[%s3736 + $0x78] sm:$0xff]
    %3753 = vmatprep.subr.mxu0 0.0
    %3754 = vmatpush1.msra.mxu0 %v3752
    %3755 = vmatprep.subr.mxu0 0.0
    %3756 = vmatpush1.msra.mxu0 %v3751
    %3757 = vmatprep.subr.mxu0 0.0
    %3758 = vmatpush1.msra.mxu0 %v3750
    %3759 = vmatprep.subr.mxu0 0.0
    %3760 = vmatpush1.msra.mxu0 %v3749
    %3761 = vmatprep.subr.mxu0 0.0
    %3762 = vmatpush1.msra.mxu0 %v3748
    %3763 = vmatprep.subr.mxu0 0.0
    %3764 = vmatpush1.msra.mxu0 %v3747
    %3765 = vmatprep.subr.mxu0 0.0
    %3766 = vmatpush1.msra.mxu0 %v3746
    %3767 = vmatprep.subr.mxu0 0.0
    %3768 = vmatpush1.msra.mxu0 %v3745
    %3769 = vmatprep.subr.mxu0 0.0
    %3770 = vmatpush1.msra.mxu0 %v3744
    %3771 = vmatprep.subr.mxu0 0.0
    %3772 = vmatpush1.msra.mxu0 %v3743
    %3773 = vmatprep.subr.mxu0 0.0
    %3774 = vmatpush1.msra.mxu0 %v3742
    %3775 = vmatprep.subr.mxu0 0.0
    %3776 = vmatpush1.msra.mxu0 %v3741
    %3777 = vmatprep.subr.mxu0 0.0
    %3778 = vmatpush1.msra.mxu0 %v3740
    %3779 = vmatprep.subr.mxu0 0.0
    %3780 = vmatpush1.msra.mxu0 %v3739
    %3781 = vmatprep.subr.mxu0 0.0
    %3782 = vmatpush1.msra.mxu0 %v3738
    %3783 = vmatprep.subr.mxu0 0.0
    %3784 = vmatpush1.msra.mxu0 %v3737
    %3785 = vmatprep.subr.mxu0 0.0
    %3786 = vmatpush2.msra.mxu0 0.0
    %3787 = vmatprep.subr.mxu0 0.0
    %3788 = vmatpush2.msra.mxu0 0.0
    %3789 = vmatprep.subr.mxu0 0.0
    %3790 = vmatpush2.msra.mxu0 0.0
    %3791 = vmatprep.subr.mxu0 0.0
    %3792 = vmatpush2.msra.mxu0 0.0
    %3793 = vmatprep.subr.mxu0 0.0
    %3794 = vmatpush2.msra.mxu0 0.0
    %3795 = vmatprep.subr.mxu0 0.0
    %3796 = vmatpush2.msra.mxu0 0.0
    %3797 = vmatprep.subr.mxu0 0.0
    %3798 = vmatpush2.msra.mxu0 0.0
    %3799 = vmatprep.subr.mxu0 0.0
    %3800 = vmatpush2.msra.mxu0 0.0
    %3801 = vmatprep.subr.mxu0 0.0
    %3802 = vmatpush2.msra.mxu0 0.0
    %3803 = vmatprep.subr.mxu0 0.0
    %3804 = vmatpush2.msra.mxu0 0.0
    %3805 = vmatprep.subr.mxu0 0.0
    %3806 = vmatpush2.msra.mxu0 0.0
    %3807 = vmatprep.subr.mxu0 0.0
    %3808 = vmatpush2.msra.mxu0 0.0
    %3809 = vmatprep.subr.mxu0 0.0
    %3810 = vmatpush2.msra.mxu0 0.0
    %3811 = vmatprep.subr.mxu0 0.0
    %3812 = vmatpush2.msra.mxu0 0.0
    %3813 = vmatprep.subr.mxu0 0.0
    %3814 = vmatpush2.msra.mxu0 0.0
    %3815 = vmatprep.subr.mxu0 0.0
    %3816 = vmatpush2.msra.mxu0 0.0
    %3817 = vmatprep.mubr.f32.mxu0 0.0
    %3818 = vmatmul.mubr.f32.gmra.mxu0 %v3735
    %v3819 = vpop.f32.mrf.mxu0
    %v3820 = vadd.f32 0.0, %v3819
    %v3821 = vpop.f32.mrf.mxu0
    %3822 = vdwg.mxu0
    %v3823 = vld [vmem:[#allocation2] sm:$0xff]
    %v3824 = vadd.f32 %v3823, %v3820
    %3825 = vst [vmem:[#allocation2] sm:$0xff] %v3824
    %s3826 = sld [smem:[#allocation3 + $0x22]]
    %s3827 = sld [smem:[#allocation3 + $0xa2]]
    %s3828 = sld [smem:[#allocation3 + $0x122]]
    %s3829 = sld [smem:[#allocation5 + $0x22]]
    %v3830 = vstv %s3826
    %v3831 = vmul.f32 %v3830, %v51
    %v3832 = vstv %s3827
    %v3833 = vmul.f32 %v3832, %v52
    %v3834 = vadd.f32 %v3831, %v3833
    %v3835 = vstv %s3828
    %v3836 = vmul.f32 %v3835, %v53
    %v3837 = vadd.f32 %v3834, %v3836
    %v3838 = vmul.f32 %v3830, %v52
    %v3839 = vmul.f32 %v3832, %v53
    %v3840 = vadd.f32 %v3838, %v3839
    %v3841 = vmul.f32 %v3835, %v54
    %v3842 = vadd.f32 %v3840, %v3841
    %v3843 = vmax.f32 %v3837, %v3842
    %v3844 = vstv %s3829
    %v3845 = vadd.f32 %v3843, %v3844
    %v3846 = vmax.f32 %v3845, 0.0
    %s3847 = scalar_lea.vmem %s3, 4352
    %v3848 = vld [vmem:[%s3847] sm:$0xff]
    %v3849 = vld [vmem:[%s3847 + $0x8] sm:$0xff]
    %v3850 = vld [vmem:[%s3847 + $0x10] sm:$0xff]
    %v3851 = vld [vmem:[%s3847 + $0x18] sm:$0xff]
    %v3852 = vld [vmem:[%s3847 + $0x20] sm:$0xff]
    %v3853 = vld [vmem:[%s3847 + $0x28] sm:$0xff]
    %v3854 = vld [vmem:[%s3847 + $0x30] sm:$0xff]
    %v3855 = vld [vmem:[%s3847 + $0x38] sm:$0xff]
    %v3856 = vld [vmem:[%s3847 + $0x40] sm:$0xff]
    %v3857 = vld [vmem:[%s3847 + $0x48] sm:$0xff]
    %v3858 = vld [vmem:[%s3847 + $0x50] sm:$0xff]
    %v3859 = vld [vmem:[%s3847 + $0x58] sm:$0xff]
    %v3860 = vld [vmem:[%s3847 + $0x60] sm:$0xff]
    %v3861 = vld [vmem:[%s3847 + $0x68] sm:$0xff]
    %v3862 = vld [vmem:[%s3847 + $0x70] sm:$0xff]
    %v3863 = vld [vmem:[%s3847 + $0x78] sm:$0xff]
    %3864 = vmatprep.subr.mxu0 0.0
    %3865 = vmatpush1.msra.mxu0 %v3863
    %3866 = vmatprep.subr.mxu0 0.0
    %3867 = vmatpush1.msra.mxu0 %v3862
    %3868 = vmatprep.subr.mxu0 0.0
    %3869 = vmatpush1.msra.mxu0 %v3861
    %3870 = vmatprep.subr.mxu0 0.0
    %3871 = vmatpush1.msra.mxu0 %v3860
    %3872 = vmatprep.subr.mxu0 0.0
    %3873 = vmatpush1.msra.mxu0 %v3859
    %3874 = vmatprep.subr.mxu0 0.0
    %3875 = vmatpush1.msra.mxu0 %v3858
    %3876 = vmatprep.subr.mxu0 0.0
    %3877 = vmatpush1.msra.mxu0 %v3857
    %3878 = vmatprep.subr.mxu0 0.0
    %3879 = vmatpush1.msra.mxu0 %v3856
    %3880 = vmatprep.subr.mxu0 0.0
    %3881 = vmatpush1.msra.mxu0 %v3855
    %3882 = vmatprep.subr.mxu0 0.0
    %3883 = vmatpush1.msra.mxu0 %v3854
    %3884 = vmatprep.subr.mxu0 0.0
    %3885 = vmatpush1.msra.mxu0 %v3853
    %3886 = vmatprep.subr.mxu0 0.0
    %3887 = vmatpush1.msra.mxu0 %v3852
    %3888 = vmatprep.subr.mxu0 0.0
    %3889 = vmatpush1.msra.mxu0 %v3851
    %3890 = vmatprep.subr.mxu0 0.0
    %3891 = vmatpush1.msra.mxu0 %v3850
    %3892 = vmatprep.subr.mxu0 0.0
    %3893 = vmatpush1.msra.mxu0 %v3849
    %3894 = vmatprep.subr.mxu0 0.0
    %3895 = vmatpush1.msra.mxu0 %v3848
    %3896 = vmatprep.subr.mxu0 0.0
    %3897 = vmatpush2.msra.mxu0 0.0
    %3898 = vmatprep.subr.mxu0 0.0
    %3899 = vmatpush2.msra.mxu0 0.0
    %3900 = vmatprep.subr.mxu0 0.0
    %3901 = vmatpush2.msra.mxu0 0.0
    %3902 = vmatprep.subr.mxu0 0.0
    %3903 = vmatpush2.msra.mxu0 0.0
    %3904 = vmatprep.subr.mxu0 0.0
    %3905 = vmatpush2.msra.mxu0 0.0
    %3906 = vmatprep.subr.mxu0 0.0
    %3907 = vmatpush2.msra.mxu0 0.0
    %3908 = vmatprep.subr.mxu0 0.0
    %3909 = vmatpush2.msra.mxu0 0.0
    %3910 = vmatprep.subr.mxu0 0.0
    %3911 = vmatpush2.msra.mxu0 0.0
    %3912 = vmatprep.subr.mxu0 0.0
    %3913 = vmatpush2.msra.mxu0 0.0
    %3914 = vmatprep.subr.mxu0 0.0
    %3915 = vmatpush2.msra.mxu0 0.0
    %3916 = vmatprep.subr.mxu0 0.0
    %3917 = vmatpush2.msra.mxu0 0.0
    %3918 = vmatprep.subr.mxu0 0.0
    %3919 = vmatpush2.msra.mxu0 0.0
    %3920 = vmatprep.subr.mxu0 0.0
    %3921 = vmatpush2.msra.mxu0 0.0
    %3922 = vmatprep.subr.mxu0 0.0
    %3923 = vmatpush2.msra.mxu0 0.0
    %3924 = vmatprep.subr.mxu0 0.0
    %3925 = vmatpush2.msra.mxu0 0.0
    %3926 = vmatprep.subr.mxu0 0.0
    %3927 = vmatpush2.msra.mxu0 0.0
    %3928 = vmatprep.mubr.f32.mxu0 0.0
    %3929 = vmatmul.mubr.f32.gmra.mxu0 %v3846
    %v3930 = vpop.f32.mrf.mxu0
    %v3931 = vadd.f32 0.0, %v3930
    %v3932 = vpop.f32.mrf.mxu0
    %3933 = vdwg.mxu0
    %v3934 = vld [vmem:[#allocation2] sm:$0xff]
    %v3935 = vadd.f32 %v3934, %v3931
    %3936 = vst [vmem:[#allocation2] sm:$0xff] %v3935
    %s3937 = sld [smem:[#allocation3 + $0x23]]
    %s3938 = sld [smem:[#allocation3 + $0xa3]]
    %s3939 = sld [smem:[#allocation3 + $0x123]]
    %s3940 = sld [smem:[#allocation5 + $0x23]]
    %v3941 = vstv %s3937
    %v3942 = vmul.f32 %v3941, %v51
    %v3943 = vstv %s3938
    %v3944 = vmul.f32 %v3943, %v52
    %v3945 = vadd.f32 %v3942, %v3944
    %v3946 = vstv %s3939
    %v3947 = vmul.f32 %v3946, %v53
    %v3948 = vadd.f32 %v3945, %v3947
    %v3949 = vmul.f32 %v3941, %v52
    %v3950 = vmul.f32 %v3943, %v53
    %v3951 = vadd.f32 %v3949, %v3950
    %v3952 = vmul.f32 %v3946, %v54
    %v3953 = vadd.f32 %v3951, %v3952
    %v3954 = vmax.f32 %v3948, %v3953
    %v3955 = vstv %s3940
    %v3956 = vadd.f32 %v3954, %v3955
    %v3957 = vmax.f32 %v3956, 0.0
    %s3958 = scalar_lea.vmem %s3, 4480
    %v3959 = vld [vmem:[%s3958] sm:$0xff]
    %v3960 = vld [vmem:[%s3958 + $0x8] sm:$0xff]
    %v3961 = vld [vmem:[%s3958 + $0x10] sm:$0xff]
    %v3962 = vld [vmem:[%s3958 + $0x18] sm:$0xff]
    %v3963 = vld [vmem:[%s3958 + $0x20] sm:$0xff]
    %v3964 = vld [vmem:[%s3958 + $0x28] sm:$0xff]
    %v3965 = vld [vmem:[%s3958 + $0x30] sm:$0xff]
    %v3966 = vld [vmem:[%s3958 + $0x38] sm:$0xff]
    %v3967 = vld [vmem:[%s3958 + $0x40] sm:$0xff]
    %v3968 = vld [vmem:[%s3958 + $0x48] sm:$0xff]
    %v3969 = vld [vmem:[%s3958 + $0x50] sm:$0xff]
    %v3970 = vld [vmem:[%s3958 + $0x58] sm:$0xff]
    %v3971 = vld [vmem:[%s3958 + $0x60] sm:$0xff]
    %v3972 = vld [vmem:[%s3958 + $0x68] sm:$0xff]
    %v3973 = vld [vmem:[%s3958 + $0x70] sm:$0xff]
    %v3974 = vld [vmem:[%s3958 + $0x78] sm:$0xff]
    %3975 = vmatprep.subr.mxu0 0.0
    %3976 = vmatpush1.msra.mxu0 %v3974
    %3977 = vmatprep.subr.mxu0 0.0
    %3978 = vmatpush1.msra.mxu0 %v3973
    %3979 = vmatprep.subr.mxu0 0.0
    %3980 = vmatpush1.msra.mxu0 %v3972
    %3981 = vmatprep.subr.mxu0 0.0
    %3982 = vmatpush1.msra.mxu0 %v3971
    %3983 = vmatprep.subr.mxu0 0.0
    %3984 = vmatpush1.msra.mxu0 %v3970
    %3985 = vmatprep.subr.mxu0 0.0
    %3986 = vmatpush1.msra.mxu0 %v3969
    %3987 = vmatprep.subr.mxu0 0.0
    %3988 = vmatpush1.msra.mxu0 %v3968
    %3989 = vmatprep.subr.mxu0 0.0
    %3990 = vmatpush1.msra.mxu0 %v3967
    %3991 = vmatprep.subr.mxu0 0.0
    %3992 = vmatpush1.msra.mxu0 %v3966
    %3993 = vmatprep.subr.mxu0 0.0
    %3994 = vmatpush1.msra.mxu0 %v3965
    %3995 = vmatprep.subr.mxu0 0.0
    %3996 = vmatpush1.msra.mxu0 %v3964
    %3997 = vmatprep.subr.mxu0 0.0
    %3998 = vmatpush1.msra.mxu0 %v3963
    %3999 = vmatprep.subr.mxu0 0.0
    %4000 = vmatpush1.msra.mxu0 %v3962
    %4001 = vmatprep.subr.mxu0 0.0
    %4002 = vmatpush1.msra.mxu0 %v3961
    %4003 = vmatprep.subr.mxu0 0.0
    %4004 = vmatpush1.msra.mxu0 %v3960
    %4005 = vmatprep.subr.mxu0 0.0
    %4006 = vmatpush1.msra.mxu0 %v3959
    %4007 = vmatprep.subr.mxu0 0.0
    %4008 = vmatpush2.msra.mxu0 0.0
    %4009 = vmatprep.subr.mxu0 0.0
    %4010 = vmatpush2.msra.mxu0 0.0
    %4011 = vmatprep.subr.mxu0 0.0
    %4012 = vmatpush2.msra.mxu0 0.0
    %4013 = vmatprep.subr.mxu0 0.0
    %4014 = vmatpush2.msra.mxu0 0.0
    %4015 = vmatprep.subr.mxu0 0.0
    %4016 = vmatpush2.msra.mxu0 0.0
    %4017 = vmatprep.subr.mxu0 0.0
    %4018 = vmatpush2.msra.mxu0 0.0
    %4019 = vmatprep.subr.mxu0 0.0
    %4020 = vmatpush2.msra.mxu0 0.0
    %4021 = vmatprep.subr.mxu0 0.0
    %4022 = vmatpush2.msra.mxu0 0.0
    %4023 = vmatprep.subr.mxu0 0.0
    %4024 = vmatpush2.msra.mxu0 0.0
    %4025 = vmatprep.subr.mxu0 0.0
    %4026 = vmatpush2.msra.mxu0 0.0
    %4027 = vmatprep.subr.mxu0 0.0
    %4028 = vmatpush2.msra.mxu0 0.0
    %4029 = vmatprep.subr.mxu0 0.0
    %4030 = vmatpush2.msra.mxu0 0.0
    %4031 = vmatprep.subr.mxu0 0.0
    %4032 = vmatpush2.msra.mxu0 0.0
    %4033 = vmatprep.subr.mxu0 0.0
    %4034 = vmatpush2.msra.mxu0 0.0
    %4035 = vmatprep.subr.mxu0 0.0
    %4036 = vmatpush2.msra.mxu0 0.0
    %4037 = vmatprep.subr.mxu0 0.0
    %4038 = vmatpush2.msra.mxu0 0.0
    %4039 = vmatprep.mubr.f32.mxu0 0.0
    %4040 = vmatmul.mubr.f32.gmra.mxu0 %v3957
    %v4041 = vpop.f32.mrf.mxu0
    %v4042 = vadd.f32 0.0, %v4041
    %v4043 = vpop.f32.mrf.mxu0
    %4044 = vdwg.mxu0
    %v4045 = vld [vmem:[#allocation2] sm:$0xff]
    %v4046 = vadd.f32 %v4045, %v4042
    %4047 = vst [vmem:[#allocation2] sm:$0xff] %v4046
    %s4048 = sld [smem:[#allocation3 + $0x24]]
    %s4049 = sld [smem:[#allocation3 + $0xa4]]
    %s4050 = sld [smem:[#allocation3 + $0x124]]
    %s4051 = sld [smem:[#allocation5 + $0x24]]
    %v4052 = vstv %s4048
    %v4053 = vmul.f32 %v4052, %v51
    %v4054 = vstv %s4049
    %v4055 = vmul.f32 %v4054, %v52
    %v4056 = vadd.f32 %v4053, %v4055
    %v4057 = vstv %s4050
    %v4058 = vmul.f32 %v4057, %v53
    %v4059 = vadd.f32 %v4056, %v4058
    %v4060 = vmul.f32 %v4052, %v52
    %v4061 = vmul.f32 %v4054, %v53
    %v4062 = vadd.f32 %v4060, %v4061
    %v4063 = vmul.f32 %v4057, %v54
    %v4064 = vadd.f32 %v4062, %v4063
    %v4065 = vmax.f32 %v4059, %v4064
    %v4066 = vstv %s4051
    %v4067 = vadd.f32 %v4065, %v4066
    %v4068 = vmax.f32 %v4067, 0.0
    %s4069 = scalar_lea.vmem %s3, 4608
    %v4070 = vld [vmem:[%s4069] sm:$0xff]
    %v4071 = vld [vmem:[%s4069 + $0x8] sm:$0xff]
    %v4072 = vld [vmem:[%s4069 + $0x10] sm:$0xff]
    %v4073 = vld [vmem:[%s4069 + $0x18] sm:$0xff]
    %v4074 = vld [vmem:[%s4069 + $0x20] sm:$0xff]
    %v4075 = vld [vmem:[%s4069 + $0x28] sm:$0xff]
    %v4076 = vld [vmem:[%s4069 + $0x30] sm:$0xff]
    %v4077 = vld [vmem:[%s4069 + $0x38] sm:$0xff]
    %v4078 = vld [vmem:[%s4069 + $0x40] sm:$0xff]
    %v4079 = vld [vmem:[%s4069 + $0x48] sm:$0xff]
    %v4080 = vld [vmem:[%s4069 + $0x50] sm:$0xff]
    %v4081 = vld [vmem:[%s4069 + $0x58] sm:$0xff]
    %v4082 = vld [vmem:[%s4069 + $0x60] sm:$0xff]
    %v4083 = vld [vmem:[%s4069 + $0x68] sm:$0xff]
    %v4084 = vld [vmem:[%s4069 + $0x70] sm:$0xff]
    %v4085 = vld [vmem:[%s4069 + $0x78] sm:$0xff]
    %4086 = vmatprep.subr.mxu0 0.0
    %4087 = vmatpush1.msra.mxu0 %v4085
    %4088 = vmatprep.subr.mxu0 0.0
    %4089 = vmatpush1.msra.mxu0 %v4084
    %4090 = vmatprep.subr.mxu0 0.0
    %4091 = vmatpush1.msra.mxu0 %v4083
    %4092 = vmatprep.subr.mxu0 0.0
    %4093 = vmatpush1.msra.mxu0 %v4082
    %4094 = vmatprep.subr.mxu0 0.0
    %4095 = vmatpush1.msra.mxu0 %v4081
    %4096 = vmatprep.subr.mxu0 0.0
    %4097 = vmatpush1.msra.mxu0 %v4080
    %4098 = vmatprep.subr.mxu0 0.0
    %4099 = vmatpush1.msra.mxu0 %v4079
    %4100 = vmatprep.subr.mxu0 0.0
    %4101 = vmatpush1.msra.mxu0 %v4078
    %4102 = vmatprep.subr.mxu0 0.0
    %4103 = vmatpush1.msra.mxu0 %v4077
    %4104 = vmatprep.subr.mxu0 0.0
    %4105 = vmatpush1.msra.mxu0 %v4076
    %4106 = vmatprep.subr.mxu0 0.0
    %4107 = vmatpush1.msra.mxu0 %v4075
    %4108 = vmatprep.subr.mxu0 0.0
    %4109 = vmatpush1.msra.mxu0 %v4074
    %4110 = vmatprep.subr.mxu0 0.0
    %4111 = vmatpush1.msra.mxu0 %v4073
    %4112 = vmatprep.subr.mxu0 0.0
    %4113 = vmatpush1.msra.mxu0 %v4072
    %4114 = vmatprep.subr.mxu0 0.0
    %4115 = vmatpush1.msra.mxu0 %v4071
    %4116 = vmatprep.subr.mxu0 0.0
    %4117 = vmatpush1.msra.mxu0 %v4070
    %4118 = vmatprep.subr.mxu0 0.0
    %4119 = vmatpush2.msra.mxu0 0.0
    %4120 = vmatprep.subr.mxu0 0.0
    %4121 = vmatpush2.msra.mxu0 0.0
    %4122 = vmatprep.subr.mxu0 0.0
    %4123 = vmatpush2.msra.mxu0 0.0
    %4124 = vmatprep.subr.mxu0 0.0
    %4125 = vmatpush2.msra.mxu0 0.0
    %4126 = vmatprep.subr.mxu0 0.0
    %4127 = vmatpush2.msra.mxu0 0.0
    %4128 = vmatprep.subr.mxu0 0.0
    %4129 = vmatpush2.msra.mxu0 0.0
    %4130 = vmatprep.subr.mxu0 0.0
    %4131 = vmatpush2.msra.mxu0 0.0
    %4132 = vmatprep.subr.mxu0 0.0
    %4133 = vmatpush2.msra.mxu0 0.0
    %4134 = vmatprep.subr.mxu0 0.0
    %4135 = vmatpush2.msra.mxu0 0.0
    %4136 = vmatprep.subr.mxu0 0.0
    %4137 = vmatpush2.msra.mxu0 0.0
    %4138 = vmatprep.subr.mxu0 0.0
    %4139 = vmatpush2.msra.mxu0 0.0
    %4140 = vmatprep.subr.mxu0 0.0
    %4141 = vmatpush2.msra.mxu0 0.0
    %4142 = vmatprep.subr.mxu0 0.0
    %4143 = vmatpush2.msra.mxu0 0.0
    %4144 = vmatprep.subr.mxu0 0.0
    %4145 = vmatpush2.msra.mxu0 0.0
    %4146 = vmatprep.subr.mxu0 0.0
    %4147 = vmatpush2.msra.mxu0 0.0
    %4148 = vmatprep.subr.mxu0 0.0
    %4149 = vmatpush2.msra.mxu0 0.0
    %4150 = vmatprep.mubr.f32.mxu0 0.0
    %4151 = vmatmul.mubr.f32.gmra.mxu0 %v4068
    %v4152 = vpop.f32.mrf.mxu0
    %v4153 = vadd.f32 0.0, %v4152
    %v4154 = vpop.f32.mrf.mxu0
    %4155 = vdwg.mxu0
    %v4156 = vld [vmem:[#allocation2] sm:$0xff]
    %v4157 = vadd.f32 %v4156, %v4153
    %4158 = vst [vmem:[#allocation2] sm:$0xff] %v4157
    %s4159 = sld [smem:[#allocation3 + $0x25]]
    %s4160 = sld [smem:[#allocation3 + $0xa5]]
    %s4161 = sld [smem:[#allocation3 + $0x125]]
    %s4162 = sld [smem:[#allocation5 + $0x25]]
    %v4163 = vstv %s4159
    %v4164 = vmul.f32 %v4163, %v51
    %v4165 = vstv %s4160
    %v4166 = vmul.f32 %v4165, %v52
    %v4167 = vadd.f32 %v4164, %v4166
    %v4168 = vstv %s4161
    %v4169 = vmul.f32 %v4168, %v53
    %v4170 = vadd.f32 %v4167, %v4169
    %v4171 = vmul.f32 %v4163, %v52
    %v4172 = vmul.f32 %v4165, %v53
    %v4173 = vadd.f32 %v4171, %v4172
    %v4174 = vmul.f32 %v4168, %v54
    %v4175 = vadd.f32 %v4173, %v4174
    %v4176 = vmax.f32 %v4170, %v4175
    %v4177 = vstv %s4162
    %v4178 = vadd.f32 %v4176, %v4177
    %v4179 = vmax.f32 %v4178, 0.0
    %s4180 = scalar_lea.vmem %s3, 4736
    %v4181 = vld [vmem:[%s4180] sm:$0xff]
    %v4182 = vld [vmem:[%s4180 + $0x8] sm:$0xff]
    %v4183 = vld [vmem:[%s4180 + $0x10] sm:$0xff]
    %v4184 = vld [vmem:[%s4180 + $0x18] sm:$0xff]
    %v4185 = vld [vmem:[%s4180 + $0x20] sm:$0xff]
    %v4186 = vld [vmem:[%s4180 + $0x28] sm:$0xff]
    %v4187 = vld [vmem:[%s4180 + $0x30] sm:$0xff]
    %v4188 = vld [vmem:[%s4180 + $0x38] sm:$0xff]
    %v4189 = vld [vmem:[%s4180 + $0x40] sm:$0xff]
    %v4190 = vld [vmem:[%s4180 + $0x48] sm:$0xff]
    %v4191 = vld [vmem:[%s4180 + $0x50] sm:$0xff]
    %v4192 = vld [vmem:[%s4180 + $0x58] sm:$0xff]
    %v4193 = vld [vmem:[%s4180 + $0x60] sm:$0xff]
    %v4194 = vld [vmem:[%s4180 + $0x68] sm:$0xff]
    %v4195 = vld [vmem:[%s4180 + $0x70] sm:$0xff]
    %v4196 = vld [vmem:[%s4180 + $0x78] sm:$0xff]
    %4197 = vmatprep.subr.mxu0 0.0
    %4198 = vmatpush1.msra.mxu0 %v4196
    %4199 = vmatprep.subr.mxu0 0.0
    %4200 = vmatpush1.msra.mxu0 %v4195
    %4201 = vmatprep.subr.mxu0 0.0
    %4202 = vmatpush1.msra.mxu0 %v4194
    %4203 = vmatprep.subr.mxu0 0.0
    %4204 = vmatpush1.msra.mxu0 %v4193
    %4205 = vmatprep.subr.mxu0 0.0
    %4206 = vmatpush1.msra.mxu0 %v4192
    %4207 = vmatprep.subr.mxu0 0.0
    %4208 = vmatpush1.msra.mxu0 %v4191
    %4209 = vmatprep.subr.mxu0 0.0
    %4210 = vmatpush1.msra.mxu0 %v4190
    %4211 = vmatprep.subr.mxu0 0.0
    %4212 = vmatpush1.msra.mxu0 %v4189
    %4213 = vmatprep.subr.mxu0 0.0
    %4214 = vmatpush1.msra.mxu0 %v4188
    %4215 = vmatprep.subr.mxu0 0.0
    %4216 = vmatpush1.msra.mxu0 %v4187
    %4217 = vmatprep.subr.mxu0 0.0
    %4218 = vmatpush1.msra.mxu0 %v4186
    %4219 = vmatprep.subr.mxu0 0.0
    %4220 = vmatpush1.msra.mxu0 %v4185
    %4221 = vmatprep.subr.mxu0 0.0
    %4222 = vmatpush1.msra.mxu0 %v4184
    %4223 = vmatprep.subr.mxu0 0.0
    %4224 = vmatpush1.msra.mxu0 %v4183
    %4225 = vmatprep.subr.mxu0 0.0
    %4226 = vmatpush1.msra.mxu0 %v4182
    %4227 = vmatprep.subr.mxu0 0.0
    %4228 = vmatpush1.msra.mxu0 %v4181
    %4229 = vmatprep.subr.mxu0 0.0
    %4230 = vmatpush2.msra.mxu0 0.0
    %4231 = vmatprep.subr.mxu0 0.0
    %4232 = vmatpush2.msra.mxu0 0.0
    %4233 = vmatprep.subr.mxu0 0.0
    %4234 = vmatpush2.msra.mxu0 0.0
    %4235 = vmatprep.subr.mxu0 0.0
    %4236 = vmatpush2.msra.mxu0 0.0
    %4237 = vmatprep.subr.mxu0 0.0
    %4238 = vmatpush2.msra.mxu0 0.0
    %4239 = vmatprep.subr.mxu0 0.0
    %4240 = vmatpush2.msra.mxu0 0.0
    %4241 = vmatprep.subr.mxu0 0.0
    %4242 = vmatpush2.msra.mxu0 0.0
    %4243 = vmatprep.subr.mxu0 0.0
    %4244 = vmatpush2.msra.mxu0 0.0
    %4245 = vmatprep.subr.mxu0 0.0
    %4246 = vmatpush2.msra.mxu0 0.0
    %4247 = vmatprep.subr.mxu0 0.0
    %4248 = vmatpush2.msra.mxu0 0.0
    %4249 = vmatprep.subr.mxu0 0.0
    %4250 = vmatpush2.msra.mxu0 0.0
    %4251 = vmatprep.subr.mxu0 0.0
    %4252 = vmatpush2.msra.mxu0 0.0
    %4253 = vmatprep.subr.mxu0 0.0
    %4254 = vmatpush2.msra.mxu0 0.0
    %4255 = vmatprep.subr.mxu0 0.0
    %4256 = vmatpush2.msra.mxu0 0.0
    %4257 = vmatprep.subr.mxu0 0.0
    %4258 = vmatpush2.msra.mxu0 0.0
    %4259 = vmatprep.subr.mxu0 0.0
    %4260 = vmatpush2.msra.mxu0 0.0
    %4261 = vmatprep.mubr.f32.mxu0 0.0
    %4262 = vmatmul.mubr.f32.gmra.mxu0 %v4179
    %v4263 = vpop.f32.mrf.mxu0
    %v4264 = vadd.f32 0.0, %v4263
    %v4265 = vpop.f32.mrf.mxu0
    %4266 = vdwg.mxu0
    %v4267 = vld [vmem:[#allocation2] sm:$0xff]
    %v4268 = vadd.f32 %v4267, %v4264
    %4269 = vst [vmem:[#allocation2] sm:$0xff] %v4268
    %s4270 = sld [smem:[#allocation3 + $0x26]]
    %s4271 = sld [smem:[#allocation3 + $0xa6]]
    %s4272 = sld [smem:[#allocation3 + $0x126]]
    %s4273 = sld [smem:[#allocation5 + $0x26]]
    %v4274 = vstv %s4270
    %v4275 = vmul.f32 %v4274, %v51
    %v4276 = vstv %s4271
    %v4277 = vmul.f32 %v4276, %v52
    %v4278 = vadd.f32 %v4275, %v4277
    %v4279 = vstv %s4272
    %v4280 = vmul.f32 %v4279, %v53
    %v4281 = vadd.f32 %v4278, %v4280
    %v4282 = vmul.f32 %v4274, %v52
    %v4283 = vmul.f32 %v4276, %v53
    %v4284 = vadd.f32 %v4282, %v4283
    %v4285 = vmul.f32 %v4279, %v54
    %v4286 = vadd.f32 %v4284, %v4285
    %v4287 = vmax.f32 %v4281, %v4286
    %v4288 = vstv %s4273
    %v4289 = vadd.f32 %v4287, %v4288
    %v4290 = vmax.f32 %v4289, 0.0
    %s4291 = scalar_lea.vmem %s3, 4864
    %v4292 = vld [vmem:[%s4291] sm:$0xff]
    %v4293 = vld [vmem:[%s4291 + $0x8] sm:$0xff]
    %v4294 = vld [vmem:[%s4291 + $0x10] sm:$0xff]
    %v4295 = vld [vmem:[%s4291 + $0x18] sm:$0xff]
    %v4296 = vld [vmem:[%s4291 + $0x20] sm:$0xff]
    %v4297 = vld [vmem:[%s4291 + $0x28] sm:$0xff]
    %v4298 = vld [vmem:[%s4291 + $0x30] sm:$0xff]
    %v4299 = vld [vmem:[%s4291 + $0x38] sm:$0xff]
    %v4300 = vld [vmem:[%s4291 + $0x40] sm:$0xff]
    %v4301 = vld [vmem:[%s4291 + $0x48] sm:$0xff]
    %v4302 = vld [vmem:[%s4291 + $0x50] sm:$0xff]
    %v4303 = vld [vmem:[%s4291 + $0x58] sm:$0xff]
    %v4304 = vld [vmem:[%s4291 + $0x60] sm:$0xff]
    %v4305 = vld [vmem:[%s4291 + $0x68] sm:$0xff]
    %v4306 = vld [vmem:[%s4291 + $0x70] sm:$0xff]
    %v4307 = vld [vmem:[%s4291 + $0x78] sm:$0xff]
    %4308 = vmatprep.subr.mxu0 0.0
    %4309 = vmatpush1.msra.mxu0 %v4307
    %4310 = vmatprep.subr.mxu0 0.0
    %4311 = vmatpush1.msra.mxu0 %v4306
    %4312 = vmatprep.subr.mxu0 0.0
    %4313 = vmatpush1.msra.mxu0 %v4305
    %4314 = vmatprep.subr.mxu0 0.0
    %4315 = vmatpush1.msra.mxu0 %v4304
    %4316 = vmatprep.subr.mxu0 0.0
    %4317 = vmatpush1.msra.mxu0 %v4303
    %4318 = vmatprep.subr.mxu0 0.0
    %4319 = vmatpush1.msra.mxu0 %v4302
    %4320 = vmatprep.subr.mxu0 0.0
    %4321 = vmatpush1.msra.mxu0 %v4301
    %4322 = vmatprep.subr.mxu0 0.0
    %4323 = vmatpush1.msra.mxu0 %v4300
    %4324 = vmatprep.subr.mxu0 0.0
    %4325 = vmatpush1.msra.mxu0 %v4299
    %4326 = vmatprep.subr.mxu0 0.0
    %4327 = vmatpush1.msra.mxu0 %v4298
    %4328 = vmatprep.subr.mxu0 0.0
    %4329 = vmatpush1.msra.mxu0 %v4297
    %4330 = vmatprep.subr.mxu0 0.0
    %4331 = vmatpush1.msra.mxu0 %v4296
    %4332 = vmatprep.subr.mxu0 0.0
    %4333 = vmatpush1.msra.mxu0 %v4295
    %4334 = vmatprep.subr.mxu0 0.0
    %4335 = vmatpush1.msra.mxu0 %v4294
    %4336 = vmatprep.subr.mxu0 0.0
    %4337 = vmatpush1.msra.mxu0 %v4293
    %4338 = vmatprep.subr.mxu0 0.0
    %4339 = vmatpush1.msra.mxu0 %v4292
    %4340 = vmatprep.subr.mxu0 0.0
    %4341 = vmatpush2.msra.mxu0 0.0
    %4342 = vmatprep.subr.mxu0 0.0
    %4343 = vmatpush2.msra.mxu0 0.0
    %4344 = vmatprep.subr.mxu0 0.0
    %4345 = vmatpush2.msra.mxu0 0.0
    %4346 = vmatprep.subr.mxu0 0.0
    %4347 = vmatpush2.msra.mxu0 0.0
    %4348 = vmatprep.subr.mxu0 0.0
    %4349 = vmatpush2.msra.mxu0 0.0
    %4350 = vmatprep.subr.mxu0 0.0
    %4351 = vmatpush2.msra.mxu0 0.0
    %4352 = vmatprep.subr.mxu0 0.0
    %4353 = vmatpush2.msra.mxu0 0.0
    %4354 = vmatprep.subr.mxu0 0.0
    %4355 = vmatpush2.msra.mxu0 0.0
    %4356 = vmatprep.subr.mxu0 0.0
    %4357 = vmatpush2.msra.mxu0 0.0
    %4358 = vmatprep.subr.mxu0 0.0
    %4359 = vmatpush2.msra.mxu0 0.0
    %4360 = vmatprep.subr.mxu0 0.0
    %4361 = vmatpush2.msra.mxu0 0.0
    %4362 = vmatprep.subr.mxu0 0.0
    %4363 = vmatpush2.msra.mxu0 0.0
    %4364 = vmatprep.subr.mxu0 0.0
    %4365 = vmatpush2.msra.mxu0 0.0
    %4366 = vmatprep.subr.mxu0 0.0
    %4367 = vmatpush2.msra.mxu0 0.0
    %4368 = vmatprep.subr.mxu0 0.0
    %4369 = vmatpush2.msra.mxu0 0.0
    %4370 = vmatprep.subr.mxu0 0.0
    %4371 = vmatpush2.msra.mxu0 0.0
    %4372 = vmatprep.mubr.f32.mxu0 0.0
    %4373 = vmatmul.mubr.f32.gmra.mxu0 %v4290
    %v4374 = vpop.f32.mrf.mxu0
    %v4375 = vadd.f32 0.0, %v4374
    %v4376 = vpop.f32.mrf.mxu0
    %4377 = vdwg.mxu0
    %v4378 = vld [vmem:[#allocation2] sm:$0xff]
    %v4379 = vadd.f32 %v4378, %v4375
    %4380 = vst [vmem:[#allocation2] sm:$0xff] %v4379
    %s4381 = sld [smem:[#allocation3 + $0x27]]
    %s4382 = sld [smem:[#allocation3 + $0xa7]]
    %s4383 = sld [smem:[#allocation3 + $0x127]]
    %s4384 = sld [smem:[#allocation5 + $0x27]]
    %v4385 = vstv %s4381
    %v4386 = vmul.f32 %v4385, %v51
    %v4387 = vstv %s4382
    %v4388 = vmul.f32 %v4387, %v52
    %v4389 = vadd.f32 %v4386, %v4388
    %v4390 = vstv %s4383
    %v4391 = vmul.f32 %v4390, %v53
    %v4392 = vadd.f32 %v4389, %v4391
    %v4393 = vmul.f32 %v4385, %v52
    %v4394 = vmul.f32 %v4387, %v53
    %v4395 = vadd.f32 %v4393, %v4394
    %v4396 = vmul.f32 %v4390, %v54
    %v4397 = vadd.f32 %v4395, %v4396
    %v4398 = vmax.f32 %v4392, %v4397
    %v4399 = vstv %s4384
    %v4400 = vadd.f32 %v4398, %v4399
    %v4401 = vmax.f32 %v4400, 0.0
    %s4402 = scalar_lea.vmem %s3, 4992
    %v4403 = vld [vmem:[%s4402] sm:$0xff]
    %v4404 = vld [vmem:[%s4402 + $0x8] sm:$0xff]
    %v4405 = vld [vmem:[%s4402 + $0x10] sm:$0xff]
    %v4406 = vld [vmem:[%s4402 + $0x18] sm:$0xff]
    %v4407 = vld [vmem:[%s4402 + $0x20] sm:$0xff]
    %v4408 = vld [vmem:[%s4402 + $0x28] sm:$0xff]
    %v4409 = vld [vmem:[%s4402 + $0x30] sm:$0xff]
    %v4410 = vld [vmem:[%s4402 + $0x38] sm:$0xff]
    %v4411 = vld [vmem:[%s4402 + $0x40] sm:$0xff]
    %v4412 = vld [vmem:[%s4402 + $0x48] sm:$0xff]
    %v4413 = vld [vmem:[%s4402 + $0x50] sm:$0xff]
    %v4414 = vld [vmem:[%s4402 + $0x58] sm:$0xff]
    %v4415 = vld [vmem:[%s4402 + $0x60] sm:$0xff]
    %v4416 = vld [vmem:[%s4402 + $0x68] sm:$0xff]
    %v4417 = vld [vmem:[%s4402 + $0x70] sm:$0xff]
    %v4418 = vld [vmem:[%s4402 + $0x78] sm:$0xff]
    %4419 = vmatprep.subr.mxu0 0.0
    %4420 = vmatpush1.msra.mxu0 %v4418
    %4421 = vmatprep.subr.mxu0 0.0
    %4422 = vmatpush1.msra.mxu0 %v4417
    %4423 = vmatprep.subr.mxu0 0.0
    %4424 = vmatpush1.msra.mxu0 %v4416
    %4425 = vmatprep.subr.mxu0 0.0
    %4426 = vmatpush1.msra.mxu0 %v4415
    %4427 = vmatprep.subr.mxu0 0.0
    %4428 = vmatpush1.msra.mxu0 %v4414
    %4429 = vmatprep.subr.mxu0 0.0
    %4430 = vmatpush1.msra.mxu0 %v4413
    %4431 = vmatprep.subr.mxu0 0.0
    %4432 = vmatpush1.msra.mxu0 %v4412
    %4433 = vmatprep.subr.mxu0 0.0
    %4434 = vmatpush1.msra.mxu0 %v4411
    %4435 = vmatprep.subr.mxu0 0.0
    %4436 = vmatpush1.msra.mxu0 %v4410
    %4437 = vmatprep.subr.mxu0 0.0
    %4438 = vmatpush1.msra.mxu0 %v4409
    %4439 = vmatprep.subr.mxu0 0.0
    %4440 = vmatpush1.msra.mxu0 %v4408
    %4441 = vmatprep.subr.mxu0 0.0
    %4442 = vmatpush1.msra.mxu0 %v4407
    %4443 = vmatprep.subr.mxu0 0.0
    %4444 = vmatpush1.msra.mxu0 %v4406
    %4445 = vmatprep.subr.mxu0 0.0
    %4446 = vmatpush1.msra.mxu0 %v4405
    %4447 = vmatprep.subr.mxu0 0.0
    %4448 = vmatpush1.msra.mxu0 %v4404
    %4449 = vmatprep.subr.mxu0 0.0
    %4450 = vmatpush1.msra.mxu0 %v4403
    %4451 = vmatprep.subr.mxu0 0.0
    %4452 = vmatpush2.msra.mxu0 0.0
    %4453 = vmatprep.subr.mxu0 0.0
    %4454 = vmatpush2.msra.mxu0 0.0
    %4455 = vmatprep.subr.mxu0 0.0
    %4456 = vmatpush2.msra.mxu0 0.0
    %4457 = vmatprep.subr.mxu0 0.0
    %4458 = vmatpush2.msra.mxu0 0.0
    %4459 = vmatprep.subr.mxu0 0.0
    %4460 = vmatpush2.msra.mxu0 0.0
    %4461 = vmatprep.subr.mxu0 0.0
    %4462 = vmatpush2.msra.mxu0 0.0
    %4463 = vmatprep.subr.mxu0 0.0
    %4464 = vmatpush2.msra.mxu0 0.0
    %4465 = vmatprep.subr.mxu0 0.0
    %4466 = vmatpush2.msra.mxu0 0.0
    %4467 = vmatprep.subr.mxu0 0.0
    %4468 = vmatpush2.msra.mxu0 0.0
    %4469 = vmatprep.subr.mxu0 0.0
    %4470 = vmatpush2.msra.mxu0 0.0
    %4471 = vmatprep.subr.mxu0 0.0
    %4472 = vmatpush2.msra.mxu0 0.0
    %4473 = vmatprep.subr.mxu0 0.0
    %4474 = vmatpush2.msra.mxu0 0.0
    %4475 = vmatprep.subr.mxu0 0.0
    %4476 = vmatpush2.msra.mxu0 0.0
    %4477 = vmatprep.subr.mxu0 0.0
    %4478 = vmatpush2.msra.mxu0 0.0
    %4479 = vmatprep.subr.mxu0 0.0
    %4480 = vmatpush2.msra.mxu0 0.0
    %4481 = vmatprep.subr.mxu0 0.0
    %4482 = vmatpush2.msra.mxu0 0.0
    %4483 = vmatprep.mubr.f32.mxu0 0.0
    %4484 = vmatmul.mubr.f32.gmra.mxu0 %v4401
    %v4485 = vpop.f32.mrf.mxu0
    %v4486 = vadd.f32 0.0, %v4485
    %v4487 = vpop.f32.mrf.mxu0
    %4488 = vdwg.mxu0
    %v4489 = vld [vmem:[#allocation2] sm:$0xff]
    %v4490 = vadd.f32 %v4489, %v4486
    %4491 = vst [vmem:[#allocation2] sm:$0xff] %v4490
    %s4492 = sld [smem:[#allocation3 + $0x28]]
    %s4493 = sld [smem:[#allocation3 + $0xa8]]
    %s4494 = sld [smem:[#allocation3 + $0x128]]
    %s4495 = sld [smem:[#allocation5 + $0x28]]
    %v4496 = vstv %s4492
    %v4497 = vmul.f32 %v4496, %v51
    %v4498 = vstv %s4493
    %v4499 = vmul.f32 %v4498, %v52
    %v4500 = vadd.f32 %v4497, %v4499
    %v4501 = vstv %s4494
    %v4502 = vmul.f32 %v4501, %v53
    %v4503 = vadd.f32 %v4500, %v4502
    %v4504 = vmul.f32 %v4496, %v52
    %v4505 = vmul.f32 %v4498, %v53
    %v4506 = vadd.f32 %v4504, %v4505
    %v4507 = vmul.f32 %v4501, %v54
    %v4508 = vadd.f32 %v4506, %v4507
    %v4509 = vmax.f32 %v4503, %v4508
    %v4510 = vstv %s4495
    %v4511 = vadd.f32 %v4509, %v4510
    %v4512 = vmax.f32 %v4511, 0.0
    %s4513 = scalar_lea.vmem %s3, 5120
    %v4514 = vld [vmem:[%s4513] sm:$0xff]
    %v4515 = vld [vmem:[%s4513 + $0x8] sm:$0xff]
    %v4516 = vld [vmem:[%s4513 + $0x10] sm:$0xff]
    %v4517 = vld [vmem:[%s4513 + $0x18] sm:$0xff]
    %v4518 = vld [vmem:[%s4513 + $0x20] sm:$0xff]
    %v4519 = vld [vmem:[%s4513 + $0x28] sm:$0xff]
    %v4520 = vld [vmem:[%s4513 + $0x30] sm:$0xff]
    %v4521 = vld [vmem:[%s4513 + $0x38] sm:$0xff]
    %v4522 = vld [vmem:[%s4513 + $0x40] sm:$0xff]
    %v4523 = vld [vmem:[%s4513 + $0x48] sm:$0xff]
    %v4524 = vld [vmem:[%s4513 + $0x50] sm:$0xff]
    %v4525 = vld [vmem:[%s4513 + $0x58] sm:$0xff]
    %v4526 = vld [vmem:[%s4513 + $0x60] sm:$0xff]
    %v4527 = vld [vmem:[%s4513 + $0x68] sm:$0xff]
    %v4528 = vld [vmem:[%s4513 + $0x70] sm:$0xff]
    %v4529 = vld [vmem:[%s4513 + $0x78] sm:$0xff]
    %4530 = vmatprep.subr.mxu0 0.0
    %4531 = vmatpush1.msra.mxu0 %v4529
    %4532 = vmatprep.subr.mxu0 0.0
    %4533 = vmatpush1.msra.mxu0 %v4528
    %4534 = vmatprep.subr.mxu0 0.0
    %4535 = vmatpush1.msra.mxu0 %v4527
    %4536 = vmatprep.subr.mxu0 0.0
    %4537 = vmatpush1.msra.mxu0 %v4526
    %4538 = vmatprep.subr.mxu0 0.0
    %4539 = vmatpush1.msra.mxu0 %v4525
    %4540 = vmatprep.subr.mxu0 0.0
    %4541 = vmatpush1.msra.mxu0 %v4524
    %4542 = vmatprep.subr.mxu0 0.0
    %4543 = vmatpush1.msra.mxu0 %v4523
    %4544 = vmatprep.subr.mxu0 0.0
    %4545 = vmatpush1.msra.mxu0 %v4522
    %4546 = vmatprep.subr.mxu0 0.0
    %4547 = vmatpush1.msra.mxu0 %v4521
    %4548 = vmatprep.subr.mxu0 0.0
    %4549 = vmatpush1.msra.mxu0 %v4520
    %4550 = vmatprep.subr.mxu0 0.0
    %4551 = vmatpush1.msra.mxu0 %v4519
    %4552 = vmatprep.subr.mxu0 0.0
    %4553 = vmatpush1.msra.mxu0 %v4518
    %4554 = vmatprep.subr.mxu0 0.0
    %4555 = vmatpush1.msra.mxu0 %v4517
    %4556 = vmatprep.subr.mxu0 0.0
    %4557 = vmatpush1.msra.mxu0 %v4516
    %4558 = vmatprep.subr.mxu0 0.0
    %4559 = vmatpush1.msra.mxu0 %v4515
    %4560 = vmatprep.subr.mxu0 0.0
    %4561 = vmatpush1.msra.mxu0 %v4514
    %4562 = vmatprep.subr.mxu0 0.0
    %4563 = vmatpush2.msra.mxu0 0.0
    %4564 = vmatprep.subr.mxu0 0.0
    %4565 = vmatpush2.msra.mxu0 0.0
    %4566 = vmatprep.subr.mxu0 0.0
    %4567 = vmatpush2.msra.mxu0 0.0
    %4568 = vmatprep.subr.mxu0 0.0
    %4569 = vmatpush2.msra.mxu0 0.0
    %4570 = vmatprep.subr.mxu0 0.0
    %4571 = vmatpush2.msra.mxu0 0.0
    %4572 = vmatprep.subr.mxu0 0.0
    %4573 = vmatpush2.msra.mxu0 0.0
    %4574 = vmatprep.subr.mxu0 0.0
    %4575 = vmatpush2.msra.mxu0 0.0
    %4576 = vmatprep.subr.mxu0 0.0
    %4577 = vmatpush2.msra.mxu0 0.0
    %4578 = vmatprep.subr.mxu0 0.0
    %4579 = vmatpush2.msra.mxu0 0.0
    %4580 = vmatprep.subr.mxu0 0.0
    %4581 = vmatpush2.msra.mxu0 0.0
    %4582 = vmatprep.subr.mxu0 0.0
    %4583 = vmatpush2.msra.mxu0 0.0
    %4584 = vmatprep.subr.mxu0 0.0
    %4585 = vmatpush2.msra.mxu0 0.0
    %4586 = vmatprep.subr.mxu0 0.0
    %4587 = vmatpush2.msra.mxu0 0.0
    %4588 = vmatprep.subr.mxu0 0.0
    %4589 = vmatpush2.msra.mxu0 0.0
    %4590 = vmatprep.subr.mxu0 0.0
    %4591 = vmatpush2.msra.mxu0 0.0
    %4592 = vmatprep.subr.mxu0 0.0
    %4593 = vmatpush2.msra.mxu0 0.0
    %4594 = vmatprep.mubr.f32.mxu0 0.0
    %4595 = vmatmul.mubr.f32.gmra.mxu0 %v4512
    %v4596 = vpop.f32.mrf.mxu0
    %v4597 = vadd.f32 0.0, %v4596
    %v4598 = vpop.f32.mrf.mxu0
    %4599 = vdwg.mxu0
    %v4600 = vld [vmem:[#allocation2] sm:$0xff]
    %v4601 = vadd.f32 %v4600, %v4597
    %4602 = vst [vmem:[#allocation2] sm:$0xff] %v4601
    %s4603 = sld [smem:[#allocation3 + $0x29]]
    %s4604 = sld [smem:[#allocation3 + $0xa9]]
    %s4605 = sld [smem:[#allocation3 + $0x129]]
    %s4606 = sld [smem:[#allocation5 + $0x29]]
    %v4607 = vstv %s4603
    %v4608 = vmul.f32 %v4607, %v51
    %v4609 = vstv %s4604
    %v4610 = vmul.f32 %v4609, %v52
    %v4611 = vadd.f32 %v4608, %v4610
    %v4612 = vstv %s4605
    %v4613 = vmul.f32 %v4612, %v53
    %v4614 = vadd.f32 %v4611, %v4613
    %v4615 = vmul.f32 %v4607, %v52
    %v4616 = vmul.f32 %v4609, %v53
    %v4617 = vadd.f32 %v4615, %v4616
    %v4618 = vmul.f32 %v4612, %v54
    %v4619 = vadd.f32 %v4617, %v4618
    %v4620 = vmax.f32 %v4614, %v4619
    %v4621 = vstv %s4606
    %v4622 = vadd.f32 %v4620, %v4621
    %v4623 = vmax.f32 %v4622, 0.0
    %s4624 = scalar_lea.vmem %s3, 5248
    %v4625 = vld [vmem:[%s4624] sm:$0xff]
    %v4626 = vld [vmem:[%s4624 + $0x8] sm:$0xff]
    %v4627 = vld [vmem:[%s4624 + $0x10] sm:$0xff]
    %v4628 = vld [vmem:[%s4624 + $0x18] sm:$0xff]
    %v4629 = vld [vmem:[%s4624 + $0x20] sm:$0xff]
    %v4630 = vld [vmem:[%s4624 + $0x28] sm:$0xff]
    %v4631 = vld [vmem:[%s4624 + $0x30] sm:$0xff]
    %v4632 = vld [vmem:[%s4624 + $0x38] sm:$0xff]
    %v4633 = vld [vmem:[%s4624 + $0x40] sm:$0xff]
    %v4634 = vld [vmem:[%s4624 + $0x48] sm:$0xff]
    %v4635 = vld [vmem:[%s4624 + $0x50] sm:$0xff]
    %v4636 = vld [vmem:[%s4624 + $0x58] sm:$0xff]
    %v4637 = vld [vmem:[%s4624 + $0x60] sm:$0xff]
    %v4638 = vld [vmem:[%s4624 + $0x68] sm:$0xff]
    %v4639 = vld [vmem:[%s4624 + $0x70] sm:$0xff]
    %v4640 = vld [vmem:[%s4624 + $0x78] sm:$0xff]
    %4641 = vmatprep.subr.mxu0 0.0
    %4642 = vmatpush1.msra.mxu0 %v4640
    %4643 = vmatprep.subr.mxu0 0.0
    %4644 = vmatpush1.msra.mxu0 %v4639
    %4645 = vmatprep.subr.mxu0 0.0
    %4646 = vmatpush1.msra.mxu0 %v4638
    %4647 = vmatprep.subr.mxu0 0.0
    %4648 = vmatpush1.msra.mxu0 %v4637
    %4649 = vmatprep.subr.mxu0 0.0
    %4650 = vmatpush1.msra.mxu0 %v4636
    %4651 = vmatprep.subr.mxu0 0.0
    %4652 = vmatpush1.msra.mxu0 %v4635
    %4653 = vmatprep.subr.mxu0 0.0
    %4654 = vmatpush1.msra.mxu0 %v4634
    %4655 = vmatprep.subr.mxu0 0.0
    %4656 = vmatpush1.msra.mxu0 %v4633
    %4657 = vmatprep.subr.mxu0 0.0
    %4658 = vmatpush1.msra.mxu0 %v4632
    %4659 = vmatprep.subr.mxu0 0.0
    %4660 = vmatpush1.msra.mxu0 %v4631
    %4661 = vmatprep.subr.mxu0 0.0
    %4662 = vmatpush1.msra.mxu0 %v4630
    %4663 = vmatprep.subr.mxu0 0.0
    %4664 = vmatpush1.msra.mxu0 %v4629
    %4665 = vmatprep.subr.mxu0 0.0
    %4666 = vmatpush1.msra.mxu0 %v4628
    %4667 = vmatprep.subr.mxu0 0.0
    %4668 = vmatpush1.msra.mxu0 %v4627
    %4669 = vmatprep.subr.mxu0 0.0
    %4670 = vmatpush1.msra.mxu0 %v4626
    %4671 = vmatprep.subr.mxu0 0.0
    %4672 = vmatpush1.msra.mxu0 %v4625
    %4673 = vmatprep.subr.mxu0 0.0
    %4674 = vmatpush2.msra.mxu0 0.0
    %4675 = vmatprep.subr.mxu0 0.0
    %4676 = vmatpush2.msra.mxu0 0.0
    %4677 = vmatprep.subr.mxu0 0.0
    %4678 = vmatpush2.msra.mxu0 0.0
    %4679 = vmatprep.subr.mxu0 0.0
    %4680 = vmatpush2.msra.mxu0 0.0
    %4681 = vmatprep.subr.mxu0 0.0
    %4682 = vmatpush2.msra.mxu0 0.0
    %4683 = vmatprep.subr.mxu0 0.0
    %4684 = vmatpush2.msra.mxu0 0.0
    %4685 = vmatprep.subr.mxu0 0.0
    %4686 = vmatpush2.msra.mxu0 0.0
    %4687 = vmatprep.subr.mxu0 0.0
    %4688 = vmatpush2.msra.mxu0 0.0
    %4689 = vmatprep.subr.mxu0 0.0
    %4690 = vmatpush2.msra.mxu0 0.0
    %4691 = vmatprep.subr.mxu0 0.0
    %4692 = vmatpush2.msra.mxu0 0.0
    %4693 = vmatprep.subr.mxu0 0.0
    %4694 = vmatpush2.msra.mxu0 0.0
    %4695 = vmatprep.subr.mxu0 0.0
    %4696 = vmatpush2.msra.mxu0 0.0
    %4697 = vmatprep.subr.mxu0 0.0
    %4698 = vmatpush2.msra.mxu0 0.0
    %4699 = vmatprep.subr.mxu0 0.0
    %4700 = vmatpush2.msra.mxu0 0.0
    %4701 = vmatprep.subr.mxu0 0.0
    %4702 = vmatpush2.msra.mxu0 0.0
    %4703 = vmatprep.subr.mxu0 0.0
    %4704 = vmatpush2.msra.mxu0 0.0
    %4705 = vmatprep.mubr.f32.mxu0 0.0
    %4706 = vmatmul.mubr.f32.gmra.mxu0 %v4623
    %v4707 = vpop.f32.mrf.mxu0
    %v4708 = vadd.f32 0.0, %v4707
    %v4709 = vpop.f32.mrf.mxu0
    %4710 = vdwg.mxu0
    %v4711 = vld [vmem:[#allocation2] sm:$0xff]
    %v4712 = vadd.f32 %v4711, %v4708
    %4713 = vst [vmem:[#allocation2] sm:$0xff] %v4712
    %s4714 = sld [smem:[#allocation3 + $0x2a]]
    %s4715 = sld [smem:[#allocation3 + $0xaa]]
    %s4716 = sld [smem:[#allocation3 + $0x12a]]
    %s4717 = sld [smem:[#allocation5 + $0x2a]]
    %v4718 = vstv %s4714
    %v4719 = vmul.f32 %v4718, %v51
    %v4720 = vstv %s4715
    %v4721 = vmul.f32 %v4720, %v52
    %v4722 = vadd.f32 %v4719, %v4721
    %v4723 = vstv %s4716
    %v4724 = vmul.f32 %v4723, %v53
    %v4725 = vadd.f32 %v4722, %v4724
    %v4726 = vmul.f32 %v4718, %v52
    %v4727 = vmul.f32 %v4720, %v53
    %v4728 = vadd.f32 %v4726, %v4727
    %v4729 = vmul.f32 %v4723, %v54
    %v4730 = vadd.f32 %v4728, %v4729
    %v4731 = vmax.f32 %v4725, %v4730
    %v4732 = vstv %s4717
    %v4733 = vadd.f32 %v4731, %v4732
    %v4734 = vmax.f32 %v4733, 0.0
    %s4735 = scalar_lea.vmem %s3, 5376
    %v4736 = vld [vmem:[%s4735] sm:$0xff]
    %v4737 = vld [vmem:[%s4735 + $0x8] sm:$0xff]
    %v4738 = vld [vmem:[%s4735 + $0x10] sm:$0xff]
    %v4739 = vld [vmem:[%s4735 + $0x18] sm:$0xff]
    %v4740 = vld [vmem:[%s4735 + $0x20] sm:$0xff]
    %v4741 = vld [vmem:[%s4735 + $0x28] sm:$0xff]
    %v4742 = vld [vmem:[%s4735 + $0x30] sm:$0xff]
    %v4743 = vld [vmem:[%s4735 + $0x38] sm:$0xff]
    %v4744 = vld [vmem:[%s4735 + $0x40] sm:$0xff]
    %v4745 = vld [vmem:[%s4735 + $0x48] sm:$0xff]
    %v4746 = vld [vmem:[%s4735 + $0x50] sm:$0xff]
    %v4747 = vld [vmem:[%s4735 + $0x58] sm:$0xff]
    %v4748 = vld [vmem:[%s4735 + $0x60] sm:$0xff]
    %v4749 = vld [vmem:[%s4735 + $0x68] sm:$0xff]
    %v4750 = vld [vmem:[%s4735 + $0x70] sm:$0xff]
    %v4751 = vld [vmem:[%s4735 + $0x78] sm:$0xff]
    %4752 = vmatprep.subr.mxu0 0.0
    %4753 = vmatpush1.msra.mxu0 %v4751
    %4754 = vmatprep.subr.mxu0 0.0
    %4755 = vmatpush1.msra.mxu0 %v4750
    %4756 = vmatprep.subr.mxu0 0.0
    %4757 = vmatpush1.msra.mxu0 %v4749
    %4758 = vmatprep.subr.mxu0 0.0
    %4759 = vmatpush1.msra.mxu0 %v4748
    %4760 = vmatprep.subr.mxu0 0.0
    %4761 = vmatpush1.msra.mxu0 %v4747
    %4762 = vmatprep.subr.mxu0 0.0
    %4763 = vmatpush1.msra.mxu0 %v4746
    %4764 = vmatprep.subr.mxu0 0.0
    %4765 = vmatpush1.msra.mxu0 %v4745
    %4766 = vmatprep.subr.mxu0 0.0
    %4767 = vmatpush1.msra.mxu0 %v4744
    %4768 = vmatprep.subr.mxu0 0.0
    %4769 = vmatpush1.msra.mxu0 %v4743
    %4770 = vmatprep.subr.mxu0 0.0
    %4771 = vmatpush1.msra.mxu0 %v4742
    %4772 = vmatprep.subr.mxu0 0.0
    %4773 = vmatpush1.msra.mxu0 %v4741
    %4774 = vmatprep.subr.mxu0 0.0
    %4775 = vmatpush1.msra.mxu0 %v4740
    %4776 = vmatprep.subr.mxu0 0.0
    %4777 = vmatpush1.msra.mxu0 %v4739
    %4778 = vmatprep.subr.mxu0 0.0
    %4779 = vmatpush1.msra.mxu0 %v4738
    %4780 = vmatprep.subr.mxu0 0.0
    %4781 = vmatpush1.msra.mxu0 %v4737
    %4782 = vmatprep.subr.mxu0 0.0
    %4783 = vmatpush1.msra.mxu0 %v4736
    %4784 = vmatprep.subr.mxu0 0.0
    %4785 = vmatpush2.msra.mxu0 0.0
    %4786 = vmatprep.subr.mxu0 0.0
    %4787 = vmatpush2.msra.mxu0 0.0
    %4788 = vmatprep.subr.mxu0 0.0
    %4789 = vmatpush2.msra.mxu0 0.0
    %4790 = vmatprep.subr.mxu0 0.0
    %4791 = vmatpush2.msra.mxu0 0.0
    %4792 = vmatprep.subr.mxu0 0.0
    %4793 = vmatpush2.msra.mxu0 0.0
    %4794 = vmatprep.subr.mxu0 0.0
    %4795 = vmatpush2.msra.mxu0 0.0
    %4796 = vmatprep.subr.mxu0 0.0
    %4797 = vmatpush2.msra.mxu0 0.0
    %4798 = vmatprep.subr.mxu0 0.0
    %4799 = vmatpush2.msra.mxu0 0.0
    %4800 = vmatprep.subr.mxu0 0.0
    %4801 = vmatpush2.msra.mxu0 0.0
    %4802 = vmatprep.subr.mxu0 0.0
    %4803 = vmatpush2.msra.mxu0 0.0
    %4804 = vmatprep.subr.mxu0 0.0
    %4805 = vmatpush2.msra.mxu0 0.0
    %4806 = vmatprep.subr.mxu0 0.0
    %4807 = vmatpush2.msra.mxu0 0.0
    %4808 = vmatprep.subr.mxu0 0.0
    %4809 = vmatpush2.msra.mxu0 0.0
    %4810 = vmatprep.subr.mxu0 0.0
    %4811 = vmatpush2.msra.mxu0 0.0
    %4812 = vmatprep.subr.mxu0 0.0
    %4813 = vmatpush2.msra.mxu0 0.0
    %4814 = vmatprep.subr.mxu0 0.0
    %4815 = vmatpush2.msra.mxu0 0.0
    %4816 = vmatprep.mubr.f32.mxu0 0.0
    %4817 = vmatmul.mubr.f32.gmra.mxu0 %v4734
    %v4818 = vpop.f32.mrf.mxu0
    %v4819 = vadd.f32 0.0, %v4818
    %v4820 = vpop.f32.mrf.mxu0
    %4821 = vdwg.mxu0
    %v4822 = vld [vmem:[#allocation2] sm:$0xff]
    %v4823 = vadd.f32 %v4822, %v4819
    %4824 = vst [vmem:[#allocation2] sm:$0xff] %v4823
    %s4825 = sld [smem:[#allocation3 + $0x2b]]
    %s4826 = sld [smem:[#allocation3 + $0xab]]
    %s4827 = sld [smem:[#allocation3 + $0x12b]]
    %s4828 = sld [smem:[#allocation5 + $0x2b]]
    %v4829 = vstv %s4825
    %v4830 = vmul.f32 %v4829, %v51
    %v4831 = vstv %s4826
    %v4832 = vmul.f32 %v4831, %v52
    %v4833 = vadd.f32 %v4830, %v4832
    %v4834 = vstv %s4827
    %v4835 = vmul.f32 %v4834, %v53
    %v4836 = vadd.f32 %v4833, %v4835
    %v4837 = vmul.f32 %v4829, %v52
    %v4838 = vmul.f32 %v4831, %v53
    %v4839 = vadd.f32 %v4837, %v4838
    %v4840 = vmul.f32 %v4834, %v54
    %v4841 = vadd.f32 %v4839, %v4840
    %v4842 = vmax.f32 %v4836, %v4841
    %v4843 = vstv %s4828
    %v4844 = vadd.f32 %v4842, %v4843
    %v4845 = vmax.f32 %v4844, 0.0
    %s4846 = scalar_lea.vmem %s3, 5504
    %v4847 = vld [vmem:[%s4846] sm:$0xff]
    %v4848 = vld [vmem:[%s4846 + $0x8] sm:$0xff]
    %v4849 = vld [vmem:[%s4846 + $0x10] sm:$0xff]
    %v4850 = vld [vmem:[%s4846 + $0x18] sm:$0xff]
    %v4851 = vld [vmem:[%s4846 + $0x20] sm:$0xff]
    %v4852 = vld [vmem:[%s4846 + $0x28] sm:$0xff]
    %v4853 = vld [vmem:[%s4846 + $0x30] sm:$0xff]
    %v4854 = vld [vmem:[%s4846 + $0x38] sm:$0xff]
    %v4855 = vld [vmem:[%s4846 + $0x40] sm:$0xff]
    %v4856 = vld [vmem:[%s4846 + $0x48] sm:$0xff]
    %v4857 = vld [vmem:[%s4846 + $0x50] sm:$0xff]
    %v4858 = vld [vmem:[%s4846 + $0x58] sm:$0xff]
    %v4859 = vld [vmem:[%s4846 + $0x60] sm:$0xff]
    %v4860 = vld [vmem:[%s4846 + $0x68] sm:$0xff]
    %v4861 = vld [vmem:[%s4846 + $0x70] sm:$0xff]
    %v4862 = vld [vmem:[%s4846 + $0x78] sm:$0xff]
    %4863 = vmatprep.subr.mxu0 0.0
    %4864 = vmatpush1.msra.mxu0 %v4862
    %4865 = vmatprep.subr.mxu0 0.0
    %4866 = vmatpush1.msra.mxu0 %v4861
    %4867 = vmatprep.subr.mxu0 0.0
    %4868 = vmatpush1.msra.mxu0 %v4860
    %4869 = vmatprep.subr.mxu0 0.0
    %4870 = vmatpush1.msra.mxu0 %v4859
    %4871 = vmatprep.subr.mxu0 0.0
    %4872 = vmatpush1.msra.mxu0 %v4858
    %4873 = vmatprep.subr.mxu0 0.0
    %4874 = vmatpush1.msra.mxu0 %v4857
    %4875 = vmatprep.subr.mxu0 0.0
    %4876 = vmatpush1.msra.mxu0 %v4856
    %4877 = vmatprep.subr.mxu0 0.0
    %4878 = vmatpush1.msra.mxu0 %v4855
    %4879 = vmatprep.subr.mxu0 0.0
    %4880 = vmatpush1.msra.mxu0 %v4854
    %4881 = vmatprep.subr.mxu0 0.0
    %4882 = vmatpush1.msra.mxu0 %v4853
    %4883 = vmatprep.subr.mxu0 0.0
    %4884 = vmatpush1.msra.mxu0 %v4852
    %4885 = vmatprep.subr.mxu0 0.0
    %4886 = vmatpush1.msra.mxu0 %v4851
    %4887 = vmatprep.subr.mxu0 0.0
    %4888 = vmatpush1.msra.mxu0 %v4850
    %4889 = vmatprep.subr.mxu0 0.0
    %4890 = vmatpush1.msra.mxu0 %v4849
    %4891 = vmatprep.subr.mxu0 0.0
    %4892 = vmatpush1.msra.mxu0 %v4848
    %4893 = vmatprep.subr.mxu0 0.0
    %4894 = vmatpush1.msra.mxu0 %v4847
    %4895 = vmatprep.subr.mxu0 0.0
    %4896 = vmatpush2.msra.mxu0 0.0
    %4897 = vmatprep.subr.mxu0 0.0
    %4898 = vmatpush2.msra.mxu0 0.0
    %4899 = vmatprep.subr.mxu0 0.0
    %4900 = vmatpush2.msra.mxu0 0.0
    %4901 = vmatprep.subr.mxu0 0.0
    %4902 = vmatpush2.msra.mxu0 0.0
    %4903 = vmatprep.subr.mxu0 0.0
    %4904 = vmatpush2.msra.mxu0 0.0
    %4905 = vmatprep.subr.mxu0 0.0
    %4906 = vmatpush2.msra.mxu0 0.0
    %4907 = vmatprep.subr.mxu0 0.0
    %4908 = vmatpush2.msra.mxu0 0.0
    %4909 = vmatprep.subr.mxu0 0.0
    %4910 = vmatpush2.msra.mxu0 0.0
    %4911 = vmatprep.subr.mxu0 0.0
    %4912 = vmatpush2.msra.mxu0 0.0
    %4913 = vmatprep.subr.mxu0 0.0
    %4914 = vmatpush2.msra.mxu0 0.0
    %4915 = vmatprep.subr.mxu0 0.0
    %4916 = vmatpush2.msra.mxu0 0.0
    %4917 = vmatprep.subr.mxu0 0.0
    %4918 = vmatpush2.msra.mxu0 0.0
    %4919 = vmatprep.subr.mxu0 0.0
    %4920 = vmatpush2.msra.mxu0 0.0
    %4921 = vmatprep.subr.mxu0 0.0
    %4922 = vmatpush2.msra.mxu0 0.0
    %4923 = vmatprep.subr.mxu0 0.0
    %4924 = vmatpush2.msra.mxu0 0.0
    %4925 = vmatprep.subr.mxu0 0.0
    %4926 = vmatpush2.msra.mxu0 0.0
    %4927 = vmatprep.mubr.f32.mxu0 0.0
    %4928 = vmatmul.mubr.f32.gmra.mxu0 %v4845
    %v4929 = vpop.f32.mrf.mxu0
    %v4930 = vadd.f32 0.0, %v4929
    %v4931 = vpop.f32.mrf.mxu0
    %4932 = vdwg.mxu0
    %v4933 = vld [vmem:[#allocation2] sm:$0xff]
    %v4934 = vadd.f32 %v4933, %v4930
    %4935 = vst [vmem:[#allocation2] sm:$0xff] %v4934
    %s4936 = sld [smem:[#allocation3 + $0x2c]]
    %s4937 = sld [smem:[#allocation3 + $0xac]]
    %s4938 = sld [smem:[#allocation3 + $0x12c]]
    %s4939 = sld [smem:[#allocation5 + $0x2c]]
    %v4940 = vstv %s4936
    %v4941 = vmul.f32 %v4940, %v51
    %v4942 = vstv %s4937
    %v4943 = vmul.f32 %v4942, %v52
    %v4944 = vadd.f32 %v4941, %v4943
    %v4945 = vstv %s4938
    %v4946 = vmul.f32 %v4945, %v53
    %v4947 = vadd.f32 %v4944, %v4946
    %v4948 = vmul.f32 %v4940, %v52
    %v4949 = vmul.f32 %v4942, %v53
    %v4950 = vadd.f32 %v4948, %v4949
    %v4951 = vmul.f32 %v4945, %v54
    %v4952 = vadd.f32 %v4950, %v4951
    %v4953 = vmax.f32 %v4947, %v4952
    %v4954 = vstv %s4939
    %v4955 = vadd.f32 %v4953, %v4954
    %v4956 = vmax.f32 %v4955, 0.0
    %s4957 = scalar_lea.vmem %s3, 5632
    %v4958 = vld [vmem:[%s4957] sm:$0xff]
    %v4959 = vld [vmem:[%s4957 + $0x8] sm:$0xff]
    %v4960 = vld [vmem:[%s4957 + $0x10] sm:$0xff]
    %v4961 = vld [vmem:[%s4957 + $0x18] sm:$0xff]
    %v4962 = vld [vmem:[%s4957 + $0x20] sm:$0xff]
    %v4963 = vld [vmem:[%s4957 + $0x28] sm:$0xff]
    %v4964 = vld [vmem:[%s4957 + $0x30] sm:$0xff]
    %v4965 = vld [vmem:[%s4957 + $0x38] sm:$0xff]
    %v4966 = vld [vmem:[%s4957 + $0x40] sm:$0xff]
    %v4967 = vld [vmem:[%s4957 + $0x48] sm:$0xff]
    %v4968 = vld [vmem:[%s4957 + $0x50] sm:$0xff]
    %v4969 = vld [vmem:[%s4957 + $0x58] sm:$0xff]
    %v4970 = vld [vmem:[%s4957 + $0x60] sm:$0xff]
    %v4971 = vld [vmem:[%s4957 + $0x68] sm:$0xff]
    %v4972 = vld [vmem:[%s4957 + $0x70] sm:$0xff]
    %v4973 = vld [vmem:[%s4957 + $0x78] sm:$0xff]
    %4974 = vmatprep.subr.mxu0 0.0
    %4975 = vmatpush1.msra.mxu0 %v4973
    %4976 = vmatprep.subr.mxu0 0.0
    %4977 = vmatpush1.msra.mxu0 %v4972
    %4978 = vmatprep.subr.mxu0 0.0
    %4979 = vmatpush1.msra.mxu0 %v4971
    %4980 = vmatprep.subr.mxu0 0.0
    %4981 = vmatpush1.msra.mxu0 %v4970
    %4982 = vmatprep.subr.mxu0 0.0
    %4983 = vmatpush1.msra.mxu0 %v4969
    %4984 = vmatprep.subr.mxu0 0.0
    %4985 = vmatpush1.msra.mxu0 %v4968
    %4986 = vmatprep.subr.mxu0 0.0
    %4987 = vmatpush1.msra.mxu0 %v4967
    %4988 = vmatprep.subr.mxu0 0.0
    %4989 = vmatpush1.msra.mxu0 %v4966
    %4990 = vmatprep.subr.mxu0 0.0
    %4991 = vmatpush1.msra.mxu0 %v4965
    %4992 = vmatprep.subr.mxu0 0.0
    %4993 = vmatpush1.msra.mxu0 %v4964
    %4994 = vmatprep.subr.mxu0 0.0
    %4995 = vmatpush1.msra.mxu0 %v4963
    %4996 = vmatprep.subr.mxu0 0.0
    %4997 = vmatpush1.msra.mxu0 %v4962
    %4998 = vmatprep.subr.mxu0 0.0
    %4999 = vmatpush1.msra.mxu0 %v4961
    %5000 = vmatprep.subr.mxu0 0.0
    %5001 = vmatpush1.msra.mxu0 %v4960
    %5002 = vmatprep.subr.mxu0 0.0
    %5003 = vmatpush1.msra.mxu0 %v4959
    %5004 = vmatprep.subr.mxu0 0.0
    %5005 = vmatpush1.msra.mxu0 %v4958
    %5006 = vmatprep.subr.mxu0 0.0
    %5007 = vmatpush2.msra.mxu0 0.0
    %5008 = vmatprep.subr.mxu0 0.0
    %5009 = vmatpush2.msra.mxu0 0.0
    %5010 = vmatprep.subr.mxu0 0.0
    %5011 = vmatpush2.msra.mxu0 0.0
    %5012 = vmatprep.subr.mxu0 0.0
    %5013 = vmatpush2.msra.mxu0 0.0
    %5014 = vmatprep.subr.mxu0 0.0
    %5015 = vmatpush2.msra.mxu0 0.0
    %5016 = vmatprep.subr.mxu0 0.0
    %5017 = vmatpush2.msra.mxu0 0.0
    %5018 = vmatprep.subr.mxu0 0.0
    %5019 = vmatpush2.msra.mxu0 0.0
    %5020 = vmatprep.subr.mxu0 0.0
    %5021 = vmatpush2.msra.mxu0 0.0
    %5022 = vmatprep.subr.mxu0 0.0
    %5023 = vmatpush2.msra.mxu0 0.0
    %5024 = vmatprep.subr.mxu0 0.0
    %5025 = vmatpush2.msra.mxu0 0.0
    %5026 = vmatprep.subr.mxu0 0.0
    %5027 = vmatpush2.msra.mxu0 0.0
    %5028 = vmatprep.subr.mxu0 0.0
    %5029 = vmatpush2.msra.mxu0 0.0
    %5030 = vmatprep.subr.mxu0 0.0
    %5031 = vmatpush2.msra.mxu0 0.0
    %5032 = vmatprep.subr.mxu0 0.0
    %5033 = vmatpush2.msra.mxu0 0.0
    %5034 = vmatprep.subr.mxu0 0.0
    %5035 = vmatpush2.msra.mxu0 0.0
    %5036 = vmatprep.subr.mxu0 0.0
    %5037 = vmatpush2.msra.mxu0 0.0
    %5038 = vmatprep.mubr.f32.mxu0 0.0
    %5039 = vmatmul.mubr.f32.gmra.mxu0 %v4956
    %v5040 = vpop.f32.mrf.mxu0
    %v5041 = vadd.f32 0.0, %v5040
    %v5042 = vpop.f32.mrf.mxu0
    %5043 = vdwg.mxu0
    %v5044 = vld [vmem:[#allocation2] sm:$0xff]
    %v5045 = vadd.f32 %v5044, %v5041
    %5046 = vst [vmem:[#allocation2] sm:$0xff] %v5045
    %s5047 = sld [smem:[#allocation3 + $0x2d]]
    %s5048 = sld [smem:[#allocation3 + $0xad]]
    %s5049 = sld [smem:[#allocation3 + $0x12d]]
    %s5050 = sld [smem:[#allocation5 + $0x2d]]
    %v5051 = vstv %s5047
    %v5052 = vmul.f32 %v5051, %v51
    %v5053 = vstv %s5048
    %v5054 = vmul.f32 %v5053, %v52
    %v5055 = vadd.f32 %v5052, %v5054
    %v5056 = vstv %s5049
    %v5057 = vmul.f32 %v5056, %v53
    %v5058 = vadd.f32 %v5055, %v5057
    %v5059 = vmul.f32 %v5051, %v52
    %v5060 = vmul.f32 %v5053, %v53
    %v5061 = vadd.f32 %v5059, %v5060
    %v5062 = vmul.f32 %v5056, %v54
    %v5063 = vadd.f32 %v5061, %v5062
    %v5064 = vmax.f32 %v5058, %v5063
    %v5065 = vstv %s5050
    %v5066 = vadd.f32 %v5064, %v5065
    %v5067 = vmax.f32 %v5066, 0.0
    %s5068 = scalar_lea.vmem %s3, 5760
    %v5069 = vld [vmem:[%s5068] sm:$0xff]
    %v5070 = vld [vmem:[%s5068 + $0x8] sm:$0xff]
    %v5071 = vld [vmem:[%s5068 + $0x10] sm:$0xff]
    %v5072 = vld [vmem:[%s5068 + $0x18] sm:$0xff]
    %v5073 = vld [vmem:[%s5068 + $0x20] sm:$0xff]
    %v5074 = vld [vmem:[%s5068 + $0x28] sm:$0xff]
    %v5075 = vld [vmem:[%s5068 + $0x30] sm:$0xff]
    %v5076 = vld [vmem:[%s5068 + $0x38] sm:$0xff]
    %v5077 = vld [vmem:[%s5068 + $0x40] sm:$0xff]
    %v5078 = vld [vmem:[%s5068 + $0x48] sm:$0xff]
    %v5079 = vld [vmem:[%s5068 + $0x50] sm:$0xff]
    %v5080 = vld [vmem:[%s5068 + $0x58] sm:$0xff]
    %v5081 = vld [vmem:[%s5068 + $0x60] sm:$0xff]
    %v5082 = vld [vmem:[%s5068 + $0x68] sm:$0xff]
    %v5083 = vld [vmem:[%s5068 + $0x70] sm:$0xff]
    %v5084 = vld [vmem:[%s5068 + $0x78] sm:$0xff]
    %5085 = vmatprep.subr.mxu0 0.0
    %5086 = vmatpush1.msra.mxu0 %v5084
    %5087 = vmatprep.subr.mxu0 0.0
    %5088 = vmatpush1.msra.mxu0 %v5083
    %5089 = vmatprep.subr.mxu0 0.0
    %5090 = vmatpush1.msra.mxu0 %v5082
    %5091 = vmatprep.subr.mxu0 0.0
    %5092 = vmatpush1.msra.mxu0 %v5081
    %5093 = vmatprep.subr.mxu0 0.0
    %5094 = vmatpush1.msra.mxu0 %v5080
    %5095 = vmatprep.subr.mxu0 0.0
    %5096 = vmatpush1.msra.mxu0 %v5079
    %5097 = vmatprep.subr.mxu0 0.0
    %5098 = vmatpush1.msra.mxu0 %v5078
    %5099 = vmatprep.subr.mxu0 0.0
    %5100 = vmatpush1.msra.mxu0 %v5077
    %5101 = vmatprep.subr.mxu0 0.0
    %5102 = vmatpush1.msra.mxu0 %v5076
    %5103 = vmatprep.subr.mxu0 0.0
    %5104 = vmatpush1.msra.mxu0 %v5075
    %5105 = vmatprep.subr.mxu0 0.0
    %5106 = vmatpush1.msra.mxu0 %v5074
    %5107 = vmatprep.subr.mxu0 0.0
    %5108 = vmatpush1.msra.mxu0 %v5073
    %5109 = vmatprep.subr.mxu0 0.0
    %5110 = vmatpush1.msra.mxu0 %v5072
    %5111 = vmatprep.subr.mxu0 0.0
    %5112 = vmatpush1.msra.mxu0 %v5071
    %5113 = vmatprep.subr.mxu0 0.0
    %5114 = vmatpush1.msra.mxu0 %v5070
    %5115 = vmatprep.subr.mxu0 0.0
    %5116 = vmatpush1.msra.mxu0 %v5069
    %5117 = vmatprep.subr.mxu0 0.0
    %5118 = vmatpush2.msra.mxu0 0.0
    %5119 = vmatprep.subr.mxu0 0.0
    %5120 = vmatpush2.msra.mxu0 0.0
    %5121 = vmatprep.subr.mxu0 0.0
    %5122 = vmatpush2.msra.mxu0 0.0
    %5123 = vmatprep.subr.mxu0 0.0
    %5124 = vmatpush2.msra.mxu0 0.0
    %5125 = vmatprep.subr.mxu0 0.0
    %5126 = vmatpush2.msra.mxu0 0.0
    %5127 = vmatprep.subr.mxu0 0.0
    %5128 = vmatpush2.msra.mxu0 0.0
    %5129 = vmatprep.subr.mxu0 0.0
    %5130 = vmatpush2.msra.mxu0 0.0
    %5131 = vmatprep.subr.mxu0 0.0
    %5132 = vmatpush2.msra.mxu0 0.0
    %5133 = vmatprep.subr.mxu0 0.0
    %5134 = vmatpush2.msra.mxu0 0.0
    %5135 = vmatprep.subr.mxu0 0.0
    %5136 = vmatpush2.msra.mxu0 0.0
    %5137 = vmatprep.subr.mxu0 0.0
    %5138 = vmatpush2.msra.mxu0 0.0
    %5139 = vmatprep.subr.mxu0 0.0
    %5140 = vmatpush2.msra.mxu0 0.0
    %5141 = vmatprep.subr.mxu0 0.0
    %5142 = vmatpush2.msra.mxu0 0.0
    %5143 = vmatprep.subr.mxu0 0.0
    %5144 = vmatpush2.msra.mxu0 0.0
    %5145 = vmatprep.subr.mxu0 0.0
    %5146 = vmatpush2.msra.mxu0 0.0
    %5147 = vmatprep.subr.mxu0 0.0
    %5148 = vmatpush2.msra.mxu0 0.0
    %5149 = vmatprep.mubr.f32.mxu0 0.0
    %5150 = vmatmul.mubr.f32.gmra.mxu0 %v5067
    %v5151 = vpop.f32.mrf.mxu0
    %v5152 = vadd.f32 0.0, %v5151
    %v5153 = vpop.f32.mrf.mxu0
    %5154 = vdwg.mxu0
    %v5155 = vld [vmem:[#allocation2] sm:$0xff]
    %v5156 = vadd.f32 %v5155, %v5152
    %5157 = vst [vmem:[#allocation2] sm:$0xff] %v5156
    %s5158 = sld [smem:[#allocation3 + $0x2e]]
    %s5159 = sld [smem:[#allocation3 + $0xae]]
    %s5160 = sld [smem:[#allocation3 + $0x12e]]
    %s5161 = sld [smem:[#allocation5 + $0x2e]]
    %v5162 = vstv %s5158
    %v5163 = vmul.f32 %v5162, %v51
    %v5164 = vstv %s5159
    %v5165 = vmul.f32 %v5164, %v52
    %v5166 = vadd.f32 %v5163, %v5165
    %v5167 = vstv %s5160
    %v5168 = vmul.f32 %v5167, %v53
    %v5169 = vadd.f32 %v5166, %v5168
    %v5170 = vmul.f32 %v5162, %v52
    %v5171 = vmul.f32 %v5164, %v53
    %v5172 = vadd.f32 %v5170, %v5171
    %v5173 = vmul.f32 %v5167, %v54
    %v5174 = vadd.f32 %v5172, %v5173
    %v5175 = vmax.f32 %v5169, %v5174
    %v5176 = vstv %s5161
    %v5177 = vadd.f32 %v5175, %v5176
    %v5178 = vmax.f32 %v5177, 0.0
    %s5179 = scalar_lea.vmem %s3, 5888
    %v5180 = vld [vmem:[%s5179] sm:$0xff]
    %v5181 = vld [vmem:[%s5179 + $0x8] sm:$0xff]
    %v5182 = vld [vmem:[%s5179 + $0x10] sm:$0xff]
    %v5183 = vld [vmem:[%s5179 + $0x18] sm:$0xff]
    %v5184 = vld [vmem:[%s5179 + $0x20] sm:$0xff]
    %v5185 = vld [vmem:[%s5179 + $0x28] sm:$0xff]
    %v5186 = vld [vmem:[%s5179 + $0x30] sm:$0xff]
    %v5187 = vld [vmem:[%s5179 + $0x38] sm:$0xff]
    %v5188 = vld [vmem:[%s5179 + $0x40] sm:$0xff]
    %v5189 = vld [vmem:[%s5179 + $0x48] sm:$0xff]
    %v5190 = vld [vmem:[%s5179 + $0x50] sm:$0xff]
    %v5191 = vld [vmem:[%s5179 + $0x58] sm:$0xff]
    %v5192 = vld [vmem:[%s5179 + $0x60] sm:$0xff]
    %v5193 = vld [vmem:[%s5179 + $0x68] sm:$0xff]
    %v5194 = vld [vmem:[%s5179 + $0x70] sm:$0xff]
    %v5195 = vld [vmem:[%s5179 + $0x78] sm:$0xff]
    %5196 = vmatprep.subr.mxu0 0.0
    %5197 = vmatpush1.msra.mxu0 %v5195
    %5198 = vmatprep.subr.mxu0 0.0
    %5199 = vmatpush1.msra.mxu0 %v5194
    %5200 = vmatprep.subr.mxu0 0.0
    %5201 = vmatpush1.msra.mxu0 %v5193
    %5202 = vmatprep.subr.mxu0 0.0
    %5203 = vmatpush1.msra.mxu0 %v5192
    %5204 = vmatprep.subr.mxu0 0.0
    %5205 = vmatpush1.msra.mxu0 %v5191
    %5206 = vmatprep.subr.mxu0 0.0
    %5207 = vmatpush1.msra.mxu0 %v5190
    %5208 = vmatprep.subr.mxu0 0.0
    %5209 = vmatpush1.msra.mxu0 %v5189
    %5210 = vmatprep.subr.mxu0 0.0
    %5211 = vmatpush1.msra.mxu0 %v5188
    %5212 = vmatprep.subr.mxu0 0.0
    %5213 = vmatpush1.msra.mxu0 %v5187
    %5214 = vmatprep.subr.mxu0 0.0
    %5215 = vmatpush1.msra.mxu0 %v5186
    %5216 = vmatprep.subr.mxu0 0.0
    %5217 = vmatpush1.msra.mxu0 %v5185
    %5218 = vmatprep.subr.mxu0 0.0
    %5219 = vmatpush1.msra.mxu0 %v5184
    %5220 = vmatprep.subr.mxu0 0.0
    %5221 = vmatpush1.msra.mxu0 %v5183
    %5222 = vmatprep.subr.mxu0 0.0
    %5223 = vmatpush1.msra.mxu0 %v5182
    %5224 = vmatprep.subr.mxu0 0.0
    %5225 = vmatpush1.msra.mxu0 %v5181
    %5226 = vmatprep.subr.mxu0 0.0
    %5227 = vmatpush1.msra.mxu0 %v5180
    %5228 = vmatprep.subr.mxu0 0.0
    %5229 = vmatpush2.msra.mxu0 0.0
    %5230 = vmatprep.subr.mxu0 0.0
    %5231 = vmatpush2.msra.mxu0 0.0
    %5232 = vmatprep.subr.mxu0 0.0
    %5233 = vmatpush2.msra.mxu0 0.0
    %5234 = vmatprep.subr.mxu0 0.0
    %5235 = vmatpush2.msra.mxu0 0.0
    %5236 = vmatprep.subr.mxu0 0.0
    %5237 = vmatpush2.msra.mxu0 0.0
    %5238 = vmatprep.subr.mxu0 0.0
    %5239 = vmatpush2.msra.mxu0 0.0
    %5240 = vmatprep.subr.mxu0 0.0
    %5241 = vmatpush2.msra.mxu0 0.0
    %5242 = vmatprep.subr.mxu0 0.0
    %5243 = vmatpush2.msra.mxu0 0.0
    %5244 = vmatprep.subr.mxu0 0.0
    %5245 = vmatpush2.msra.mxu0 0.0
    %5246 = vmatprep.subr.mxu0 0.0
    %5247 = vmatpush2.msra.mxu0 0.0
    %5248 = vmatprep.subr.mxu0 0.0
    %5249 = vmatpush2.msra.mxu0 0.0
    %5250 = vmatprep.subr.mxu0 0.0
    %5251 = vmatpush2.msra.mxu0 0.0
    %5252 = vmatprep.subr.mxu0 0.0
    %5253 = vmatpush2.msra.mxu0 0.0
    %5254 = vmatprep.subr.mxu0 0.0
    %5255 = vmatpush2.msra.mxu0 0.0
    %5256 = vmatprep.subr.mxu0 0.0
    %5257 = vmatpush2.msra.mxu0 0.0
    %5258 = vmatprep.subr.mxu0 0.0
    %5259 = vmatpush2.msra.mxu0 0.0
    %5260 = vmatprep.mubr.f32.mxu0 0.0
    %5261 = vmatmul.mubr.f32.gmra.mxu0 %v5178
    %v5262 = vpop.f32.mrf.mxu0
    %v5263 = vadd.f32 0.0, %v5262
    %v5264 = vpop.f32.mrf.mxu0
    %5265 = vdwg.mxu0
    %v5266 = vld [vmem:[#allocation2] sm:$0xff]
    %v5267 = vadd.f32 %v5266, %v5263
    %5268 = vst [vmem:[#allocation2] sm:$0xff] %v5267
    %s5269 = sld [smem:[#allocation3 + $0x2f]]
    %s5270 = sld [smem:[#allocation3 + $0xaf]]
    %s5271 = sld [smem:[#allocation3 + $0x12f]]
    %s5272 = sld [smem:[#allocation5 + $0x2f]]
    %v5273 = vstv %s5269
    %v5274 = vmul.f32 %v5273, %v51
    %v5275 = vstv %s5270
    %v5276 = vmul.f32 %v5275, %v52
    %v5277 = vadd.f32 %v5274, %v5276
    %v5278 = vstv %s5271
    %v5279 = vmul.f32 %v5278, %v53
    %v5280 = vadd.f32 %v5277, %v5279
    %v5281 = vmul.f32 %v5273, %v52
    %v5282 = vmul.f32 %v5275, %v53
    %v5283 = vadd.f32 %v5281, %v5282
    %v5284 = vmul.f32 %v5278, %v54
    %v5285 = vadd.f32 %v5283, %v5284
    %v5286 = vmax.f32 %v5280, %v5285
    %v5287 = vstv %s5272
    %v5288 = vadd.f32 %v5286, %v5287
    %v5289 = vmax.f32 %v5288, 0.0
    %s5290 = scalar_lea.vmem %s3, 6016
    %v5291 = vld [vmem:[%s5290] sm:$0xff]
    %v5292 = vld [vmem:[%s5290 + $0x8] sm:$0xff]
    %v5293 = vld [vmem:[%s5290 + $0x10] sm:$0xff]
    %v5294 = vld [vmem:[%s5290 + $0x18] sm:$0xff]
    %v5295 = vld [vmem:[%s5290 + $0x20] sm:$0xff]
    %v5296 = vld [vmem:[%s5290 + $0x28] sm:$0xff]
    %v5297 = vld [vmem:[%s5290 + $0x30] sm:$0xff]
    %v5298 = vld [vmem:[%s5290 + $0x38] sm:$0xff]
    %v5299 = vld [vmem:[%s5290 + $0x40] sm:$0xff]
    %v5300 = vld [vmem:[%s5290 + $0x48] sm:$0xff]
    %v5301 = vld [vmem:[%s5290 + $0x50] sm:$0xff]
    %v5302 = vld [vmem:[%s5290 + $0x58] sm:$0xff]
    %v5303 = vld [vmem:[%s5290 + $0x60] sm:$0xff]
    %v5304 = vld [vmem:[%s5290 + $0x68] sm:$0xff]
    %v5305 = vld [vmem:[%s5290 + $0x70] sm:$0xff]
    %v5306 = vld [vmem:[%s5290 + $0x78] sm:$0xff]
    %5307 = vmatprep.subr.mxu0 0.0
    %5308 = vmatpush1.msra.mxu0 %v5306
    %5309 = vmatprep.subr.mxu0 0.0
    %5310 = vmatpush1.msra.mxu0 %v5305
    %5311 = vmatprep.subr.mxu0 0.0
    %5312 = vmatpush1.msra.mxu0 %v5304
    %5313 = vmatprep.subr.mxu0 0.0
    %5314 = vmatpush1.msra.mxu0 %v5303
    %5315 = vmatprep.subr.mxu0 0.0
    %5316 = vmatpush1.msra.mxu0 %v5302
    %5317 = vmatprep.subr.mxu0 0.0
    %5318 = vmatpush1.msra.mxu0 %v5301
    %5319 = vmatprep.subr.mxu0 0.0
    %5320 = vmatpush1.msra.mxu0 %v5300
    %5321 = vmatprep.subr.mxu0 0.0
    %5322 = vmatpush1.msra.mxu0 %v5299
    %5323 = vmatprep.subr.mxu0 0.0
    %5324 = vmatpush1.msra.mxu0 %v5298
    %5325 = vmatprep.subr.mxu0 0.0
    %5326 = vmatpush1.msra.mxu0 %v5297
    %5327 = vmatprep.subr.mxu0 0.0
    %5328 = vmatpush1.msra.mxu0 %v5296
    %5329 = vmatprep.subr.mxu0 0.0
    %5330 = vmatpush1.msra.mxu0 %v5295
    %5331 = vmatprep.subr.mxu0 0.0
    %5332 = vmatpush1.msra.mxu0 %v5294
    %5333 = vmatprep.subr.mxu0 0.0
    %5334 = vmatpush1.msra.mxu0 %v5293
    %5335 = vmatprep.subr.mxu0 0.0
    %5336 = vmatpush1.msra.mxu0 %v5292
    %5337 = vmatprep.subr.mxu0 0.0
    %5338 = vmatpush1.msra.mxu0 %v5291
    %5339 = vmatprep.subr.mxu0 0.0
    %5340 = vmatpush2.msra.mxu0 0.0
    %5341 = vmatprep.subr.mxu0 0.0
    %5342 = vmatpush2.msra.mxu0 0.0
    %5343 = vmatprep.subr.mxu0 0.0
    %5344 = vmatpush2.msra.mxu0 0.0
    %5345 = vmatprep.subr.mxu0 0.0
    %5346 = vmatpush2.msra.mxu0 0.0
    %5347 = vmatprep.subr.mxu0 0.0
    %5348 = vmatpush2.msra.mxu0 0.0
    %5349 = vmatprep.subr.mxu0 0.0
    %5350 = vmatpush2.msra.mxu0 0.0
    %5351 = vmatprep.subr.mxu0 0.0
    %5352 = vmatpush2.msra.mxu0 0.0
    %5353 = vmatprep.subr.mxu0 0.0
    %5354 = vmatpush2.msra.mxu0 0.0
    %5355 = vmatprep.subr.mxu0 0.0
    %5356 = vmatpush2.msra.mxu0 0.0
    %5357 = vmatprep.subr.mxu0 0.0
    %5358 = vmatpush2.msra.mxu0 0.0
    %5359 = vmatprep.subr.mxu0 0.0
    %5360 = vmatpush2.msra.mxu0 0.0
    %5361 = vmatprep.subr.mxu0 0.0
    %5362 = vmatpush2.msra.mxu0 0.0
    %5363 = vmatprep.subr.mxu0 0.0
    %5364 = vmatpush2.msra.mxu0 0.0
    %5365 = vmatprep.subr.mxu0 0.0
    %5366 = vmatpush2.msra.mxu0 0.0
    %5367 = vmatprep.subr.mxu0 0.0
    %5368 = vmatpush2.msra.mxu0 0.0
    %5369 = vmatprep.subr.mxu0 0.0
    %5370 = vmatpush2.msra.mxu0 0.0
    %5371 = vmatprep.mubr.f32.mxu0 0.0
    %5372 = vmatmul.mubr.f32.gmra.mxu0 %v5289
    %v5373 = vpop.f32.mrf.mxu0
    %v5374 = vadd.f32 0.0, %v5373
    %v5375 = vpop.f32.mrf.mxu0
    %5376 = vdwg.mxu0
    %v5377 = vld [vmem:[#allocation2] sm:$0xff]
    %v5378 = vadd.f32 %v5377, %v5374
    %5379 = vst [vmem:[#allocation2] sm:$0xff] %v5378
    %s5380 = sld [smem:[#allocation3 + $0x30]]
    %s5381 = sld [smem:[#allocation3 + $0xb0]]
    %s5382 = sld [smem:[#allocation3 + $0x130]]
    %s5383 = sld [smem:[#allocation5 + $0x30]]
    %v5384 = vstv %s5380
    %v5385 = vmul.f32 %v5384, %v51
    %v5386 = vstv %s5381
    %v5387 = vmul.f32 %v5386, %v52
    %v5388 = vadd.f32 %v5385, %v5387
    %v5389 = vstv %s5382
    %v5390 = vmul.f32 %v5389, %v53
    %v5391 = vadd.f32 %v5388, %v5390
    %v5392 = vmul.f32 %v5384, %v52
    %v5393 = vmul.f32 %v5386, %v53
    %v5394 = vadd.f32 %v5392, %v5393
    %v5395 = vmul.f32 %v5389, %v54
    %v5396 = vadd.f32 %v5394, %v5395
    %v5397 = vmax.f32 %v5391, %v5396
    %v5398 = vstv %s5383
    %v5399 = vadd.f32 %v5397, %v5398
    %v5400 = vmax.f32 %v5399, 0.0
    %s5401 = scalar_lea.vmem %s3, 6144
    %v5402 = vld [vmem:[%s5401] sm:$0xff]
    %v5403 = vld [vmem:[%s5401 + $0x8] sm:$0xff]
    %v5404 = vld [vmem:[%s5401 + $0x10] sm:$0xff]
    %v5405 = vld [vmem:[%s5401 + $0x18] sm:$0xff]
    %v5406 = vld [vmem:[%s5401 + $0x20] sm:$0xff]
    %v5407 = vld [vmem:[%s5401 + $0x28] sm:$0xff]
    %v5408 = vld [vmem:[%s5401 + $0x30] sm:$0xff]
    %v5409 = vld [vmem:[%s5401 + $0x38] sm:$0xff]
    %v5410 = vld [vmem:[%s5401 + $0x40] sm:$0xff]
    %v5411 = vld [vmem:[%s5401 + $0x48] sm:$0xff]
    %v5412 = vld [vmem:[%s5401 + $0x50] sm:$0xff]
    %v5413 = vld [vmem:[%s5401 + $0x58] sm:$0xff]
    %v5414 = vld [vmem:[%s5401 + $0x60] sm:$0xff]
    %v5415 = vld [vmem:[%s5401 + $0x68] sm:$0xff]
    %v5416 = vld [vmem:[%s5401 + $0x70] sm:$0xff]
    %v5417 = vld [vmem:[%s5401 + $0x78] sm:$0xff]
    %5418 = vmatprep.subr.mxu0 0.0
    %5419 = vmatpush1.msra.mxu0 %v5417
    %5420 = vmatprep.subr.mxu0 0.0
    %5421 = vmatpush1.msra.mxu0 %v5416
    %5422 = vmatprep.subr.mxu0 0.0
    %5423 = vmatpush1.msra.mxu0 %v5415
    %5424 = vmatprep.subr.mxu0 0.0
    %5425 = vmatpush1.msra.mxu0 %v5414
    %5426 = vmatprep.subr.mxu0 0.0
    %5427 = vmatpush1.msra.mxu0 %v5413
    %5428 = vmatprep.subr.mxu0 0.0
    %5429 = vmatpush1.msra.mxu0 %v5412
    %5430 = vmatprep.subr.mxu0 0.0
    %5431 = vmatpush1.msra.mxu0 %v5411
    %5432 = vmatprep.subr.mxu0 0.0
    %5433 = vmatpush1.msra.mxu0 %v5410
    %5434 = vmatprep.subr.mxu0 0.0
    %5435 = vmatpush1.msra.mxu0 %v5409
    %5436 = vmatprep.subr.mxu0 0.0
    %5437 = vmatpush1.msra.mxu0 %v5408
    %5438 = vmatprep.subr.mxu0 0.0
    %5439 = vmatpush1.msra.mxu0 %v5407
    %5440 = vmatprep.subr.mxu0 0.0
    %5441 = vmatpush1.msra.mxu0 %v5406
    %5442 = vmatprep.subr.mxu0 0.0
    %5443 = vmatpush1.msra.mxu0 %v5405
    %5444 = vmatprep.subr.mxu0 0.0
    %5445 = vmatpush1.msra.mxu0 %v5404
    %5446 = vmatprep.subr.mxu0 0.0
    %5447 = vmatpush1.msra.mxu0 %v5403
    %5448 = vmatprep.subr.mxu0 0.0
    %5449 = vmatpush1.msra.mxu0 %v5402
    %5450 = vmatprep.subr.mxu0 0.0
    %5451 = vmatpush2.msra.mxu0 0.0
    %5452 = vmatprep.subr.mxu0 0.0
    %5453 = vmatpush2.msra.mxu0 0.0
    %5454 = vmatprep.subr.mxu0 0.0
    %5455 = vmatpush2.msra.mxu0 0.0
    %5456 = vmatprep.subr.mxu0 0.0
    %5457 = vmatpush2.msra.mxu0 0.0
    %5458 = vmatprep.subr.mxu0 0.0
    %5459 = vmatpush2.msra.mxu0 0.0
    %5460 = vmatprep.subr.mxu0 0.0
    %5461 = vmatpush2.msra.mxu0 0.0
    %5462 = vmatprep.subr.mxu0 0.0
    %5463 = vmatpush2.msra.mxu0 0.0
    %5464 = vmatprep.subr.mxu0 0.0
    %5465 = vmatpush2.msra.mxu0 0.0
    %5466 = vmatprep.subr.mxu0 0.0
    %5467 = vmatpush2.msra.mxu0 0.0
    %5468 = vmatprep.subr.mxu0 0.0
    %5469 = vmatpush2.msra.mxu0 0.0
    %5470 = vmatprep.subr.mxu0 0.0
    %5471 = vmatpush2.msra.mxu0 0.0
    %5472 = vmatprep.subr.mxu0 0.0
    %5473 = vmatpush2.msra.mxu0 0.0
    %5474 = vmatprep.subr.mxu0 0.0
    %5475 = vmatpush2.msra.mxu0 0.0
    %5476 = vmatprep.subr.mxu0 0.0
    %5477 = vmatpush2.msra.mxu0 0.0
    %5478 = vmatprep.subr.mxu0 0.0
    %5479 = vmatpush2.msra.mxu0 0.0
    %5480 = vmatprep.subr.mxu0 0.0
    %5481 = vmatpush2.msra.mxu0 0.0
    %5482 = vmatprep.mubr.f32.mxu0 0.0
    %5483 = vmatmul.mubr.f32.gmra.mxu0 %v5400
    %v5484 = vpop.f32.mrf.mxu0
    %v5485 = vadd.f32 0.0, %v5484
    %v5486 = vpop.f32.mrf.mxu0
    %5487 = vdwg.mxu0
    %v5488 = vld [vmem:[#allocation2] sm:$0xff]
    %v5489 = vadd.f32 %v5488, %v5485
    %5490 = vst [vmem:[#allocation2] sm:$0xff] %v5489
    %s5491 = sld [smem:[#allocation3 + $0x31]]
    %s5492 = sld [smem:[#allocation3 + $0xb1]]
    %s5493 = sld [smem:[#allocation3 + $0x131]]
    %s5494 = sld [smem:[#allocation5 + $0x31]]
    %v5495 = vstv %s5491
    %v5496 = vmul.f32 %v5495, %v51
    %v5497 = vstv %s5492
    %v5498 = vmul.f32 %v5497, %v52
    %v5499 = vadd.f32 %v5496, %v5498
    %v5500 = vstv %s5493
    %v5501 = vmul.f32 %v5500, %v53
    %v5502 = vadd.f32 %v5499, %v5501
    %v5503 = vmul.f32 %v5495, %v52
    %v5504 = vmul.f32 %v5497, %v53
    %v5505 = vadd.f32 %v5503, %v5504
    %v5506 = vmul.f32 %v5500, %v54
    %v5507 = vadd.f32 %v5505, %v5506
    %v5508 = vmax.f32 %v5502, %v5507
    %v5509 = vstv %s5494
    %v5510 = vadd.f32 %v5508, %v5509
    %v5511 = vmax.f32 %v5510, 0.0
    %s5512 = scalar_lea.vmem %s3, 6272
    %v5513 = vld [vmem:[%s5512] sm:$0xff]
    %v5514 = vld [vmem:[%s5512 + $0x8] sm:$0xff]
    %v5515 = vld [vmem:[%s5512 + $0x10] sm:$0xff]
    %v5516 = vld [vmem:[%s5512 + $0x18] sm:$0xff]
    %v5517 = vld [vmem:[%s5512 + $0x20] sm:$0xff]
    %v5518 = vld [vmem:[%s5512 + $0x28] sm:$0xff]
    %v5519 = vld [vmem:[%s5512 + $0x30] sm:$0xff]
    %v5520 = vld [vmem:[%s5512 + $0x38] sm:$0xff]
    %v5521 = vld [vmem:[%s5512 + $0x40] sm:$0xff]
    %v5522 = vld [vmem:[%s5512 + $0x48] sm:$0xff]
    %v5523 = vld [vmem:[%s5512 + $0x50] sm:$0xff]
    %v5524 = vld [vmem:[%s5512 + $0x58] sm:$0xff]
    %v5525 = vld [vmem:[%s5512 + $0x60] sm:$0xff]
    %v5526 = vld [vmem:[%s5512 + $0x68] sm:$0xff]
    %v5527 = vld [vmem:[%s5512 + $0x70] sm:$0xff]
    %v5528 = vld [vmem:[%s5512 + $0x78] sm:$0xff]
    %5529 = vmatprep.subr.mxu0 0.0
    %5530 = vmatpush1.msra.mxu0 %v5528
    %5531 = vmatprep.subr.mxu0 0.0
    %5532 = vmatpush1.msra.mxu0 %v5527
    %5533 = vmatprep.subr.mxu0 0.0
    %5534 = vmatpush1.msra.mxu0 %v5526
    %5535 = vmatprep.subr.mxu0 0.0
    %5536 = vmatpush1.msra.mxu0 %v5525
    %5537 = vmatprep.subr.mxu0 0.0
    %5538 = vmatpush1.msra.mxu0 %v5524
    %5539 = vmatprep.subr.mxu0 0.0
    %5540 = vmatpush1.msra.mxu0 %v5523
    %5541 = vmatprep.subr.mxu0 0.0
    %5542 = vmatpush1.msra.mxu0 %v5522
    %5543 = vmatprep.subr.mxu0 0.0
    %5544 = vmatpush1.msra.mxu0 %v5521
    %5545 = vmatprep.subr.mxu0 0.0
    %5546 = vmatpush1.msra.mxu0 %v5520
    %5547 = vmatprep.subr.mxu0 0.0
    %5548 = vmatpush1.msra.mxu0 %v5519
    %5549 = vmatprep.subr.mxu0 0.0
    %5550 = vmatpush1.msra.mxu0 %v5518
    %5551 = vmatprep.subr.mxu0 0.0
    %5552 = vmatpush1.msra.mxu0 %v5517
    %5553 = vmatprep.subr.mxu0 0.0
    %5554 = vmatpush1.msra.mxu0 %v5516
    %5555 = vmatprep.subr.mxu0 0.0
    %5556 = vmatpush1.msra.mxu0 %v5515
    %5557 = vmatprep.subr.mxu0 0.0
    %5558 = vmatpush1.msra.mxu0 %v5514
    %5559 = vmatprep.subr.mxu0 0.0
    %5560 = vmatpush1.msra.mxu0 %v5513
    %5561 = vmatprep.subr.mxu0 0.0
    %5562 = vmatpush2.msra.mxu0 0.0
    %5563 = vmatprep.subr.mxu0 0.0
    %5564 = vmatpush2.msra.mxu0 0.0
    %5565 = vmatprep.subr.mxu0 0.0
    %5566 = vmatpush2.msra.mxu0 0.0
    %5567 = vmatprep.subr.mxu0 0.0
    %5568 = vmatpush2.msra.mxu0 0.0
    %5569 = vmatprep.subr.mxu0 0.0
    %5570 = vmatpush2.msra.mxu0 0.0
    %5571 = vmatprep.subr.mxu0 0.0
    %5572 = vmatpush2.msra.mxu0 0.0
    %5573 = vmatprep.subr.mxu0 0.0
    %5574 = vmatpush2.msra.mxu0 0.0
    %5575 = vmatprep.subr.mxu0 0.0
    %5576 = vmatpush2.msra.mxu0 0.0
    %5577 = vmatprep.subr.mxu0 0.0
    %5578 = vmatpush2.msra.mxu0 0.0
    %5579 = vmatprep.subr.mxu0 0.0
    %5580 = vmatpush2.msra.mxu0 0.0
    %5581 = vmatprep.subr.mxu0 0.0
    %5582 = vmatpush2.msra.mxu0 0.0
    %5583 = vmatprep.subr.mxu0 0.0
    %5584 = vmatpush2.msra.mxu0 0.0
    %5585 = vmatprep.subr.mxu0 0.0
    %5586 = vmatpush2.msra.mxu0 0.0
    %5587 = vmatprep.subr.mxu0 0.0
    %5588 = vmatpush2.msra.mxu0 0.0
    %5589 = vmatprep.subr.mxu0 0.0
    %5590 = vmatpush2.msra.mxu0 0.0
    %5591 = vmatprep.subr.mxu0 0.0
    %5592 = vmatpush2.msra.mxu0 0.0
    %5593 = vmatprep.mubr.f32.mxu0 0.0
    %5594 = vmatmul.mubr.f32.gmra.mxu0 %v5511
    %v5595 = vpop.f32.mrf.mxu0
    %v5596 = vadd.f32 0.0, %v5595
    %v5597 = vpop.f32.mrf.mxu0
    %5598 = vdwg.mxu0
    %v5599 = vld [vmem:[#allocation2] sm:$0xff]
    %v5600 = vadd.f32 %v5599, %v5596
    %5601 = vst [vmem:[#allocation2] sm:$0xff] %v5600
    %s5602 = sld [smem:[#allocation3 + $0x32]]
    %s5603 = sld [smem:[#allocation3 + $0xb2]]
    %s5604 = sld [smem:[#allocation3 + $0x132]]
    %s5605 = sld [smem:[#allocation5 + $0x32]]
    %v5606 = vstv %s5602
    %v5607 = vmul.f32 %v5606, %v51
    %v5608 = vstv %s5603
    %v5609 = vmul.f32 %v5608, %v52
    %v5610 = vadd.f32 %v5607, %v5609
    %v5611 = vstv %s5604
    %v5612 = vmul.f32 %v5611, %v53
    %v5613 = vadd.f32 %v5610, %v5612
    %v5614 = vmul.f32 %v5606, %v52
    %v5615 = vmul.f32 %v5608, %v53
    %v5616 = vadd.f32 %v5614, %v5615
    %v5617 = vmul.f32 %v5611, %v54
    %v5618 = vadd.f32 %v5616, %v5617
    %v5619 = vmax.f32 %v5613, %v5618
    %v5620 = vstv %s5605
    %v5621 = vadd.f32 %v5619, %v5620
    %v5622 = vmax.f32 %v5621, 0.0
    %s5623 = scalar_lea.vmem %s3, 6400
    %v5624 = vld [vmem:[%s5623] sm:$0xff]
    %v5625 = vld [vmem:[%s5623 + $0x8] sm:$0xff]
    %v5626 = vld [vmem:[%s5623 + $0x10] sm:$0xff]
    %v5627 = vld [vmem:[%s5623 + $0x18] sm:$0xff]
    %v5628 = vld [vmem:[%s5623 + $0x20] sm:$0xff]
    %v5629 = vld [vmem:[%s5623 + $0x28] sm:$0xff]
    %v5630 = vld [vmem:[%s5623 + $0x30] sm:$0xff]
    %v5631 = vld [vmem:[%s5623 + $0x38] sm:$0xff]
    %v5632 = vld [vmem:[%s5623 + $0x40] sm:$0xff]
    %v5633 = vld [vmem:[%s5623 + $0x48] sm:$0xff]
    %v5634 = vld [vmem:[%s5623 + $0x50] sm:$0xff]
    %v5635 = vld [vmem:[%s5623 + $0x58] sm:$0xff]
    %v5636 = vld [vmem:[%s5623 + $0x60] sm:$0xff]
    %v5637 = vld [vmem:[%s5623 + $0x68] sm:$0xff]
    %v5638 = vld [vmem:[%s5623 + $0x70] sm:$0xff]
    %v5639 = vld [vmem:[%s5623 + $0x78] sm:$0xff]
    %5640 = vmatprep.subr.mxu0 0.0
    %5641 = vmatpush1.msra.mxu0 %v5639
    %5642 = vmatprep.subr.mxu0 0.0
    %5643 = vmatpush1.msra.mxu0 %v5638
    %5644 = vmatprep.subr.mxu0 0.0
    %5645 = vmatpush1.msra.mxu0 %v5637
    %5646 = vmatprep.subr.mxu0 0.0
    %5647 = vmatpush1.msra.mxu0 %v5636
    %5648 = vmatprep.subr.mxu0 0.0
    %5649 = vmatpush1.msra.mxu0 %v5635
    %5650 = vmatprep.subr.mxu0 0.0
    %5651 = vmatpush1.msra.mxu0 %v5634
    %5652 = vmatprep.subr.mxu0 0.0
    %5653 = vmatpush1.msra.mxu0 %v5633
    %5654 = vmatprep.subr.mxu0 0.0
    %5655 = vmatpush1.msra.mxu0 %v5632
    %5656 = vmatprep.subr.mxu0 0.0
    %5657 = vmatpush1.msra.mxu0 %v5631
    %5658 = vmatprep.subr.mxu0 0.0
    %5659 = vmatpush1.msra.mxu0 %v5630
    %5660 = vmatprep.subr.mxu0 0.0
    %5661 = vmatpush1.msra.mxu0 %v5629
    %5662 = vmatprep.subr.mxu0 0.0
    %5663 = vmatpush1.msra.mxu0 %v5628
    %5664 = vmatprep.subr.mxu0 0.0
    %5665 = vmatpush1.msra.mxu0 %v5627
    %5666 = vmatprep.subr.mxu0 0.0
    %5667 = vmatpush1.msra.mxu0 %v5626
    %5668 = vmatprep.subr.mxu0 0.0
    %5669 = vmatpush1.msra.mxu0 %v5625
    %5670 = vmatprep.subr.mxu0 0.0
    %5671 = vmatpush1.msra.mxu0 %v5624
    %5672 = vmatprep.subr.mxu0 0.0
    %5673 = vmatpush2.msra.mxu0 0.0
    %5674 = vmatprep.subr.mxu0 0.0
    %5675 = vmatpush2.msra.mxu0 0.0
    %5676 = vmatprep.subr.mxu0 0.0
    %5677 = vmatpush2.msra.mxu0 0.0
    %5678 = vmatprep.subr.mxu0 0.0
    %5679 = vmatpush2.msra.mxu0 0.0
    %5680 = vmatprep.subr.mxu0 0.0
    %5681 = vmatpush2.msra.mxu0 0.0
    %5682 = vmatprep.subr.mxu0 0.0
    %5683 = vmatpush2.msra.mxu0 0.0
    %5684 = vmatprep.subr.mxu0 0.0
    %5685 = vmatpush2.msra.mxu0 0.0
    %5686 = vmatprep.subr.mxu0 0.0
    %5687 = vmatpush2.msra.mxu0 0.0
    %5688 = vmatprep.subr.mxu0 0.0
    %5689 = vmatpush2.msra.mxu0 0.0
    %5690 = vmatprep.subr.mxu0 0.0
    %5691 = vmatpush2.msra.mxu0 0.0
    %5692 = vmatprep.subr.mxu0 0.0
    %5693 = vmatpush2.msra.mxu0 0.0
    %5694 = vmatprep.subr.mxu0 0.0
    %5695 = vmatpush2.msra.mxu0 0.0
    %5696 = vmatprep.subr.mxu0 0.0
    %5697 = vmatpush2.msra.mxu0 0.0
    %5698 = vmatprep.subr.mxu0 0.0
    %5699 = vmatpush2.msra.mxu0 0.0
    %5700 = vmatprep.subr.mxu0 0.0
    %5701 = vmatpush2.msra.mxu0 0.0
    %5702 = vmatprep.subr.mxu0 0.0
    %5703 = vmatpush2.msra.mxu0 0.0
    %5704 = vmatprep.mubr.f32.mxu0 0.0
    %5705 = vmatmul.mubr.f32.gmra.mxu0 %v5622
    %v5706 = vpop.f32.mrf.mxu0
    %v5707 = vadd.f32 0.0, %v5706
    %v5708 = vpop.f32.mrf.mxu0
    %5709 = vdwg.mxu0
    %v5710 = vld [vmem:[#allocation2] sm:$0xff]
    %v5711 = vadd.f32 %v5710, %v5707
    %5712 = vst [vmem:[#allocation2] sm:$0xff] %v5711
    %s5713 = sld [smem:[#allocation3 + $0x33]]
    %s5714 = sld [smem:[#allocation3 + $0xb3]]
    %s5715 = sld [smem:[#allocation3 + $0x133]]
    %s5716 = sld [smem:[#allocation5 + $0x33]]
    %v5717 = vstv %s5713
    %v5718 = vmul.f32 %v5717, %v51
    %v5719 = vstv %s5714
    %v5720 = vmul.f32 %v5719, %v52
    %v5721 = vadd.f32 %v5718, %v5720
    %v5722 = vstv %s5715
    %v5723 = vmul.f32 %v5722, %v53
    %v5724 = vadd.f32 %v5721, %v5723
    %v5725 = vmul.f32 %v5717, %v52
    %v5726 = vmul.f32 %v5719, %v53
    %v5727 = vadd.f32 %v5725, %v5726
    %v5728 = vmul.f32 %v5722, %v54
    %v5729 = vadd.f32 %v5727, %v5728
    %v5730 = vmax.f32 %v5724, %v5729
    %v5731 = vstv %s5716
    %v5732 = vadd.f32 %v5730, %v5731
    %v5733 = vmax.f32 %v5732, 0.0
    %s5734 = scalar_lea.vmem %s3, 6528
    %v5735 = vld [vmem:[%s5734] sm:$0xff]
    %v5736 = vld [vmem:[%s5734 + $0x8] sm:$0xff]
    %v5737 = vld [vmem:[%s5734 + $0x10] sm:$0xff]
    %v5738 = vld [vmem:[%s5734 + $0x18] sm:$0xff]
    %v5739 = vld [vmem:[%s5734 + $0x20] sm:$0xff]
    %v5740 = vld [vmem:[%s5734 + $0x28] sm:$0xff]
    %v5741 = vld [vmem:[%s5734 + $0x30] sm:$0xff]
    %v5742 = vld [vmem:[%s5734 + $0x38] sm:$0xff]
    %v5743 = vld [vmem:[%s5734 + $0x40] sm:$0xff]
    %v5744 = vld [vmem:[%s5734 + $0x48] sm:$0xff]
    %v5745 = vld [vmem:[%s5734 + $0x50] sm:$0xff]
    %v5746 = vld [vmem:[%s5734 + $0x58] sm:$0xff]
    %v5747 = vld [vmem:[%s5734 + $0x60] sm:$0xff]
    %v5748 = vld [vmem:[%s5734 + $0x68] sm:$0xff]
    %v5749 = vld [vmem:[%s5734 + $0x70] sm:$0xff]
    %v5750 = vld [vmem:[%s5734 + $0x78] sm:$0xff]
    %5751 = vmatprep.subr.mxu0 0.0
    %5752 = vmatpush1.msra.mxu0 %v5750
    %5753 = vmatprep.subr.mxu0 0.0
    %5754 = vmatpush1.msra.mxu0 %v5749
    %5755 = vmatprep.subr.mxu0 0.0
    %5756 = vmatpush1.msra.mxu0 %v5748
    %5757 = vmatprep.subr.mxu0 0.0
    %5758 = vmatpush1.msra.mxu0 %v5747
    %5759 = vmatprep.subr.mxu0 0.0
    %5760 = vmatpush1.msra.mxu0 %v5746
    %5761 = vmatprep.subr.mxu0 0.0
    %5762 = vmatpush1.msra.mxu0 %v5745
    %5763 = vmatprep.subr.mxu0 0.0
    %5764 = vmatpush1.msra.mxu0 %v5744
    %5765 = vmatprep.subr.mxu0 0.0
    %5766 = vmatpush1.msra.mxu0 %v5743
    %5767 = vmatprep.subr.mxu0 0.0
    %5768 = vmatpush1.msra.mxu0 %v5742
    %5769 = vmatprep.subr.mxu0 0.0
    %5770 = vmatpush1.msra.mxu0 %v5741
    %5771 = vmatprep.subr.mxu0 0.0
    %5772 = vmatpush1.msra.mxu0 %v5740
    %5773 = vmatprep.subr.mxu0 0.0
    %5774 = vmatpush1.msra.mxu0 %v5739
    %5775 = vmatprep.subr.mxu0 0.0
    %5776 = vmatpush1.msra.mxu0 %v5738
    %5777 = vmatprep.subr.mxu0 0.0
    %5778 = vmatpush1.msra.mxu0 %v5737
    %5779 = vmatprep.subr.mxu0 0.0
    %5780 = vmatpush1.msra.mxu0 %v5736
    %5781 = vmatprep.subr.mxu0 0.0
    %5782 = vmatpush1.msra.mxu0 %v5735
    %5783 = vmatprep.subr.mxu0 0.0
    %5784 = vmatpush2.msra.mxu0 0.0
    %5785 = vmatprep.subr.mxu0 0.0
    %5786 = vmatpush2.msra.mxu0 0.0
    %5787 = vmatprep.subr.mxu0 0.0
    %5788 = vmatpush2.msra.mxu0 0.0
    %5789 = vmatprep.subr.mxu0 0.0
    %5790 = vmatpush2.msra.mxu0 0.0
    %5791 = vmatprep.subr.mxu0 0.0
    %5792 = vmatpush2.msra.mxu0 0.0
    %5793 = vmatprep.subr.mxu0 0.0
    %5794 = vmatpush2.msra.mxu0 0.0
    %5795 = vmatprep.subr.mxu0 0.0
    %5796 = vmatpush2.msra.mxu0 0.0
    %5797 = vmatprep.subr.mxu0 0.0
    %5798 = vmatpush2.msra.mxu0 0.0
    %5799 = vmatprep.subr.mxu0 0.0
    %5800 = vmatpush2.msra.mxu0 0.0
    %5801 = vmatprep.subr.mxu0 0.0
    %5802 = vmatpush2.msra.mxu0 0.0
    %5803 = vmatprep.subr.mxu0 0.0
    %5804 = vmatpush2.msra.mxu0 0.0
    %5805 = vmatprep.subr.mxu0 0.0
    %5806 = vmatpush2.msra.mxu0 0.0
    %5807 = vmatprep.subr.mxu0 0.0
    %5808 = vmatpush2.msra.mxu0 0.0
    %5809 = vmatprep.subr.mxu0 0.0
    %5810 = vmatpush2.msra.mxu0 0.0
    %5811 = vmatprep.subr.mxu0 0.0
    %5812 = vmatpush2.msra.mxu0 0.0
    %5813 = vmatprep.subr.mxu0 0.0
    %5814 = vmatpush2.msra.mxu0 0.0
    %5815 = vmatprep.mubr.f32.mxu0 0.0
    %5816 = vmatmul.mubr.f32.gmra.mxu0 %v5733
    %v5817 = vpop.f32.mrf.mxu0
    %v5818 = vadd.f32 0.0, %v5817
    %v5819 = vpop.f32.mrf.mxu0
    %5820 = vdwg.mxu0
    %v5821 = vld [vmem:[#allocation2] sm:$0xff]
    %v5822 = vadd.f32 %v5821, %v5818
    %5823 = vst [vmem:[#allocation2] sm:$0xff] %v5822
    %s5824 = sld [smem:[#allocation3 + $0x34]]
    %s5825 = sld [smem:[#allocation3 + $0xb4]]
    %s5826 = sld [smem:[#allocation3 + $0x134]]
    %s5827 = sld [smem:[#allocation5 + $0x34]]
    %v5828 = vstv %s5824
    %v5829 = vmul.f32 %v5828, %v51
    %v5830 = vstv %s5825
    %v5831 = vmul.f32 %v5830, %v52
    %v5832 = vadd.f32 %v5829, %v5831
    %v5833 = vstv %s5826
    %v5834 = vmul.f32 %v5833, %v53
    %v5835 = vadd.f32 %v5832, %v5834
    %v5836 = vmul.f32 %v5828, %v52
    %v5837 = vmul.f32 %v5830, %v53
    %v5838 = vadd.f32 %v5836, %v5837
    %v5839 = vmul.f32 %v5833, %v54
    %v5840 = vadd.f32 %v5838, %v5839
    %v5841 = vmax.f32 %v5835, %v5840
    %v5842 = vstv %s5827
    %v5843 = vadd.f32 %v5841, %v5842
    %v5844 = vmax.f32 %v5843, 0.0
    %s5845 = scalar_lea.vmem %s3, 6656
    %v5846 = vld [vmem:[%s5845] sm:$0xff]
    %v5847 = vld [vmem:[%s5845 + $0x8] sm:$0xff]
    %v5848 = vld [vmem:[%s5845 + $0x10] sm:$0xff]
    %v5849 = vld [vmem:[%s5845 + $0x18] sm:$0xff]
    %v5850 = vld [vmem:[%s5845 + $0x20] sm:$0xff]
    %v5851 = vld [vmem:[%s5845 + $0x28] sm:$0xff]
    %v5852 = vld [vmem:[%s5845 + $0x30] sm:$0xff]
    %v5853 = vld [vmem:[%s5845 + $0x38] sm:$0xff]
    %v5854 = vld [vmem:[%s5845 + $0x40] sm:$0xff]
    %v5855 = vld [vmem:[%s5845 + $0x48] sm:$0xff]
    %v5856 = vld [vmem:[%s5845 + $0x50] sm:$0xff]
    %v5857 = vld [vmem:[%s5845 + $0x58] sm:$0xff]
    %v5858 = vld [vmem:[%s5845 + $0x60] sm:$0xff]
    %v5859 = vld [vmem:[%s5845 + $0x68] sm:$0xff]
    %v5860 = vld [vmem:[%s5845 + $0x70] sm:$0xff]
    %v5861 = vld [vmem:[%s5845 + $0x78] sm:$0xff]
    %5862 = vmatprep.subr.mxu0 0.0
    %5863 = vmatpush1.msra.mxu0 %v5861
    %5864 = vmatprep.subr.mxu0 0.0
    %5865 = vmatpush1.msra.mxu0 %v5860
    %5866 = vmatprep.subr.mxu0 0.0
    %5867 = vmatpush1.msra.mxu0 %v5859
    %5868 = vmatprep.subr.mxu0 0.0
    %5869 = vmatpush1.msra.mxu0 %v5858
    %5870 = vmatprep.subr.mxu0 0.0
    %5871 = vmatpush1.msra.mxu0 %v5857
    %5872 = vmatprep.subr.mxu0 0.0
    %5873 = vmatpush1.msra.mxu0 %v5856
    %5874 = vmatprep.subr.mxu0 0.0
    %5875 = vmatpush1.msra.mxu0 %v5855
    %5876 = vmatprep.subr.mxu0 0.0
    %5877 = vmatpush1.msra.mxu0 %v5854
    %5878 = vmatprep.subr.mxu0 0.0
    %5879 = vmatpush1.msra.mxu0 %v5853
    %5880 = vmatprep.subr.mxu0 0.0
    %5881 = vmatpush1.msra.mxu0 %v5852
    %5882 = vmatprep.subr.mxu0 0.0
    %5883 = vmatpush1.msra.mxu0 %v5851
    %5884 = vmatprep.subr.mxu0 0.0
    %5885 = vmatpush1.msra.mxu0 %v5850
    %5886 = vmatprep.subr.mxu0 0.0
    %5887 = vmatpush1.msra.mxu0 %v5849
    %5888 = vmatprep.subr.mxu0 0.0
    %5889 = vmatpush1.msra.mxu0 %v5848
    %5890 = vmatprep.subr.mxu0 0.0
    %5891 = vmatpush1.msra.mxu0 %v5847
    %5892 = vmatprep.subr.mxu0 0.0
    %5893 = vmatpush1.msra.mxu0 %v5846
    %5894 = vmatprep.subr.mxu0 0.0
    %5895 = vmatpush2.msra.mxu0 0.0
    %5896 = vmatprep.subr.mxu0 0.0
    %5897 = vmatpush2.msra.mxu0 0.0
    %5898 = vmatprep.subr.mxu0 0.0
    %5899 = vmatpush2.msra.mxu0 0.0
    %5900 = vmatprep.subr.mxu0 0.0
    %5901 = vmatpush2.msra.mxu0 0.0
    %5902 = vmatprep.subr.mxu0 0.0
    %5903 = vmatpush2.msra.mxu0 0.0
    %5904 = vmatprep.subr.mxu0 0.0
    %5905 = vmatpush2.msra.mxu0 0.0
    %5906 = vmatprep.subr.mxu0 0.0
    %5907 = vmatpush2.msra.mxu0 0.0
    %5908 = vmatprep.subr.mxu0 0.0
    %5909 = vmatpush2.msra.mxu0 0.0
    %5910 = vmatprep.subr.mxu0 0.0
    %5911 = vmatpush2.msra.mxu0 0.0
    %5912 = vmatprep.subr.mxu0 0.0
    %5913 = vmatpush2.msra.mxu0 0.0
    %5914 = vmatprep.subr.mxu0 0.0
    %5915 = vmatpush2.msra.mxu0 0.0
    %5916 = vmatprep.subr.mxu0 0.0
    %5917 = vmatpush2.msra.mxu0 0.0
    %5918 = vmatprep.subr.mxu0 0.0
    %5919 = vmatpush2.msra.mxu0 0.0
    %5920 = vmatprep.subr.mxu0 0.0
    %5921 = vmatpush2.msra.mxu0 0.0
    %5922 = vmatprep.subr.mxu0 0.0
    %5923 = vmatpush2.msra.mxu0 0.0
    %5924 = vmatprep.subr.mxu0 0.0
    %5925 = vmatpush2.msra.mxu0 0.0
    %5926 = vmatprep.mubr.f32.mxu0 0.0
    %5927 = vmatmul.mubr.f32.gmra.mxu0 %v5844
    %v5928 = vpop.f32.mrf.mxu0
    %v5929 = vadd.f32 0.0, %v5928
    %v5930 = vpop.f32.mrf.mxu0
    %5931 = vdwg.mxu0
    %v5932 = vld [vmem:[#allocation2] sm:$0xff]
    %v5933 = vadd.f32 %v5932, %v5929
    %5934 = vst [vmem:[#allocation2] sm:$0xff] %v5933
    %s5935 = sld [smem:[#allocation3 + $0x35]]
    %s5936 = sld [smem:[#allocation3 + $0xb5]]
    %s5937 = sld [smem:[#allocation3 + $0x135]]
    %s5938 = sld [smem:[#allocation5 + $0x35]]
    %v5939 = vstv %s5935
    %v5940 = vmul.f32 %v5939, %v51
    %v5941 = vstv %s5936
    %v5942 = vmul.f32 %v5941, %v52
    %v5943 = vadd.f32 %v5940, %v5942
    %v5944 = vstv %s5937
    %v5945 = vmul.f32 %v5944, %v53
    %v5946 = vadd.f32 %v5943, %v5945
    %v5947 = vmul.f32 %v5939, %v52
    %v5948 = vmul.f32 %v5941, %v53
    %v5949 = vadd.f32 %v5947, %v5948
    %v5950 = vmul.f32 %v5944, %v54
    %v5951 = vadd.f32 %v5949, %v5950
    %v5952 = vmax.f32 %v5946, %v5951
    %v5953 = vstv %s5938
    %v5954 = vadd.f32 %v5952, %v5953
    %v5955 = vmax.f32 %v5954, 0.0
    %s5956 = scalar_lea.vmem %s3, 6784
    %v5957 = vld [vmem:[%s5956] sm:$0xff]
    %v5958 = vld [vmem:[%s5956 + $0x8] sm:$0xff]
    %v5959 = vld [vmem:[%s5956 + $0x10] sm:$0xff]
    %v5960 = vld [vmem:[%s5956 + $0x18] sm:$0xff]
    %v5961 = vld [vmem:[%s5956 + $0x20] sm:$0xff]
    %v5962 = vld [vmem:[%s5956 + $0x28] sm:$0xff]
    %v5963 = vld [vmem:[%s5956 + $0x30] sm:$0xff]
    %v5964 = vld [vmem:[%s5956 + $0x38] sm:$0xff]
    %v5965 = vld [vmem:[%s5956 + $0x40] sm:$0xff]
    %v5966 = vld [vmem:[%s5956 + $0x48] sm:$0xff]
    %v5967 = vld [vmem:[%s5956 + $0x50] sm:$0xff]
    %v5968 = vld [vmem:[%s5956 + $0x58] sm:$0xff]
    %v5969 = vld [vmem:[%s5956 + $0x60] sm:$0xff]
    %v5970 = vld [vmem:[%s5956 + $0x68] sm:$0xff]
    %v5971 = vld [vmem:[%s5956 + $0x70] sm:$0xff]
    %v5972 = vld [vmem:[%s5956 + $0x78] sm:$0xff]
    %5973 = vmatprep.subr.mxu0 0.0
    %5974 = vmatpush1.msra.mxu0 %v5972
    %5975 = vmatprep.subr.mxu0 0.0
    %5976 = vmatpush1.msra.mxu0 %v5971
    %5977 = vmatprep.subr.mxu0 0.0
    %5978 = vmatpush1.msra.mxu0 %v5970
    %5979 = vmatprep.subr.mxu0 0.0
    %5980 = vmatpush1.msra.mxu0 %v5969
    %5981 = vmatprep.subr.mxu0 0.0
    %5982 = vmatpush1.msra.mxu0 %v5968
    %5983 = vmatprep.subr.mxu0 0.0
    %5984 = vmatpush1.msra.mxu0 %v5967
    %5985 = vmatprep.subr.mxu0 0.0
    %5986 = vmatpush1.msra.mxu0 %v5966
    %5987 = vmatprep.subr.mxu0 0.0
    %5988 = vmatpush1.msra.mxu0 %v5965
    %5989 = vmatprep.subr.mxu0 0.0
    %5990 = vmatpush1.msra.mxu0 %v5964
    %5991 = vmatprep.subr.mxu0 0.0
    %5992 = vmatpush1.msra.mxu0 %v5963
    %5993 = vmatprep.subr.mxu0 0.0
    %5994 = vmatpush1.msra.mxu0 %v5962
    %5995 = vmatprep.subr.mxu0 0.0
    %5996 = vmatpush1.msra.mxu0 %v5961
    %5997 = vmatprep.subr.mxu0 0.0
    %5998 = vmatpush1.msra.mxu0 %v5960
    %5999 = vmatprep.subr.mxu0 0.0
    %6000 = vmatpush1.msra.mxu0 %v5959
    %6001 = vmatprep.subr.mxu0 0.0
    %6002 = vmatpush1.msra.mxu0 %v5958
    %6003 = vmatprep.subr.mxu0 0.0
    %6004 = vmatpush1.msra.mxu0 %v5957
    %6005 = vmatprep.subr.mxu0 0.0
    %6006 = vmatpush2.msra.mxu0 0.0
    %6007 = vmatprep.subr.mxu0 0.0
    %6008 = vmatpush2.msra.mxu0 0.0
    %6009 = vmatprep.subr.mxu0 0.0
    %6010 = vmatpush2.msra.mxu0 0.0
    %6011 = vmatprep.subr.mxu0 0.0
    %6012 = vmatpush2.msra.mxu0 0.0
    %6013 = vmatprep.subr.mxu0 0.0
    %6014 = vmatpush2.msra.mxu0 0.0
    %6015 = vmatprep.subr.mxu0 0.0
    %6016 = vmatpush2.msra.mxu0 0.0
    %6017 = vmatprep.subr.mxu0 0.0
    %6018 = vmatpush2.msra.mxu0 0.0
    %6019 = vmatprep.subr.mxu0 0.0
    %6020 = vmatpush2.msra.mxu0 0.0
    %6021 = vmatprep.subr.mxu0 0.0
    %6022 = vmatpush2.msra.mxu0 0.0
    %6023 = vmatprep.subr.mxu0 0.0
    %6024 = vmatpush2.msra.mxu0 0.0
    %6025 = vmatprep.subr.mxu0 0.0
    %6026 = vmatpush2.msra.mxu0 0.0
    %6027 = vmatprep.subr.mxu0 0.0
    %6028 = vmatpush2.msra.mxu0 0.0
    %6029 = vmatprep.subr.mxu0 0.0
    %6030 = vmatpush2.msra.mxu0 0.0
    %6031 = vmatprep.subr.mxu0 0.0
    %6032 = vmatpush2.msra.mxu0 0.0
    %6033 = vmatprep.subr.mxu0 0.0
    %6034 = vmatpush2.msra.mxu0 0.0
    %6035 = vmatprep.subr.mxu0 0.0
    %6036 = vmatpush2.msra.mxu0 0.0
    %6037 = vmatprep.mubr.f32.mxu0 0.0
    %6038 = vmatmul.mubr.f32.gmra.mxu0 %v5955
    %v6039 = vpop.f32.mrf.mxu0
    %v6040 = vadd.f32 0.0, %v6039
    %v6041 = vpop.f32.mrf.mxu0
    %6042 = vdwg.mxu0
    %v6043 = vld [vmem:[#allocation2] sm:$0xff]
    %v6044 = vadd.f32 %v6043, %v6040
    %6045 = vst [vmem:[#allocation2] sm:$0xff] %v6044
    %s6046 = sld [smem:[#allocation3 + $0x36]]
    %s6047 = sld [smem:[#allocation3 + $0xb6]]
    %s6048 = sld [smem:[#allocation3 + $0x136]]
    %s6049 = sld [smem:[#allocation5 + $0x36]]
    %v6050 = vstv %s6046
    %v6051 = vmul.f32 %v6050, %v51
    %v6052 = vstv %s6047
    %v6053 = vmul.f32 %v6052, %v52
    %v6054 = vadd.f32 %v6051, %v6053
    %v6055 = vstv %s6048
    %v6056 = vmul.f32 %v6055, %v53
    %v6057 = vadd.f32 %v6054, %v6056
    %v6058 = vmul.f32 %v6050, %v52
    %v6059 = vmul.f32 %v6052, %v53
    %v6060 = vadd.f32 %v6058, %v6059
    %v6061 = vmul.f32 %v6055, %v54
    %v6062 = vadd.f32 %v6060, %v6061
    %v6063 = vmax.f32 %v6057, %v6062
    %v6064 = vstv %s6049
    %v6065 = vadd.f32 %v6063, %v6064
    %v6066 = vmax.f32 %v6065, 0.0
    %s6067 = scalar_lea.vmem %s3, 6912
    %v6068 = vld [vmem:[%s6067] sm:$0xff]
    %v6069 = vld [vmem:[%s6067 + $0x8] sm:$0xff]
    %v6070 = vld [vmem:[%s6067 + $0x10] sm:$0xff]
    %v6071 = vld [vmem:[%s6067 + $0x18] sm:$0xff]
    %v6072 = vld [vmem:[%s6067 + $0x20] sm:$0xff]
    %v6073 = vld [vmem:[%s6067 + $0x28] sm:$0xff]
    %v6074 = vld [vmem:[%s6067 + $0x30] sm:$0xff]
    %v6075 = vld [vmem:[%s6067 + $0x38] sm:$0xff]
    %v6076 = vld [vmem:[%s6067 + $0x40] sm:$0xff]
    %v6077 = vld [vmem:[%s6067 + $0x48] sm:$0xff]
    %v6078 = vld [vmem:[%s6067 + $0x50] sm:$0xff]
    %v6079 = vld [vmem:[%s6067 + $0x58] sm:$0xff]
    %v6080 = vld [vmem:[%s6067 + $0x60] sm:$0xff]
    %v6081 = vld [vmem:[%s6067 + $0x68] sm:$0xff]
    %v6082 = vld [vmem:[%s6067 + $0x70] sm:$0xff]
    %v6083 = vld [vmem:[%s6067 + $0x78] sm:$0xff]
    %6084 = vmatprep.subr.mxu0 0.0
    %6085 = vmatpush1.msra.mxu0 %v6083
    %6086 = vmatprep.subr.mxu0 0.0
    %6087 = vmatpush1.msra.mxu0 %v6082
    %6088 = vmatprep.subr.mxu0 0.0
    %6089 = vmatpush1.msra.mxu0 %v6081
    %6090 = vmatprep.subr.mxu0 0.0
    %6091 = vmatpush1.msra.mxu0 %v6080
    %6092 = vmatprep.subr.mxu0 0.0
    %6093 = vmatpush1.msra.mxu0 %v6079
    %6094 = vmatprep.subr.mxu0 0.0
    %6095 = vmatpush1.msra.mxu0 %v6078
    %6096 = vmatprep.subr.mxu0 0.0
    %6097 = vmatpush1.msra.mxu0 %v6077
    %6098 = vmatprep.subr.mxu0 0.0
    %6099 = vmatpush1.msra.mxu0 %v6076
    %6100 = vmatprep.subr.mxu0 0.0
    %6101 = vmatpush1.msra.mxu0 %v6075
    %6102 = vmatprep.subr.mxu0 0.0
    %6103 = vmatpush1.msra.mxu0 %v6074
    %6104 = vmatprep.subr.mxu0 0.0
    %6105 = vmatpush1.msra.mxu0 %v6073
    %6106 = vmatprep.subr.mxu0 0.0
    %6107 = vmatpush1.msra.mxu0 %v6072
    %6108 = vmatprep.subr.mxu0 0.0
    %6109 = vmatpush1.msra.mxu0 %v6071
    %6110 = vmatprep.subr.mxu0 0.0
    %6111 = vmatpush1.msra.mxu0 %v6070
    %6112 = vmatprep.subr.mxu0 0.0
    %6113 = vmatpush1.msra.mxu0 %v6069
    %6114 = vmatprep.subr.mxu0 0.0
    %6115 = vmatpush1.msra.mxu0 %v6068
    %6116 = vmatprep.subr.mxu0 0.0
    %6117 = vmatpush2.msra.mxu0 0.0
    %6118 = vmatprep.subr.mxu0 0.0
    %6119 = vmatpush2.msra.mxu0 0.0
    %6120 = vmatprep.subr.mxu0 0.0
    %6121 = vmatpush2.msra.mxu0 0.0
    %6122 = vmatprep.subr.mxu0 0.0
    %6123 = vmatpush2.msra.mxu0 0.0
    %6124 = vmatprep.subr.mxu0 0.0
    %6125 = vmatpush2.msra.mxu0 0.0
    %6126 = vmatprep.subr.mxu0 0.0
    %6127 = vmatpush2.msra.mxu0 0.0
    %6128 = vmatprep.subr.mxu0 0.0
    %6129 = vmatpush2.msra.mxu0 0.0
    %6130 = vmatprep.subr.mxu0 0.0
    %6131 = vmatpush2.msra.mxu0 0.0
    %6132 = vmatprep.subr.mxu0 0.0
    %6133 = vmatpush2.msra.mxu0 0.0
    %6134 = vmatprep.subr.mxu0 0.0
    %6135 = vmatpush2.msra.mxu0 0.0
    %6136 = vmatprep.subr.mxu0 0.0
    %6137 = vmatpush2.msra.mxu0 0.0
    %6138 = vmatprep.subr.mxu0 0.0
    %6139 = vmatpush2.msra.mxu0 0.0
    %6140 = vmatprep.subr.mxu0 0.0
    %6141 = vmatpush2.msra.mxu0 0.0
    %6142 = vmatprep.subr.mxu0 0.0
    %6143 = vmatpush2.msra.mxu0 0.0
    %6144 = vmatprep.subr.mxu0 0.0
    %6145 = vmatpush2.msra.mxu0 0.0
    %6146 = vmatprep.subr.mxu0 0.0
    %6147 = vmatpush2.msra.mxu0 0.0
    %6148 = vmatprep.mubr.f32.mxu0 0.0
    %6149 = vmatmul.mubr.f32.gmra.mxu0 %v6066
    %v6150 = vpop.f32.mrf.mxu0
    %v6151 = vadd.f32 0.0, %v6150
    %v6152 = vpop.f32.mrf.mxu0
    %6153 = vdwg.mxu0
    %v6154 = vld [vmem:[#allocation2] sm:$0xff]
    %v6155 = vadd.f32 %v6154, %v6151
    %6156 = vst [vmem:[#allocation2] sm:$0xff] %v6155
    %s6157 = sld [smem:[#allocation3 + $0x37]]
    %s6158 = sld [smem:[#allocation3 + $0xb7]]
    %s6159 = sld [smem:[#allocation3 + $0x137]]
    %s6160 = sld [smem:[#allocation5 + $0x37]]
    %v6161 = vstv %s6157
    %v6162 = vmul.f32 %v6161, %v51
    %v6163 = vstv %s6158
    %v6164 = vmul.f32 %v6163, %v52
    %v6165 = vadd.f32 %v6162, %v6164
    %v6166 = vstv %s6159
    %v6167 = vmul.f32 %v6166, %v53
    %v6168 = vadd.f32 %v6165, %v6167
    %v6169 = vmul.f32 %v6161, %v52
    %v6170 = vmul.f32 %v6163, %v53
    %v6171 = vadd.f32 %v6169, %v6170
    %v6172 = vmul.f32 %v6166, %v54
    %v6173 = vadd.f32 %v6171, %v6172
    %v6174 = vmax.f32 %v6168, %v6173
    %v6175 = vstv %s6160
    %v6176 = vadd.f32 %v6174, %v6175
    %v6177 = vmax.f32 %v6176, 0.0
    %s6178 = scalar_lea.vmem %s3, 7040
    %v6179 = vld [vmem:[%s6178] sm:$0xff]
    %v6180 = vld [vmem:[%s6178 + $0x8] sm:$0xff]
    %v6181 = vld [vmem:[%s6178 + $0x10] sm:$0xff]
    %v6182 = vld [vmem:[%s6178 + $0x18] sm:$0xff]
    %v6183 = vld [vmem:[%s6178 + $0x20] sm:$0xff]
    %v6184 = vld [vmem:[%s6178 + $0x28] sm:$0xff]
    %v6185 = vld [vmem:[%s6178 + $0x30] sm:$0xff]
    %v6186 = vld [vmem:[%s6178 + $0x38] sm:$0xff]
    %v6187 = vld [vmem:[%s6178 + $0x40] sm:$0xff]
    %v6188 = vld [vmem:[%s6178 + $0x48] sm:$0xff]
    %v6189 = vld [vmem:[%s6178 + $0x50] sm:$0xff]
    %v6190 = vld [vmem:[%s6178 + $0x58] sm:$0xff]
    %v6191 = vld [vmem:[%s6178 + $0x60] sm:$0xff]
    %v6192 = vld [vmem:[%s6178 + $0x68] sm:$0xff]
    %v6193 = vld [vmem:[%s6178 + $0x70] sm:$0xff]
    %v6194 = vld [vmem:[%s6178 + $0x78] sm:$0xff]
    %6195 = vmatprep.subr.mxu0 0.0
    %6196 = vmatpush1.msra.mxu0 %v6194
    %6197 = vmatprep.subr.mxu0 0.0
    %6198 = vmatpush1.msra.mxu0 %v6193
    %6199 = vmatprep.subr.mxu0 0.0
    %6200 = vmatpush1.msra.mxu0 %v6192
    %6201 = vmatprep.subr.mxu0 0.0
    %6202 = vmatpush1.msra.mxu0 %v6191
    %6203 = vmatprep.subr.mxu0 0.0
    %6204 = vmatpush1.msra.mxu0 %v6190
    %6205 = vmatprep.subr.mxu0 0.0
    %6206 = vmatpush1.msra.mxu0 %v6189
    %6207 = vmatprep.subr.mxu0 0.0
    %6208 = vmatpush1.msra.mxu0 %v6188
    %6209 = vmatprep.subr.mxu0 0.0
    %6210 = vmatpush1.msra.mxu0 %v6187
    %6211 = vmatprep.subr.mxu0 0.0
    %6212 = vmatpush1.msra.mxu0 %v6186
    %6213 = vmatprep.subr.mxu0 0.0
    %6214 = vmatpush1.msra.mxu0 %v6185
    %6215 = vmatprep.subr.mxu0 0.0
    %6216 = vmatpush1.msra.mxu0 %v6184
    %6217 = vmatprep.subr.mxu0 0.0
    %6218 = vmatpush1.msra.mxu0 %v6183
    %6219 = vmatprep.subr.mxu0 0.0
    %6220 = vmatpush1.msra.mxu0 %v6182
    %6221 = vmatprep.subr.mxu0 0.0
    %6222 = vmatpush1.msra.mxu0 %v6181
    %6223 = vmatprep.subr.mxu0 0.0
    %6224 = vmatpush1.msra.mxu0 %v6180
    %6225 = vmatprep.subr.mxu0 0.0
    %6226 = vmatpush1.msra.mxu0 %v6179
    %6227 = vmatprep.subr.mxu0 0.0
    %6228 = vmatpush2.msra.mxu0 0.0
    %6229 = vmatprep.subr.mxu0 0.0
    %6230 = vmatpush2.msra.mxu0 0.0
    %6231 = vmatprep.subr.mxu0 0.0
    %6232 = vmatpush2.msra.mxu0 0.0
    %6233 = vmatprep.subr.mxu0 0.0
    %6234 = vmatpush2.msra.mxu0 0.0
    %6235 = vmatprep.subr.mxu0 0.0
    %6236 = vmatpush2.msra.mxu0 0.0
    %6237 = vmatprep.subr.mxu0 0.0
    %6238 = vmatpush2.msra.mxu0 0.0
    %6239 = vmatprep.subr.mxu0 0.0
    %6240 = vmatpush2.msra.mxu0 0.0
    %6241 = vmatprep.subr.mxu0 0.0
    %6242 = vmatpush2.msra.mxu0 0.0
    %6243 = vmatprep.subr.mxu0 0.0
    %6244 = vmatpush2.msra.mxu0 0.0
    %6245 = vmatprep.subr.mxu0 0.0
    %6246 = vmatpush2.msra.mxu0 0.0
    %6247 = vmatprep.subr.mxu0 0.0
    %6248 = vmatpush2.msra.mxu0 0.0
    %6249 = vmatprep.subr.mxu0 0.0
    %6250 = vmatpush2.msra.mxu0 0.0
    %6251 = vmatprep.subr.mxu0 0.0
    %6252 = vmatpush2.msra.mxu0 0.0
    %6253 = vmatprep.subr.mxu0 0.0
    %6254 = vmatpush2.msra.mxu0 0.0
    %6255 = vmatprep.subr.mxu0 0.0
    %6256 = vmatpush2.msra.mxu0 0.0
    %6257 = vmatprep.subr.mxu0 0.0
    %6258 = vmatpush2.msra.mxu0 0.0
    %6259 = vmatprep.mubr.f32.mxu0 0.0
    %6260 = vmatmul.mubr.f32.gmra.mxu0 %v6177
    %v6261 = vpop.f32.mrf.mxu0
    %v6262 = vadd.f32 0.0, %v6261
    %v6263 = vpop.f32.mrf.mxu0
    %6264 = vdwg.mxu0
    %v6265 = vld [vmem:[#allocation2] sm:$0xff]
    %v6266 = vadd.f32 %v6265, %v6262
    %6267 = vst [vmem:[#allocation2] sm:$0xff] %v6266
    %s6268 = sld [smem:[#allocation3 + $0x38]]
    %s6269 = sld [smem:[#allocation3 + $0xb8]]
    %s6270 = sld [smem:[#allocation3 + $0x138]]
    %s6271 = sld [smem:[#allocation5 + $0x38]]
    %v6272 = vstv %s6268
    %v6273 = vmul.f32 %v6272, %v51
    %v6274 = vstv %s6269
    %v6275 = vmul.f32 %v6274, %v52
    %v6276 = vadd.f32 %v6273, %v6275
    %v6277 = vstv %s6270
    %v6278 = vmul.f32 %v6277, %v53
    %v6279 = vadd.f32 %v6276, %v6278
    %v6280 = vmul.f32 %v6272, %v52
    %v6281 = vmul.f32 %v6274, %v53
    %v6282 = vadd.f32 %v6280, %v6281
    %v6283 = vmul.f32 %v6277, %v54
    %v6284 = vadd.f32 %v6282, %v6283
    %v6285 = vmax.f32 %v6279, %v6284
    %v6286 = vstv %s6271
    %v6287 = vadd.f32 %v6285, %v6286
    %v6288 = vmax.f32 %v6287, 0.0
    %s6289 = scalar_lea.vmem %s3, 7168
    %v6290 = vld [vmem:[%s6289] sm:$0xff]
    %v6291 = vld [vmem:[%s6289 + $0x8] sm:$0xff]
    %v6292 = vld [vmem:[%s6289 + $0x10] sm:$0xff]
    %v6293 = vld [vmem:[%s6289 + $0x18] sm:$0xff]
    %v6294 = vld [vmem:[%s6289 + $0x20] sm:$0xff]
    %v6295 = vld [vmem:[%s6289 + $0x28] sm:$0xff]
    %v6296 = vld [vmem:[%s6289 + $0x30] sm:$0xff]
    %v6297 = vld [vmem:[%s6289 + $0x38] sm:$0xff]
    %v6298 = vld [vmem:[%s6289 + $0x40] sm:$0xff]
    %v6299 = vld [vmem:[%s6289 + $0x48] sm:$0xff]
    %v6300 = vld [vmem:[%s6289 + $0x50] sm:$0xff]
    %v6301 = vld [vmem:[%s6289 + $0x58] sm:$0xff]
    %v6302 = vld [vmem:[%s6289 + $0x60] sm:$0xff]
    %v6303 = vld [vmem:[%s6289 + $0x68] sm:$0xff]
    %v6304 = vld [vmem:[%s6289 + $0x70] sm:$0xff]
    %v6305 = vld [vmem:[%s6289 + $0x78] sm:$0xff]
    %6306 = vmatprep.subr.mxu0 0.0
    %6307 = vmatpush1.msra.mxu0 %v6305
    %6308 = vmatprep.subr.mxu0 0.0
    %6309 = vmatpush1.msra.mxu0 %v6304
    %6310 = vmatprep.subr.mxu0 0.0
    %6311 = vmatpush1.msra.mxu0 %v6303
    %6312 = vmatprep.subr.mxu0 0.0
    %6313 = vmatpush1.msra.mxu0 %v6302
    %6314 = vmatprep.subr.mxu0 0.0
    %6315 = vmatpush1.msra.mxu0 %v6301
    %6316 = vmatprep.subr.mxu0 0.0
    %6317 = vmatpush1.msra.mxu0 %v6300
    %6318 = vmatprep.subr.mxu0 0.0
    %6319 = vmatpush1.msra.mxu0 %v6299
    %6320 = vmatprep.subr.mxu0 0.0
    %6321 = vmatpush1.msra.mxu0 %v6298
    %6322 = vmatprep.subr.mxu0 0.0
    %6323 = vmatpush1.msra.mxu0 %v6297
    %6324 = vmatprep.subr.mxu0 0.0
    %6325 = vmatpush1.msra.mxu0 %v6296
    %6326 = vmatprep.subr.mxu0 0.0
    %6327 = vmatpush1.msra.mxu0 %v6295
    %6328 = vmatprep.subr.mxu0 0.0
    %6329 = vmatpush1.msra.mxu0 %v6294
    %6330 = vmatprep.subr.mxu0 0.0
    %6331 = vmatpush1.msra.mxu0 %v6293
    %6332 = vmatprep.subr.mxu0 0.0
    %6333 = vmatpush1.msra.mxu0 %v6292
    %6334 = vmatprep.subr.mxu0 0.0
    %6335 = vmatpush1.msra.mxu0 %v6291
    %6336 = vmatprep.subr.mxu0 0.0
    %6337 = vmatpush1.msra.mxu0 %v6290
    %6338 = vmatprep.subr.mxu0 0.0
    %6339 = vmatpush2.msra.mxu0 0.0
    %6340 = vmatprep.subr.mxu0 0.0
    %6341 = vmatpush2.msra.mxu0 0.0
    %6342 = vmatprep.subr.mxu0 0.0
    %6343 = vmatpush2.msra.mxu0 0.0
    %6344 = vmatprep.subr.mxu0 0.0
    %6345 = vmatpush2.msra.mxu0 0.0
    %6346 = vmatprep.subr.mxu0 0.0
    %6347 = vmatpush2.msra.mxu0 0.0
    %6348 = vmatprep.subr.mxu0 0.0
    %6349 = vmatpush2.msra.mxu0 0.0
    %6350 = vmatprep.subr.mxu0 0.0
    %6351 = vmatpush2.msra.mxu0 0.0
    %6352 = vmatprep.subr.mxu0 0.0
    %6353 = vmatpush2.msra.mxu0 0.0
    %6354 = vmatprep.subr.mxu0 0.0
    %6355 = vmatpush2.msra.mxu0 0.0
    %6356 = vmatprep.subr.mxu0 0.0
    %6357 = vmatpush2.msra.mxu0 0.0
    %6358 = vmatprep.subr.mxu0 0.0
    %6359 = vmatpush2.msra.mxu0 0.0
    %6360 = vmatprep.subr.mxu0 0.0
    %6361 = vmatpush2.msra.mxu0 0.0
    %6362 = vmatprep.subr.mxu0 0.0
    %6363 = vmatpush2.msra.mxu0 0.0
    %6364 = vmatprep.subr.mxu0 0.0
    %6365 = vmatpush2.msra.mxu0 0.0
    %6366 = vmatprep.subr.mxu0 0.0
    %6367 = vmatpush2.msra.mxu0 0.0
    %6368 = vmatprep.subr.mxu0 0.0
    %6369 = vmatpush2.msra.mxu0 0.0
    %6370 = vmatprep.mubr.f32.mxu0 0.0
    %6371 = vmatmul.mubr.f32.gmra.mxu0 %v6288
    %v6372 = vpop.f32.mrf.mxu0
    %v6373 = vadd.f32 0.0, %v6372
    %v6374 = vpop.f32.mrf.mxu0
    %6375 = vdwg.mxu0
    %v6376 = vld [vmem:[#allocation2] sm:$0xff]
    %v6377 = vadd.f32 %v6376, %v6373
    %6378 = vst [vmem:[#allocation2] sm:$0xff] %v6377
    %s6379 = sld [smem:[#allocation3 + $0x39]]
    %s6380 = sld [smem:[#allocation3 + $0xb9]]
    %s6381 = sld [smem:[#allocation3 + $0x139]]
    %s6382 = sld [smem:[#allocation5 + $0x39]]
    %v6383 = vstv %s6379
    %v6384 = vmul.f32 %v6383, %v51
    %v6385 = vstv %s6380
    %v6386 = vmul.f32 %v6385, %v52
    %v6387 = vadd.f32 %v6384, %v6386
    %v6388 = vstv %s6381
    %v6389 = vmul.f32 %v6388, %v53
    %v6390 = vadd.f32 %v6387, %v6389
    %v6391 = vmul.f32 %v6383, %v52
    %v6392 = vmul.f32 %v6385, %v53
    %v6393 = vadd.f32 %v6391, %v6392
    %v6394 = vmul.f32 %v6388, %v54
    %v6395 = vadd.f32 %v6393, %v6394
    %v6396 = vmax.f32 %v6390, %v6395
    %v6397 = vstv %s6382
    %v6398 = vadd.f32 %v6396, %v6397
    %v6399 = vmax.f32 %v6398, 0.0
    %s6400 = scalar_lea.vmem %s3, 7296
    %v6401 = vld [vmem:[%s6400] sm:$0xff]
    %v6402 = vld [vmem:[%s6400 + $0x8] sm:$0xff]
    %v6403 = vld [vmem:[%s6400 + $0x10] sm:$0xff]
    %v6404 = vld [vmem:[%s6400 + $0x18] sm:$0xff]
    %v6405 = vld [vmem:[%s6400 + $0x20] sm:$0xff]
    %v6406 = vld [vmem:[%s6400 + $0x28] sm:$0xff]
    %v6407 = vld [vmem:[%s6400 + $0x30] sm:$0xff]
    %v6408 = vld [vmem:[%s6400 + $0x38] sm:$0xff]
    %v6409 = vld [vmem:[%s6400 + $0x40] sm:$0xff]
    %v6410 = vld [vmem:[%s6400 + $0x48] sm:$0xff]
    %v6411 = vld [vmem:[%s6400 + $0x50] sm:$0xff]
    %v6412 = vld [vmem:[%s6400 + $0x58] sm:$0xff]
    %v6413 = vld [vmem:[%s6400 + $0x60] sm:$0xff]
    %v6414 = vld [vmem:[%s6400 + $0x68] sm:$0xff]
    %v6415 = vld [vmem:[%s6400 + $0x70] sm:$0xff]
    %v6416 = vld [vmem:[%s6400 + $0x78] sm:$0xff]
    %6417 = vmatprep.subr.mxu0 0.0
    %6418 = vmatpush1.msra.mxu0 %v6416
    %6419 = vmatprep.subr.mxu0 0.0
    %6420 = vmatpush1.msra.mxu0 %v6415
    %6421 = vmatprep.subr.mxu0 0.0
    %6422 = vmatpush1.msra.mxu0 %v6414
    %6423 = vmatprep.subr.mxu0 0.0
    %6424 = vmatpush1.msra.mxu0 %v6413
    %6425 = vmatprep.subr.mxu0 0.0
    %6426 = vmatpush1.msra.mxu0 %v6412
    %6427 = vmatprep.subr.mxu0 0.0
    %6428 = vmatpush1.msra.mxu0 %v6411
    %6429 = vmatprep.subr.mxu0 0.0
    %6430 = vmatpush1.msra.mxu0 %v6410
    %6431 = vmatprep.subr.mxu0 0.0
    %6432 = vmatpush1.msra.mxu0 %v6409
    %6433 = vmatprep.subr.mxu0 0.0
    %6434 = vmatpush1.msra.mxu0 %v6408
    %6435 = vmatprep.subr.mxu0 0.0
    %6436 = vmatpush1.msra.mxu0 %v6407
    %6437 = vmatprep.subr.mxu0 0.0
    %6438 = vmatpush1.msra.mxu0 %v6406
    %6439 = vmatprep.subr.mxu0 0.0
    %6440 = vmatpush1.msra.mxu0 %v6405
    %6441 = vmatprep.subr.mxu0 0.0
    %6442 = vmatpush1.msra.mxu0 %v6404
    %6443 = vmatprep.subr.mxu0 0.0
    %6444 = vmatpush1.msra.mxu0 %v6403
    %6445 = vmatprep.subr.mxu0 0.0
    %6446 = vmatpush1.msra.mxu0 %v6402
    %6447 = vmatprep.subr.mxu0 0.0
    %6448 = vmatpush1.msra.mxu0 %v6401
    %6449 = vmatprep.subr.mxu0 0.0
    %6450 = vmatpush2.msra.mxu0 0.0
    %6451 = vmatprep.subr.mxu0 0.0
    %6452 = vmatpush2.msra.mxu0 0.0
    %6453 = vmatprep.subr.mxu0 0.0
    %6454 = vmatpush2.msra.mxu0 0.0
    %6455 = vmatprep.subr.mxu0 0.0
    %6456 = vmatpush2.msra.mxu0 0.0
    %6457 = vmatprep.subr.mxu0 0.0
    %6458 = vmatpush2.msra.mxu0 0.0
    %6459 = vmatprep.subr.mxu0 0.0
    %6460 = vmatpush2.msra.mxu0 0.0
    %6461 = vmatprep.subr.mxu0 0.0
    %6462 = vmatpush2.msra.mxu0 0.0
    %6463 = vmatprep.subr.mxu0 0.0
    %6464 = vmatpush2.msra.mxu0 0.0
    %6465 = vmatprep.subr.mxu0 0.0
    %6466 = vmatpush2.msra.mxu0 0.0
    %6467 = vmatprep.subr.mxu0 0.0
    %6468 = vmatpush2.msra.mxu0 0.0
    %6469 = vmatprep.subr.mxu0 0.0
    %6470 = vmatpush2.msra.mxu0 0.0
    %6471 = vmatprep.subr.mxu0 0.0
    %6472 = vmatpush2.msra.mxu0 0.0
    %6473 = vmatprep.subr.mxu0 0.0
    %6474 = vmatpush2.msra.mxu0 0.0
    %6475 = vmatprep.subr.mxu0 0.0
    %6476 = vmatpush2.msra.mxu0 0.0
    %6477 = vmatprep.subr.mxu0 0.0
    %6478 = vmatpush2.msra.mxu0 0.0
    %6479 = vmatprep.subr.mxu0 0.0
    %6480 = vmatpush2.msra.mxu0 0.0
    %6481 = vmatprep.mubr.f32.mxu0 0.0
    %6482 = vmatmul.mubr.f32.gmra.mxu0 %v6399
    %v6483 = vpop.f32.mrf.mxu0
    %v6484 = vadd.f32 0.0, %v6483
    %v6485 = vpop.f32.mrf.mxu0
    %6486 = vdwg.mxu0
    %v6487 = vld [vmem:[#allocation2] sm:$0xff]
    %v6488 = vadd.f32 %v6487, %v6484
    %6489 = vst [vmem:[#allocation2] sm:$0xff] %v6488
    %s6490 = sld [smem:[#allocation3 + $0x3a]]
    %s6491 = sld [smem:[#allocation3 + $0xba]]
    %s6492 = sld [smem:[#allocation3 + $0x13a]]
    %s6493 = sld [smem:[#allocation5 + $0x3a]]
    %v6494 = vstv %s6490
    %v6495 = vmul.f32 %v6494, %v51
    %v6496 = vstv %s6491
    %v6497 = vmul.f32 %v6496, %v52
    %v6498 = vadd.f32 %v6495, %v6497
    %v6499 = vstv %s6492
    %v6500 = vmul.f32 %v6499, %v53
    %v6501 = vadd.f32 %v6498, %v6500
    %v6502 = vmul.f32 %v6494, %v52
    %v6503 = vmul.f32 %v6496, %v53
    %v6504 = vadd.f32 %v6502, %v6503
    %v6505 = vmul.f32 %v6499, %v54
    %v6506 = vadd.f32 %v6504, %v6505
    %v6507 = vmax.f32 %v6501, %v6506
    %v6508 = vstv %s6493
    %v6509 = vadd.f32 %v6507, %v6508
    %v6510 = vmax.f32 %v6509, 0.0
    %s6511 = scalar_lea.vmem %s3, 7424
    %v6512 = vld [vmem:[%s6511] sm:$0xff]
    %v6513 = vld [vmem:[%s6511 + $0x8] sm:$0xff]
    %v6514 = vld [vmem:[%s6511 + $0x10] sm:$0xff]
    %v6515 = vld [vmem:[%s6511 + $0x18] sm:$0xff]
    %v6516 = vld [vmem:[%s6511 + $0x20] sm:$0xff]
    %v6517 = vld [vmem:[%s6511 + $0x28] sm:$0xff]
    %v6518 = vld [vmem:[%s6511 + $0x30] sm:$0xff]
    %v6519 = vld [vmem:[%s6511 + $0x38] sm:$0xff]
    %v6520 = vld [vmem:[%s6511 + $0x40] sm:$0xff]
    %v6521 = vld [vmem:[%s6511 + $0x48] sm:$0xff]
    %v6522 = vld [vmem:[%s6511 + $0x50] sm:$0xff]
    %v6523 = vld [vmem:[%s6511 + $0x58] sm:$0xff]
    %v6524 = vld [vmem:[%s6511 + $0x60] sm:$0xff]
    %v6525 = vld [vmem:[%s6511 + $0x68] sm:$0xff]
    %v6526 = vld [vmem:[%s6511 + $0x70] sm:$0xff]
    %v6527 = vld [vmem:[%s6511 + $0x78] sm:$0xff]
    %6528 = vmatprep.subr.mxu0 0.0
    %6529 = vmatpush1.msra.mxu0 %v6527
    %6530 = vmatprep.subr.mxu0 0.0
    %6531 = vmatpush1.msra.mxu0 %v6526
    %6532 = vmatprep.subr.mxu0 0.0
    %6533 = vmatpush1.msra.mxu0 %v6525
    %6534 = vmatprep.subr.mxu0 0.0
    %6535 = vmatpush1.msra.mxu0 %v6524
    %6536 = vmatprep.subr.mxu0 0.0
    %6537 = vmatpush1.msra.mxu0 %v6523
    %6538 = vmatprep.subr.mxu0 0.0
    %6539 = vmatpush1.msra.mxu0 %v6522
    %6540 = vmatprep.subr.mxu0 0.0
    %6541 = vmatpush1.msra.mxu0 %v6521
    %6542 = vmatprep.subr.mxu0 0.0
    %6543 = vmatpush1.msra.mxu0 %v6520
    %6544 = vmatprep.subr.mxu0 0.0
    %6545 = vmatpush1.msra.mxu0 %v6519
    %6546 = vmatprep.subr.mxu0 0.0
    %6547 = vmatpush1.msra.mxu0 %v6518
    %6548 = vmatprep.subr.mxu0 0.0
    %6549 = vmatpush1.msra.mxu0 %v6517
    %6550 = vmatprep.subr.mxu0 0.0
    %6551 = vmatpush1.msra.mxu0 %v6516
    %6552 = vmatprep.subr.mxu0 0.0
    %6553 = vmatpush1.msra.mxu0 %v6515
    %6554 = vmatprep.subr.mxu0 0.0
    %6555 = vmatpush1.msra.mxu0 %v6514
    %6556 = vmatprep.subr.mxu0 0.0
    %6557 = vmatpush1.msra.mxu0 %v6513
    %6558 = vmatprep.subr.mxu0 0.0
    %6559 = vmatpush1.msra.mxu0 %v6512
    %6560 = vmatprep.subr.mxu0 0.0
    %6561 = vmatpush2.msra.mxu0 0.0
    %6562 = vmatprep.subr.mxu0 0.0
    %6563 = vmatpush2.msra.mxu0 0.0
    %6564 = vmatprep.subr.mxu0 0.0
    %6565 = vmatpush2.msra.mxu0 0.0
    %6566 = vmatprep.subr.mxu0 0.0
    %6567 = vmatpush2.msra.mxu0 0.0
    %6568 = vmatprep.subr.mxu0 0.0
    %6569 = vmatpush2.msra.mxu0 0.0
    %6570 = vmatprep.subr.mxu0 0.0
    %6571 = vmatpush2.msra.mxu0 0.0
    %6572 = vmatprep.subr.mxu0 0.0
    %6573 = vmatpush2.msra.mxu0 0.0
    %6574 = vmatprep.subr.mxu0 0.0
    %6575 = vmatpush2.msra.mxu0 0.0
    %6576 = vmatprep.subr.mxu0 0.0
    %6577 = vmatpush2.msra.mxu0 0.0
    %6578 = vmatprep.subr.mxu0 0.0
    %6579 = vmatpush2.msra.mxu0 0.0
    %6580 = vmatprep.subr.mxu0 0.0
    %6581 = vmatpush2.msra.mxu0 0.0
    %6582 = vmatprep.subr.mxu0 0.0
    %6583 = vmatpush2.msra.mxu0 0.0
    %6584 = vmatprep.subr.mxu0 0.0
    %6585 = vmatpush2.msra.mxu0 0.0
    %6586 = vmatprep.subr.mxu0 0.0
    %6587 = vmatpush2.msra.mxu0 0.0
    %6588 = vmatprep.subr.mxu0 0.0
    %6589 = vmatpush2.msra.mxu0 0.0
    %6590 = vmatprep.subr.mxu0 0.0
    %6591 = vmatpush2.msra.mxu0 0.0
    %6592 = vmatprep.mubr.f32.mxu0 0.0
    %6593 = vmatmul.mubr.f32.gmra.mxu0 %v6510
    %v6594 = vpop.f32.mrf.mxu0
    %v6595 = vadd.f32 0.0, %v6594
    %v6596 = vpop.f32.mrf.mxu0
    %6597 = vdwg.mxu0
    %v6598 = vld [vmem:[#allocation2] sm:$0xff]
    %v6599 = vadd.f32 %v6598, %v6595
    %6600 = vst [vmem:[#allocation2] sm:$0xff] %v6599
    %s6601 = sld [smem:[#allocation3 + $0x3b]]
    %s6602 = sld [smem:[#allocation3 + $0xbb]]
    %s6603 = sld [smem:[#allocation3 + $0x13b]]
    %s6604 = sld [smem:[#allocation5 + $0x3b]]
    %v6605 = vstv %s6601
    %v6606 = vmul.f32 %v6605, %v51
    %v6607 = vstv %s6602
    %v6608 = vmul.f32 %v6607, %v52
    %v6609 = vadd.f32 %v6606, %v6608
    %v6610 = vstv %s6603
    %v6611 = vmul.f32 %v6610, %v53
    %v6612 = vadd.f32 %v6609, %v6611
    %v6613 = vmul.f32 %v6605, %v52
    %v6614 = vmul.f32 %v6607, %v53
    %v6615 = vadd.f32 %v6613, %v6614
    %v6616 = vmul.f32 %v6610, %v54
    %v6617 = vadd.f32 %v6615, %v6616
    %v6618 = vmax.f32 %v6612, %v6617
    %v6619 = vstv %s6604
    %v6620 = vadd.f32 %v6618, %v6619
    %v6621 = vmax.f32 %v6620, 0.0
    %s6622 = scalar_lea.vmem %s3, 7552
    %v6623 = vld [vmem:[%s6622] sm:$0xff]
    %v6624 = vld [vmem:[%s6622 + $0x8] sm:$0xff]
    %v6625 = vld [vmem:[%s6622 + $0x10] sm:$0xff]
    %v6626 = vld [vmem:[%s6622 + $0x18] sm:$0xff]
    %v6627 = vld [vmem:[%s6622 + $0x20] sm:$0xff]
    %v6628 = vld [vmem:[%s6622 + $0x28] sm:$0xff]
    %v6629 = vld [vmem:[%s6622 + $0x30] sm:$0xff]
    %v6630 = vld [vmem:[%s6622 + $0x38] sm:$0xff]
    %v6631 = vld [vmem:[%s6622 + $0x40] sm:$0xff]
    %v6632 = vld [vmem:[%s6622 + $0x48] sm:$0xff]
    %v6633 = vld [vmem:[%s6622 + $0x50] sm:$0xff]
    %v6634 = vld [vmem:[%s6622 + $0x58] sm:$0xff]
    %v6635 = vld [vmem:[%s6622 + $0x60] sm:$0xff]
    %v6636 = vld [vmem:[%s6622 + $0x68] sm:$0xff]
    %v6637 = vld [vmem:[%s6622 + $0x70] sm:$0xff]
    %v6638 = vld [vmem:[%s6622 + $0x78] sm:$0xff]
    %6639 = vmatprep.subr.mxu0 0.0
    %6640 = vmatpush1.msra.mxu0 %v6638
    %6641 = vmatprep.subr.mxu0 0.0
    %6642 = vmatpush1.msra.mxu0 %v6637
    %6643 = vmatprep.subr.mxu0 0.0
    %6644 = vmatpush1.msra.mxu0 %v6636
    %6645 = vmatprep.subr.mxu0 0.0
    %6646 = vmatpush1.msra.mxu0 %v6635
    %6647 = vmatprep.subr.mxu0 0.0
    %6648 = vmatpush1.msra.mxu0 %v6634
    %6649 = vmatprep.subr.mxu0 0.0
    %6650 = vmatpush1.msra.mxu0 %v6633
    %6651 = vmatprep.subr.mxu0 0.0
    %6652 = vmatpush1.msra.mxu0 %v6632
    %6653 = vmatprep.subr.mxu0 0.0
    %6654 = vmatpush1.msra.mxu0 %v6631
    %6655 = vmatprep.subr.mxu0 0.0
    %6656 = vmatpush1.msra.mxu0 %v6630
    %6657 = vmatprep.subr.mxu0 0.0
    %6658 = vmatpush1.msra.mxu0 %v6629
    %6659 = vmatprep.subr.mxu0 0.0
    %6660 = vmatpush1.msra.mxu0 %v6628
    %6661 = vmatprep.subr.mxu0 0.0
    %6662 = vmatpush1.msra.mxu0 %v6627
    %6663 = vmatprep.subr.mxu0 0.0
    %6664 = vmatpush1.msra.mxu0 %v6626
    %6665 = vmatprep.subr.mxu0 0.0
    %6666 = vmatpush1.msra.mxu0 %v6625
    %6667 = vmatprep.subr.mxu0 0.0
    %6668 = vmatpush1.msra.mxu0 %v6624
    %6669 = vmatprep.subr.mxu0 0.0
    %6670 = vmatpush1.msra.mxu0 %v6623
    %6671 = vmatprep.subr.mxu0 0.0
    %6672 = vmatpush2.msra.mxu0 0.0
    %6673 = vmatprep.subr.mxu0 0.0
    %6674 = vmatpush2.msra.mxu0 0.0
    %6675 = vmatprep.subr.mxu0 0.0
    %6676 = vmatpush2.msra.mxu0 0.0
    %6677 = vmatprep.subr.mxu0 0.0
    %6678 = vmatpush2.msra.mxu0 0.0
    %6679 = vmatprep.subr.mxu0 0.0
    %6680 = vmatpush2.msra.mxu0 0.0
    %6681 = vmatprep.subr.mxu0 0.0
    %6682 = vmatpush2.msra.mxu0 0.0
    %6683 = vmatprep.subr.mxu0 0.0
    %6684 = vmatpush2.msra.mxu0 0.0
    %6685 = vmatprep.subr.mxu0 0.0
    %6686 = vmatpush2.msra.mxu0 0.0
    %6687 = vmatprep.subr.mxu0 0.0
    %6688 = vmatpush2.msra.mxu0 0.0
    %6689 = vmatprep.subr.mxu0 0.0
    %6690 = vmatpush2.msra.mxu0 0.0
    %6691 = vmatprep.subr.mxu0 0.0
    %6692 = vmatpush2.msra.mxu0 0.0
    %6693 = vmatprep.subr.mxu0 0.0
    %6694 = vmatpush2.msra.mxu0 0.0
    %6695 = vmatprep.subr.mxu0 0.0
    %6696 = vmatpush2.msra.mxu0 0.0
    %6697 = vmatprep.subr.mxu0 0.0
    %6698 = vmatpush2.msra.mxu0 0.0
    %6699 = vmatprep.subr.mxu0 0.0
    %6700 = vmatpush2.msra.mxu0 0.0
    %6701 = vmatprep.subr.mxu0 0.0
    %6702 = vmatpush2.msra.mxu0 0.0
    %6703 = vmatprep.mubr.f32.mxu0 0.0
    %6704 = vmatmul.mubr.f32.gmra.mxu0 %v6621
    %v6705 = vpop.f32.mrf.mxu0
    %v6706 = vadd.f32 0.0, %v6705
    %v6707 = vpop.f32.mrf.mxu0
    %6708 = vdwg.mxu0
    %v6709 = vld [vmem:[#allocation2] sm:$0xff]
    %v6710 = vadd.f32 %v6709, %v6706
    %6711 = vst [vmem:[#allocation2] sm:$0xff] %v6710
    %s6712 = sld [smem:[#allocation3 + $0x3c]]
    %s6713 = sld [smem:[#allocation3 + $0xbc]]
    %s6714 = sld [smem:[#allocation3 + $0x13c]]
    %s6715 = sld [smem:[#allocation5 + $0x3c]]
    %v6716 = vstv %s6712
    %v6717 = vmul.f32 %v6716, %v51
    %v6718 = vstv %s6713
    %v6719 = vmul.f32 %v6718, %v52
    %v6720 = vadd.f32 %v6717, %v6719
    %v6721 = vstv %s6714
    %v6722 = vmul.f32 %v6721, %v53
    %v6723 = vadd.f32 %v6720, %v6722
    %v6724 = vmul.f32 %v6716, %v52
    %v6725 = vmul.f32 %v6718, %v53
    %v6726 = vadd.f32 %v6724, %v6725
    %v6727 = vmul.f32 %v6721, %v54
    %v6728 = vadd.f32 %v6726, %v6727
    %v6729 = vmax.f32 %v6723, %v6728
    %v6730 = vstv %s6715
    %v6731 = vadd.f32 %v6729, %v6730
    %v6732 = vmax.f32 %v6731, 0.0
    %s6733 = scalar_lea.vmem %s3, 7680
    %v6734 = vld [vmem:[%s6733] sm:$0xff]
    %v6735 = vld [vmem:[%s6733 + $0x8] sm:$0xff]
    %v6736 = vld [vmem:[%s6733 + $0x10] sm:$0xff]
    %v6737 = vld [vmem:[%s6733 + $0x18] sm:$0xff]
    %v6738 = vld [vmem:[%s6733 + $0x20] sm:$0xff]
    %v6739 = vld [vmem:[%s6733 + $0x28] sm:$0xff]
    %v6740 = vld [vmem:[%s6733 + $0x30] sm:$0xff]
    %v6741 = vld [vmem:[%s6733 + $0x38] sm:$0xff]
    %v6742 = vld [vmem:[%s6733 + $0x40] sm:$0xff]
    %v6743 = vld [vmem:[%s6733 + $0x48] sm:$0xff]
    %v6744 = vld [vmem:[%s6733 + $0x50] sm:$0xff]
    %v6745 = vld [vmem:[%s6733 + $0x58] sm:$0xff]
    %v6746 = vld [vmem:[%s6733 + $0x60] sm:$0xff]
    %v6747 = vld [vmem:[%s6733 + $0x68] sm:$0xff]
    %v6748 = vld [vmem:[%s6733 + $0x70] sm:$0xff]
    %v6749 = vld [vmem:[%s6733 + $0x78] sm:$0xff]
    %6750 = vmatprep.subr.mxu0 0.0
    %6751 = vmatpush1.msra.mxu0 %v6749
    %6752 = vmatprep.subr.mxu0 0.0
    %6753 = vmatpush1.msra.mxu0 %v6748
    %6754 = vmatprep.subr.mxu0 0.0
    %6755 = vmatpush1.msra.mxu0 %v6747
    %6756 = vmatprep.subr.mxu0 0.0
    %6757 = vmatpush1.msra.mxu0 %v6746
    %6758 = vmatprep.subr.mxu0 0.0
    %6759 = vmatpush1.msra.mxu0 %v6745
    %6760 = vmatprep.subr.mxu0 0.0
    %6761 = vmatpush1.msra.mxu0 %v6744
    %6762 = vmatprep.subr.mxu0 0.0
    %6763 = vmatpush1.msra.mxu0 %v6743
    %6764 = vmatprep.subr.mxu0 0.0
    %6765 = vmatpush1.msra.mxu0 %v6742
    %6766 = vmatprep.subr.mxu0 0.0
    %6767 = vmatpush1.msra.mxu0 %v6741
    %6768 = vmatprep.subr.mxu0 0.0
    %6769 = vmatpush1.msra.mxu0 %v6740
    %6770 = vmatprep.subr.mxu0 0.0
    %6771 = vmatpush1.msra.mxu0 %v6739
    %6772 = vmatprep.subr.mxu0 0.0
    %6773 = vmatpush1.msra.mxu0 %v6738
    %6774 = vmatprep.subr.mxu0 0.0
    %6775 = vmatpush1.msra.mxu0 %v6737
    %6776 = vmatprep.subr.mxu0 0.0
    %6777 = vmatpush1.msra.mxu0 %v6736
    %6778 = vmatprep.subr.mxu0 0.0
    %6779 = vmatpush1.msra.mxu0 %v6735
    %6780 = vmatprep.subr.mxu0 0.0
    %6781 = vmatpush1.msra.mxu0 %v6734
    %6782 = vmatprep.subr.mxu0 0.0
    %6783 = vmatpush2.msra.mxu0 0.0
    %6784 = vmatprep.subr.mxu0 0.0
    %6785 = vmatpush2.msra.mxu0 0.0
    %6786 = vmatprep.subr.mxu0 0.0
    %6787 = vmatpush2.msra.mxu0 0.0
    %6788 = vmatprep.subr.mxu0 0.0
    %6789 = vmatpush2.msra.mxu0 0.0
    %6790 = vmatprep.subr.mxu0 0.0
    %6791 = vmatpush2.msra.mxu0 0.0
    %6792 = vmatprep.subr.mxu0 0.0
    %6793 = vmatpush2.msra.mxu0 0.0
    %6794 = vmatprep.subr.mxu0 0.0
    %6795 = vmatpush2.msra.mxu0 0.0
    %6796 = vmatprep.subr.mxu0 0.0
    %6797 = vmatpush2.msra.mxu0 0.0
    %6798 = vmatprep.subr.mxu0 0.0
    %6799 = vmatpush2.msra.mxu0 0.0
    %6800 = vmatprep.subr.mxu0 0.0
    %6801 = vmatpush2.msra.mxu0 0.0
    %6802 = vmatprep.subr.mxu0 0.0
    %6803 = vmatpush2.msra.mxu0 0.0
    %6804 = vmatprep.subr.mxu0 0.0
    %6805 = vmatpush2.msra.mxu0 0.0
    %6806 = vmatprep.subr.mxu0 0.0
    %6807 = vmatpush2.msra.mxu0 0.0
    %6808 = vmatprep.subr.mxu0 0.0
    %6809 = vmatpush2.msra.mxu0 0.0
    %6810 = vmatprep.subr.mxu0 0.0
    %6811 = vmatpush2.msra.mxu0 0.0
    %6812 = vmatprep.subr.mxu0 0.0
    %6813 = vmatpush2.msra.mxu0 0.0
    %6814 = vmatprep.mubr.f32.mxu0 0.0
    %6815 = vmatmul.mubr.f32.gmra.mxu0 %v6732
    %v6816 = vpop.f32.mrf.mxu0
    %v6817 = vadd.f32 0.0, %v6816
    %v6818 = vpop.f32.mrf.mxu0
    %6819 = vdwg.mxu0
    %v6820 = vld [vmem:[#allocation2] sm:$0xff]
    %v6821 = vadd.f32 %v6820, %v6817
    %6822 = vst [vmem:[#allocation2] sm:$0xff] %v6821
    %s6823 = sld [smem:[#allocation3 + $0x3d]]
    %s6824 = sld [smem:[#allocation3 + $0xbd]]
    %s6825 = sld [smem:[#allocation3 + $0x13d]]
    %s6826 = sld [smem:[#allocation5 + $0x3d]]
    %v6827 = vstv %s6823
    %v6828 = vmul.f32 %v6827, %v51
    %v6829 = vstv %s6824
    %v6830 = vmul.f32 %v6829, %v52
    %v6831 = vadd.f32 %v6828, %v6830
    %v6832 = vstv %s6825
    %v6833 = vmul.f32 %v6832, %v53
    %v6834 = vadd.f32 %v6831, %v6833
    %v6835 = vmul.f32 %v6827, %v52
    %v6836 = vmul.f32 %v6829, %v53
    %v6837 = vadd.f32 %v6835, %v6836
    %v6838 = vmul.f32 %v6832, %v54
    %v6839 = vadd.f32 %v6837, %v6838
    %v6840 = vmax.f32 %v6834, %v6839
    %v6841 = vstv %s6826
    %v6842 = vadd.f32 %v6840, %v6841
    %v6843 = vmax.f32 %v6842, 0.0
    %s6844 = scalar_lea.vmem %s3, 7808
    %v6845 = vld [vmem:[%s6844] sm:$0xff]
    %v6846 = vld [vmem:[%s6844 + $0x8] sm:$0xff]
    %v6847 = vld [vmem:[%s6844 + $0x10] sm:$0xff]
    %v6848 = vld [vmem:[%s6844 + $0x18] sm:$0xff]
    %v6849 = vld [vmem:[%s6844 + $0x20] sm:$0xff]
    %v6850 = vld [vmem:[%s6844 + $0x28] sm:$0xff]
    %v6851 = vld [vmem:[%s6844 + $0x30] sm:$0xff]
    %v6852 = vld [vmem:[%s6844 + $0x38] sm:$0xff]
    %v6853 = vld [vmem:[%s6844 + $0x40] sm:$0xff]
    %v6854 = vld [vmem:[%s6844 + $0x48] sm:$0xff]
    %v6855 = vld [vmem:[%s6844 + $0x50] sm:$0xff]
    %v6856 = vld [vmem:[%s6844 + $0x58] sm:$0xff]
    %v6857 = vld [vmem:[%s6844 + $0x60] sm:$0xff]
    %v6858 = vld [vmem:[%s6844 + $0x68] sm:$0xff]
    %v6859 = vld [vmem:[%s6844 + $0x70] sm:$0xff]
    %v6860 = vld [vmem:[%s6844 + $0x78] sm:$0xff]
    %6861 = vmatprep.subr.mxu0 0.0
    %6862 = vmatpush1.msra.mxu0 %v6860
    %6863 = vmatprep.subr.mxu0 0.0
    %6864 = vmatpush1.msra.mxu0 %v6859
    %6865 = vmatprep.subr.mxu0 0.0
    %6866 = vmatpush1.msra.mxu0 %v6858
    %6867 = vmatprep.subr.mxu0 0.0
    %6868 = vmatpush1.msra.mxu0 %v6857
    %6869 = vmatprep.subr.mxu0 0.0
    %6870 = vmatpush1.msra.mxu0 %v6856
    %6871 = vmatprep.subr.mxu0 0.0
    %6872 = vmatpush1.msra.mxu0 %v6855
    %6873 = vmatprep.subr.mxu0 0.0
    %6874 = vmatpush1.msra.mxu0 %v6854
    %6875 = vmatprep.subr.mxu0 0.0
    %6876 = vmatpush1.msra.mxu0 %v6853
    %6877 = vmatprep.subr.mxu0 0.0
    %6878 = vmatpush1.msra.mxu0 %v6852
    %6879 = vmatprep.subr.mxu0 0.0
    %6880 = vmatpush1.msra.mxu0 %v6851
    %6881 = vmatprep.subr.mxu0 0.0
    %6882 = vmatpush1.msra.mxu0 %v6850
    %6883 = vmatprep.subr.mxu0 0.0
    %6884 = vmatpush1.msra.mxu0 %v6849
    %6885 = vmatprep.subr.mxu0 0.0
    %6886 = vmatpush1.msra.mxu0 %v6848
    %6887 = vmatprep.subr.mxu0 0.0
    %6888 = vmatpush1.msra.mxu0 %v6847
    %6889 = vmatprep.subr.mxu0 0.0
    %6890 = vmatpush1.msra.mxu0 %v6846
    %6891 = vmatprep.subr.mxu0 0.0
    %6892 = vmatpush1.msra.mxu0 %v6845
    %6893 = vmatprep.subr.mxu0 0.0
    %6894 = vmatpush2.msra.mxu0 0.0
    %6895 = vmatprep.subr.mxu0 0.0
    %6896 = vmatpush2.msra.mxu0 0.0
    %6897 = vmatprep.subr.mxu0 0.0
    %6898 = vmatpush2.msra.mxu0 0.0
    %6899 = vmatprep.subr.mxu0 0.0
    %6900 = vmatpush2.msra.mxu0 0.0
    %6901 = vmatprep.subr.mxu0 0.0
    %6902 = vmatpush2.msra.mxu0 0.0
    %6903 = vmatprep.subr.mxu0 0.0
    %6904 = vmatpush2.msra.mxu0 0.0
    %6905 = vmatprep.subr.mxu0 0.0
    %6906 = vmatpush2.msra.mxu0 0.0
    %6907 = vmatprep.subr.mxu0 0.0
    %6908 = vmatpush2.msra.mxu0 0.0
    %6909 = vmatprep.subr.mxu0 0.0
    %6910 = vmatpush2.msra.mxu0 0.0
    %6911 = vmatprep.subr.mxu0 0.0
    %6912 = vmatpush2.msra.mxu0 0.0
    %6913 = vmatprep.subr.mxu0 0.0
    %6914 = vmatpush2.msra.mxu0 0.0
    %6915 = vmatprep.subr.mxu0 0.0
    %6916 = vmatpush2.msra.mxu0 0.0
    %6917 = vmatprep.subr.mxu0 0.0
    %6918 = vmatpush2.msra.mxu0 0.0
    %6919 = vmatprep.subr.mxu0 0.0
    %6920 = vmatpush2.msra.mxu0 0.0
    %6921 = vmatprep.subr.mxu0 0.0
    %6922 = vmatpush2.msra.mxu0 0.0
    %6923 = vmatprep.subr.mxu0 0.0
    %6924 = vmatpush2.msra.mxu0 0.0
    %6925 = vmatprep.mubr.f32.mxu0 0.0
    %6926 = vmatmul.mubr.f32.gmra.mxu0 %v6843
    %v6927 = vpop.f32.mrf.mxu0
    %v6928 = vadd.f32 0.0, %v6927
    %v6929 = vpop.f32.mrf.mxu0
    %6930 = vdwg.mxu0
    %v6931 = vld [vmem:[#allocation2] sm:$0xff]
    %v6932 = vadd.f32 %v6931, %v6928
    %6933 = vst [vmem:[#allocation2] sm:$0xff] %v6932
    %s6934 = sld [smem:[#allocation3 + $0x3e]]
    %s6935 = sld [smem:[#allocation3 + $0xbe]]
    %s6936 = sld [smem:[#allocation3 + $0x13e]]
    %s6937 = sld [smem:[#allocation5 + $0x3e]]
    %v6938 = vstv %s6934
    %v6939 = vmul.f32 %v6938, %v51
    %v6940 = vstv %s6935
    %v6941 = vmul.f32 %v6940, %v52
    %v6942 = vadd.f32 %v6939, %v6941
    %v6943 = vstv %s6936
    %v6944 = vmul.f32 %v6943, %v53
    %v6945 = vadd.f32 %v6942, %v6944
    %v6946 = vmul.f32 %v6938, %v52
    %v6947 = vmul.f32 %v6940, %v53
    %v6948 = vadd.f32 %v6946, %v6947
    %v6949 = vmul.f32 %v6943, %v54
    %v6950 = vadd.f32 %v6948, %v6949
    %v6951 = vmax.f32 %v6945, %v6950
    %v6952 = vstv %s6937
    %v6953 = vadd.f32 %v6951, %v6952
    %v6954 = vmax.f32 %v6953, 0.0
    %s6955 = scalar_lea.vmem %s3, 7936
    %v6956 = vld [vmem:[%s6955] sm:$0xff]
    %v6957 = vld [vmem:[%s6955 + $0x8] sm:$0xff]
    %v6958 = vld [vmem:[%s6955 + $0x10] sm:$0xff]
    %v6959 = vld [vmem:[%s6955 + $0x18] sm:$0xff]
    %v6960 = vld [vmem:[%s6955 + $0x20] sm:$0xff]
    %v6961 = vld [vmem:[%s6955 + $0x28] sm:$0xff]
    %v6962 = vld [vmem:[%s6955 + $0x30] sm:$0xff]
    %v6963 = vld [vmem:[%s6955 + $0x38] sm:$0xff]
    %v6964 = vld [vmem:[%s6955 + $0x40] sm:$0xff]
    %v6965 = vld [vmem:[%s6955 + $0x48] sm:$0xff]
    %v6966 = vld [vmem:[%s6955 + $0x50] sm:$0xff]
    %v6967 = vld [vmem:[%s6955 + $0x58] sm:$0xff]
    %v6968 = vld [vmem:[%s6955 + $0x60] sm:$0xff]
    %v6969 = vld [vmem:[%s6955 + $0x68] sm:$0xff]
    %v6970 = vld [vmem:[%s6955 + $0x70] sm:$0xff]
    %v6971 = vld [vmem:[%s6955 + $0x78] sm:$0xff]
    %6972 = vmatprep.subr.mxu0 0.0
    %6973 = vmatpush1.msra.mxu0 %v6971
    %6974 = vmatprep.subr.mxu0 0.0
    %6975 = vmatpush1.msra.mxu0 %v6970
    %6976 = vmatprep.subr.mxu0 0.0
    %6977 = vmatpush1.msra.mxu0 %v6969
    %6978 = vmatprep.subr.mxu0 0.0
    %6979 = vmatpush1.msra.mxu0 %v6968
    %6980 = vmatprep.subr.mxu0 0.0
    %6981 = vmatpush1.msra.mxu0 %v6967
    %6982 = vmatprep.subr.mxu0 0.0
    %6983 = vmatpush1.msra.mxu0 %v6966
    %6984 = vmatprep.subr.mxu0 0.0
    %6985 = vmatpush1.msra.mxu0 %v6965
    %6986 = vmatprep.subr.mxu0 0.0
    %6987 = vmatpush1.msra.mxu0 %v6964
    %6988 = vmatprep.subr.mxu0 0.0
    %6989 = vmatpush1.msra.mxu0 %v6963
    %6990 = vmatprep.subr.mxu0 0.0
    %6991 = vmatpush1.msra.mxu0 %v6962
    %6992 = vmatprep.subr.mxu0 0.0
    %6993 = vmatpush1.msra.mxu0 %v6961
    %6994 = vmatprep.subr.mxu0 0.0
    %6995 = vmatpush1.msra.mxu0 %v6960
    %6996 = vmatprep.subr.mxu0 0.0
    %6997 = vmatpush1.msra.mxu0 %v6959
    %6998 = vmatprep.subr.mxu0 0.0
    %6999 = vmatpush1.msra.mxu0 %v6958
    %7000 = vmatprep.subr.mxu0 0.0
    %7001 = vmatpush1.msra.mxu0 %v6957
    %7002 = vmatprep.subr.mxu0 0.0
    %7003 = vmatpush1.msra.mxu0 %v6956
    %7004 = vmatprep.subr.mxu0 0.0
    %7005 = vmatpush2.msra.mxu0 0.0
    %7006 = vmatprep.subr.mxu0 0.0
    %7007 = vmatpush2.msra.mxu0 0.0
    %7008 = vmatprep.subr.mxu0 0.0
    %7009 = vmatpush2.msra.mxu0 0.0
    %7010 = vmatprep.subr.mxu0 0.0
    %7011 = vmatpush2.msra.mxu0 0.0
    %7012 = vmatprep.subr.mxu0 0.0
    %7013 = vmatpush2.msra.mxu0 0.0
    %7014 = vmatprep.subr.mxu0 0.0
    %7015 = vmatpush2.msra.mxu0 0.0
    %7016 = vmatprep.subr.mxu0 0.0
    %7017 = vmatpush2.msra.mxu0 0.0
    %7018 = vmatprep.subr.mxu0 0.0
    %7019 = vmatpush2.msra.mxu0 0.0
    %7020 = vmatprep.subr.mxu0 0.0
    %7021 = vmatpush2.msra.mxu0 0.0
    %7022 = vmatprep.subr.mxu0 0.0
    %7023 = vmatpush2.msra.mxu0 0.0
    %7024 = vmatprep.subr.mxu0 0.0
    %7025 = vmatpush2.msra.mxu0 0.0
    %7026 = vmatprep.subr.mxu0 0.0
    %7027 = vmatpush2.msra.mxu0 0.0
    %7028 = vmatprep.subr.mxu0 0.0
    %7029 = vmatpush2.msra.mxu0 0.0
    %7030 = vmatprep.subr.mxu0 0.0
    %7031 = vmatpush2.msra.mxu0 0.0
    %7032 = vmatprep.subr.mxu0 0.0
    %7033 = vmatpush2.msra.mxu0 0.0
    %7034 = vmatprep.subr.mxu0 0.0
    %7035 = vmatpush2.msra.mxu0 0.0
    %7036 = vmatprep.mubr.f32.mxu0 0.0
    %7037 = vmatmul.mubr.f32.gmra.mxu0 %v6954
    %v7038 = vpop.f32.mrf.mxu0
    %v7039 = vadd.f32 0.0, %v7038
    %v7040 = vpop.f32.mrf.mxu0
    %7041 = vdwg.mxu0
    %v7042 = vld [vmem:[#allocation2] sm:$0xff]
    %v7043 = vadd.f32 %v7042, %v7039
    %7044 = vst [vmem:[#allocation2] sm:$0xff] %v7043
    %s7045 = sld [smem:[#allocation3 + $0x3f]]
    %s7046 = sld [smem:[#allocation3 + $0xbf]]
    %s7047 = sld [smem:[#allocation3 + $0x13f]]
    %s7048 = sld [smem:[#allocation5 + $0x3f]]
    %v7049 = vstv %s7045
    %v7050 = vmul.f32 %v7049, %v51
    %v7051 = vstv %s7046
    %v7052 = vmul.f32 %v7051, %v52
    %v7053 = vadd.f32 %v7050, %v7052
    %v7054 = vstv %s7047
    %v7055 = vmul.f32 %v7054, %v53
    %v7056 = vadd.f32 %v7053, %v7055
    %v7057 = vmul.f32 %v7049, %v52
    %v7058 = vmul.f32 %v7051, %v53
    %v7059 = vadd.f32 %v7057, %v7058
    %v7060 = vmul.f32 %v7054, %v54
    %v7061 = vadd.f32 %v7059, %v7060
    %v7062 = vmax.f32 %v7056, %v7061
    %v7063 = vstv %s7048
    %v7064 = vadd.f32 %v7062, %v7063
    %v7065 = vmax.f32 %v7064, 0.0
    %s7066 = scalar_lea.vmem %s3, 8064
    %v7067 = vld [vmem:[%s7066] sm:$0xff]
    %v7068 = vld [vmem:[%s7066 + $0x8] sm:$0xff]
    %v7069 = vld [vmem:[%s7066 + $0x10] sm:$0xff]
    %v7070 = vld [vmem:[%s7066 + $0x18] sm:$0xff]
    %v7071 = vld [vmem:[%s7066 + $0x20] sm:$0xff]
    %v7072 = vld [vmem:[%s7066 + $0x28] sm:$0xff]
    %v7073 = vld [vmem:[%s7066 + $0x30] sm:$0xff]
    %v7074 = vld [vmem:[%s7066 + $0x38] sm:$0xff]
    %v7075 = vld [vmem:[%s7066 + $0x40] sm:$0xff]
    %v7076 = vld [vmem:[%s7066 + $0x48] sm:$0xff]
    %v7077 = vld [vmem:[%s7066 + $0x50] sm:$0xff]
    %v7078 = vld [vmem:[%s7066 + $0x58] sm:$0xff]
    %v7079 = vld [vmem:[%s7066 + $0x60] sm:$0xff]
    %v7080 = vld [vmem:[%s7066 + $0x68] sm:$0xff]
    %v7081 = vld [vmem:[%s7066 + $0x70] sm:$0xff]
    %v7082 = vld [vmem:[%s7066 + $0x78] sm:$0xff]
    %7083 = vmatprep.subr.mxu0 0.0
    %7084 = vmatpush1.msra.mxu0 %v7082
    %7085 = vmatprep.subr.mxu0 0.0
    %7086 = vmatpush1.msra.mxu0 %v7081
    %7087 = vmatprep.subr.mxu0 0.0
    %7088 = vmatpush1.msra.mxu0 %v7080
    %7089 = vmatprep.subr.mxu0 0.0
    %7090 = vmatpush1.msra.mxu0 %v7079
    %7091 = vmatprep.subr.mxu0 0.0
    %7092 = vmatpush1.msra.mxu0 %v7078
    %7093 = vmatprep.subr.mxu0 0.0
    %7094 = vmatpush1.msra.mxu0 %v7077
    %7095 = vmatprep.subr.mxu0 0.0
    %7096 = vmatpush1.msra.mxu0 %v7076
    %7097 = vmatprep.subr.mxu0 0.0
    %7098 = vmatpush1.msra.mxu0 %v7075
    %7099 = vmatprep.subr.mxu0 0.0
    %7100 = vmatpush1.msra.mxu0 %v7074
    %7101 = vmatprep.subr.mxu0 0.0
    %7102 = vmatpush1.msra.mxu0 %v7073
    %7103 = vmatprep.subr.mxu0 0.0
    %7104 = vmatpush1.msra.mxu0 %v7072
    %7105 = vmatprep.subr.mxu0 0.0
    %7106 = vmatpush1.msra.mxu0 %v7071
    %7107 = vmatprep.subr.mxu0 0.0
    %7108 = vmatpush1.msra.mxu0 %v7070
    %7109 = vmatprep.subr.mxu0 0.0
    %7110 = vmatpush1.msra.mxu0 %v7069
    %7111 = vmatprep.subr.mxu0 0.0
    %7112 = vmatpush1.msra.mxu0 %v7068
    %7113 = vmatprep.subr.mxu0 0.0
    %7114 = vmatpush1.msra.mxu0 %v7067
    %7115 = vmatprep.subr.mxu0 0.0
    %7116 = vmatpush2.msra.mxu0 0.0
    %7117 = vmatprep.subr.mxu0 0.0
    %7118 = vmatpush2.msra.mxu0 0.0
    %7119 = vmatprep.subr.mxu0 0.0
    %7120 = vmatpush2.msra.mxu0 0.0
    %7121 = vmatprep.subr.mxu0 0.0
    %7122 = vmatpush2.msra.mxu0 0.0
    %7123 = vmatprep.subr.mxu0 0.0
    %7124 = vmatpush2.msra.mxu0 0.0
    %7125 = vmatprep.subr.mxu0 0.0
    %7126 = vmatpush2.msra.mxu0 0.0
    %7127 = vmatprep.subr.mxu0 0.0
    %7128 = vmatpush2.msra.mxu0 0.0
    %7129 = vmatprep.subr.mxu0 0.0
    %7130 = vmatpush2.msra.mxu0 0.0
    %7131 = vmatprep.subr.mxu0 0.0
    %7132 = vmatpush2.msra.mxu0 0.0
    %7133 = vmatprep.subr.mxu0 0.0
    %7134 = vmatpush2.msra.mxu0 0.0
    %7135 = vmatprep.subr.mxu0 0.0
    %7136 = vmatpush2.msra.mxu0 0.0
    %7137 = vmatprep.subr.mxu0 0.0
    %7138 = vmatpush2.msra.mxu0 0.0
    %7139 = vmatprep.subr.mxu0 0.0
    %7140 = vmatpush2.msra.mxu0 0.0
    %7141 = vmatprep.subr.mxu0 0.0
    %7142 = vmatpush2.msra.mxu0 0.0
    %7143 = vmatprep.subr.mxu0 0.0
    %7144 = vmatpush2.msra.mxu0 0.0
    %7145 = vmatprep.subr.mxu0 0.0
    %7146 = vmatpush2.msra.mxu0 0.0
    %7147 = vmatprep.mubr.f32.mxu0 0.0
    %7148 = vmatmul.mubr.f32.gmra.mxu0 %v7065
    %v7149 = vpop.f32.mrf.mxu0
    %v7150 = vadd.f32 0.0, %v7149
    %v7151 = vpop.f32.mrf.mxu0
    %7152 = vdwg.mxu0
    %v7153 = vld [vmem:[#allocation2] sm:$0xff]
    %v7154 = vadd.f32 %v7153, %v7150
    %7155 = vst [vmem:[#allocation2] sm:$0xff] %v7154
    %v7156 = vld [vmem:[#allocation2] sm:$0xff]
    %v7157 = vld [vmem:[%s4] sm:$0x1]
    %v7159 = vlaneseq
    %v7160 = vshrl.u32 %v7159, 7
    %v7161 = vsub.s32 0, %v7160
    %v7162 = vrot.slane %v7157, %v7161
    %v7164 = vadd.f32 %v7156, %v7162
    %v7165 = vmax.f32 %v7164, 0.0
    %v7166 = vld [vmem:[%s5] sm:$0xff]
    %v7167 = vld [vmem:[%s5 + $0x8] sm:$0xff]
    %v7168 = vld [vmem:[%s5 + $0x10] sm:$0xff]
    %v7169 = vld [vmem:[%s5 + $0x18] sm:$0xff]
    %v7170 = vld [vmem:[%s5 + $0x20] sm:$0xff]
    %v7171 = vld [vmem:[%s5 + $0x28] sm:$0xff]
    %v7172 = vld [vmem:[%s5 + $0x30] sm:$0xff]
    %v7173 = vld [vmem:[%s5 + $0x38] sm:$0xff]
    %v7174 = vld [vmem:[%s5 + $0x40] sm:$0xff]
    %v7175 = vld [vmem:[%s5 + $0x48] sm:$0xff]
    %v7176 = vld [vmem:[%s5 + $0x50] sm:$0xff]
    %v7177 = vld [vmem:[%s5 + $0x58] sm:$0xff]
    %v7178 = vld [vmem:[%s5 + $0x60] sm:$0xff]
    %v7179 = vld [vmem:[%s5 + $0x68] sm:$0xff]
    %v7180 = vld [vmem:[%s5 + $0x70] sm:$0xff]
    %v7181 = vld [vmem:[%s5 + $0x78] sm:$0xff]
    %v7182 = vld [vmem:[%s6] sm:$0x1]
    %v7184 = vlaneseq
    %v7185 = vshrl.u32 %v7184, 7
    %v7186 = vsub.s32 0, %v7185
    %v7187 = vrot.slane %v7182, %v7186
    %7189 = vmatprep.subr.mxu0 0.0
    %7190 = vmatpush1.msra.mxu0 %v7181
    %7191 = vmatprep.subr.mxu0 0.0
    %7192 = vmatpush1.msra.mxu0 %v7180
    %7193 = vmatprep.subr.mxu0 0.0
    %7194 = vmatpush1.msra.mxu0 %v7179
    %7195 = vmatprep.subr.mxu0 0.0
    %7196 = vmatpush1.msra.mxu0 %v7178
    %7197 = vmatprep.subr.mxu0 0.0
    %7198 = vmatpush1.msra.mxu0 %v7177
    %7199 = vmatprep.subr.mxu0 0.0
    %7200 = vmatpush1.msra.mxu0 %v7176
    %7201 = vmatprep.subr.mxu0 0.0
    %7202 = vmatpush1.msra.mxu0 %v7175
    %7203 = vmatprep.subr.mxu0 0.0
    %7204 = vmatpush1.msra.mxu0 %v7174
    %7205 = vmatprep.subr.mxu0 0.0
    %7206 = vmatpush1.msra.mxu0 %v7173
    %7207 = vmatprep.subr.mxu0 0.0
    %7208 = vmatpush1.msra.mxu0 %v7172
    %7209 = vmatprep.subr.mxu0 0.0
    %7210 = vmatpush1.msra.mxu0 %v7171
    %7211 = vmatprep.subr.mxu0 0.0
    %7212 = vmatpush1.msra.mxu0 %v7170
    %7213 = vmatprep.subr.mxu0 0.0
    %7214 = vmatpush1.msra.mxu0 %v7169
    %7215 = vmatprep.subr.mxu0 0.0
    %7216 = vmatpush1.msra.mxu0 %v7168
    %7217 = vmatprep.subr.mxu0 0.0
    %7218 = vmatpush1.msra.mxu0 %v7167
    %7219 = vmatprep.subr.mxu0 0.0
    %7220 = vmatpush1.msra.mxu0 %v7166
    %7221 = vmatprep.subr.mxu0 0.0
    %7222 = vmatpush2.msra.mxu0 0.0
    %7223 = vmatprep.subr.mxu0 0.0
    %7224 = vmatpush2.msra.mxu0 0.0
    %7225 = vmatprep.subr.mxu0 0.0
    %7226 = vmatpush2.msra.mxu0 0.0
    %7227 = vmatprep.subr.mxu0 0.0
    %7228 = vmatpush2.msra.mxu0 0.0
    %7229 = vmatprep.subr.mxu0 0.0
    %7230 = vmatpush2.msra.mxu0 0.0
    %7231 = vmatprep.subr.mxu0 0.0
    %7232 = vmatpush2.msra.mxu0 0.0
    %7233 = vmatprep.subr.mxu0 0.0
    %7234 = vmatpush2.msra.mxu0 0.0
    %7235 = vmatprep.subr.mxu0 0.0
    %7236 = vmatpush2.msra.mxu0 0.0
    %7237 = vmatprep.subr.mxu0 0.0
    %7238 = vmatpush2.msra.mxu0 0.0
    %7239 = vmatprep.subr.mxu0 0.0
    %7240 = vmatpush2.msra.mxu0 0.0
    %7241 = vmatprep.subr.mxu0 0.0
    %7242 = vmatpush2.msra.mxu0 0.0
    %7243 = vmatprep.subr.mxu0 0.0
    %7244 = vmatpush2.msra.mxu0 0.0
    %7245 = vmatprep.subr.mxu0 0.0
    %7246 = vmatpush2.msra.mxu0 0.0
    %7247 = vmatprep.subr.mxu0 0.0
    %7248 = vmatpush2.msra.mxu0 0.0
    %7249 = vmatprep.subr.mxu0 0.0
    %7250 = vmatpush2.msra.mxu0 0.0
    %7251 = vmatprep.subr.mxu0 0.0
    %7252 = vmatpush2.msra.mxu0 0.0
    %7253 = vmatprep.mubr.f32.mxu0 0.0
    %7254 = vmatmul.mubr.f32.gmra.mxu0 %v7165
    %v7255 = vpop.f32.mrf.mxu0
    %v7256 = vadd.f32 %v7187, %v7255
    %v7257 = vpop.f32.mrf.mxu0
    %7258 = vdwg.mxu0
    %7259 = vst [vmem:[%s7] sm:$0xff] %v7256
    // Predicated region
    $region38: #{cnn_forecast_forward.1} parent=1 // pred_check
      _
    $region39: #{cnn_forecast_forward.1} parent=1 // pred_check_branch
      %7261 = sbr.rel (0) target = $region41
    $region40: #{cnn_forecast_forward.1} parent=1 // pred_region
      _
    $region41: #{cnn_forecast_forward.1} parent=1 // pred_fallthru
      _
    // Predicated region
    $region42: #{cnn_forecast_forward.1} parent=1 // pred_check
      _
    $region43: #{cnn_forecast_forward.1} parent=1 // pred_check_branch
      %7263 = sbr.rel (0) target = $region45
    $region44: #{cnn_forecast_forward.1} parent=1 // pred_region
      _
    $region45: #{cnn_forecast_forward.1} parent=1 // pred_fallthru
      _
    %7264 = vsyncpa [#allocation4], 1
    %7265 = vsyncpa [#allocation6], 1

</llo_original>
